<compile_context>
chip_gen: v7x
topology: tpu7x:2x2x1
jax: 0.10.0
libtpu: 0.0.40
codegen_flags: <defaults>
</compile_context>

<pallas_src>
import functools

import jax
import jax.numpy as jnp
from jax.experimental import pallas as pl
from jax.experimental.pallas import tpu as pltpu


def _round_up(x, m):
    return ((x + m - 1) // m) * m


# --------------------------------------------------------------------------
# Kernel: one CHUNK of GRU timesteps per grid iteration.
# PyTorch gate order along the 3H axis: [r, z, n].
# --------------------------------------------------------------------------
def encoder_gru_kernel(x_ref,       # VMEM (CHUNK, H) bf16  embedded tokens for this chunk
                       h0_ref,      # VMEM (1, H)     f32   initial hidden (resident)
                       wih_ref,     # VMEM (H, 3H)    bf16  W_ih^T (resident)
                       whh_ref,     # VMEM (H, 3H)    bf16  W_hh^T (resident)
                       bx_ref,      # VMEM (1, 3H)    f32   folded bias (r/z fused, b_in)
                       bhn_ref,     # VMEM (1, H)     f32   b_hn (stays inside r*(...))
                       out_ref,     # VMEM (CHUNK, H) f32   per-step hidden outputs
                       h_scratch,   # VMEM (1, H)     f32   carried hidden state
                       gi_scratch): # VMEM (CHUNK, 3H) f32  staged input projection
    H = h_scratch.shape[-1]
    chunk = out_ref.shape[0]

    @pl.when(pl.program_id(0) == 0)
    def _():
        h_scratch[...] = h0_ref[...]

    # Hoisted input projection: one M=CHUNK bf16 matmul per chunk (no serial
    # dependency on h), staged to VMEM so the recurrence reads one row/step.
    gi_scratch[...] = (
        jnp.dot(x_ref[...], wih_ref[...], preferred_element_type=jnp.float32)
        + bx_ref[...])

    h = h_scratch[...]                                    # (1, H) f32

    # Serial recurrence, statically unrolled (CHUNK is small & static) so the
    # scheduler can overlap MXU pops with neighbouring steps' VPU/EUP math.
    for i in range(chunk):
        gh = jnp.dot(h.astype(jnp.bfloat16), whh_ref[...],
                     preferred_element_type=jnp.float32)  # (1, 3H) f32
        gi_i = gi_scratch[i:i + 1, :]                     # (1, 3H) f32, static row
        r = jax.nn.sigmoid(gi_i[:, 0:H] + gh[:, 0:H])
        z = jax.nn.sigmoid(gi_i[:, H:2 * H] + gh[:, H:2 * H])
        n = jnp.tanh(gi_i[:, 2 * H:] + r * (gh[:, 2 * H:] + bhn_ref[...]))
        h = n + z * (h - n)                               # == (1-z)*n + z*h
        out_ref[i:i + 1, :] = h                           # row store into chunk block

    h_scratch[...] = h                                    # carry into next chunk


@functools.partial(jax.jit, static_argnames=("chunk",))
def encoder_gru_forward(token_ids_pad, h0, emb_bf16, w_ih_t_bf16, w_hh_t_bf16,
                        b_x, b_hn, *, chunk):
    """token_ids_pad: (S_pad,) int32 with S_pad % chunk == 0.
    Returns per-step hidden states of shape (S_pad, H) f32."""
    s_pad = token_ids_pad.shape[0]
    H = h0.shape[-1]
    n_chunks = s_pad // chunk

    # Embedding row gather (XLA gather); the input projection matmul itself is
    # done per-chunk inside the kernel.
    x = jnp.take(emb_bf16, token_ids_pad, axis=0)         # (S_pad, H) bf16

    grid_spec = pltpu.PrefetchScalarGridSpec(
        num_scalar_prefetch=0,
        grid=(n_chunks,),
        in_specs=[
            pl.BlockSpec((chunk, H), lambda c: (c, 0)),    # x chunk (streamed)
            pl.BlockSpec((1, H), lambda c: (0, 0)),        # h0      (resident)
            pl.BlockSpec((H, 3 * H), lambda c: (0, 0)),    # W_ih^T  (resident)
            pl.BlockSpec((H, 3 * H), lambda c: (0, 0)),    # W_hh^T  (resident)
            pl.BlockSpec((1, 3 * H), lambda c: (0, 0)),    # b_x     (resident)
            pl.BlockSpec((1, H), lambda c: (0, 0)),        # b_hn    (resident)
        ],
        out_specs=pl.BlockSpec((chunk, H), lambda c: (c, 0)),
        scratch_shapes=[
            pltpu.VMEM((1, H), jnp.float32),               # carried hidden state
            pltpu.VMEM((chunk, 3 * H), jnp.float32),       # staged GI for the chunk
        ],
    )

    return pl.pallas_call(
        encoder_gru_kernel,
        out_shape=jax.ShapeDtypeStruct((s_pad, H), jnp.float32),
        grid_spec=grid_spec,
        compiler_params=pltpu.CompilerParams(
            dimension_semantics=("arbitrary",),   # chunks carry h serially
            vmem_limit_bytes=32 * 1024 * 1024,
        ),
    )(x, h0, w_ih_t_bf16, w_hh_t_bf16, b_x, b_hn)


# --------------------------------------------------------------------------
# JAX/Pallas port of the PyTorch EncoderRNN forward pass.
# --------------------------------------------------------------------------
class EncoderRNNPallas:

    def __init__(self, input_size, hidden_size, key):
        self.hidden_size = hidden_size
        H = hidden_size
        k_emb, k_wih, k_whh, k_bih, k_bhh = jax.random.split(key, 5)
        bound = 1.0 / jnp.sqrt(H)

        # f32 master parameters (used by the pure-JAX reference).
        # nn.Embedding(input_size, H): N(0, 1) init.
        self.embedding = jax.random.normal(k_emb, (input_size, H), dtype=jnp.float32)
        # nn.GRU(H, H) params stored transposed: (H, 3H), gate order [r, z, n].
        self.w_ih_t = jax.random.uniform(k_wih, (H, 3 * H), jnp.float32, -bound, bound)
        self.w_hh_t = jax.random.uniform(k_whh, (H, 3 * H), jnp.float32, -bound, bound)
        self.b_ih = jax.random.uniform(k_bih, (1, 3 * H), jnp.float32, -bound, bound)
        self.b_hh = jax.random.uniform(k_bhh, (1, 3 * H), jnp.float32, -bound, bound)

        # bf16 MXU operands (gate math stays f32 inside the kernel).
        self.emb_bf16 = self.embedding.astype(jnp.bfloat16)
        self.w_ih_t_bf16 = self.w_ih_t.astype(jnp.bfloat16)
        self.w_hh_t_bf16 = self.w_hh_t.astype(jnp.bfloat16)

        # Pre-folded f32 biases: r/z gates take b_ih+b_hh; n gate keeps b_in on
        # the input side, b_hn stays inside r*(h@W_hn + b_hn) (PyTorch GRU).
        b_rz = self.b_ih[:, :2 * H] + self.b_hh[:, :2 * H]
        self.b_x = jnp.concatenate([b_rz, self.b_ih[:, 2 * H:]], axis=1)   # (1, 3H)
        self.b_hn = self.b_hh[:, 2 * H:]                                   # (1, H)

    def init_hidden(self):
        return jnp.zeros((1, 1, self.hidden_size), dtype=jnp.float32)

    initHidden = init_hidden  # PyTorch-style alias

    def forward(self, input, hidden):
        """input: scalar token id (original PyTorch semantics) or (S,) sequence.
        Returns (output (S,1,H), hidden (1,1,H))."""
        token_ids = jnp.atleast_1d(jnp.asarray(input, dtype=jnp.int32))
        S = int(token_ids.shape[0])
        H = self.hidden_size

        # CHUNK: multiple of 16 (bf16 sublane tile), capped for unroll sanity.
        chunk = min(32, _round_up(max(S, 1), 16))
        s_pad = _round_up(S, chunk)
        ids_pad = jnp.pad(token_ids, (0, s_pad - S))       # padded steps are sliced off

        h0 = hidden.reshape(1, H).astype(jnp.float32)
        out = encoder_gru_forward(ids_pad, h0, self.emb_bf16, self.w_ih_t_bf16,
                                  self.w_hh_t_bf16, self.b_x, self.b_hn,
                                  chunk=chunk)
        output = out[:S].reshape(S, 1, H)
        new_hidden = out[S - 1].reshape(1, 1, H)
        return output, new_hidden


# --------------------------------------------------------------------------
# Pure-JAX reference of PyTorch GRU semantics (unfused biases), for checking.
# matmul_dtype lets us build a matched-precision (bf16 operand) reference.
# --------------------------------------------------------------------------
def _reference_forward(enc, token_ids, hidden, matmul_dtype=jnp.float32):
    H = enc.hidden_size
    h = hidden.reshape(1, H).astype(jnp.float32)
    emb = enc.embedding.astype(matmul_dtype)
    w_ih = enc.w_ih_t.astype(matmul_dtype)
    w_hh = enc.w_hh_t.astype(matmul_dtype)
    outs = []
    for t in list(token_ids):
        x = emb[t].reshape(1, H)
        gi = jnp.dot(x, w_ih, preferred_element_type=jnp.float32) + enc.b_ih
        gh = jnp.dot(h.astype(matmul_dtype), w_hh,
                     preferred_element_type=jnp.float32) + enc.b_hh
        r = jax.nn.sigmoid(gi[:, 0:H] + gh[:, 0:H])
        z = jax.nn.sigmoid(gi[:, H:2 * H] + gh[:, H:2 * H])
        n = jnp.tanh(gi[:, 2 * H:] + r * gh[:, 2 * H:])
        h = (1.0 - z) * n + z * h
        outs.append(h)
    out = jnp.stack(outs, axis=0)          # (S, 1, H)
    return out, h.reshape(1, 1, H)


if __name__ == "__main__":
    key = jax.random.PRNGKey(0)
    input_size = 100      # vocab size
    hidden_size = 256     # matches the PyTorch module's hidden_size (lane-dense)
    seq_len = 8

    enc = EncoderRNNPallas(input_size, hidden_size, key)

    k_tok, _ = jax.random.split(jax.random.PRNGKey(0))
    token_ids = jax.random.randint(k_tok, (seq_len,), 0, input_size, dtype=jnp.int32)
    hidden = enc.init_hidden()

    # Full-sequence pass: one kernel launch for all timesteps (single chunk).
    output, new_hidden = enc.forward(token_ids, hidden)
    output = jax.block_until_ready(output)
    new_hidden = jax.block_until_ready(new_hidden)
    assert output.shape == (seq_len, 1, hidden_size)
    assert new_hidden.shape == (1, 1, hidden_size)

    # Tight check vs a matched-precision reference (bf16 MXU operands, f32 math).
    ref_out_b, ref_hid_b = _reference_forward(enc, token_ids, hidden, jnp.bfloat16)
    assert jnp.allclose(output, ref_out_b, atol=5e-3, rtol=5e-3)
    assert jnp.allclose(new_hidden, ref_hid_b, atol=5e-3, rtol=5e-3)

    # Check vs the exact f32 PyTorch-GRU-semantics reference (tolerance loosened
    # because matmul operands are bf16, as flagged in the perf review).
    ref_out, ref_hid = _reference_forward(enc, token_ids, hidden, jnp.float32)
    assert jnp.allclose(output, ref_out, atol=5e-2, rtol=5e-2)
    assert jnp.allclose(new_hidden, ref_hid, atol=5e-2, rtol=5e-2)

    # Single-token path == original EncoderRNN.forward(input, hidden) semantics.
    out1, hid1 = enc.forward(jnp.int32(7), hidden)
    out1 = jax.block_until_ready(out1)
    hid1 = jax.block_until_ready(hid1)
    ref_out1, ref_hid1 = _reference_forward(enc, jnp.array([7], jnp.int32), hidden,
                                            jnp.bfloat16)
    assert out1.shape == (1, 1, hidden_size) and hid1.shape == (1, 1, hidden_size)
    assert jnp.allclose(out1, ref_out1, atol=5e-3, rtol=5e-3)
    assert jnp.allclose(hid1, ref_hid1, atol=5e-3, rtol=5e-3)

    print("KERNEL_OK")
</pallas_src>

<mosaic_0001>
module attributes {stable_mosaic.version = 11 : i64} {
  func.func @encoder_gru_kernel(%arg0: i32, %arg1: memref<16x256xbf16, #tpu.memory_space<vmem>>, %arg2: memref<1x256xf32, #tpu.memory_space<vmem>>, %arg3: memref<256x768xbf16, #tpu.memory_space<vmem>>, %arg4: memref<256x768xbf16, #tpu.memory_space<vmem>>, %arg5: memref<1x768xf32, #tpu.memory_space<vmem>>, %arg6: memref<1x256xf32, #tpu.memory_space<vmem>>, %arg7: memref<16x256xf32, #tpu.memory_space<vmem>>, %arg8: memref<1x256xf32, #tpu.memory_space<vmem>>, %arg9: memref<16x768xf32, #tpu.memory_space<vmem>>) attributes {dimension_semantics = [#tpu.dimension_semantics<arbitrary>], iteration_bounds = array<i64: 1>, scalar_prefetch = 0 : i64, scratch_operands = 2 : i64, tpu.core_type = #tpu.core_type<tc>, window_params = [{transform_indices = @transform_0, window_bounds = array<i64: 16, 256>}, {pipeline_mode = #tpu.pipeline_mode<synchronous>, transform_indices = @transform_1, window_bounds = array<i64: 1, 256>}, {pipeline_mode = #tpu.pipeline_mode<synchronous>, transform_indices = @transform_2, window_bounds = array<i64: 256, 768>}, {pipeline_mode = #tpu.pipeline_mode<synchronous>, transform_indices = @transform_3, window_bounds = array<i64: 256, 768>}, {pipeline_mode = #tpu.pipeline_mode<synchronous>, transform_indices = @transform_4, window_bounds = array<i64: 1, 768>}, {pipeline_mode = #tpu.pipeline_mode<synchronous>, transform_indices = @transform_5, window_bounds = array<i64: 1, 256>}, {transform_indices = @transform_6, window_bounds = array<i64: 16, 256>}]} {
    %c0_i32 = arith.constant 0 : i32
    %0 = arith.cmpi eq, %arg0, %c0_i32 : i32
    %1 = arith.extui %0 : i1 to i32
    %c0_i32_0 = arith.constant 0 : i32
    %2 = arith.cmpi ne, %1, %c0_i32_0 : i32
    scf.if %2 {
      %c0_173 = arith.constant 0 : index
      %c0_174 = arith.constant 0 : index
      %508 = vector.load %arg2[%c0_173, %c0_174] : memref<1x256xf32, #tpu.memory_space<vmem>>, vector<1x256xf32>
      %c0_175 = arith.constant 0 : index
      %c0_176 = arith.constant 0 : index
      %509 = vector.load %arg8[%c0_175, %c0_176] : memref<1x256xf32, #tpu.memory_space<vmem>>, vector<1x256xf32>
      tpu.vector_store %arg8[%c0_175, %c0_176], %508 {strides = array<i32>} : memref<1x256xf32, #tpu.memory_space<vmem>>, vector<1x256xf32>,
    } else {
    }
    %c0 = arith.constant 0 : index
    %c0_1 = arith.constant 0 : index
    %3 = vector.load %arg1[%c0, %c0_1] : memref<16x256xbf16, #tpu.memory_space<vmem>>, vector<16x256xbf16>
    %c0_2 = arith.constant 0 : index
    %c0_3 = arith.constant 0 : index
    %4 = vector.load %arg3[%c0_2, %c0_3] : memref<256x768xbf16, #tpu.memory_space<vmem>>, vector<256x768xbf16>
    %cst = arith.constant dense<0.000000e+00> : vector<16x768xf32>
    %5 = tpu.matmul %3, %4, %cst {dimension_numbers = #tpu.dot_dimension_numbers<[1], [0], [0], [1], [0, 0, 1, 1], [], []>} : vector<16x256xbf16>, vector<256x768xbf16>, vector<16x768xf32> -> vector<16x768xf32>
    %c0_4 = arith.constant 0 : index
    %c0_5 = arith.constant 0 : index
    %6 = vector.load %arg5[%c0_4, %c0_5] : memref<1x768xf32, #tpu.memory_space<vmem>>, vector<1x768xf32>
    %7 = vector.broadcast %6 : vector<1x768xf32> to vector<16x768xf32>
    %8 = arith.addf %5, %7 : vector<16x768xf32>
    %c0_6 = arith.constant 0 : index
    %c0_7 = arith.constant 0 : index
    %9 = vector.load %arg9[%c0_6, %c0_7] : memref<16x768xf32, #tpu.memory_space<vmem>>, vector<16x768xf32>
    tpu.vector_store %arg9[%c0_6, %c0_7], %8 {strides = array<i32>} : memref<16x768xf32, #tpu.memory_space<vmem>>, vector<16x768xf32>,
    %c0_8 = arith.constant 0 : index
    %c0_9 = arith.constant 0 : index
    %10 = vector.load %arg8[%c0_8, %c0_9] : memref<1x256xf32, #tpu.memory_space<vmem>>, vector<1x256xf32>
    %11 = arith.truncf %10 : vector<1x256xf32> to vector<1x256xbf16>
    %c0_10 = arith.constant 0 : index
    %c0_11 = arith.constant 0 : index
    %12 = vector.load %arg4[%c0_10, %c0_11] : memref<256x768xbf16, #tpu.memory_space<vmem>>, vector<256x768xbf16>
    %cst_12 = arith.constant dense<0.000000e+00> : vector<1x768xf32>
    %13 = tpu.matmul %11, %12, %cst_12 {dimension_numbers = #tpu.dot_dimension_numbers<[1], [0], [0], [1], [0, 0, 1, 1], [], []>} : vector<1x256xbf16>, vector<256x768xbf16>, vector<1x768xf32> -> vector<1x768xf32>
    %c0_13 = arith.constant 0 : index
    %c0_14 = arith.constant 0 : index
    %14 = vector.load %arg9[%c0_13, %c0_14] : memref<16x768xf32, #tpu.memory_space<vmem>>, vector<1x768xf32>
    %15 = vector.extract_strided_slice %14 {offsets = [0, 0], sizes = [1, 256], strides = [1, 1]} : vector<1x768xf32> to vector<1x256xf32>
    %16 = vector.extract_strided_slice %13 {offsets = [0, 0], sizes = [1, 256], strides = [1, 1]} : vector<1x768xf32> to vector<1x256xf32>
    %17 = arith.addf %15, %16 : vector<1x256xf32>
    %18 = arith.negf %17 : vector<1x256xf32>
    %19 = math.exp %18 : vector<1x256xf32>
    %cst_15 = arith.constant 1.000000e+00 : f32
    %20 = vector.broadcast %cst_15 : f32 to vector<1x256xf32>
    %21 = arith.addf %20, %19 : vector<1x256xf32>
    %22 = arith.divf %20, %21 : vector<1x256xf32>
    %23 = vector.extract_strided_slice %14 {offsets = [0, 256], sizes = [1, 256], strides = [1, 1]} : vector<1x768xf32> to vector<1x256xf32>
    %24 = vector.extract_strided_slice %13 {offsets = [0, 256], sizes = [1, 256], strides = [1, 1]} : vector<1x768xf32> to vector<1x256xf32>
    %25 = arith.addf %23, %24 : vector<1x256xf32>
    %26 = arith.negf %25 : vector<1x256xf32>
    %27 = math.exp %26 : vector<1x256xf32>
    %cst_16 = arith.constant 1.000000e+00 : f32
    %28 = vector.broadcast %cst_16 : f32 to vector<1x256xf32>
    %29 = arith.addf %28, %27 : vector<1x256xf32>
    %30 = arith.divf %28, %29 : vector<1x256xf32>
    %31 = vector.extract_strided_slice %14 {offsets = [0, 512], sizes = [1, 256], strides = [1, 1]} : vector<1x768xf32> to vector<1x256xf32>
    %32 = vector.extract_strided_slice %13 {offsets = [0, 512], sizes = [1, 256], strides = [1, 1]} : vector<1x768xf32> to vector<1x256xf32>
    %c0_17 = arith.constant 0 : index
    %c0_18 = arith.constant 0 : index
    %33 = vector.load %arg6[%c0_17, %c0_18] : memref<1x256xf32, #tpu.memory_space<vmem>>, vector<1x256xf32>
    %34 = arith.addf %32, %33 : vector<1x256xf32>
    %35 = arith.mulf %22, %34 : vector<1x256xf32>
    %36 = arith.addf %31, %35 : vector<1x256xf32>
    %37 = math.tanh %36 : vector<1x256xf32>
    %38 = arith.subf %10, %37 : vector<1x256xf32>
    %39 = arith.mulf %30, %38 : vector<1x256xf32>
    %40 = arith.addf %37, %39 : vector<1x256xf32>
    %c0_19 = arith.constant 0 : index
    %c0_20 = arith.constant 0 : index
    %41 = vector.load %arg7[%c0_19, %c0_20] : memref<16x256xf32, #tpu.memory_space<vmem>>, vector<1x256xf32>
    tpu.vector_store %arg7[%c0_19, %c0_20], %40 {strides = array<i32>} : memref<16x256xf32, #tpu.memory_space<vmem>>, vector<1x256xf32>,
    %42 = arith.truncf %40 : vector<1x256xf32> to vector<1x256xbf16>
    %c0_21 = arith.constant 0 : index
    %c0_22 = arith.constant 0 : index
    %43 = vector.load %arg4[%c0_21, %c0_22] : memref<256x768xbf16, #tpu.memory_space<vmem>>, vector<256x768xbf16>
    %cst_23 = arith.constant dense<0.000000e+00> : vector<1x768xf32>
    %44 = tpu.matmul %42, %43, %cst_23 {dimension_numbers = #tpu.dot_dimension_numbers<[1], [0], [0], [1], [0, 0, 1, 1], [], []>} : vector<1x256xbf16>, vector<256x768xbf16>, vector<1x768xf32> -> vector<1x768xf32>
    %c1 = arith.constant 1 : index
    %c0_24 = arith.constant 0 : index
    %45 = vector.load %arg9[%c1, %c0_24] : memref<16x768xf32, #tpu.memory_space<vmem>>, vector<1x768xf32>
    %46 = vector.extract_strided_slice %45 {offsets = [0, 0], sizes = [1, 256], strides = [1, 1]} : vector<1x768xf32> to vector<1x256xf32>
    %47 = vector.extract_strided_slice %44 {offsets = [0, 0], sizes = [1, 256], strides = [1, 1]} : vector<1x768xf32> to vector<1x256xf32>
    %48 = arith.addf %46, %47 : vector<1x256xf32>
    %49 = arith.negf %48 : vector<1x256xf32>
    %50 = math.exp %49 : vector<1x256xf32>
    %cst_25 = arith.constant 1.000000e+00 : f32
    %51 = vector.broadcast %cst_25 : f32 to vector<1x256xf32>
    %52 = arith.addf %51, %50 : vector<1x256xf32>
    %53 = arith.divf %51, %52 : vector<1x256xf32>
    %54 = vector.extract_strided_slice %45 {offsets = [0, 256], sizes = [1, 256], strides = [1, 1]} : vector<1x768xf32> to vector<1x256xf32>
    %55 = vector.extract_strided_slice %44 {offsets = [0, 256], sizes = [1, 256], strides = [1, 1]} : vector<1x768xf32> to vector<1x256xf32>
    %56 = arith.addf %54, %55 : vector<1x256xf32>
    %57 = arith.negf %56 : vector<1x256xf32>
    %58 = math.exp %57 : vector<1x256xf32>
    %cst_26 = arith.constant 1.000000e+00 : f32
    %59 = vector.broadcast %cst_26 : f32 to vector<1x256xf32>
    %60 = arith.addf %59, %58 : vector<1x256xf32>
    %61 = arith.divf %59, %60 : vector<1x256xf32>
    %62 = vector.extract_strided_slice %45 {offsets = [0, 512], sizes = [1, 256], strides = [1, 1]} : vector<1x768xf32> to vector<1x256xf32>
    %63 = vector.extract_strided_slice %44 {offsets = [0, 512], sizes = [1, 256], strides = [1, 1]} : vector<1x768xf32> to vector<1x256xf32>
    %c0_27 = arith.constant 0 : index
    %c0_28 = arith.constant 0 : index
    %64 = vector.load %arg6[%c0_27, %c0_28] : memref<1x256xf32, #tpu.memory_space<vmem>>, vector<1x256xf32>
    %65 = arith.addf %63, %64 : vector<1x256xf32>
    %66 = arith.mulf %53, %65 : vector<1x256xf32>
    %67 = arith.addf %62, %66 : vector<1x256xf32>
    %68 = math.tanh %67 : vector<1x256xf32>
    %69 = arith.subf %40, %68 : vector<1x256xf32>
    %70 = arith.mulf %61, %69 : vector<1x256xf32>
    %71 = arith.addf %68, %70 : vector<1x256xf32>
    %c1_29 = arith.constant 1 : index
    %c0_30 = arith.constant 0 : index
    %72 = vector.load %arg7[%c1_29, %c0_30] : memref<16x256xf32, #tpu.memory_space<vmem>>, vector<1x256xf32>
    tpu.vector_store %arg7[%c1_29, %c0_30], %71 {strides = array<i32>} : memref<16x256xf32, #tpu.memory_space<vmem>>, vector<1x256xf32>,
    %73 = arith.truncf %71 : vector<1x256xf32> to vector<1x256xbf16>
    %c0_31 = arith.constant 0 : index
    %c0_32 = arith.constant 0 : index
    %74 = vector.load %arg4[%c0_31, %c0_32] : memref<256x768xbf16, #tpu.memory_space<vmem>>, vector<256x768xbf16>
    %cst_33 = arith.constant dense<0.000000e+00> : vector<1x768xf32>
    %75 = tpu.matmul %73, %74, %cst_33 {dimension_numbers = #tpu.dot_dimension_numbers<[1], [0], [0], [1], [0, 0, 1, 1], [], []>} : vector<1x256xbf16>, vector<256x768xbf16>, vector<1x768xf32> -> vector<1x768xf32>
    %c2 = arith.constant 2 : index
    %c0_34 = arith.constant 0 : index
    %76 = vector.load %arg9[%c2, %c0_34] : memref<16x768xf32, #tpu.memory_space<vmem>>, vector<1x768xf32>
    %77 = vector.extract_strided_slice %76 {offsets = [0, 0], sizes = [1, 256], strides = [1, 1]} : vector<1x768xf32> to vector<1x256xf32>
    %78 = vector.extract_strided_slice %75 {offsets = [0, 0], sizes = [1, 256], strides = [1, 1]} : vector<1x768xf32> to vector<1x256xf32>
    %79 = arith.addf %77, %78 : vector<1x256xf32>
    %80 = arith.negf %79 : vector<1x256xf32>
    %81 = math.exp %80 : vector<1x256xf32>
    %cst_35 = arith.constant 1.000000e+00 : f32
    %82 = vector.broadcast %cst_35 : f32 to vector<1x256xf32>
    %83 = arith.addf %82, %81 : vector<1x256xf32>
    %84 = arith.divf %82, %83 : vector<1x256xf32>
    %85 = vector.extract_strided_slice %76 {offsets = [0, 256], sizes = [1, 256], strides = [1, 1]} : vector<1x768xf32> to vector<1x256xf32>
    %86 = vector.extract_strided_slice %75 {offsets = [0, 256], sizes = [1, 256], strides = [1, 1]} : vector<1x768xf32> to vector<1x256xf32>
    %87 = arith.addf %85, %86 : vector<1x256xf32>
    %88 = arith.negf %87 : vector<1x256xf32>
    %89 = math.exp %88 : vector<1x256xf32>
    %cst_36 = arith.constant 1.000000e+00 : f32
    %90 = vector.broadcast %cst_36 : f32 to vector<1x256xf32>
    %91 = arith.addf %90, %89 : vector<1x256xf32>
    %92 = arith.divf %90, %91 : vector<1x256xf32>
    %93 = vector.extract_strided_slice %76 {offsets = [0, 512], sizes = [1, 256], strides = [1, 1]} : vector<1x768xf32> to vector<1x256xf32>
    %94 = vector.extract_strided_slice %75 {offsets = [0, 512], sizes = [1, 256], strides = [1, 1]} : vector<1x768xf32> to vector<1x256xf32>
    %c0_37 = arith.constant 0 : index
    %c0_38 = arith.constant 0 : index
    %95 = vector.load %arg6[%c0_37, %c0_38] : memref<1x256xf32, #tpu.memory_space<vmem>>, vector<1x256xf32>
    %96 = arith.addf %94, %95 : vector<1x256xf32>
    %97 = arith.mulf %84, %96 : vector<1x256xf32>
    %98 = arith.addf %93, %97 : vector<1x256xf32>
    %99 = math.tanh %98 : vector<1x256xf32>
    %100 = arith.subf %71, %99 : vector<1x256xf32>
    %101 = arith.mulf %92, %100 : vector<1x256xf32>
    %102 = arith.addf %99, %101 : vector<1x256xf32>
    %c2_39 = arith.constant 2 : index
    %c0_40 = arith.constant 0 : index
    %103 = vector.load %arg7[%c2_39, %c0_40] : memref<16x256xf32, #tpu.memory_space<vmem>>, vector<1x256xf32>
    tpu.vector_store %arg7[%c2_39, %c0_40], %102 {strides = array<i32>} : memref<16x256xf32, #tpu.memory_space<vmem>>, vector<1x256xf32>,
    %104 = arith.truncf %102 : vector<1x256xf32> to vector<1x256xbf16>
    %c0_41 = arith.constant 0 : index
    %c0_42 = arith.constant 0 : index
    %105 = vector.load %arg4[%c0_41, %c0_42] : memref<256x768xbf16, #tpu.memory_space<vmem>>, vector<256x768xbf16>
    %cst_43 = arith.constant dense<0.000000e+00> : vector<1x768xf32>
    %106 = tpu.matmul %104, %105, %cst_43 {dimension_numbers = #tpu.dot_dimension_numbers<[1], [0], [0], [1], [0, 0, 1, 1], [], []>} : vector<1x256xbf16>, vector<256x768xbf16>, vector<1x768xf32> -> vector<1x768xf32>
    %c3 = arith.constant 3 : index
    %c0_44 = arith.constant 0 : index
    %107 = vector.load %arg9[%c3, %c0_44] : memref<16x768xf32, #tpu.memory_space<vmem>>, vector<1x768xf32>
    %108 = vector.extract_strided_slice %107 {offsets = [0, 0], sizes = [1, 256], strides = [1, 1]} : vector<1x768xf32> to vector<1x256xf32>
    %109 = vector.extract_strided_slice %106 {offsets = [0, 0], sizes = [1, 256], strides = [1, 1]} : vector<1x768xf32> to vector<1x256xf32>
    %110 = arith.addf %108, %109 : vector<1x256xf32>
    %111 = arith.negf %110 : vector<1x256xf32>
    %112 = math.exp %111 : vector<1x256xf32>
    %cst_45 = arith.constant 1.000000e+00 : f32
    %113 = vector.broadcast %cst_45 : f32 to vector<1x256xf32>
    %114 = arith.addf %113, %112 : vector<1x256xf32>
    %115 = arith.divf %113, %114 : vector<1x256xf32>
    %116 = vector.extract_strided_slice %107 {offsets = [0, 256], sizes = [1, 256], strides = [1, 1]} : vector<1x768xf32> to vector<1x256xf32>
    %117 = vector.extract_strided_slice %106 {offsets = [0, 256], sizes = [1, 256], strides = [1, 1]} : vector<1x768xf32> to vector<1x256xf32>
    %118 = arith.addf %116, %117 : vector<1x256xf32>
    %119 = arith.negf %118 : vector<1x256xf32>
    %120 = math.exp %119 : vector<1x256xf32>
    %cst_46 = arith.constant 1.000000e+00 : f32
    %121 = vector.broadcast %cst_46 : f32 to vector<1x256xf32>
    %122 = arith.addf %121, %120 : vector<1x256xf32>
    %123 = arith.divf %121, %122 : vector<1x256xf32>
    %124 = vector.extract_strided_slice %107 {offsets = [0, 512], sizes = [1, 256], strides = [1, 1]} : vector<1x768xf32> to vector<1x256xf32>
    %125 = vector.extract_strided_slice %106 {offsets = [0, 512], sizes = [1, 256], strides = [1, 1]} : vector<1x768xf32> to vector<1x256xf32>
    %c0_47 = arith.constant 0 : index
    %c0_48 = arith.constant 0 : index
    %126 = vector.load %arg6[%c0_47, %c0_48] : memref<1x256xf32, #tpu.memory_space<vmem>>, vector<1x256xf32>
    %127 = arith.addf %125, %126 : vector<1x256xf32>
    %128 = arith.mulf %115, %127 : vector<1x256xf32>
    %129 = arith.addf %124, %128 : vector<1x256xf32>
    %130 = math.tanh %129 : vector<1x256xf32>
    %131 = arith.subf %102, %130 : vector<1x256xf32>
    %132 = arith.mulf %123, %131 : vector<1x256xf32>
    %133 = arith.addf %130, %132 : vector<1x256xf32>
    %c3_49 = arith.constant 3 : index
    %c0_50 = arith.constant 0 : index
    %134 = vector.load %arg7[%c3_49, %c0_50] : memref<16x256xf32, #tpu.memory_space<vmem>>, vector<1x256xf32>
    tpu.vector_store %arg7[%c3_49, %c0_50], %133 {strides = array<i32>} : memref<16x256xf32, #tpu.memory_space<vmem>>, vector<1x256xf32>,
    %135 = arith.truncf %133 : vector<1x256xf32> to vector<1x256xbf16>
    %c0_51 = arith.constant 0 : index
    %c0_52 = arith.constant 0 : index
    %136 = vector.load %arg4[%c0_51, %c0_52] : memref<256x768xbf16, #tpu.memory_space<vmem>>, vector<256x768xbf16>
    %cst_53 = arith.constant dense<0.000000e+00> : vector<1x768xf32>
    %137 = tpu.matmul %135, %136, %cst_53 {dimension_numbers = #tpu.dot_dimension_numbers<[1], [0], [0], [1], [0, 0, 1, 1], [], []>} : vector<1x256xbf16>, vector<256x768xbf16>, vector<1x768xf32> -> vector<1x768xf32>
    %c4 = arith.constant 4 : index
    %c0_54 = arith.constant 0 : index
    %138 = vector.load %arg9[%c4, %c0_54] : memref<16x768xf32, #tpu.memory_space<vmem>>, vector<1x768xf32>
    %139 = vector.extract_strided_slice %138 {offsets = [0, 0], sizes = [1, 256], strides = [1, 1]} : vector<1x768xf32> to vector<1x256xf32>
    %140 = vector.extract_strided_slice %137 {offsets = [0, 0], sizes = [1, 256], strides = [1, 1]} : vector<1x768xf32> to vector<1x256xf32>
    %141 = arith.addf %139, %140 : vector<1x256xf32>
    %142 = arith.negf %141 : vector<1x256xf32>
    %143 = math.exp %142 : vector<1x256xf32>
    %cst_55 = arith.constant 1.000000e+00 : f32
    %144 = vector.broadcast %cst_55 : f32 to vector<1x256xf32>
    %145 = arith.addf %144, %143 : vector<1x256xf32>
    %146 = arith.divf %144, %145 : vector<1x256xf32>
    %147 = vector.extract_strided_slice %138 {offsets = [0, 256], sizes = [1, 256], strides = [1, 1]} : vector<1x768xf32> to vector<1x256xf32>
    %148 = vector.extract_strided_slice %137 {offsets = [0, 256], sizes = [1, 256], strides = [1, 1]} : vector<1x768xf32> to vector<1x256xf32>
    %149 = arith.addf %147, %148 : vector<1x256xf32>
    %150 = arith.negf %149 : vector<1x256xf32>
    %151 = math.exp %150 : vector<1x256xf32>
    %cst_56 = arith.constant 1.000000e+00 : f32
    %152 = vector.broadcast %cst_56 : f32 to vector<1x256xf32>
    %153 = arith.addf %152, %151 : vector<1x256xf32>
    %154 = arith.divf %152, %153 : vector<1x256xf32>
    %155 = vector.extract_strided_slice %138 {offsets = [0, 512], sizes = [1, 256], strides = [1, 1]} : vector<1x768xf32> to vector<1x256xf32>
    %156 = vector.extract_strided_slice %137 {offsets = [0, 512], sizes = [1, 256], strides = [1, 1]} : vector<1x768xf32> to vector<1x256xf32>
    %c0_57 = arith.constant 0 : index
    %c0_58 = arith.constant 0 : index
    %157 = vector.load %arg6[%c0_57, %c0_58] : memref<1x256xf32, #tpu.memory_space<vmem>>, vector<1x256xf32>
    %158 = arith.addf %156, %157 : vector<1x256xf32>
    %159 = arith.mulf %146, %158 : vector<1x256xf32>
    %160 = arith.addf %155, %159 : vector<1x256xf32>
    %161 = math.tanh %160 : vector<1x256xf32>
    %162 = arith.subf %133, %161 : vector<1x256xf32>
    %163 = arith.mulf %154, %162 : vector<1x256xf32>
    %164 = arith.addf %161, %163 : vector<1x256xf32>
    %c4_59 = arith.constant 4 : index
    %c0_60 = arith.constant 0 : index
    %165 = vector.load %arg7[%c4_59, %c0_60] : memref<16x256xf32, #tpu.memory_space<vmem>>, vector<1x256xf32>
    tpu.vector_store %arg7[%c4_59, %c0_60], %164 {strides = array<i32>} : memref<16x256xf32, #tpu.memory_space<vmem>>, vector<1x256xf32>,
    %166 = arith.truncf %164 : vector<1x256xf32> to vector<1x256xbf16>
    %c0_61 = arith.constant 0 : index
    %c0_62 = arith.constant 0 : index
    %167 = vector.load %arg4[%c0_61, %c0_62] : memref<256x768xbf16, #tpu.memory_space<vmem>>, vector<256x768xbf16>
    %cst_63 = arith.constant dense<0.000000e+00> : vector<1x768xf32>
    %168 = tpu.matmul %166, %167, %cst_63 {dimension_numbers = #tpu.dot_dimension_numbers<[1], [0], [0], [1], [0, 0, 1, 1], [], []>} : vector<1x256xbf16>, vector<256x768xbf16>, vector<1x768xf32> -> vector<1x768xf32>
    %c5 = arith.constant 5 : index
    %c0_64 = arith.constant 0 : index
    %169 = vector.load %arg9[%c5, %c0_64] : memref<16x768xf32, #tpu.memory_space<vmem>>, vector<1x768xf32>
    %170 = vector.extract_strided_slice %169 {offsets = [0, 0], sizes = [1, 256], strides = [1, 1]} : vector<1x768xf32> to vector<1x256xf32>
    %171 = vector.extract_strided_slice %168 {offsets = [0, 0], sizes = [1, 256], strides = [1, 1]} : vector<1x768xf32> to vector<1x256xf32>
    %172 = arith.addf %170, %171 : vector<1x256xf32>
    %173 = arith.negf %172 : vector<1x256xf32>
    %174 = math.exp %173 : vector<1x256xf32>
    %cst_65 = arith.constant 1.000000e+00 : f32
    %175 = vector.broadcast %cst_65 : f32 to vector<1x256xf32>
    %176 = arith.addf %175, %174 : vector<1x256xf32>
    %177 = arith.divf %175, %176 : vector<1x256xf32>
    %178 = vector.extract_strided_slice %169 {offsets = [0, 256], sizes = [1, 256], strides = [1, 1]} : vector<1x768xf32> to vector<1x256xf32>
    %179 = vector.extract_strided_slice %168 {offsets = [0, 256], sizes = [1, 256], strides = [1, 1]} : vector<1x768xf32> to vector<1x256xf32>
    %180 = arith.addf %178, %179 : vector<1x256xf32>
    %181 = arith.negf %180 : vector<1x256xf32>
    %182 = math.exp %181 : vector<1x256xf32>
    %cst_66 = arith.constant 1.000000e+00 : f32
    %183 = vector.broadcast %cst_66 : f32 to vector<1x256xf32>
    %184 = arith.addf %183, %182 : vector<1x256xf32>
    %185 = arith.divf %183, %184 : vector<1x256xf32>
    %186 = vector.extract_strided_slice %169 {offsets = [0, 512], sizes = [1, 256], strides = [1, 1]} : vector<1x768xf32> to vector<1x256xf32>
    %187 = vector.extract_strided_slice %168 {offsets = [0, 512], sizes = [1, 256], strides = [1, 1]} : vector<1x768xf32> to vector<1x256xf32>
    %c0_67 = arith.constant 0 : index
    %c0_68 = arith.constant 0 : index
    %188 = vector.load %arg6[%c0_67, %c0_68] : memref<1x256xf32, #tpu.memory_space<vmem>>, vector<1x256xf32>
    %189 = arith.addf %187, %188 : vector<1x256xf32>
    %190 = arith.mulf %177, %189 : vector<1x256xf32>
    %191 = arith.addf %186, %190 : vector<1x256xf32>
    %192 = math.tanh %191 : vector<1x256xf32>
    %193 = arith.subf %164, %192 : vector<1x256xf32>
    %194 = arith.mulf %185, %193 : vector<1x256xf32>
    %195 = arith.addf %192, %194 : vector<1x256xf32>
    %c5_69 = arith.constant 5 : index
    %c0_70 = arith.constant 0 : index
    %196 = vector.load %arg7[%c5_69, %c0_70] : memref<16x256xf32, #tpu.memory_space<vmem>>, vector<1x256xf32>
    tpu.vector_store %arg7[%c5_69, %c0_70], %195 {strides = array<i32>} : memref<16x256xf32, #tpu.memory_space<vmem>>, vector<1x256xf32>,
    %197 = arith.truncf %195 : vector<1x256xf32> to vector<1x256xbf16>
    %c0_71 = arith.constant 0 : index
    %c0_72 = arith.constant 0 : index
    %198 = vector.load %arg4[%c0_71, %c0_72] : memref<256x768xbf16, #tpu.memory_space<vmem>>, vector<256x768xbf16>
    %cst_73 = arith.constant dense<0.000000e+00> : vector<1x768xf32>
    %199 = tpu.matmul %197, %198, %cst_73 {dimension_numbers = #tpu.dot_dimension_numbers<[1], [0], [0], [1], [0, 0, 1, 1], [], []>} : vector<1x256xbf16>, vector<256x768xbf16>, vector<1x768xf32> -> vector<1x768xf32>
    %c6 = arith.constant 6 : index
    %c0_74 = arith.constant 0 : index
    %200 = vector.load %arg9[%c6, %c0_74] : memref<16x768xf32, #tpu.memory_space<vmem>>, vector<1x768xf32>
    %201 = vector.extract_strided_slice %200 {offsets = [0, 0], sizes = [1, 256], strides = [1, 1]} : vector<1x768xf32> to vector<1x256xf32>
    %202 = vector.extract_strided_slice %199 {offsets = [0, 0], sizes = [1, 256], strides = [1, 1]} : vector<1x768xf32> to vector<1x256xf32>
    %203 = arith.addf %201, %202 : vector<1x256xf32>
    %204 = arith.negf %203 : vector<1x256xf32>
    %205 = math.exp %204 : vector<1x256xf32>
    %cst_75 = arith.constant 1.000000e+00 : f32
    %206 = vector.broadcast %cst_75 : f32 to vector<1x256xf32>
    %207 = arith.addf %206, %205 : vector<1x256xf32>
    %208 = arith.divf %206, %207 : vector<1x256xf32>
    %209 = vector.extract_strided_slice %200 {offsets = [0, 256], sizes = [1, 256], strides = [1, 1]} : vector<1x768xf32> to vector<1x256xf32>
    %210 = vector.extract_strided_slice %199 {offsets = [0, 256], sizes = [1, 256], strides = [1, 1]} : vector<1x768xf32> to vector<1x256xf32>
    %211 = arith.addf %209, %210 : vector<1x256xf32>
    %212 = arith.negf %211 : vector<1x256xf32>
    %213 = math.exp %212 : vector<1x256xf32>
    %cst_76 = arith.constant 1.000000e+00 : f32
    %214 = vector.broadcast %cst_76 : f32 to vector<1x256xf32>
    %215 = arith.addf %214, %213 : vector<1x256xf32>
    %216 = arith.divf %214, %215 : vector<1x256xf32>
    %217 = vector.extract_strided_slice %200 {offsets = [0, 512], sizes = [1, 256], strides = [1, 1]} : vector<1x768xf32> to vector<1x256xf32>
    %218 = vector.extract_strided_slice %199 {offsets = [0, 512], sizes = [1, 256], strides = [1, 1]} : vector<1x768xf32> to vector<1x256xf32>
    %c0_77 = arith.constant 0 : index
    %c0_78 = arith.constant 0 : index
    %219 = vector.load %arg6[%c0_77, %c0_78] : memref<1x256xf32, #tpu.memory_space<vmem>>, vector<1x256xf32>
    %220 = arith.addf %218, %219 : vector<1x256xf32>
    %221 = arith.mulf %208, %220 : vector<1x256xf32>
    %222 = arith.addf %217, %221 : vector<1x256xf32>
    %223 = math.tanh %222 : vector<1x256xf32>
    %224 = arith.subf %195, %223 : vector<1x256xf32>
    %225 = arith.mulf %216, %224 : vector<1x256xf32>
    %226 = arith.addf %223, %225 : vector<1x256xf32>
    %c6_79 = arith.constant 6 : index
    %c0_80 = arith.constant 0 : index
    %227 = vector.load %arg7[%c6_79, %c0_80] : memref<16x256xf32, #tpu.memory_space<vmem>>, vector<1x256xf32>
    tpu.vector_store %arg7[%c6_79, %c0_80], %226 {strides = array<i32>} : memref<16x256xf32, #tpu.memory_space<vmem>>, vector<1x256xf32>,
    %228 = arith.truncf %226 : vector<1x256xf32> to vector<1x256xbf16>
    %c0_81 = arith.constant 0 : index
    %c0_82 = arith.constant 0 : index
    %229 = vector.load %arg4[%c0_81, %c0_82] : memref<256x768xbf16, #tpu.memory_space<vmem>>, vector<256x768xbf16>
    %cst_83 = arith.constant dense<0.000000e+00> : vector<1x768xf32>
    %230 = tpu.matmul %228, %229, %cst_83 {dimension_numbers = #tpu.dot_dimension_numbers<[1], [0], [0], [1], [0, 0, 1, 1], [], []>} : vector<1x256xbf16>, vector<256x768xbf16>, vector<1x768xf32> -> vector<1x768xf32>
    %c7 = arith.constant 7 : index
    %c0_84 = arith.constant 0 : index
    %231 = vector.load %arg9[%c7, %c0_84] : memref<16x768xf32, #tpu.memory_space<vmem>>, vector<1x768xf32>
    %232 = vector.extract_strided_slice %231 {offsets = [0, 0], sizes = [1, 256], strides = [1, 1]} : vector<1x768xf32> to vector<1x256xf32>
    %233 = vector.extract_strided_slice %230 {offsets = [0, 0], sizes = [1, 256], strides = [1, 1]} : vector<1x768xf32> to vector<1x256xf32>
    %234 = arith.addf %232, %233 : vector<1x256xf32>
    %235 = arith.negf %234 : vector<1x256xf32>
    %236 = math.exp %235 : vector<1x256xf32>
    %cst_85 = arith.constant 1.000000e+00 : f32
    %237 = vector.broadcast %cst_85 : f32 to vector<1x256xf32>
    %238 = arith.addf %237, %236 : vector<1x256xf32>
    %239 = arith.divf %237, %238 : vector<1x256xf32>
    %240 = vector.extract_strided_slice %231 {offsets = [0, 256], sizes = [1, 256], strides = [1, 1]} : vector<1x768xf32> to vector<1x256xf32>
    %241 = vector.extract_strided_slice %230 {offsets = [0, 256], sizes = [1, 256], strides = [1, 1]} : vector<1x768xf32> to vector<1x256xf32>
    %242 = arith.addf %240, %241 : vector<1x256xf32>
    %243 = arith.negf %242 : vector<1x256xf32>
    %244 = math.exp %243 : vector<1x256xf32>
    %cst_86 = arith.constant 1.000000e+00 : f32
    %245 = vector.broadcast %cst_86 : f32 to vector<1x256xf32>
    %246 = arith.addf %245, %244 : vector<1x256xf32>
    %247 = arith.divf %245, %246 : vector<1x256xf32>
    %248 = vector.extract_strided_slice %231 {offsets = [0, 512], sizes = [1, 256], strides = [1, 1]} : vector<1x768xf32> to vector<1x256xf32>
    %249 = vector.extract_strided_slice %230 {offsets = [0, 512], sizes = [1, 256], strides = [1, 1]} : vector<1x768xf32> to vector<1x256xf32>
    %c0_87 = arith.constant 0 : index
    %c0_88 = arith.constant 0 : index
    %250 = vector.load %arg6[%c0_87, %c0_88] : memref<1x256xf32, #tpu.memory_space<vmem>>, vector<1x256xf32>
    %251 = arith.addf %249, %250 : vector<1x256xf32>
    %252 = arith.mulf %239, %251 : vector<1x256xf32>
    %253 = arith.addf %248, %252 : vector<1x256xf32>
    %254 = math.tanh %253 : vector<1x256xf32>
    %255 = arith.subf %226, %254 : vector<1x256xf32>
    %256 = arith.mulf %247, %255 : vector<1x256xf32>
    %257 = arith.addf %254, %256 : vector<1x256xf32>
    %c7_89 = arith.constant 7 : index
    %c0_90 = arith.constant 0 : index
    %258 = vector.load %arg7[%c7_89, %c0_90] : memref<16x256xf32, #tpu.memory_space<vmem>>, vector<1x256xf32>
    tpu.vector_store %arg7[%c7_89, %c0_90], %257 {strides = array<i32>} : memref<16x256xf32, #tpu.memory_space<vmem>>, vector<1x256xf32>,
    %259 = arith.truncf %257 : vector<1x256xf32> to vector<1x256xbf16>
    %c0_91 = arith.constant 0 : index
    %c0_92 = arith.constant 0 : index
    %260 = vector.load %arg4[%c0_91, %c0_92] : memref<256x768xbf16, #tpu.memory_space<vmem>>, vector<256x768xbf16>
    %cst_93 = arith.constant dense<0.000000e+00> : vector<1x768xf32>
    %261 = tpu.matmul %259, %260, %cst_93 {dimension_numbers = #tpu.dot_dimension_numbers<[1], [0], [0], [1], [0, 0, 1, 1], [], []>} : vector<1x256xbf16>, vector<256x768xbf16>, vector<1x768xf32> -> vector<1x768xf32>
    %c8 = arith.constant 8 : index
    %c0_94 = arith.constant 0 : index
    %262 = vector.load %arg9[%c8, %c0_94] : memref<16x768xf32, #tpu.memory_space<vmem>>, vector<1x768xf32>
    %263 = vector.extract_strided_slice %262 {offsets = [0, 0], sizes = [1, 256], strides = [1, 1]} : vector<1x768xf32> to vector<1x256xf32>
    %264 = vector.extract_strided_slice %261 {offsets = [0, 0], sizes = [1, 256], strides = [1, 1]} : vector<1x768xf32> to vector<1x256xf32>
    %265 = arith.addf %263, %264 : vector<1x256xf32>
    %266 = arith.negf %265 : vector<1x256xf32>
    %267 = math.exp %266 : vector<1x256xf32>
    %cst_95 = arith.constant 1.000000e+00 : f32
    %268 = vector.broadcast %cst_95 : f32 to vector<1x256xf32>
    %269 = arith.addf %268, %267 : vector<1x256xf32>
    %270 = arith.divf %268, %269 : vector<1x256xf32>
    %271 = vector.extract_strided_slice %262 {offsets = [0, 256], sizes = [1, 256], strides = [1, 1]} : vector<1x768xf32> to vector<1x256xf32>
    %272 = vector.extract_strided_slice %261 {offsets = [0, 256], sizes = [1, 256], strides = [1, 1]} : vector<1x768xf32> to vector<1x256xf32>
    %273 = arith.addf %271, %272 : vector<1x256xf32>
    %274 = arith.negf %273 : vector<1x256xf32>
    %275 = math.exp %274 : vector<1x256xf32>
    %cst_96 = arith.constant 1.000000e+00 : f32
    %276 = vector.broadcast %cst_96 : f32 to vector<1x256xf32>
    %277 = arith.addf %276, %275 : vector<1x256xf32>
    %278 = arith.divf %276, %277 : vector<1x256xf32>
    %279 = vector.extract_strided_slice %262 {offsets = [0, 512], sizes = [1, 256], strides = [1, 1]} : vector<1x768xf32> to vector<1x256xf32>
    %280 = vector.extract_strided_slice %261 {offsets = [0, 512], sizes = [1, 256], strides = [1, 1]} : vector<1x768xf32> to vector<1x256xf32>
    %c0_97 = arith.constant 0 : index
    %c0_98 = arith.constant 0 : index
    %281 = vector.load %arg6[%c0_97, %c0_98] : memref<1x256xf32, #tpu.memory_space<vmem>>, vector<1x256xf32>
    %282 = arith.addf %280, %281 : vector<1x256xf32>
    %283 = arith.mulf %270, %282 : vector<1x256xf32>
    %284 = arith.addf %279, %283 : vector<1x256xf32>
    %285 = math.tanh %284 : vector<1x256xf32>
    %286 = arith.subf %257, %285 : vector<1x256xf32>
    %287 = arith.mulf %278, %286 : vector<1x256xf32>
    %288 = arith.addf %285, %287 : vector<1x256xf32>
    %c8_99 = arith.constant 8 : index
    %c0_100 = arith.constant 0 : index
    %289 = vector.load %arg7[%c8_99, %c0_100] : memref<16x256xf32, #tpu.memory_space<vmem>>, vector<1x256xf32>
    tpu.vector_store %arg7[%c8_99, %c0_100], %288 {strides = array<i32>} : memref<16x256xf32, #tpu.memory_space<vmem>>, vector<1x256xf32>,
    %290 = arith.truncf %288 : vector<1x256xf32> to vector<1x256xbf16>
    %c0_101 = arith.constant 0 : index
    %c0_102 = arith.constant 0 : index
    %291 = vector.load %arg4[%c0_101, %c0_102] : memref<256x768xbf16, #tpu.memory_space<vmem>>, vector<256x768xbf16>
    %cst_103 = arith.constant dense<0.000000e+00> : vector<1x768xf32>
    %292 = tpu.matmul %290, %291, %cst_103 {dimension_numbers = #tpu.dot_dimension_numbers<[1], [0], [0], [1], [0, 0, 1, 1], [], []>} : vector<1x256xbf16>, vector<256x768xbf16>, vector<1x768xf32> -> vector<1x768xf32>
    %c9 = arith.constant 9 : index
    %c0_104 = arith.constant 0 : index
    %293 = vector.load %arg9[%c9, %c0_104] : memref<16x768xf32, #tpu.memory_space<vmem>>, vector<1x768xf32>
    %294 = vector.extract_strided_slice %293 {offsets = [0, 0], sizes = [1, 256], strides = [1, 1]} : vector<1x768xf32> to vector<1x256xf32>
    %295 = vector.extract_strided_slice %292 {offsets = [0, 0], sizes = [1, 256], strides = [1, 1]} : vector<1x768xf32> to vector<1x256xf32>
    %296 = arith.addf %294, %295 : vector<1x256xf32>
    %297 = arith.negf %296 : vector<1x256xf32>
    %298 = math.exp %297 : vector<1x256xf32>
    %cst_105 = arith.constant 1.000000e+00 : f32
    %299 = vector.broadcast %cst_105 : f32 to vector<1x256xf32>
    %300 = arith.addf %299, %298 : vector<1x256xf32>
    %301 = arith.divf %299, %300 : vector<1x256xf32>
    %302 = vector.extract_strided_slice %293 {offsets = [0, 256], sizes = [1, 256], strides = [1, 1]} : vector<1x768xf32> to vector<1x256xf32>
    %303 = vector.extract_strided_slice %292 {offsets = [0, 256], sizes = [1, 256], strides = [1, 1]} : vector<1x768xf32> to vector<1x256xf32>
    %304 = arith.addf %302, %303 : vector<1x256xf32>
    %305 = arith.negf %304 : vector<1x256xf32>
    %306 = math.exp %305 : vector<1x256xf32>
    %cst_106 = arith.constant 1.000000e+00 : f32
    %307 = vector.broadcast %cst_106 : f32 to vector<1x256xf32>
    %308 = arith.addf %307, %306 : vector<1x256xf32>
    %309 = arith.divf %307, %308 : vector<1x256xf32>
    %310 = vector.extract_strided_slice %293 {offsets = [0, 512], sizes = [1, 256], strides = [1, 1]} : vector<1x768xf32> to vector<1x256xf32>
    %311 = vector.extract_strided_slice %292 {offsets = [0, 512], sizes = [1, 256], strides = [1, 1]} : vector<1x768xf32> to vector<1x256xf32>
    %c0_107 = arith.constant 0 : index
    %c0_108 = arith.constant 0 : index
    %312 = vector.load %arg6[%c0_107, %c0_108] : memref<1x256xf32, #tpu.memory_space<vmem>>, vector<1x256xf32>
    %313 = arith.addf %311, %312 : vector<1x256xf32>
    %314 = arith.mulf %301, %313 : vector<1x256xf32>
    %315 = arith.addf %310, %314 : vector<1x256xf32>
    %316 = math.tanh %315 : vector<1x256xf32>
    %317 = arith.subf %288, %316 : vector<1x256xf32>
    %318 = arith.mulf %309, %317 : vector<1x256xf32>
    %319 = arith.addf %316, %318 : vector<1x256xf32>
    %c9_109 = arith.constant 9 : index
    %c0_110 = arith.constant 0 : index
    %320 = vector.load %arg7[%c9_109, %c0_110] : memref<16x256xf32, #tpu.memory_space<vmem>>, vector<1x256xf32>
    tpu.vector_store %arg7[%c9_109, %c0_110], %319 {strides = array<i32>} : memref<16x256xf32, #tpu.memory_space<vmem>>, vector<1x256xf32>,
    %321 = arith.truncf %319 : vector<1x256xf32> to vector<1x256xbf16>
    %c0_111 = arith.constant 0 : index
    %c0_112 = arith.constant 0 : index
    %322 = vector.load %arg4[%c0_111, %c0_112] : memref<256x768xbf16, #tpu.memory_space<vmem>>, vector<256x768xbf16>
    %cst_113 = arith.constant dense<0.000000e+00> : vector<1x768xf32>
    %323 = tpu.matmul %321, %322, %cst_113 {dimension_numbers = #tpu.dot_dimension_numbers<[1], [0], [0], [1], [0, 0, 1, 1], [], []>} : vector<1x256xbf16>, vector<256x768xbf16>, vector<1x768xf32> -> vector<1x768xf32>
    %c10 = arith.constant 10 : index
    %c0_114 = arith.constant 0 : index
    %324 = vector.load %arg9[%c10, %c0_114] : memref<16x768xf32, #tpu.memory_space<vmem>>, vector<1x768xf32>
    %325 = vector.extract_strided_slice %324 {offsets = [0, 0], sizes = [1, 256], strides = [1, 1]} : vector<1x768xf32> to vector<1x256xf32>
    %326 = vector.extract_strided_slice %323 {offsets = [0, 0], sizes = [1, 256], strides = [1, 1]} : vector<1x768xf32> to vector<1x256xf32>
    %327 = arith.addf %325, %326 : vector<1x256xf32>
    %328 = arith.negf %327 : vector<1x256xf32>
    %329 = math.exp %328 : vector<1x256xf32>
    %cst_115 = arith.constant 1.000000e+00 : f32
    %330 = vector.broadcast %cst_115 : f32 to vector<1x256xf32>
    %331 = arith.addf %330, %329 : vector<1x256xf32>
    %332 = arith.divf %330, %331 : vector<1x256xf32>
    %333 = vector.extract_strided_slice %324 {offsets = [0, 256], sizes = [1, 256], strides = [1, 1]} : vector<1x768xf32> to vector<1x256xf32>
    %334 = vector.extract_strided_slice %323 {offsets = [0, 256], sizes = [1, 256], strides = [1, 1]} : vector<1x768xf32> to vector<1x256xf32>
    %335 = arith.addf %333, %334 : vector<1x256xf32>
    %336 = arith.negf %335 : vector<1x256xf32>
    %337 = math.exp %336 : vector<1x256xf32>
    %cst_116 = arith.constant 1.000000e+00 : f32
    %338 = vector.broadcast %cst_116 : f32 to vector<1x256xf32>
    %339 = arith.addf %338, %337 : vector<1x256xf32>
    %340 = arith.divf %338, %339 : vector<1x256xf32>
    %341 = vector.extract_strided_slice %324 {offsets = [0, 512], sizes = [1, 256], strides = [1, 1]} : vector<1x768xf32> to vector<1x256xf32>
    %342 = vector.extract_strided_slice %323 {offsets = [0, 512], sizes = [1, 256], strides = [1, 1]} : vector<1x768xf32> to vector<1x256xf32>
    %c0_117 = arith.constant 0 : index
    %c0_118 = arith.constant 0 : index
    %343 = vector.load %arg6[%c0_117, %c0_118] : memref<1x256xf32, #tpu.memory_space<vmem>>, vector<1x256xf32>
    %344 = arith.addf %342, %343 : vector<1x256xf32>
    %345 = arith.mulf %332, %344 : vector<1x256xf32>
    %346 = arith.addf %341, %345 : vector<1x256xf32>
    %347 = math.tanh %346 : vector<1x256xf32>
    %348 = arith.subf %319, %347 : vector<1x256xf32>
    %349 = arith.mulf %340, %348 : vector<1x256xf32>
    %350 = arith.addf %347, %349 : vector<1x256xf32>
    %c10_119 = arith.constant 10 : index
    %c0_120 = arith.constant 0 : index
    %351 = vector.load %arg7[%c10_119, %c0_120] : memref<16x256xf32, #tpu.memory_space<vmem>>, vector<1x256xf32>
    tpu.vector_store %arg7[%c10_119, %c0_120], %350 {strides = array<i32>} : memref<16x256xf32, #tpu.memory_space<vmem>>, vector<1x256xf32>,
    %352 = arith.truncf %350 : vector<1x256xf32> to vector<1x256xbf16>
    %c0_121 = arith.constant 0 : index
    %c0_122 = arith.constant 0 : index
    %353 = vector.load %arg4[%c0_121, %c0_122] : memref<256x768xbf16, #tpu.memory_space<vmem>>, vector<256x768xbf16>
    %cst_123 = arith.constant dense<0.000000e+00> : vector<1x768xf32>
    %354 = tpu.matmul %352, %353, %cst_123 {dimension_numbers = #tpu.dot_dimension_numbers<[1], [0], [0], [1], [0, 0, 1, 1], [], []>} : vector<1x256xbf16>, vector<256x768xbf16>, vector<1x768xf32> -> vector<1x768xf32>
    %c11 = arith.constant 11 : index
    %c0_124 = arith.constant 0 : index
    %355 = vector.load %arg9[%c11, %c0_124] : memref<16x768xf32, #tpu.memory_space<vmem>>, vector<1x768xf32>
    %356 = vector.extract_strided_slice %355 {offsets = [0, 0], sizes = [1, 256], strides = [1, 1]} : vector<1x768xf32> to vector<1x256xf32>
    %357 = vector.extract_strided_slice %354 {offsets = [0, 0], sizes = [1, 256], strides = [1, 1]} : vector<1x768xf32> to vector<1x256xf32>
    %358 = arith.addf %356, %357 : vector<1x256xf32>
    %359 = arith.negf %358 : vector<1x256xf32>
    %360 = math.exp %359 : vector<1x256xf32>
    %cst_125 = arith.constant 1.000000e+00 : f32
    %361 = vector.broadcast %cst_125 : f32 to vector<1x256xf32>
    %362 = arith.addf %361, %360 : vector<1x256xf32>
    %363 = arith.divf %361, %362 : vector<1x256xf32>
    %364 = vector.extract_strided_slice %355 {offsets = [0, 256], sizes = [1, 256], strides = [1, 1]} : vector<1x768xf32> to vector<1x256xf32>
    %365 = vector.extract_strided_slice %354 {offsets = [0, 256], sizes = [1, 256], strides = [1, 1]} : vector<1x768xf32> to vector<1x256xf32>
    %366 = arith.addf %364, %365 : vector<1x256xf32>
    %367 = arith.negf %366 : vector<1x256xf32>
    %368 = math.exp %367 : vector<1x256xf32>
    %cst_126 = arith.constant 1.000000e+00 : f32
    %369 = vector.broadcast %cst_126 : f32 to vector<1x256xf32>
    %370 = arith.addf %369, %368 : vector<1x256xf32>
    %371 = arith.divf %369, %370 : vector<1x256xf32>
    %372 = vector.extract_strided_slice %355 {offsets = [0, 512], sizes = [1, 256], strides = [1, 1]} : vector<1x768xf32> to vector<1x256xf32>
    %373 = vector.extract_strided_slice %354 {offsets = [0, 512], sizes = [1, 256], strides = [1, 1]} : vector<1x768xf32> to vector<1x256xf32>
    %c0_127 = arith.constant 0 : index
    %c0_128 = arith.constant 0 : index
    %374 = vector.load %arg6[%c0_127, %c0_128] : memref<1x256xf32, #tpu.memory_space<vmem>>, vector<1x256xf32>
    %375 = arith.addf %373, %374 : vector<1x256xf32>
    %376 = arith.mulf %363, %375 : vector<1x256xf32>
    %377 = arith.addf %372, %376 : vector<1x256xf32>
    %378 = math.tanh %377 : vector<1x256xf32>
    %379 = arith.subf %350, %378 : vector<1x256xf32>
    %380 = arith.mulf %371, %379 : vector<1x256xf32>
    %381 = arith.addf %378, %380 : vector<1x256xf32>
    %c11_129 = arith.constant 11 : index
    %c0_130 = arith.constant 0 : index
    %382 = vector.load %arg7[%c11_129, %c0_130] : memref<16x256xf32, #tpu.memory_space<vmem>>, vector<1x256xf32>
    tpu.vector_store %arg7[%c11_129, %c0_130], %381 {strides = array<i32>} : memref<16x256xf32, #tpu.memory_space<vmem>>, vector<1x256xf32>,
    %383 = arith.truncf %381 : vector<1x256xf32> to vector<1x256xbf16>
    %c0_131 = arith.constant 0 : index
    %c0_132 = arith.constant 0 : index
    %384 = vector.load %arg4[%c0_131, %c0_132] : memref<256x768xbf16, #tpu.memory_space<vmem>>, vector<256x768xbf16>
    %cst_133 = arith.constant dense<0.000000e+00> : vector<1x768xf32>
    %385 = tpu.matmul %383, %384, %cst_133 {dimension_numbers = #tpu.dot_dimension_numbers<[1], [0], [0], [1], [0, 0, 1, 1], [], []>} : vector<1x256xbf16>, vector<256x768xbf16>, vector<1x768xf32> -> vector<1x768xf32>
    %c12 = arith.constant 12 : index
    %c0_134 = arith.constant 0 : index
    %386 = vector.load %arg9[%c12, %c0_134] : memref<16x768xf32, #tpu.memory_space<vmem>>, vector<1x768xf32>
    %387 = vector.extract_strided_slice %386 {offsets = [0, 0], sizes = [1, 256], strides = [1, 1]} : vector<1x768xf32> to vector<1x256xf32>
    %388 = vector.extract_strided_slice %385 {offsets = [0, 0], sizes = [1, 256], strides = [1, 1]} : vector<1x768xf32> to vector<1x256xf32>
    %389 = arith.addf %387, %388 : vector<1x256xf32>
    %390 = arith.negf %389 : vector<1x256xf32>
    %391 = math.exp %390 : vector<1x256xf32>
    %cst_135 = arith.constant 1.000000e+00 : f32
    %392 = vector.broadcast %cst_135 : f32 to vector<1x256xf32>
    %393 = arith.addf %392, %391 : vector<1x256xf32>
    %394 = arith.divf %392, %393 : vector<1x256xf32>
    %395 = vector.extract_strided_slice %386 {offsets = [0, 256], sizes = [1, 256], strides = [1, 1]} : vector<1x768xf32> to vector<1x256xf32>
    %396 = vector.extract_strided_slice %385 {offsets = [0, 256], sizes = [1, 256], strides = [1, 1]} : vector<1x768xf32> to vector<1x256xf32>
    %397 = arith.addf %395, %396 : vector<1x256xf32>
    %398 = arith.negf %397 : vector<1x256xf32>
    %399 = math.exp %398 : vector<1x256xf32>
    %cst_136 = arith.constant 1.000000e+00 : f32
    %400 = vector.broadcast %cst_136 : f32 to vector<1x256xf32>
    %401 = arith.addf %400, %399 : vector<1x256xf32>
    %402 = arith.divf %400, %401 : vector<1x256xf32>
    %403 = vector.extract_strided_slice %386 {offsets = [0, 512], sizes = [1, 256], strides = [1, 1]} : vector<1x768xf32> to vector<1x256xf32>
    %404 = vector.extract_strided_slice %385 {offsets = [0, 512], sizes = [1, 256], strides = [1, 1]} : vector<1x768xf32> to vector<1x256xf32>
    %c0_137 = arith.constant 0 : index
    %c0_138 = arith.constant 0 : index
    %405 = vector.load %arg6[%c0_137, %c0_138] : memref<1x256xf32, #tpu.memory_space<vmem>>, vector<1x256xf32>
    %406 = arith.addf %404, %405 : vector<1x256xf32>
    %407 = arith.mulf %394, %406 : vector<1x256xf32>
    %408 = arith.addf %403, %407 : vector<1x256xf32>
    %409 = math.tanh %408 : vector<1x256xf32>
    %410 = arith.subf %381, %409 : vector<1x256xf32>
    %411 = arith.mulf %402, %410 : vector<1x256xf32>
    %412 = arith.addf %409, %411 : vector<1x256xf32>
    %c12_139 = arith.constant 12 : index
    %c0_140 = arith.constant 0 : index
    %413 = vector.load %arg7[%c12_139, %c0_140] : memref<16x256xf32, #tpu.memory_space<vmem>>, vector<1x256xf32>
    tpu.vector_store %arg7[%c12_139, %c0_140], %412 {strides = array<i32>} : memref<16x256xf32, #tpu.memory_space<vmem>>, vector<1x256xf32>,
    %414 = arith.truncf %412 : vector<1x256xf32> to vector<1x256xbf16>
    %c0_141 = arith.constant 0 : index
    %c0_142 = arith.constant 0 : index
    %415 = vector.load %arg4[%c0_141, %c0_142] : memref<256x768xbf16, #tpu.memory_space<vmem>>, vector<256x768xbf16>
    %cst_143 = arith.constant dense<0.000000e+00> : vector<1x768xf32>
    %416 = tpu.matmul %414, %415, %cst_143 {dimension_numbers = #tpu.dot_dimension_numbers<[1], [0], [0], [1], [0, 0, 1, 1], [], []>} : vector<1x256xbf16>, vector<256x768xbf16>, vector<1x768xf32> -> vector<1x768xf32>
    %c13 = arith.constant 13 : index
    %c0_144 = arith.constant 0 : index
    %417 = vector.load %arg9[%c13, %c0_144] : memref<16x768xf32, #tpu.memory_space<vmem>>, vector<1x768xf32>
    %418 = vector.extract_strided_slice %417 {offsets = [0, 0], sizes = [1, 256], strides = [1, 1]} : vector<1x768xf32> to vector<1x256xf32>
    %419 = vector.extract_strided_slice %416 {offsets = [0, 0], sizes = [1, 256], strides = [1, 1]} : vector<1x768xf32> to vector<1x256xf32>
    %420 = arith.addf %418, %419 : vector<1x256xf32>
    %421 = arith.negf %420 : vector<1x256xf32>
    %422 = math.exp %421 : vector<1x256xf32>
    %cst_145 = arith.constant 1.000000e+00 : f32
    %423 = vector.broadcast %cst_145 : f32 to vector<1x256xf32>
    %424 = arith.addf %423, %422 : vector<1x256xf32>
    %425 = arith.divf %423, %424 : vector<1x256xf32>
    %426 = vector.extract_strided_slice %417 {offsets = [0, 256], sizes = [1, 256], strides = [1, 1]} : vector<1x768xf32> to vector<1x256xf32>
    %427 = vector.extract_strided_slice %416 {offsets = [0, 256], sizes = [1, 256], strides = [1, 1]} : vector<1x768xf32> to vector<1x256xf32>
    %428 = arith.addf %426, %427 : vector<1x256xf32>
    %429 = arith.negf %428 : vector<1x256xf32>
    %430 = math.exp %429 : vector<1x256xf32>
    %cst_146 = arith.constant 1.000000e+00 : f32
    %431 = vector.broadcast %cst_146 : f32 to vector<1x256xf32>
    %432 = arith.addf %431, %430 : vector<1x256xf32>
    %433 = arith.divf %431, %432 : vector<1x256xf32>
    %434 = vector.extract_strided_slice %417 {offsets = [0, 512], sizes = [1, 256], strides = [1, 1]} : vector<1x768xf32> to vector<1x256xf32>
    %435 = vector.extract_strided_slice %416 {offsets = [0, 512], sizes = [1, 256], strides = [1, 1]} : vector<1x768xf32> to vector<1x256xf32>
    %c0_147 = arith.constant 0 : index
    %c0_148 = arith.constant 0 : index
    %436 = vector.load %arg6[%c0_147, %c0_148] : memref<1x256xf32, #tpu.memory_space<vmem>>, vector<1x256xf32>
    %437 = arith.addf %435, %436 : vector<1x256xf32>
    %438 = arith.mulf %425, %437 : vector<1x256xf32>
    %439 = arith.addf %434, %438 : vector<1x256xf32>
    %440 = math.tanh %439 : vector<1x256xf32>
    %441 = arith.subf %412, %440 : vector<1x256xf32>
    %442 = arith.mulf %433, %441 : vector<1x256xf32>
    %443 = arith.addf %440, %442 : vector<1x256xf32>
    %c13_149 = arith.constant 13 : index
    %c0_150 = arith.constant 0 : index
    %444 = vector.load %arg7[%c13_149, %c0_150] : memref<16x256xf32, #tpu.memory_space<vmem>>, vector<1x256xf32>
    tpu.vector_store %arg7[%c13_149, %c0_150], %443 {strides = array<i32>} : memref<16x256xf32, #tpu.memory_space<vmem>>, vector<1x256xf32>,
    %445 = arith.truncf %443 : vector<1x256xf32> to vector<1x256xbf16>
    %c0_151 = arith.constant 0 : index
    %c0_152 = arith.constant 0 : index
    %446 = vector.load %arg4[%c0_151, %c0_152] : memref<256x768xbf16, #tpu.memory_space<vmem>>, vector<256x768xbf16>
    %cst_153 = arith.constant dense<0.000000e+00> : vector<1x768xf32>
    %447 = tpu.matmul %445, %446, %cst_153 {dimension_numbers = #tpu.dot_dimension_numbers<[1], [0], [0], [1], [0, 0, 1, 1], [], []>} : vector<1x256xbf16>, vector<256x768xbf16>, vector<1x768xf32> -> vector<1x768xf32>
    %c14 = arith.constant 14 : index
    %c0_154 = arith.constant 0 : index
    %448 = vector.load %arg9[%c14, %c0_154] : memref<16x768xf32, #tpu.memory_space<vmem>>, vector<1x768xf32>
    %449 = vector.extract_strided_slice %448 {offsets = [0, 0], sizes = [1, 256], strides = [1, 1]} : vector<1x768xf32> to vector<1x256xf32>
    %450 = vector.extract_strided_slice %447 {offsets = [0, 0], sizes = [1, 256], strides = [1, 1]} : vector<1x768xf32> to vector<1x256xf32>
    %451 = arith.addf %449, %450 : vector<1x256xf32>
    %452 = arith.negf %451 : vector<1x256xf32>
    %453 = math.exp %452 : vector<1x256xf32>
    %cst_155 = arith.constant 1.000000e+00 : f32
    %454 = vector.broadcast %cst_155 : f32 to vector<1x256xf32>
    %455 = arith.addf %454, %453 : vector<1x256xf32>
    %456 = arith.divf %454, %455 : vector<1x256xf32>
    %457 = vector.extract_strided_slice %448 {offsets = [0, 256], sizes = [1, 256], strides = [1, 1]} : vector<1x768xf32> to vector<1x256xf32>
    %458 = vector.extract_strided_slice %447 {offsets = [0, 256], sizes = [1, 256], strides = [1, 1]} : vector<1x768xf32> to vector<1x256xf32>
    %459 = arith.addf %457, %458 : vector<1x256xf32>
    %460 = arith.negf %459 : vector<1x256xf32>
    %461 = math.exp %460 : vector<1x256xf32>
    %cst_156 = arith.constant 1.000000e+00 : f32
    %462 = vector.broadcast %cst_156 : f32 to vector<1x256xf32>
    %463 = arith.addf %462, %461 : vector<1x256xf32>
    %464 = arith.divf %462, %463 : vector<1x256xf32>
    %465 = vector.extract_strided_slice %448 {offsets = [0, 512], sizes = [1, 256], strides = [1, 1]} : vector<1x768xf32> to vector<1x256xf32>
    %466 = vector.extract_strided_slice %447 {offsets = [0, 512], sizes = [1, 256], strides = [1, 1]} : vector<1x768xf32> to vector<1x256xf32>
    %c0_157 = arith.constant 0 : index
    %c0_158 = arith.constant 0 : index
    %467 = vector.load %arg6[%c0_157, %c0_158] : memref<1x256xf32, #tpu.memory_space<vmem>>, vector<1x256xf32>
    %468 = arith.addf %466, %467 : vector<1x256xf32>
    %469 = arith.mulf %456, %468 : vector<1x256xf32>
    %470 = arith.addf %465, %469 : vector<1x256xf32>
    %471 = math.tanh %470 : vector<1x256xf32>
    %472 = arith.subf %443, %471 : vector<1x256xf32>
    %473 = arith.mulf %464, %472 : vector<1x256xf32>
    %474 = arith.addf %471, %473 : vector<1x256xf32>
    %c14_159 = arith.constant 14 : index
    %c0_160 = arith.constant 0 : index
    %475 = vector.load %arg7[%c14_159, %c0_160] : memref<16x256xf32, #tpu.memory_space<vmem>>, vector<1x256xf32>
    tpu.vector_store %arg7[%c14_159, %c0_160], %474 {strides = array<i32>} : memref<16x256xf32, #tpu.memory_space<vmem>>, vector<1x256xf32>,
    %476 = arith.truncf %474 : vector<1x256xf32> to vector<1x256xbf16>
    %c0_161 = arith.constant 0 : index
    %c0_162 = arith.constant 0 : index
    %477 = vector.load %arg4[%c0_161, %c0_162] : memref<256x768xbf16, #tpu.memory_space<vmem>>, vector<256x768xbf16>
    %cst_163 = arith.constant dense<0.000000e+00> : vector<1x768xf32>
    %478 = tpu.matmul %476, %477, %cst_163 {dimension_numbers = #tpu.dot_dimension_numbers<[1], [0], [0], [1], [0, 0, 1, 1], [], []>} : vector<1x256xbf16>, vector<256x768xbf16>, vector<1x768xf32> -> vector<1x768xf32>
    %c15 = arith.constant 15 : index
    %c0_164 = arith.constant 0 : index
    %479 = vector.load %arg9[%c15, %c0_164] : memref<16x768xf32, #tpu.memory_space<vmem>>, vector<1x768xf32>
    %480 = vector.extract_strided_slice %479 {offsets = [0, 0], sizes = [1, 256], strides = [1, 1]} : vector<1x768xf32> to vector<1x256xf32>
    %481 = vector.extract_strided_slice %478 {offsets = [0, 0], sizes = [1, 256], strides = [1, 1]} : vector<1x768xf32> to vector<1x256xf32>
    %482 = arith.addf %480, %481 : vector<1x256xf32>
    %483 = arith.negf %482 : vector<1x256xf32>
    %484 = math.exp %483 : vector<1x256xf32>
    %cst_165 = arith.constant 1.000000e+00 : f32
    %485 = vector.broadcast %cst_165 : f32 to vector<1x256xf32>
    %486 = arith.addf %485, %484 : vector<1x256xf32>
    %487 = arith.divf %485, %486 : vector<1x256xf32>
    %488 = vector.extract_strided_slice %479 {offsets = [0, 256], sizes = [1, 256], strides = [1, 1]} : vector<1x768xf32> to vector<1x256xf32>
    %489 = vector.extract_strided_slice %478 {offsets = [0, 256], sizes = [1, 256], strides = [1, 1]} : vector<1x768xf32> to vector<1x256xf32>
    %490 = arith.addf %488, %489 : vector<1x256xf32>
    %491 = arith.negf %490 : vector<1x256xf32>
    %492 = math.exp %491 : vector<1x256xf32>
    %cst_166 = arith.constant 1.000000e+00 : f32
    %493 = vector.broadcast %cst_166 : f32 to vector<1x256xf32>
    %494 = arith.addf %493, %492 : vector<1x256xf32>
    %495 = arith.divf %493, %494 : vector<1x256xf32>
    %496 = vector.extract_strided_slice %479 {offsets = [0, 512], sizes = [1, 256], strides = [1, 1]} : vector<1x768xf32> to vector<1x256xf32>
    %497 = vector.extract_strided_slice %478 {offsets = [0, 512], sizes = [1, 256], strides = [1, 1]} : vector<1x768xf32> to vector<1x256xf32>
    %c0_167 = arith.constant 0 : index
    %c0_168 = arith.constant 0 : index
    %498 = vector.load %arg6[%c0_167, %c0_168] : memref<1x256xf32, #tpu.memory_space<vmem>>, vector<1x256xf32>
    %499 = arith.addf %497, %498 : vector<1x256xf32>
    %500 = arith.mulf %487, %499 : vector<1x256xf32>
    %501 = arith.addf %496, %500 : vector<1x256xf32>
    %502 = math.tanh %501 : vector<1x256xf32>
    %503 = arith.subf %474, %502 : vector<1x256xf32>
    %504 = arith.mulf %495, %503 : vector<1x256xf32>
    %505 = arith.addf %502, %504 : vector<1x256xf32>
    %c15_169 = arith.constant 15 : index
    %c0_170 = arith.constant 0 : index
    %506 = vector.load %arg7[%c15_169, %c0_170] : memref<16x256xf32, #tpu.memory_space<vmem>>, vector<1x256xf32>
    tpu.vector_store %arg7[%c15_169, %c0_170], %505 {strides = array<i32>} : memref<16x256xf32, #tpu.memory_space<vmem>>, vector<1x256xf32>,
    %c0_171 = arith.constant 0 : index
    %c0_172 = arith.constant 0 : index
    %507 = vector.load %arg8[%c0_171, %c0_172] : memref<1x256xf32, #tpu.memory_space<vmem>>, vector<1x256xf32>
    tpu.vector_store %arg8[%c0_171, %c0_172], %505 {strides = array<i32>} : memref<1x256xf32, #tpu.memory_space<vmem>>, vector<1x256xf32>,
    return
  }
  func.func @transform_0(%arg0: i32) -> (i32, i32) {
    %c0_i32 = arith.constant 0 : i32
    %c0_i32_0 = arith.constant 0 : i32
    return %arg0, %c0_i32 : i32, i32
  }
  func.func @transform_1(%arg0: i32) -> (i32, i32) {
    %c0_i32 = arith.constant 0 : i32
    %c0_i32_0 = arith.constant 0 : i32
    %c0_i32_1 = arith.constant 0 : i32
    return %c0_i32, %c0_i32_0 : i32, i32
  }
  func.func @transform_2(%arg0: i32) -> (i32, i32) {
    %c0_i32 = arith.constant 0 : i32
    %c0_i32_0 = arith.constant 0 : i32
    %c0_i32_1 = arith.constant 0 : i32
    return %c0_i32, %c0_i32_0 : i32, i32
  }
  func.func @transform_3(%arg0: i32) -> (i32, i32) {
    %c0_i32 = arith.constant 0 : i32
    %c0_i32_0 = arith.constant 0 : i32
    %c0_i32_1 = arith.constant 0 : i32
    return %c0_i32, %c0_i32_0 : i32, i32
  }
  func.func @transform_4(%arg0: i32) -> (i32, i32) {
    %c0_i32 = arith.constant 0 : i32
    %c0_i32_0 = arith.constant 0 : i32
    %c0_i32_1 = arith.constant 0 : i32
    return %c0_i32, %c0_i32_0 : i32, i32
  }
  func.func @transform_5(%arg0: i32) -> (i32, i32) {
    %c0_i32 = arith.constant 0 : i32
    %c0_i32_0 = arith.constant 0 : i32
    %c0_i32_1 = arith.constant 0 : i32
    return %c0_i32, %c0_i32_0 : i32, i32
  }
  func.func @transform_6(%arg0: i32) -> (i32, i32) {
    %c0_i32 = arith.constant 0 : i32
    %c0_i32_0 = arith.constant 0 : i32
    return %arg0, %c0_i32 : i32, i32
  }
}

</mosaic_0001>

<llo_original>
// kernel: encoder_gru_forward.1
$region0: #{encoder_gru_forward.1}
  #allocation0 [shape = 'u32[]', space=smem, size = 0x4, offset = 0x4, fixed_abs, tag = 'smem constant byte address 0x4 - core index']
  #allocation1 [shape = 'u32[144,128]{1,0:T(1,128)}', space=vmem, size = 0x12000, scoped, tag = 'internal scratch']
  #allocation2 [shape = 'f32[1,256]{1,0:T(1,128)}', space=vmem, size = 0x400, scoped, tag = 'scratch operand']
  #allocation3 [shape = 'f32[16,768]{1,0:T(8,128)}', space=vmem, size = 0xc000, scoped, tag = 'scratch operand']
  %s0 = inlined_call_operand.vmem [shape: bf16[16,256], index: 0, kind: input, shape index: {}]
  %s1 = inlined_call_operand.vmem [shape: f32[1,256], index: 1, kind: input, shape index: {}]
  %s2 = inlined_call_operand.hbm [shape: bf16[256,768], index: 2, kind: input, shape index: {}]
  %s3 = inlined_call_operand.hbm [shape: bf16[256,768], index: 3, kind: input, shape index: {}]
  %s4 = inlined_call_operand.vmem [shape: f32[1,768], index: 4, kind: input, shape index: {}]
  %s5 = inlined_call_operand.vmem [shape: f32[1,256], index: 5, kind: input, shape index: {}]
  %s6 = inlined_call_operand.hbm [shape: f32[16,256], index: 6, kind: output, shape index: {}]
  %s7 = sld [smem:[#allocation0]]
  $region46: #{encoder_gru_forward.1} parent=0
    _
  %s9 = ssub.s32 1, %s7
  %s10 = scalar_select 0, %s9, %s7
  $region1: #{encoder_gru_forward.1} parent=0
    #allocation4 [shape = 'u8[393216]{0}', space=vmem, size = 0x60000, scoped, tag = 'input window, operand 2, single buffered']
    #allocation5 [shape = 's32[1]{0}', space=sflag, size = 0x4, scoped, tag = 'scoped memory for encoder_gru_forward.1']
    #allocation6 [shape = 's32[1]{0}', space=sflag, size = 0x4, scoped, tag = 'scoped memory for encoder_gru_forward.1']
    #allocation7 [shape = 'u8[393216]{0}', space=vmem, size = 0x60000, scoped, tag = 'input window, operand 3, single buffered']
    #allocation8 [shape = 's32[1]{0}', space=sflag, size = 0x4, scoped, tag = 'scoped memory for encoder_gru_forward.1']
    #allocation9 [shape = 'u8[16384]{0}', space=vmem, size = 0x4000, scoped, tag = 'output window, operand 0, single buffered']
    %11 = vsyncpa [#allocation5], 0
    %12 = vsyncpa [#allocation8], 0
    %13 = vsyncpa [#allocation6], 0
    // Predicated region
    $region2: #{encoder_gru_forward.1} parent=1 // pred_check
      _
    $region3: #{encoder_gru_forward.1} parent=1 // pred_check_branch
      %15 = sbr.rel (0) target = $region5
    $region4: #{encoder_gru_forward.1} parent=1 // pred_region
      _
    $region5: #{encoder_gru_forward.1} parent=1 // pred_fallthru
      _
    // Predicated region
    $region6: #{encoder_gru_forward.1} parent=1 // pred_check
      _
    $region7: #{encoder_gru_forward.1} parent=1 // pred_check_branch
      %17 = sbr.rel (0) target = $region9
    $region8: #{encoder_gru_forward.1} parent=1 // pred_region
      _
    $region9: #{encoder_gru_forward.1} parent=1 // pred_fallthru
      _
    // Predicated region
    $region10: #{encoder_gru_forward.1} parent=1 // pred_check
      _
    $region11: #{encoder_gru_forward.1} parent=1 // pred_check_branch
      %19 = sbr.rel (0) target = $region13
    $region12: #{encoder_gru_forward.1} parent=1 // pred_region
      %s21 = ssub.s32 12288, 12288
      %22 = vsyncadd [#allocation5], %s21
      %s23 = sshll.u32 [#allocation4], 4
      %s24 = int_to_ptr.vmem [resolvable:$true] %s23
      %29 = dma.hbm_to_vmem [thread:$0]  %s2, 12288, %s24, [#allocation5], 384, 384, 24
    $region13: #{encoder_gru_forward.1} parent=1 // pred_fallthru
      _
    // Predicated region
    $region14: #{encoder_gru_forward.1} parent=1 // pred_check
      _
    $region15: #{encoder_gru_forward.1} parent=1 // pred_check_branch
      %31 = sbr.rel (0) target = $region17
    $region16: #{encoder_gru_forward.1} parent=1 // pred_region
      %s33 = ssub.s32 12288, 12288
      %34 = vsyncadd [#allocation8], %s33
      %s35 = sshll.u32 [#allocation7], 4
      %s36 = int_to_ptr.vmem [resolvable:$true] %s35
      %41 = dma.hbm_to_vmem [thread:$0]  %s3, 12288, %s36, [#allocation8], 384, 384, 24
    $region17: #{encoder_gru_forward.1} parent=1 // pred_fallthru
      _
    // Predicated region
    $region18: #{encoder_gru_forward.1} parent=1 // pred_check
      _
    $region19: #{encoder_gru_forward.1} parent=1 // pred_check_branch
      %43 = sbr.rel (0) target = $region21
    $region20: #{encoder_gru_forward.1} parent=1 // pred_region
      _
    $region21: #{encoder_gru_forward.1} parent=1 // pred_fallthru
      _
    // Predicated region
    $region22: #{encoder_gru_forward.1} parent=1 // pred_check
      _
    $region23: #{encoder_gru_forward.1} parent=1 // pred_check_branch
      %45 = sbr.rel (0) target = $region25
    $region24: #{encoder_gru_forward.1} parent=1 // pred_region
      _
    $region25: #{encoder_gru_forward.1} parent=1 // pred_fallthru
      _
    // Predicated region
    $region26: #{encoder_gru_forward.1} parent=1 // pred_check
      _
    $region27: #{encoder_gru_forward.1} parent=1 // pred_check_branch
      %47 = sbr.rel (0) target = $region29
    $region28: #{encoder_gru_forward.1} parent=1 // pred_region
      %48 = dma.done [#allocation5], 12288
    $region29: #{encoder_gru_forward.1} parent=1 // pred_fallthru
      _
    // Predicated region
    $region30: #{encoder_gru_forward.1} parent=1 // pred_check
      _
    $region31: #{encoder_gru_forward.1} parent=1 // pred_check_branch
      %50 = sbr.rel (0) target = $region33
    $region32: #{encoder_gru_forward.1} parent=1 // pred_region
      %51 = dma.done [#allocation8], 12288
    $region33: #{encoder_gru_forward.1} parent=1 // pred_fallthru
      _
    %p52 = scmp.eq.s32.totalorder 0, 0
    // Predicated region
    $region34: #{encoder_gru_forward.1} parent=1 // pred_check
      %p53 = pneg %p52
    $region35: #{encoder_gru_forward.1} parent=1 // pred_check_branch
      %55 = sbr.rel (%p53) target = $region37
    $region36: #{encoder_gru_forward.1} parent=1 // pred_region
      %v56 = vld [vmem:[%s1] sm:$0x3]
      %v57 = vlaneseq
      %vm58 = vcmp.ge.s32.totalorder %v57, 0
      %vm59 = vcmp.lt.s32.totalorder %v57, 256
      %vm60 = vmand %vm58, %vm59
      %61 = vst.msk [vmem:[#allocation2] sm:$0x3] %vm60, %v56
    $region37: #{encoder_gru_forward.1} parent=1 // pred_fallthru
      _
    %v62 = vld [vmem:[%s0] sm:$0xff]
    %v63 = vld [vmem:[%s0 + $0x8] sm:$0xff]
    %v64 = vld [vmem:[#allocation4] sm:$0xff]
    %v65 = vld [vmem:[#allocation4 + $0x8] sm:$0xff]
    %v66 = vld [vmem:[#allocation4 + $0x10] sm:$0xff]
    %v67 = vld [vmem:[#allocation4 + $0x18] sm:$0xff]
    %v68 = vld [vmem:[#allocation4 + $0x20] sm:$0xff]
    %v69 = vld [vmem:[#allocation4 + $0x28] sm:$0xff]
    %v70 = vld [vmem:[#allocation4 + $0x30] sm:$0xff]
    %v71 = vld [vmem:[#allocation4 + $0x38] sm:$0xff]
    %v72 = vld [vmem:[#allocation4 + $0x40] sm:$0xff]
    %v73 = vld [vmem:[#allocation4 + $0x48] sm:$0xff]
    %v74 = vld [vmem:[#allocation4 + $0x50] sm:$0xff]
    %v75 = vld [vmem:[#allocation4 + $0x58] sm:$0xff]
    %v76 = vld [vmem:[#allocation4 + $0x60] sm:$0xff]
    %v77 = vld [vmem:[#allocation4 + $0x68] sm:$0xff]
    %v78 = vld [vmem:[#allocation4 + $0x70] sm:$0xff]
    %v79 = vld [vmem:[#allocation4 + $0x78] sm:$0xff]
    %v80 = vld [vmem:[#allocation4 + $0x80] sm:$0xff]
    %v81 = vld [vmem:[#allocation4 + $0x88] sm:$0xff]
    %v82 = vld [vmem:[#allocation4 + $0x90] sm:$0xff]
    %v83 = vld [vmem:[#allocation4 + $0x98] sm:$0xff]
    %v84 = vld [vmem:[#allocation4 + $0xa0] sm:$0xff]
    %v85 = vld [vmem:[#allocation4 + $0xa8] sm:$0xff]
    %v86 = vld [vmem:[#allocation4 + $0xb0] sm:$0xff]
    %v87 = vld [vmem:[#allocation4 + $0xb8] sm:$0xff]
    %v88 = vld [vmem:[#allocation4 + $0xc0] sm:$0xff]
    %v89 = vld [vmem:[#allocation4 + $0xc8] sm:$0xff]
    %v90 = vld [vmem:[#allocation4 + $0xd0] sm:$0xff]
    %v91 = vld [vmem:[#allocation4 + $0xd8] sm:$0xff]
    %v92 = vld [vmem:[#allocation4 + $0xe0] sm:$0xff]
    %v93 = vld [vmem:[#allocation4 + $0xe8] sm:$0xff]
    %v94 = vld [vmem:[#allocation4 + $0xf0] sm:$0xff]
    %v95 = vld [vmem:[#allocation4 + $0xf8] sm:$0xff]
    %v96 = vld [vmem:[#allocation4 + $0x100] sm:$0xff]
    %v97 = vld [vmem:[#allocation4 + $0x108] sm:$0xff]
    %v98 = vld [vmem:[#allocation4 + $0x110] sm:$0xff]
    %v99 = vld [vmem:[#allocation4 + $0x118] sm:$0xff]
    %v100 = vld [vmem:[#allocation4 + $0x120] sm:$0xff]
    %v101 = vld [vmem:[#allocation4 + $0x128] sm:$0xff]
    %v102 = vld [vmem:[#allocation4 + $0x130] sm:$0xff]
    %v103 = vld [vmem:[#allocation4 + $0x138] sm:$0xff]
    %v104 = vld [vmem:[#allocation4 + $0x140] sm:$0xff]
    %v105 = vld [vmem:[#allocation4 + $0x148] sm:$0xff]
    %v106 = vld [vmem:[#allocation4 + $0x150] sm:$0xff]
    %v107 = vld [vmem:[#allocation4 + $0x158] sm:$0xff]
    %v108 = vld [vmem:[#allocation4 + $0x160] sm:$0xff]
    %v109 = vld [vmem:[#allocation4 + $0x168] sm:$0xff]
    %v110 = vld [vmem:[#allocation4 + $0x170] sm:$0xff]
    %v111 = vld [vmem:[#allocation4 + $0x178] sm:$0xff]
    %v112 = vld [vmem:[#allocation4 + $0x180] sm:$0xff]
    %v113 = vld [vmem:[#allocation4 + $0x188] sm:$0xff]
    %v114 = vld [vmem:[#allocation4 + $0x190] sm:$0xff]
    %v115 = vld [vmem:[#allocation4 + $0x198] sm:$0xff]
    %v116 = vld [vmem:[#allocation4 + $0x1a0] sm:$0xff]
    %v117 = vld [vmem:[#allocation4 + $0x1a8] sm:$0xff]
    %v118 = vld [vmem:[#allocation4 + $0x1b0] sm:$0xff]
    %v119 = vld [vmem:[#allocation4 + $0x1b8] sm:$0xff]
    %v120 = vld [vmem:[#allocation4 + $0x1c0] sm:$0xff]
    %v121 = vld [vmem:[#allocation4 + $0x1c8] sm:$0xff]
    %v122 = vld [vmem:[#allocation4 + $0x1d0] sm:$0xff]
    %v123 = vld [vmem:[#allocation4 + $0x1d8] sm:$0xff]
    %v124 = vld [vmem:[#allocation4 + $0x1e0] sm:$0xff]
    %v125 = vld [vmem:[#allocation4 + $0x1e8] sm:$0xff]
    %v126 = vld [vmem:[#allocation4 + $0x1f0] sm:$0xff]
    %v127 = vld [vmem:[#allocation4 + $0x1f8] sm:$0xff]
    %v128 = vld [vmem:[#allocation4 + $0x200] sm:$0xff]
    %v129 = vld [vmem:[#allocation4 + $0x208] sm:$0xff]
    %v130 = vld [vmem:[#allocation4 + $0x210] sm:$0xff]
    %v131 = vld [vmem:[#allocation4 + $0x218] sm:$0xff]
    %v132 = vld [vmem:[#allocation4 + $0x220] sm:$0xff]
    %v133 = vld [vmem:[#allocation4 + $0x228] sm:$0xff]
    %v134 = vld [vmem:[#allocation4 + $0x230] sm:$0xff]
    %v135 = vld [vmem:[#allocation4 + $0x238] sm:$0xff]
    %v136 = vld [vmem:[#allocation4 + $0x240] sm:$0xff]
    %v137 = vld [vmem:[#allocation4 + $0x248] sm:$0xff]
    %v138 = vld [vmem:[#allocation4 + $0x250] sm:$0xff]
    %v139 = vld [vmem:[#allocation4 + $0x258] sm:$0xff]
    %v140 = vld [vmem:[#allocation4 + $0x260] sm:$0xff]
    %v141 = vld [vmem:[#allocation4 + $0x268] sm:$0xff]
    %v142 = vld [vmem:[#allocation4 + $0x270] sm:$0xff]
    %v143 = vld [vmem:[#allocation4 + $0x278] sm:$0xff]
    %v144 = vld [vmem:[#allocation4 + $0x280] sm:$0xff]
    %v145 = vld [vmem:[#allocation4 + $0x288] sm:$0xff]
    %v146 = vld [vmem:[#allocation4 + $0x290] sm:$0xff]
    %v147 = vld [vmem:[#allocation4 + $0x298] sm:$0xff]
    %v148 = vld [vmem:[#allocation4 + $0x2a0] sm:$0xff]
    %v149 = vld [vmem:[#allocation4 + $0x2a8] sm:$0xff]
    %v150 = vld [vmem:[#allocation4 + $0x2b0] sm:$0xff]
    %v151 = vld [vmem:[#allocation4 + $0x2b8] sm:$0xff]
    %v152 = vld [vmem:[#allocation4 + $0x2c0] sm:$0xff]
    %v153 = vld [vmem:[#allocation4 + $0x2c8] sm:$0xff]
    %v154 = vld [vmem:[#allocation4 + $0x2d0] sm:$0xff]
    %v155 = vld [vmem:[#allocation4 + $0x2d8] sm:$0xff]
    %v156 = vld [vmem:[#allocation4 + $0x2e0] sm:$0xff]
    %v157 = vld [vmem:[#allocation4 + $0x2e8] sm:$0xff]
    %v158 = vld [vmem:[#allocation4 + $0x2f0] sm:$0xff]
    %v159 = vld [vmem:[#allocation4 + $0x2f8] sm:$0xff]
    %v160 = vld [vmem:[%s4] sm:$0x3f]
    %v162 = vlaneseq
    %v163 = vshrl.u32 %v162, 7
    %v164 = vsub.s32 0, %v163
    %v165 = vrot.slane %v160, %v164
    %v166 = vlaneseq
    %v167 = vshrl.u32 %v166, 7
    %v168 = vsub.s32 1, %v167
    %v169 = vrot.slane %v160, %v168
    %v170 = vlaneseq
    %v171 = vshrl.u32 %v170, 7
    %v172 = vsub.s32 2, %v171
    %v173 = vrot.slane %v160, %v172
    %v174 = vlaneseq
    %v175 = vshrl.u32 %v174, 7
    %v176 = vsub.s32 3, %v175
    %v177 = vrot.slane %v160, %v176
    %v178 = vlaneseq
    %v179 = vshrl.u32 %v178, 7
    %v180 = vsub.s32 4, %v179
    %v181 = vrot.slane %v160, %v180
    %v182 = vlaneseq
    %v183 = vshrl.u32 %v182, 7
    %v184 = vsub.s32 5, %v183
    %v185 = vrot.slane %v160, %v184
    %v194 = vunpack.c.l.b16 %v62
    %v195 = vunpack.c.h.b16 %v62
    %v196 = vunpack.c.l.b16 %v63
    %v197 = vunpack.c.h.b16 %v63
    %v198 = vpack.c.b16 %v196, %v194
    %v199 = vpack.c.b16 %v197, %v195
    %v298 = vunpack.c.l.b16 %v64
    %v299 = vunpack.c.h.b16 %v64
    %v300 = vunpack.c.l.b16 %v65
    %v301 = vunpack.c.h.b16 %v65
    %v302 = vunpack.c.l.b16 %v66
    %v303 = vunpack.c.h.b16 %v66
    %v304 = vunpack.c.l.b16 %v67
    %v305 = vunpack.c.h.b16 %v67
    %v306 = vunpack.c.l.b16 %v68
    %v307 = vunpack.c.h.b16 %v68
    %v308 = vunpack.c.l.b16 %v69
    %v309 = vunpack.c.h.b16 %v69
    %v310 = vunpack.c.l.b16 %v70
    %v311 = vunpack.c.h.b16 %v70
    %v312 = vunpack.c.l.b16 %v71
    %v313 = vunpack.c.h.b16 %v71
    %v314 = vunpack.c.l.b16 %v72
    %v315 = vunpack.c.h.b16 %v72
    %v316 = vunpack.c.l.b16 %v73
    %v317 = vunpack.c.h.b16 %v73
    %v318 = vunpack.c.l.b16 %v74
    %v319 = vunpack.c.h.b16 %v74
    %v320 = vunpack.c.l.b16 %v75
    %v321 = vunpack.c.h.b16 %v75
    %v322 = vunpack.c.l.b16 %v76
    %v323 = vunpack.c.h.b16 %v76
    %v324 = vunpack.c.l.b16 %v77
    %v325 = vunpack.c.h.b16 %v77
    %v326 = vunpack.c.l.b16 %v78
    %v327 = vunpack.c.h.b16 %v78
    %v328 = vunpack.c.l.b16 %v79
    %v329 = vunpack.c.h.b16 %v79
    %v330 = vunpack.c.l.b16 %v80
    %v331 = vunpack.c.h.b16 %v80
    %v332 = vunpack.c.l.b16 %v81
    %v333 = vunpack.c.h.b16 %v81
    %v334 = vunpack.c.l.b16 %v82
    %v335 = vunpack.c.h.b16 %v82
    %v336 = vunpack.c.l.b16 %v83
    %v337 = vunpack.c.h.b16 %v83
    %v338 = vunpack.c.l.b16 %v84
    %v339 = vunpack.c.h.b16 %v84
    %v340 = vunpack.c.l.b16 %v85
    %v341 = vunpack.c.h.b16 %v85
    %v342 = vunpack.c.l.b16 %v86
    %v343 = vunpack.c.h.b16 %v86
    %v344 = vunpack.c.l.b16 %v87
    %v345 = vunpack.c.h.b16 %v87
    %v346 = vunpack.c.l.b16 %v88
    %v347 = vunpack.c.h.b16 %v88
    %v348 = vunpack.c.l.b16 %v89
    %v349 = vunpack.c.h.b16 %v89
    %v350 = vunpack.c.l.b16 %v90
    %v351 = vunpack.c.h.b16 %v90
    %v352 = vunpack.c.l.b16 %v91
    %v353 = vunpack.c.h.b16 %v91
    %v354 = vunpack.c.l.b16 %v92
    %v355 = vunpack.c.h.b16 %v92
    %v356 = vunpack.c.l.b16 %v93
    %v357 = vunpack.c.h.b16 %v93
    %v358 = vunpack.c.l.b16 %v94
    %v359 = vunpack.c.h.b16 %v94
    %v360 = vunpack.c.l.b16 %v95
    %v361 = vunpack.c.h.b16 %v95
    %v362 = vunpack.c.l.b16 %v96
    %v363 = vunpack.c.h.b16 %v96
    %v364 = vunpack.c.l.b16 %v97
    %v365 = vunpack.c.h.b16 %v97
    %v366 = vunpack.c.l.b16 %v98
    %v367 = vunpack.c.h.b16 %v98
    %v368 = vunpack.c.l.b16 %v99
    %v369 = vunpack.c.h.b16 %v99
    %v370 = vunpack.c.l.b16 %v100
    %v371 = vunpack.c.h.b16 %v100
    %v372 = vunpack.c.l.b16 %v101
    %v373 = vunpack.c.h.b16 %v101
    %v374 = vunpack.c.l.b16 %v102
    %v375 = vunpack.c.h.b16 %v102
    %v376 = vunpack.c.l.b16 %v103
    %v377 = vunpack.c.h.b16 %v103
    %v378 = vunpack.c.l.b16 %v104
    %v379 = vunpack.c.h.b16 %v104
    %v380 = vunpack.c.l.b16 %v105
    %v381 = vunpack.c.h.b16 %v105
    %v382 = vunpack.c.l.b16 %v106
    %v383 = vunpack.c.h.b16 %v106
    %v384 = vunpack.c.l.b16 %v107
    %v385 = vunpack.c.h.b16 %v107
    %v386 = vunpack.c.l.b16 %v108
    %v387 = vunpack.c.h.b16 %v108
    %v388 = vunpack.c.l.b16 %v109
    %v389 = vunpack.c.h.b16 %v109
    %v390 = vunpack.c.l.b16 %v110
    %v391 = vunpack.c.h.b16 %v110
    %v392 = vunpack.c.l.b16 %v111
    %v393 = vunpack.c.h.b16 %v111
    %v394 = vunpack.c.l.b16 %v112
    %v395 = vunpack.c.h.b16 %v112
    %v396 = vunpack.c.l.b16 %v113
    %v397 = vunpack.c.h.b16 %v113
    %v398 = vunpack.c.l.b16 %v114
    %v399 = vunpack.c.h.b16 %v114
    %v400 = vunpack.c.l.b16 %v115
    %v401 = vunpack.c.h.b16 %v115
    %v402 = vunpack.c.l.b16 %v116
    %v403 = vunpack.c.h.b16 %v116
    %v404 = vunpack.c.l.b16 %v117
    %v405 = vunpack.c.h.b16 %v117
    %v406 = vunpack.c.l.b16 %v118
    %v407 = vunpack.c.h.b16 %v118
    %v408 = vunpack.c.l.b16 %v119
    %v409 = vunpack.c.h.b16 %v119
    %v410 = vunpack.c.l.b16 %v120
    %v411 = vunpack.c.h.b16 %v120
    %v412 = vunpack.c.l.b16 %v121
    %v413 = vunpack.c.h.b16 %v121
    %v414 = vunpack.c.l.b16 %v122
    %v415 = vunpack.c.h.b16 %v122
    %v416 = vunpack.c.l.b16 %v123
    %v417 = vunpack.c.h.b16 %v123
    %v418 = vunpack.c.l.b16 %v124
    %v419 = vunpack.c.h.b16 %v124
    %v420 = vunpack.c.l.b16 %v125
    %v421 = vunpack.c.h.b16 %v125
    %v422 = vunpack.c.l.b16 %v126
    %v423 = vunpack.c.h.b16 %v126
    %v424 = vunpack.c.l.b16 %v127
    %v425 = vunpack.c.h.b16 %v127
    %v426 = vunpack.c.l.b16 %v128
    %v427 = vunpack.c.h.b16 %v128
    %v428 = vunpack.c.l.b16 %v129
    %v429 = vunpack.c.h.b16 %v129
    %v430 = vunpack.c.l.b16 %v130
    %v431 = vunpack.c.h.b16 %v130
    %v432 = vunpack.c.l.b16 %v131
    %v433 = vunpack.c.h.b16 %v131
    %v434 = vunpack.c.l.b16 %v132
    %v435 = vunpack.c.h.b16 %v132
    %v436 = vunpack.c.l.b16 %v133
    %v437 = vunpack.c.h.b16 %v133
    %v438 = vunpack.c.l.b16 %v134
    %v439 = vunpack.c.h.b16 %v134
    %v440 = vunpack.c.l.b16 %v135
    %v441 = vunpack.c.h.b16 %v135
    %v442 = vunpack.c.l.b16 %v136
    %v443 = vunpack.c.h.b16 %v136
    %v444 = vunpack.c.l.b16 %v137
    %v445 = vunpack.c.h.b16 %v137
    %v446 = vunpack.c.l.b16 %v138
    %v447 = vunpack.c.h.b16 %v138
    %v448 = vunpack.c.l.b16 %v139
    %v449 = vunpack.c.h.b16 %v139
    %v450 = vunpack.c.l.b16 %v140
    %v451 = vunpack.c.h.b16 %v140
    %v452 = vunpack.c.l.b16 %v141
    %v453 = vunpack.c.h.b16 %v141
    %v454 = vunpack.c.l.b16 %v142
    %v455 = vunpack.c.h.b16 %v142
    %v456 = vunpack.c.l.b16 %v143
    %v457 = vunpack.c.h.b16 %v143
    %v458 = vunpack.c.l.b16 %v144
    %v459 = vunpack.c.h.b16 %v144
    %v460 = vunpack.c.l.b16 %v145
    %v461 = vunpack.c.h.b16 %v145
    %v462 = vunpack.c.l.b16 %v146
    %v463 = vunpack.c.h.b16 %v146
    %v464 = vunpack.c.l.b16 %v147
    %v465 = vunpack.c.h.b16 %v147
    %v466 = vunpack.c.l.b16 %v148
    %v467 = vunpack.c.h.b16 %v148
    %v468 = vunpack.c.l.b16 %v149
    %v469 = vunpack.c.h.b16 %v149
    %v470 = vunpack.c.l.b16 %v150
    %v471 = vunpack.c.h.b16 %v150
    %v472 = vunpack.c.l.b16 %v151
    %v473 = vunpack.c.h.b16 %v151
    %v474 = vunpack.c.l.b16 %v152
    %v475 = vunpack.c.h.b16 %v152
    %v476 = vunpack.c.l.b16 %v153
    %v477 = vunpack.c.h.b16 %v153
    %v478 = vunpack.c.l.b16 %v154
    %v479 = vunpack.c.h.b16 %v154
    %v480 = vunpack.c.l.b16 %v155
    %v481 = vunpack.c.h.b16 %v155
    %v482 = vunpack.c.l.b16 %v156
    %v483 = vunpack.c.h.b16 %v156
    %v484 = vunpack.c.l.b16 %v157
    %v485 = vunpack.c.h.b16 %v157
    %v486 = vunpack.c.l.b16 %v158
    %v487 = vunpack.c.h.b16 %v158
    %v488 = vunpack.c.l.b16 %v159
    %v489 = vunpack.c.h.b16 %v159
    %v490 = vpack.c.b16 %v304, %v298
    %v491 = vpack.c.b16 %v305, %v299
    %v492 = vpack.c.b16 %v306, %v300
    %v493 = vpack.c.b16 %v307, %v301
    %v494 = vpack.c.b16 %v308, %v302
    %v495 = vpack.c.b16 %v309, %v303
    %v496 = vpack.c.b16 %v316, %v310
    %v497 = vpack.c.b16 %v317, %v311
    %v498 = vpack.c.b16 %v318, %v312
    %v499 = vpack.c.b16 %v319, %v313
    %v500 = vpack.c.b16 %v320, %v314
    %v501 = vpack.c.b16 %v321, %v315
    %v502 = vpack.c.b16 %v328, %v322
    %v503 = vpack.c.b16 %v329, %v323
    %v504 = vpack.c.b16 %v330, %v324
    %v505 = vpack.c.b16 %v331, %v325
    %v506 = vpack.c.b16 %v332, %v326
    %v507 = vpack.c.b16 %v333, %v327
    %v508 = vpack.c.b16 %v340, %v334
    %v509 = vpack.c.b16 %v341, %v335
    %v510 = vpack.c.b16 %v342, %v336
    %v511 = vpack.c.b16 %v343, %v337
    %v512 = vpack.c.b16 %v344, %v338
    %v513 = vpack.c.b16 %v345, %v339
    %v514 = vpack.c.b16 %v352, %v346
    %v515 = vpack.c.b16 %v353, %v347
    %v516 = vpack.c.b16 %v354, %v348
    %v517 = vpack.c.b16 %v355, %v349
    %v518 = vpack.c.b16 %v356, %v350
    %v519 = vpack.c.b16 %v357, %v351
    %v520 = vpack.c.b16 %v364, %v358
    %v521 = vpack.c.b16 %v365, %v359
    %v522 = vpack.c.b16 %v366, %v360
    %v523 = vpack.c.b16 %v367, %v361
    %v524 = vpack.c.b16 %v368, %v362
    %v525 = vpack.c.b16 %v369, %v363
    %v526 = vpack.c.b16 %v376, %v370
    %v527 = vpack.c.b16 %v377, %v371
    %v528 = vpack.c.b16 %v378, %v372
    %v529 = vpack.c.b16 %v379, %v373
    %v530 = vpack.c.b16 %v380, %v374
    %v531 = vpack.c.b16 %v381, %v375
    %v532 = vpack.c.b16 %v388, %v382
    %v533 = vpack.c.b16 %v389, %v383
    %v534 = vpack.c.b16 %v390, %v384
    %v535 = vpack.c.b16 %v391, %v385
    %v536 = vpack.c.b16 %v392, %v386
    %v537 = vpack.c.b16 %v393, %v387
    %v538 = vpack.c.b16 %v400, %v394
    %v539 = vpack.c.b16 %v401, %v395
    %v540 = vpack.c.b16 %v402, %v396
    %v541 = vpack.c.b16 %v403, %v397
    %v542 = vpack.c.b16 %v404, %v398
    %v543 = vpack.c.b16 %v405, %v399
    %v544 = vpack.c.b16 %v412, %v406
    %v545 = vpack.c.b16 %v413, %v407
    %v546 = vpack.c.b16 %v414, %v408
    %v547 = vpack.c.b16 %v415, %v409
    %v548 = vpack.c.b16 %v416, %v410
    %v549 = vpack.c.b16 %v417, %v411
    %v550 = vpack.c.b16 %v424, %v418
    %v551 = vpack.c.b16 %v425, %v419
    %v552 = vpack.c.b16 %v426, %v420
    %v553 = vpack.c.b16 %v427, %v421
    %v554 = vpack.c.b16 %v428, %v422
    %v555 = vpack.c.b16 %v429, %v423
    %v556 = vpack.c.b16 %v436, %v430
    %v557 = vpack.c.b16 %v437, %v431
    %v558 = vpack.c.b16 %v438, %v432
    %v559 = vpack.c.b16 %v439, %v433
    %v560 = vpack.c.b16 %v440, %v434
    %v561 = vpack.c.b16 %v441, %v435
    %v562 = vpack.c.b16 %v448, %v442
    %v563 = vpack.c.b16 %v449, %v443
    %v564 = vpack.c.b16 %v450, %v444
    %v565 = vpack.c.b16 %v451, %v445
    %v566 = vpack.c.b16 %v452, %v446
    %v567 = vpack.c.b16 %v453, %v447
    %v568 = vpack.c.b16 %v460, %v454
    %v569 = vpack.c.b16 %v461, %v455
    %v570 = vpack.c.b16 %v462, %v456
    %v571 = vpack.c.b16 %v463, %v457
    %v572 = vpack.c.b16 %v464, %v458
    %v573 = vpack.c.b16 %v465, %v459
    %v574 = vpack.c.b16 %v472, %v466
    %v575 = vpack.c.b16 %v473, %v467
    %v576 = vpack.c.b16 %v474, %v468
    %v577 = vpack.c.b16 %v475, %v469
    %v578 = vpack.c.b16 %v476, %v470
    %v579 = vpack.c.b16 %v477, %v471
    %v580 = vpack.c.b16 %v484, %v478
    %v581 = vpack.c.b16 %v485, %v479
    %v582 = vpack.c.b16 %v486, %v480
    %v583 = vpack.c.b16 %v487, %v481
    %v584 = vpack.c.b16 %v488, %v482
    %v585 = vpack.c.b16 %v489, %v483
    %682 = vmatprep.subr.bf16.mxu0 %v491
    %683 = vmatpush1.bf16.msra.mxu0 %v490
    %684 = vmatprep.subr.bf16.mxu0 %v497
    %685 = vmatpush1.bf16.msra.mxu0 %v496
    %686 = vmatprep.subr.bf16.mxu0 %v503
    %687 = vmatpush1.bf16.msra.mxu0 %v502
    %688 = vmatprep.subr.bf16.mxu0 %v509
    %689 = vmatpush1.bf16.msra.mxu0 %v508
    %690 = vmatprep.subr.bf16.mxu0 %v515
    %691 = vmatpush1.bf16.msra.mxu0 %v514
    %692 = vmatprep.subr.bf16.mxu0 %v521
    %693 = vmatpush1.bf16.msra.mxu0 %v520
    %694 = vmatprep.subr.bf16.mxu0 %v527
    %695 = vmatpush1.bf16.msra.mxu0 %v526
    %696 = vmatprep.subr.bf16.mxu0 %v533
    %697 = vmatpush1.bf16.msra.mxu0 %v532
    %698 = vmatprep.subr.bf16.mxu0 %v539
    %699 = vmatpush1.bf16.msra.mxu0 %v538
    %700 = vmatprep.subr.bf16.mxu0 %v545
    %701 = vmatpush1.bf16.msra.mxu0 %v544
    %702 = vmatprep.subr.bf16.mxu0 %v551
    %703 = vmatpush1.bf16.msra.mxu0 %v550
    %704 = vmatprep.subr.bf16.mxu0 %v557
    %705 = vmatpush1.bf16.msra.mxu0 %v556
    %706 = vmatprep.subr.bf16.mxu0 %v563
    %707 = vmatpush1.bf16.msra.mxu0 %v562
    %708 = vmatprep.subr.bf16.mxu0 %v569
    %709 = vmatpush1.bf16.msra.mxu0 %v568
    %710 = vmatprep.subr.bf16.mxu0 %v575
    %711 = vmatpush1.bf16.msra.mxu0 %v574
    %712 = vmatprep.subr.bf16.mxu0 %v581
    %713 = vmatpush1.bf16.msra.mxu0 %v580
    %714 = vmatprep.mubr.bf16.mxu0 %v199
    %715 = vmatmul.mubr.bf16.gmra.mrb[0].mxu0 %v198
    %v716 = vpop.f32.mrb[0].mxu0
    %v717 = vadd.f32 %v165, %v716
    %v718 = vpop.f32.mrb[0].mxu0
    %v719 = vadd.f32 %v169, %v718
    %v720 = vpop.f32.mrb[0].mxu0
    %v721 = vadd.f32 %v165, %v720
    %v722 = vpop.f32.mrb[0].mxu0
    %v723 = vadd.f32 %v169, %v722
    %724 = vdwg.mxu0
    %725 = vmatprep.subr.bf16.mxu0 %v493
    %726 = vmatpush1.bf16.msra.mxu0 %v492
    %727 = vmatprep.subr.bf16.mxu0 %v499
    %728 = vmatpush1.bf16.msra.mxu0 %v498
    %729 = vmatprep.subr.bf16.mxu0 %v505
    %730 = vmatpush1.bf16.msra.mxu0 %v504
    %731 = vmatprep.subr.bf16.mxu0 %v511
    %732 = vmatpush1.bf16.msra.mxu0 %v510
    %733 = vmatprep.subr.bf16.mxu0 %v517
    %734 = vmatpush1.bf16.msra.mxu0 %v516
    %735 = vmatprep.subr.bf16.mxu0 %v523
    %736 = vmatpush1.bf16.msra.mxu0 %v522
    %737 = vmatprep.subr.bf16.mxu0 %v529
    %738 = vmatpush1.bf16.msra.mxu0 %v528
    %739 = vmatprep.subr.bf16.mxu0 %v535
    %740 = vmatpush1.bf16.msra.mxu0 %v534
    %741 = vmatprep.subr.bf16.mxu0 %v541
    %742 = vmatpush1.bf16.msra.mxu0 %v540
    %743 = vmatprep.subr.bf16.mxu0 %v547
    %744 = vmatpush1.bf16.msra.mxu0 %v546
    %745 = vmatprep.subr.bf16.mxu0 %v553
    %746 = vmatpush1.bf16.msra.mxu0 %v552
    %747 = vmatprep.subr.bf16.mxu0 %v559
    %748 = vmatpush1.bf16.msra.mxu0 %v558
    %749 = vmatprep.subr.bf16.mxu0 %v565
    %750 = vmatpush1.bf16.msra.mxu0 %v564
    %751 = vmatprep.subr.bf16.mxu0 %v571
    %752 = vmatpush1.bf16.msra.mxu0 %v570
    %753 = vmatprep.subr.bf16.mxu0 %v577
    %754 = vmatpush1.bf16.msra.mxu0 %v576
    %755 = vmatprep.subr.bf16.mxu0 %v583
    %756 = vmatpush1.bf16.msra.mxu0 %v582
    %757 = vmatprep.mubr.bf16.mxu0 %v199
    %758 = vmatmul.mubr.bf16.gmra.mrb[0].mxu0 %v198
    %v759 = vpop.f32.mrb[0].mxu0
    %v760 = vadd.f32 %v173, %v759
    %v761 = vpop.f32.mrb[0].mxu0
    %v762 = vadd.f32 %v177, %v761
    %v763 = vpop.f32.mrb[0].mxu0
    %v764 = vadd.f32 %v173, %v763
    %v765 = vpop.f32.mrb[0].mxu0
    %v766 = vadd.f32 %v177, %v765
    %767 = vdwg.mxu0
    %768 = vmatprep.subr.bf16.mxu0 %v495
    %769 = vmatpush1.bf16.msra.mxu0 %v494
    %770 = vmatprep.subr.bf16.mxu0 %v501
    %771 = vmatpush1.bf16.msra.mxu0 %v500
    %772 = vmatprep.subr.bf16.mxu0 %v507
    %773 = vmatpush1.bf16.msra.mxu0 %v506
    %774 = vmatprep.subr.bf16.mxu0 %v513
    %775 = vmatpush1.bf16.msra.mxu0 %v512
    %776 = vmatprep.subr.bf16.mxu0 %v519
    %777 = vmatpush1.bf16.msra.mxu0 %v518
    %778 = vmatprep.subr.bf16.mxu0 %v525
    %779 = vmatpush1.bf16.msra.mxu0 %v524
    %780 = vmatprep.subr.bf16.mxu0 %v531
    %781 = vmatpush1.bf16.msra.mxu0 %v530
    %782 = vmatprep.subr.bf16.mxu0 %v537
    %783 = vmatpush1.bf16.msra.mxu0 %v536
    %784 = vmatprep.subr.bf16.mxu0 %v543
    %785 = vmatpush1.bf16.msra.mxu0 %v542
    %786 = vmatprep.subr.bf16.mxu0 %v549
    %787 = vmatpush1.bf16.msra.mxu0 %v548
    %788 = vmatprep.subr.bf16.mxu0 %v555
    %789 = vmatpush1.bf16.msra.mxu0 %v554
    %790 = vmatprep.subr.bf16.mxu0 %v561
    %791 = vmatpush1.bf16.msra.mxu0 %v560
    %792 = vmatprep.subr.bf16.mxu0 %v567
    %793 = vmatpush1.bf16.msra.mxu0 %v566
    %794 = vmatprep.subr.bf16.mxu0 %v573
    %795 = vmatpush1.bf16.msra.mxu0 %v572
    %796 = vmatprep.subr.bf16.mxu0 %v579
    %797 = vmatpush1.bf16.msra.mxu0 %v578
    %798 = vmatprep.subr.bf16.mxu0 %v585
    %799 = vmatpush1.bf16.msra.mxu0 %v584
    %800 = vmatprep.mubr.bf16.mxu0 %v199
    %801 = vmatmul.mubr.bf16.gmra.mrb[0].mxu0 %v198
    %v802 = vpop.f32.mrb[0].mxu0
    %v803 = vadd.f32 %v181, %v802
    %v804 = vpop.f32.mrb[0].mxu0
    %v805 = vadd.f32 %v185, %v804
    %v806 = vpop.f32.mrb[0].mxu0
    %v807 = vadd.f32 %v181, %v806
    %v808 = vpop.f32.mrb[0].mxu0
    %v809 = vadd.f32 %v185, %v808
    %810 = vdwg.mxu0
    %811 = vst [vmem:[#allocation3] sm:$0xff] %v717
    %812 = vst [vmem:[#allocation3 + $0x8] sm:$0xff] %v719
    %813 = vst [vmem:[#allocation3 + $0x10] sm:$0xff] %v760
    %814 = vst [vmem:[#allocation3 + $0x18] sm:$0xff] %v762
    %815 = vst [vmem:[#allocation3 + $0x20] sm:$0xff] %v803
    %816 = vst [vmem:[#allocation3 + $0x28] sm:$0xff] %v805
    %817 = vst [vmem:[#allocation3 + $0x30] sm:$0xff] %v721
    %818 = vst [vmem:[#allocation3 + $0x38] sm:$0xff] %v723
    %819 = vst [vmem:[#allocation3 + $0x40] sm:$0xff] %v764
    %820 = vst [vmem:[#allocation3 + $0x48] sm:$0xff] %v766
    %821 = vst [vmem:[#allocation3 + $0x50] sm:$0xff] %v807
    %822 = vst [vmem:[#allocation3 + $0x58] sm:$0xff] %v809
    %v823 = vld [vmem:[#allocation2] sm:$0x3]
    %v825 = vlaneseq
    %v826 = vshrl.u32 %v825, 7
    %v827 = vsub.s32 0, %v826
    %v828 = vrot.slane %v823, %v827
    %v829 = vlaneseq
    %v830 = vshrl.u32 %v829, 7
    %v831 = vsub.s32 1, %v830
    %v832 = vrot.slane %v823, %v831
    %v835 = vpack.c.bf16 %v828, %v828
    %v836 = vpack.c.bf16 %v832, %v832
    %v837 = vld [vmem:[#allocation7] sm:$0xff]
    %v838 = vld [vmem:[#allocation7 + $0x8] sm:$0xff]
    %v839 = vld [vmem:[#allocation7 + $0x10] sm:$0xff]
    %v840 = vld [vmem:[#allocation7 + $0x18] sm:$0xff]
    %v841 = vld [vmem:[#allocation7 + $0x20] sm:$0xff]
    %v842 = vld [vmem:[#allocation7 + $0x28] sm:$0xff]
    %v843 = vld [vmem:[#allocation7 + $0x30] sm:$0xff]
    %v844 = vld [vmem:[#allocation7 + $0x38] sm:$0xff]
    %v845 = vld [vmem:[#allocation7 + $0x40] sm:$0xff]
    %v846 = vld [vmem:[#allocation7 + $0x48] sm:$0xff]
    %v847 = vld [vmem:[#allocation7 + $0x50] sm:$0xff]
    %v848 = vld [vmem:[#allocation7 + $0x58] sm:$0xff]
    %v849 = vld [vmem:[#allocation7 + $0x60] sm:$0xff]
    %v850 = vld [vmem:[#allocation7 + $0x68] sm:$0xff]
    %v851 = vld [vmem:[#allocation7 + $0x70] sm:$0xff]
    %v852 = vld [vmem:[#allocation7 + $0x78] sm:$0xff]
    %v853 = vld [vmem:[#allocation7 + $0x80] sm:$0xff]
    %v854 = vld [vmem:[#allocation7 + $0x88] sm:$0xff]
    %v855 = vld [vmem:[#allocation7 + $0x90] sm:$0xff]
    %v856 = vld [vmem:[#allocation7 + $0x98] sm:$0xff]
    %v857 = vld [vmem:[#allocation7 + $0xa0] sm:$0xff]
    %v858 = vld [vmem:[#allocation7 + $0xa8] sm:$0xff]
    %v859 = vld [vmem:[#allocation7 + $0xb0] sm:$0xff]
    %v860 = vld [vmem:[#allocation7 + $0xb8] sm:$0xff]
    %v861 = vld [vmem:[#allocation7 + $0xc0] sm:$0xff]
    %v862 = vld [vmem:[#allocation7 + $0xc8] sm:$0xff]
    %v863 = vld [vmem:[#allocation7 + $0xd0] sm:$0xff]
    %v864 = vld [vmem:[#allocation7 + $0xd8] sm:$0xff]
    %v865 = vld [vmem:[#allocation7 + $0xe0] sm:$0xff]
    %v866 = vld [vmem:[#allocation7 + $0xe8] sm:$0xff]
    %v867 = vld [vmem:[#allocation7 + $0xf0] sm:$0xff]
    %v868 = vld [vmem:[#allocation7 + $0xf8] sm:$0xff]
    %v869 = vld [vmem:[#allocation7 + $0x100] sm:$0xff]
    %v870 = vld [vmem:[#allocation7 + $0x108] sm:$0xff]
    %v871 = vld [vmem:[#allocation7 + $0x110] sm:$0xff]
    %v872 = vld [vmem:[#allocation7 + $0x118] sm:$0xff]
    %v873 = vld [vmem:[#allocation7 + $0x120] sm:$0xff]
    %v874 = vld [vmem:[#allocation7 + $0x128] sm:$0xff]
    %v875 = vld [vmem:[#allocation7 + $0x130] sm:$0xff]
    %v876 = vld [vmem:[#allocation7 + $0x138] sm:$0xff]
    %v877 = vld [vmem:[#allocation7 + $0x140] sm:$0xff]
    %v878 = vld [vmem:[#allocation7 + $0x148] sm:$0xff]
    %v879 = vld [vmem:[#allocation7 + $0x150] sm:$0xff]
    %v880 = vld [vmem:[#allocation7 + $0x158] sm:$0xff]
    %v881 = vld [vmem:[#allocation7 + $0x160] sm:$0xff]
    %v882 = vld [vmem:[#allocation7 + $0x168] sm:$0xff]
    %v883 = vld [vmem:[#allocation7 + $0x170] sm:$0xff]
    %v884 = vld [vmem:[#allocation7 + $0x178] sm:$0xff]
    %v885 = vld [vmem:[#allocation7 + $0x180] sm:$0xff]
    %v886 = vld [vmem:[#allocation7 + $0x188] sm:$0xff]
    %v887 = vld [vmem:[#allocation7 + $0x190] sm:$0xff]
    %v888 = vld [vmem:[#allocation7 + $0x198] sm:$0xff]
    %v889 = vld [vmem:[#allocation7 + $0x1a0] sm:$0xff]
    %v890 = vld [vmem:[#allocation7 + $0x1a8] sm:$0xff]
    %v891 = vld [vmem:[#allocation7 + $0x1b0] sm:$0xff]
    %v892 = vld [vmem:[#allocation7 + $0x1b8] sm:$0xff]
    %v893 = vld [vmem:[#allocation7 + $0x1c0] sm:$0xff]
    %v894 = vld [vmem:[#allocation7 + $0x1c8] sm:$0xff]
    %v895 = vld [vmem:[#allocation7 + $0x1d0] sm:$0xff]
    %v896 = vld [vmem:[#allocation7 + $0x1d8] sm:$0xff]
    %v897 = vld [vmem:[#allocation7 + $0x1e0] sm:$0xff]
    %v898 = vld [vmem:[#allocation7 + $0x1e8] sm:$0xff]
    %v899 = vld [vmem:[#allocation7 + $0x1f0] sm:$0xff]
    %v900 = vld [vmem:[#allocation7 + $0x1f8] sm:$0xff]
    %v901 = vld [vmem:[#allocation7 + $0x200] sm:$0xff]
    %v902 = vld [vmem:[#allocation7 + $0x208] sm:$0xff]
    %v903 = vld [vmem:[#allocation7 + $0x210] sm:$0xff]
    %v904 = vld [vmem:[#allocation7 + $0x218] sm:$0xff]
    %v905 = vld [vmem:[#allocation7 + $0x220] sm:$0xff]
    %v906 = vld [vmem:[#allocation7 + $0x228] sm:$0xff]
    %v907 = vld [vmem:[#allocation7 + $0x230] sm:$0xff]
    %v908 = vld [vmem:[#allocation7 + $0x238] sm:$0xff]
    %v909 = vld [vmem:[#allocation7 + $0x240] sm:$0xff]
    %v910 = vld [vmem:[#allocation7 + $0x248] sm:$0xff]
    %v911 = vld [vmem:[#allocation7 + $0x250] sm:$0xff]
    %v912 = vld [vmem:[#allocation7 + $0x258] sm:$0xff]
    %v913 = vld [vmem:[#allocation7 + $0x260] sm:$0xff]
    %v914 = vld [vmem:[#allocation7 + $0x268] sm:$0xff]
    %v915 = vld [vmem:[#allocation7 + $0x270] sm:$0xff]
    %v916 = vld [vmem:[#allocation7 + $0x278] sm:$0xff]
    %v917 = vld [vmem:[#allocation7 + $0x280] sm:$0xff]
    %v918 = vld [vmem:[#allocation7 + $0x288] sm:$0xff]
    %v919 = vld [vmem:[#allocation7 + $0x290] sm:$0xff]
    %v920 = vld [vmem:[#allocation7 + $0x298] sm:$0xff]
    %v921 = vld [vmem:[#allocation7 + $0x2a0] sm:$0xff]
    %v922 = vld [vmem:[#allocation7 + $0x2a8] sm:$0xff]
    %v923 = vld [vmem:[#allocation7 + $0x2b0] sm:$0xff]
    %v924 = vld [vmem:[#allocation7 + $0x2b8] sm:$0xff]
    %v925 = vld [vmem:[#allocation7 + $0x2c0] sm:$0xff]
    %v926 = vld [vmem:[#allocation7 + $0x2c8] sm:$0xff]
    %v927 = vld [vmem:[#allocation7 + $0x2d0] sm:$0xff]
    %v928 = vld [vmem:[#allocation7 + $0x2d8] sm:$0xff]
    %v929 = vld [vmem:[#allocation7 + $0x2e0] sm:$0xff]
    %v930 = vld [vmem:[#allocation7 + $0x2e8] sm:$0xff]
    %v931 = vld [vmem:[#allocation7 + $0x2f0] sm:$0xff]
    %v932 = vld [vmem:[#allocation7 + $0x2f8] sm:$0xff]
    %v1029 = vunpack.c.l.b16 %v837
    %v1030 = vunpack.c.h.b16 %v837
    %v1031 = vunpack.c.l.b16 %v838
    %v1032 = vunpack.c.h.b16 %v838
    %v1033 = vunpack.c.l.b16 %v839
    %v1034 = vunpack.c.h.b16 %v839
    %v1035 = vunpack.c.l.b16 %v840
    %v1036 = vunpack.c.h.b16 %v840
    %v1037 = vunpack.c.l.b16 %v841
    %v1038 = vunpack.c.h.b16 %v841
    %v1039 = vunpack.c.l.b16 %v842
    %v1040 = vunpack.c.h.b16 %v842
    %v1041 = vunpack.c.l.b16 %v843
    %v1042 = vunpack.c.h.b16 %v843
    %v1043 = vunpack.c.l.b16 %v844
    %v1044 = vunpack.c.h.b16 %v844
    %v1045 = vunpack.c.l.b16 %v845
    %v1046 = vunpack.c.h.b16 %v845
    %v1047 = vunpack.c.l.b16 %v846
    %v1048 = vunpack.c.h.b16 %v846
    %v1049 = vunpack.c.l.b16 %v847
    %v1050 = vunpack.c.h.b16 %v847
    %v1051 = vunpack.c.l.b16 %v848
    %v1052 = vunpack.c.h.b16 %v848
    %v1053 = vunpack.c.l.b16 %v849
    %v1054 = vunpack.c.h.b16 %v849
    %v1055 = vunpack.c.l.b16 %v850
    %v1056 = vunpack.c.h.b16 %v850
    %v1057 = vunpack.c.l.b16 %v851
    %v1058 = vunpack.c.h.b16 %v851
    %v1059 = vunpack.c.l.b16 %v852
    %v1060 = vunpack.c.h.b16 %v852
    %v1061 = vunpack.c.l.b16 %v853
    %v1062 = vunpack.c.h.b16 %v853
    %v1063 = vunpack.c.l.b16 %v854
    %v1064 = vunpack.c.h.b16 %v854
    %v1065 = vunpack.c.l.b16 %v855
    %v1066 = vunpack.c.h.b16 %v855
    %v1067 = vunpack.c.l.b16 %v856
    %v1068 = vunpack.c.h.b16 %v856
    %v1069 = vunpack.c.l.b16 %v857
    %v1070 = vunpack.c.h.b16 %v857
    %v1071 = vunpack.c.l.b16 %v858
    %v1072 = vunpack.c.h.b16 %v858
    %v1073 = vunpack.c.l.b16 %v859
    %v1074 = vunpack.c.h.b16 %v859
    %v1075 = vunpack.c.l.b16 %v860
    %v1076 = vunpack.c.h.b16 %v860
    %v1077 = vunpack.c.l.b16 %v861
    %v1078 = vunpack.c.h.b16 %v861
    %v1079 = vunpack.c.l.b16 %v862
    %v1080 = vunpack.c.h.b16 %v862
    %v1081 = vunpack.c.l.b16 %v863
    %v1082 = vunpack.c.h.b16 %v863
    %v1083 = vunpack.c.l.b16 %v864
    %v1084 = vunpack.c.h.b16 %v864
    %v1085 = vunpack.c.l.b16 %v865
    %v1086 = vunpack.c.h.b16 %v865
    %v1087 = vunpack.c.l.b16 %v866
    %v1088 = vunpack.c.h.b16 %v866
    %v1089 = vunpack.c.l.b16 %v867
    %v1090 = vunpack.c.h.b16 %v867
    %v1091 = vunpack.c.l.b16 %v868
    %v1092 = vunpack.c.h.b16 %v868
    %v1093 = vunpack.c.l.b16 %v869
    %v1094 = vunpack.c.h.b16 %v869
    %v1095 = vunpack.c.l.b16 %v870
    %v1096 = vunpack.c.h.b16 %v870
    %v1097 = vunpack.c.l.b16 %v871
    %v1098 = vunpack.c.h.b16 %v871
    %v1099 = vunpack.c.l.b16 %v872
    %v1100 = vunpack.c.h.b16 %v872
    %v1101 = vunpack.c.l.b16 %v873
    %v1102 = vunpack.c.h.b16 %v873
    %v1103 = vunpack.c.l.b16 %v874
    %v1104 = vunpack.c.h.b16 %v874
    %v1105 = vunpack.c.l.b16 %v875
    %v1106 = vunpack.c.h.b16 %v875
    %v1107 = vunpack.c.l.b16 %v876
    %v1108 = vunpack.c.h.b16 %v876
    %v1109 = vunpack.c.l.b16 %v877
    %v1110 = vunpack.c.h.b16 %v877
    %v1111 = vunpack.c.l.b16 %v878
    %v1112 = vunpack.c.h.b16 %v878
    %v1113 = vunpack.c.l.b16 %v879
    %v1114 = vunpack.c.h.b16 %v879
    %v1115 = vunpack.c.l.b16 %v880
    %v1116 = vunpack.c.h.b16 %v880
    %v1117 = vunpack.c.l.b16 %v881
    %v1118 = vunpack.c.h.b16 %v881
    %v1119 = vunpack.c.l.b16 %v882
    %v1120 = vunpack.c.h.b16 %v882
    %v1121 = vunpack.c.l.b16 %v883
    %v1122 = vunpack.c.h.b16 %v883
    %v1123 = vunpack.c.l.b16 %v884
    %v1124 = vunpack.c.h.b16 %v884
    %v1125 = vunpack.c.l.b16 %v885
    %v1126 = vunpack.c.h.b16 %v885
    %v1127 = vunpack.c.l.b16 %v886
    %v1128 = vunpack.c.h.b16 %v886
    %v1129 = vunpack.c.l.b16 %v887
    %v1130 = vunpack.c.h.b16 %v887
    %v1131 = vunpack.c.l.b16 %v888
    %v1132 = vunpack.c.h.b16 %v888
    %v1133 = vunpack.c.l.b16 %v889
    %v1134 = vunpack.c.h.b16 %v889
    %v1135 = vunpack.c.l.b16 %v890
    %v1136 = vunpack.c.h.b16 %v890
    %v1137 = vunpack.c.l.b16 %v891
    %v1138 = vunpack.c.h.b16 %v891
    %v1139 = vunpack.c.l.b16 %v892
    %v1140 = vunpack.c.h.b16 %v892
    %v1141 = vunpack.c.l.b16 %v893
    %v1142 = vunpack.c.h.b16 %v893
    %v1143 = vunpack.c.l.b16 %v894
    %v1144 = vunpack.c.h.b16 %v894
    %v1145 = vunpack.c.l.b16 %v895
    %v1146 = vunpack.c.h.b16 %v895
    %v1147 = vunpack.c.l.b16 %v896
    %v1148 = vunpack.c.h.b16 %v896
    %v1149 = vunpack.c.l.b16 %v897
    %v1150 = vunpack.c.h.b16 %v897
    %v1151 = vunpack.c.l.b16 %v898
    %v1152 = vunpack.c.h.b16 %v898
    %v1153 = vunpack.c.l.b16 %v899
    %v1154 = vunpack.c.h.b16 %v899
    %v1155 = vunpack.c.l.b16 %v900
    %v1156 = vunpack.c.h.b16 %v900
    %v1157 = vunpack.c.l.b16 %v901
    %v1158 = vunpack.c.h.b16 %v901
    %v1159 = vunpack.c.l.b16 %v902
    %v1160 = vunpack.c.h.b16 %v902
    %v1161 = vunpack.c.l.b16 %v903
    %v1162 = vunpack.c.h.b16 %v903
    %v1163 = vunpack.c.l.b16 %v904
    %v1164 = vunpack.c.h.b16 %v904
    %v1165 = vunpack.c.l.b16 %v905
    %v1166 = vunpack.c.h.b16 %v905
    %v1167 = vunpack.c.l.b16 %v906
    %v1168 = vunpack.c.h.b16 %v906
    %v1169 = vunpack.c.l.b16 %v907
    %v1170 = vunpack.c.h.b16 %v907
    %v1171 = vunpack.c.l.b16 %v908
    %v1172 = vunpack.c.h.b16 %v908
    %v1173 = vunpack.c.l.b16 %v909
    %v1174 = vunpack.c.h.b16 %v909
    %v1175 = vunpack.c.l.b16 %v910
    %v1176 = vunpack.c.h.b16 %v910
    %v1177 = vunpack.c.l.b16 %v911
    %v1178 = vunpack.c.h.b16 %v911
    %v1179 = vunpack.c.l.b16 %v912
    %v1180 = vunpack.c.h.b16 %v912
    %v1181 = vunpack.c.l.b16 %v913
    %v1182 = vunpack.c.h.b16 %v913
    %v1183 = vunpack.c.l.b16 %v914
    %v1184 = vunpack.c.h.b16 %v914
    %v1185 = vunpack.c.l.b16 %v915
    %v1186 = vunpack.c.h.b16 %v915
    %v1187 = vunpack.c.l.b16 %v916
    %v1188 = vunpack.c.h.b16 %v916
    %v1189 = vunpack.c.l.b16 %v917
    %v1190 = vunpack.c.h.b16 %v917
    %v1191 = vunpack.c.l.b16 %v918
    %v1192 = vunpack.c.h.b16 %v918
    %v1193 = vunpack.c.l.b16 %v919
    %v1194 = vunpack.c.h.b16 %v919
    %v1195 = vunpack.c.l.b16 %v920
    %v1196 = vunpack.c.h.b16 %v920
    %v1197 = vunpack.c.l.b16 %v921
    %v1198 = vunpack.c.h.b16 %v921
    %v1199 = vunpack.c.l.b16 %v922
    %v1200 = vunpack.c.h.b16 %v922
    %v1201 = vunpack.c.l.b16 %v923
    %v1202 = vunpack.c.h.b16 %v923
    %v1203 = vunpack.c.l.b16 %v924
    %v1204 = vunpack.c.h.b16 %v924
    %v1205 = vunpack.c.l.b16 %v925
    %v1206 = vunpack.c.h.b16 %v925
    %v1207 = vunpack.c.l.b16 %v926
    %v1208 = vunpack.c.h.b16 %v926
    %v1209 = vunpack.c.l.b16 %v927
    %v1210 = vunpack.c.h.b16 %v927
    %v1211 = vunpack.c.l.b16 %v928
    %v1212 = vunpack.c.h.b16 %v928
    %v1213 = vunpack.c.l.b16 %v929
    %v1214 = vunpack.c.h.b16 %v929
    %v1215 = vunpack.c.l.b16 %v930
    %v1216 = vunpack.c.h.b16 %v930
    %v1217 = vunpack.c.l.b16 %v931
    %v1218 = vunpack.c.h.b16 %v931
    %v1219 = vunpack.c.l.b16 %v932
    %v1220 = vunpack.c.h.b16 %v932
    %v1221 = vpack.c.b16 %v1035, %v1029
    %v1222 = vpack.c.b16 %v1036, %v1030
    %v1223 = vpack.c.b16 %v1037, %v1031
    %v1224 = vpack.c.b16 %v1038, %v1032
    %v1225 = vpack.c.b16 %v1039, %v1033
    %v1226 = vpack.c.b16 %v1040, %v1034
    %v1227 = vpack.c.b16 %v1047, %v1041
    %v1228 = vpack.c.b16 %v1048, %v1042
    %v1229 = vpack.c.b16 %v1049, %v1043
    %v1230 = vpack.c.b16 %v1050, %v1044
    %v1231 = vpack.c.b16 %v1051, %v1045
    %v1232 = vpack.c.b16 %v1052, %v1046
    %v1233 = vpack.c.b16 %v1059, %v1053
    %v1234 = vpack.c.b16 %v1060, %v1054
    %v1235 = vpack.c.b16 %v1061, %v1055
    %v1236 = vpack.c.b16 %v1062, %v1056
    %v1237 = vpack.c.b16 %v1063, %v1057
    %v1238 = vpack.c.b16 %v1064, %v1058
    %v1239 = vpack.c.b16 %v1071, %v1065
    %v1240 = vpack.c.b16 %v1072, %v1066
    %v1241 = vpack.c.b16 %v1073, %v1067
    %v1242 = vpack.c.b16 %v1074, %v1068
    %v1243 = vpack.c.b16 %v1075, %v1069
    %v1244 = vpack.c.b16 %v1076, %v1070
    %v1245 = vpack.c.b16 %v1083, %v1077
    %v1246 = vpack.c.b16 %v1084, %v1078
    %v1247 = vpack.c.b16 %v1085, %v1079
    %v1248 = vpack.c.b16 %v1086, %v1080
    %v1249 = vpack.c.b16 %v1087, %v1081
    %v1250 = vpack.c.b16 %v1088, %v1082
    %v1251 = vpack.c.b16 %v1095, %v1089
    %v1252 = vpack.c.b16 %v1096, %v1090
    %v1253 = vpack.c.b16 %v1097, %v1091
    %v1254 = vpack.c.b16 %v1098, %v1092
    %v1255 = vpack.c.b16 %v1099, %v1093
    %v1256 = vpack.c.b16 %v1100, %v1094
    %v1257 = vpack.c.b16 %v1107, %v1101
    %v1258 = vpack.c.b16 %v1108, %v1102
    %v1259 = vpack.c.b16 %v1109, %v1103
    %v1260 = vpack.c.b16 %v1110, %v1104
    %v1261 = vpack.c.b16 %v1111, %v1105
    %v1262 = vpack.c.b16 %v1112, %v1106
    %v1263 = vpack.c.b16 %v1119, %v1113
    %v1264 = vpack.c.b16 %v1120, %v1114
    %v1265 = vpack.c.b16 %v1121, %v1115
    %v1266 = vpack.c.b16 %v1122, %v1116
    %v1267 = vpack.c.b16 %v1123, %v1117
    %v1268 = vpack.c.b16 %v1124, %v1118
    %v1269 = vpack.c.b16 %v1131, %v1125
    %v1270 = vpack.c.b16 %v1132, %v1126
    %v1271 = vpack.c.b16 %v1133, %v1127
    %v1272 = vpack.c.b16 %v1134, %v1128
    %v1273 = vpack.c.b16 %v1135, %v1129
    %v1274 = vpack.c.b16 %v1136, %v1130
    %v1275 = vpack.c.b16 %v1143, %v1137
    %v1276 = vpack.c.b16 %v1144, %v1138
    %v1277 = vpack.c.b16 %v1145, %v1139
    %v1278 = vpack.c.b16 %v1146, %v1140
    %v1279 = vpack.c.b16 %v1147, %v1141
    %v1280 = vpack.c.b16 %v1148, %v1142
    %v1281 = vpack.c.b16 %v1155, %v1149
    %v1282 = vpack.c.b16 %v1156, %v1150
    %v1283 = vpack.c.b16 %v1157, %v1151
    %v1284 = vpack.c.b16 %v1158, %v1152
    %v1285 = vpack.c.b16 %v1159, %v1153
    %v1286 = vpack.c.b16 %v1160, %v1154
    %v1287 = vpack.c.b16 %v1167, %v1161
    %v1288 = vpack.c.b16 %v1168, %v1162
    %v1289 = vpack.c.b16 %v1169, %v1163
    %v1290 = vpack.c.b16 %v1170, %v1164
    %v1291 = vpack.c.b16 %v1171, %v1165
    %v1292 = vpack.c.b16 %v1172, %v1166
    %v1293 = vpack.c.b16 %v1179, %v1173
    %v1294 = vpack.c.b16 %v1180, %v1174
    %v1295 = vpack.c.b16 %v1181, %v1175
    %v1296 = vpack.c.b16 %v1182, %v1176
    %v1297 = vpack.c.b16 %v1183, %v1177
    %v1298 = vpack.c.b16 %v1184, %v1178
    %v1299 = vpack.c.b16 %v1191, %v1185
    %v1300 = vpack.c.b16 %v1192, %v1186
    %v1301 = vpack.c.b16 %v1193, %v1187
    %v1302 = vpack.c.b16 %v1194, %v1188
    %v1303 = vpack.c.b16 %v1195, %v1189
    %v1304 = vpack.c.b16 %v1196, %v1190
    %v1305 = vpack.c.b16 %v1203, %v1197
    %v1306 = vpack.c.b16 %v1204, %v1198
    %v1307 = vpack.c.b16 %v1205, %v1199
    %v1308 = vpack.c.b16 %v1206, %v1200
    %v1309 = vpack.c.b16 %v1207, %v1201
    %v1310 = vpack.c.b16 %v1208, %v1202
    %v1311 = vpack.c.b16 %v1215, %v1209
    %v1312 = vpack.c.b16 %v1216, %v1210
    %v1313 = vpack.c.b16 %v1217, %v1211
    %v1314 = vpack.c.b16 %v1218, %v1212
    %v1315 = vpack.c.b16 %v1219, %v1213
    %v1316 = vpack.c.b16 %v1220, %v1214
    %1413 = vmatprep.subr.bf16.mxu0 %v1222
    %1414 = vmatpush1.bf16.msra.mxu0 %v1221
    %1415 = vmatprep.subr.bf16.mxu0 %v1228
    %1416 = vmatpush1.bf16.msra.mxu0 %v1227
    %1417 = vmatprep.subr.bf16.mxu0 %v1234
    %1418 = vmatpush1.bf16.msra.mxu0 %v1233
    %1419 = vmatprep.subr.bf16.mxu0 %v1240
    %1420 = vmatpush1.bf16.msra.mxu0 %v1239
    %1421 = vmatprep.subr.bf16.mxu0 %v1246
    %1422 = vmatpush1.bf16.msra.mxu0 %v1245
    %1423 = vmatprep.subr.bf16.mxu0 %v1252
    %1424 = vmatpush1.bf16.msra.mxu0 %v1251
    %1425 = vmatprep.subr.bf16.mxu0 %v1258
    %1426 = vmatpush1.bf16.msra.mxu0 %v1257
    %1427 = vmatprep.subr.bf16.mxu0 %v1264
    %1428 = vmatpush1.bf16.msra.mxu0 %v1263
    %1429 = vmatprep.subr.bf16.mxu0 %v1270
    %1430 = vmatpush1.bf16.msra.mxu0 %v1269
    %1431 = vmatprep.subr.bf16.mxu0 %v1276
    %1432 = vmatpush1.bf16.msra.mxu0 %v1275
    %1433 = vmatprep.subr.bf16.mxu0 %v1282
    %1434 = vmatpush1.bf16.msra.mxu0 %v1281
    %1435 = vmatprep.subr.bf16.mxu0 %v1288
    %1436 = vmatpush1.bf16.msra.mxu0 %v1287
    %1437 = vmatprep.subr.bf16.mxu0 %v1294
    %1438 = vmatpush1.bf16.msra.mxu0 %v1293
    %1439 = vmatprep.subr.bf16.mxu0 %v1300
    %1440 = vmatpush1.bf16.msra.mxu0 %v1299
    %1441 = vmatprep.subr.bf16.mxu0 %v1306
    %1442 = vmatpush1.bf16.msra.mxu0 %v1305
    %1443 = vmatprep.subr.bf16.mxu0 %v1312
    %1444 = vmatpush1.bf16.msra.mxu0 %v1311
    %1445 = vmatprep.mubr.bf16.mxu0 %v836
    %1446 = vmatmul.mubr.bf16.gmra.mrb[0].mxu0 %v835
    %v1447 = vpop.f32.mrb[0].mxu0
    %v1448 = vadd.f32 0.0, %v1447
    %v1449 = vpop.f32.mrb[0].mxu0
    %v1450 = vadd.f32 0.0, %v1449
    %v1451 = vpop.f32.mrb[0].mxu0
    %v1452 = vpop.f32.mrb[0].mxu0
    %1453 = vdwg.mxu0
    %1454 = vmatprep.subr.bf16.mxu0 %v1224
    %1455 = vmatpush1.bf16.msra.mxu0 %v1223
    %1456 = vmatprep.subr.bf16.mxu0 %v1230
    %1457 = vmatpush1.bf16.msra.mxu0 %v1229
    %1458 = vmatprep.subr.bf16.mxu0 %v1236
    %1459 = vmatpush1.bf16.msra.mxu0 %v1235
    %1460 = vmatprep.subr.bf16.mxu0 %v1242
    %1461 = vmatpush1.bf16.msra.mxu0 %v1241
    %1462 = vmatprep.subr.bf16.mxu0 %v1248
    %1463 = vmatpush1.bf16.msra.mxu0 %v1247
    %1464 = vmatprep.subr.bf16.mxu0 %v1254
    %1465 = vmatpush1.bf16.msra.mxu0 %v1253
    %1466 = vmatprep.subr.bf16.mxu0 %v1260
    %1467 = vmatpush1.bf16.msra.mxu0 %v1259
    %1468 = vmatprep.subr.bf16.mxu0 %v1266
    %1469 = vmatpush1.bf16.msra.mxu0 %v1265
    %1470 = vmatprep.subr.bf16.mxu0 %v1272
    %1471 = vmatpush1.bf16.msra.mxu0 %v1271
    %1472 = vmatprep.subr.bf16.mxu0 %v1278
    %1473 = vmatpush1.bf16.msra.mxu0 %v1277
    %1474 = vmatprep.subr.bf16.mxu0 %v1284
    %1475 = vmatpush1.bf16.msra.mxu0 %v1283
    %1476 = vmatprep.subr.bf16.mxu0 %v1290
    %1477 = vmatpush1.bf16.msra.mxu0 %v1289
    %1478 = vmatprep.subr.bf16.mxu0 %v1296
    %1479 = vmatpush1.bf16.msra.mxu0 %v1295
    %1480 = vmatprep.subr.bf16.mxu0 %v1302
    %1481 = vmatpush1.bf16.msra.mxu0 %v1301
    %1482 = vmatprep.subr.bf16.mxu0 %v1308
    %1483 = vmatpush1.bf16.msra.mxu0 %v1307
    %1484 = vmatprep.subr.bf16.mxu0 %v1314
    %1485 = vmatpush1.bf16.msra.mxu0 %v1313
    %1486 = vmatprep.mubr.bf16.mxu0 %v836
    %1487 = vmatmul.mubr.bf16.gmra.mrb[0].mxu0 %v835
    %v1488 = vpop.f32.mrb[0].mxu0
    %v1489 = vadd.f32 0.0, %v1488
    %v1490 = vpop.f32.mrb[0].mxu0
    %v1491 = vadd.f32 0.0, %v1490
    %v1492 = vpop.f32.mrb[0].mxu0
    %v1493 = vpop.f32.mrb[0].mxu0
    %1494 = vdwg.mxu0
    %1495 = vmatprep.subr.bf16.mxu0 %v1226
    %1496 = vmatpush1.bf16.msra.mxu0 %v1225
    %1497 = vmatprep.subr.bf16.mxu0 %v1232
    %1498 = vmatpush1.bf16.msra.mxu0 %v1231
    %1499 = vmatprep.subr.bf16.mxu0 %v1238
    %1500 = vmatpush1.bf16.msra.mxu0 %v1237
    %1501 = vmatprep.subr.bf16.mxu0 %v1244
    %1502 = vmatpush1.bf16.msra.mxu0 %v1243
    %1503 = vmatprep.subr.bf16.mxu0 %v1250
    %1504 = vmatpush1.bf16.msra.mxu0 %v1249
    %1505 = vmatprep.subr.bf16.mxu0 %v1256
    %1506 = vmatpush1.bf16.msra.mxu0 %v1255
    %1507 = vmatprep.subr.bf16.mxu0 %v1262
    %1508 = vmatpush1.bf16.msra.mxu0 %v1261
    %1509 = vmatprep.subr.bf16.mxu0 %v1268
    %1510 = vmatpush1.bf16.msra.mxu0 %v1267
    %1511 = vmatprep.subr.bf16.mxu0 %v1274
    %1512 = vmatpush1.bf16.msra.mxu0 %v1273
    %1513 = vmatprep.subr.bf16.mxu0 %v1280
    %1514 = vmatpush1.bf16.msra.mxu0 %v1279
    %1515 = vmatprep.subr.bf16.mxu0 %v1286
    %1516 = vmatpush1.bf16.msra.mxu0 %v1285
    %1517 = vmatprep.subr.bf16.mxu0 %v1292
    %1518 = vmatpush1.bf16.msra.mxu0 %v1291
    %1519 = vmatprep.subr.bf16.mxu0 %v1298
    %1520 = vmatpush1.bf16.msra.mxu0 %v1297
    %1521 = vmatprep.subr.bf16.mxu0 %v1304
    %1522 = vmatpush1.bf16.msra.mxu0 %v1303
    %1523 = vmatprep.subr.bf16.mxu0 %v1310
    %1524 = vmatpush1.bf16.msra.mxu0 %v1309
    %1525 = vmatprep.subr.bf16.mxu0 %v1316
    %1526 = vmatpush1.bf16.msra.mxu0 %v1315
    %1527 = vmatprep.mubr.bf16.mxu0 %v836
    %1528 = vmatmul.mubr.bf16.gmra.mrb[0].mxu0 %v835
    %v1529 = vpop.f32.mrb[0].mxu0
    %v1530 = vadd.f32 0.0, %v1529
    %v1531 = vpop.f32.mrb[0].mxu0
    %v1532 = vadd.f32 0.0, %v1531
    %v1533 = vpop.f32.mrb[0].mxu0
    %v1534 = vpop.f32.mrb[0].mxu0
    %1535 = vdwg.mxu0
    %v1536 = vld [vmem:[#allocation3] ss:$8 sm:$0xf]
    %v1537 = vld [vmem:[#allocation3] ss:$8 sm:$0x30]
    %v1538 = vor.u32 %v1536, %v1537
    %v1541 = vcombine.low %v1448, %v1450
    %v1543 = vunpack.c.l.s4 1966171168
    %v1544 = vunpack.c.0.s8 %v1543
    %v1545 = vlaneseq
    %v1546 = vshrl.u32 %v1545, 7
    %v1547 = vsub.s32 %v1544, %v1546
    %v1548 = vrot.slane %v1541, %v1547
    %v1550 = vunpack.c.l.s4 1966171168
    %v1551 = vunpack.c.0.s8 %v1550
    %v1552 = vlaneseq
    %v1553 = vshrl.u32 %v1552, 7
    %v1554 = vsub.s32 %v1551, %v1553
    %v1555 = vrot.slane %v1548, %v1554
    %v1557 = vadd.f32 %v1538, %v1555
    %v1558 = vxor.u32 %v1557, 2147483648
    %v1559 = vmul.f32 %v1558, 1.442695
    %v1560 = vpow.pop %v1559
    %v1561 = vadd.f32 %v1560, 1.0
    %v1562 = vrcp.pop %v1561
    %v1563 = vmul.f32 1.0, %v1562
    %v1565 = vrot.slane %v1538, 2
    %v1569 = vcombine.low %v1489, %v1491
    %v1571 = vunpack.c.l.s4 1966171168
    %v1572 = vunpack.c.0.s8 %v1571
    %v1573 = vlaneseq
    %v1574 = vshrl.u32 %v1573, 7
    %v1575 = vsub.s32 %v1572, %v1574
    %v1576 = vrot.slane %v1569, %v1575
    %v1578 = vunpack.c.l.s4 1966171168
    %v1579 = vunpack.c.0.s8 %v1578
    %v1580 = vlaneseq
    %v1581 = vshrl.u32 %v1580, 7
    %v1582 = vsub.s32 %v1579, %v1581
    %v1583 = vrot.slane %v1576, %v1582
    %v1585 = vadd.f32 %v1565, %v1583
    %v1586 = vxor.u32 %v1585, 2147483648
    %v1587 = vmul.f32 %v1586, 1.442695
    %v1588 = vpow.pop %v1587
    %v1589 = vadd.f32 %v1588, 1.0
    %v1590 = vrcp.pop %v1589
    %v1591 = vmul.f32 1.0, %v1590
    %v1592 = vld [vmem:[%s5] sm:$0x3]
    %v1594 = vlaneseq
    %v1595 = vshrl.u32 %v1594, 7
    %v1596 = vsub.s32 0, %v1595
    %v1597 = vrot.slane %v1592, %v1596
    %v1598 = vlaneseq
    %v1599 = vshrl.u32 %v1598, 7
    %v1600 = vsub.s32 1, %v1599
    %v1601 = vrot.slane %v1592, %v1600
    %v1604 = vadd.f32 %v1530, %v1597
    %v1605 = vadd.f32 %v1532, %v1601
    %v1608 = vcombine.low %v1604, %v1605
    %v1610 = vunpack.c.l.s4 1966171168
    %v1611 = vunpack.c.0.s8 %v1610
    %v1612 = vlaneseq
    %v1613 = vshrl.u32 %v1612, 7
    %v1614 = vsub.s32 %v1611, %v1613
    %v1615 = vrot.slane %v1608, %v1614
    %v1617 = vunpack.c.l.s4 1966171168
    %v1618 = vunpack.c.0.s8 %v1617
    %v1619 = vlaneseq
    %v1620 = vshrl.u32 %v1619, 7
    %v1621 = vsub.s32 %v1618, %v1620
    %v1622 = vrot.slane %v1615, %v1621
    %v1624 = vmul.f32 %v1563, %v1622
    %v1625 = vrot.slane %v1538, 4
    %v1627 = vadd.f32 %v1625, %v1624
    %v1628 = vtanh.pop %v1627
    %v1629 = vsub.f32 %v823, %v1628
    %v1630 = vmul.f32 %v1591, %v1629
    %v1631 = vadd.f32 %v1628, %v1630
    %v1632 = vlaneseq
    %vm1633 = vcmp.ge.s32.totalorder %v1632, 0
    %vm1634 = vcmp.lt.s32.totalorder %v1632, 256
    %vm1635 = vmand %vm1633, %vm1634
    %1636 = vst.msk [vmem:[#allocation9] ss:$8 sm:$0x3] %vm1635, %v1631
    %1637 = vst.msk [vmem:[#allocation9] ss:$8 sm:$0x0] %vm1635, %v1631
    %v1639 = vlaneseq
    %v1640 = vshrl.u32 %v1639, 7
    %v1641 = vsub.s32 0, %v1640
    %v1642 = vrot.slane %v1631, %v1641
    %v1643 = vlaneseq
    %v1644 = vshrl.u32 %v1643, 7
    %v1645 = vsub.s32 1, %v1644
    %v1646 = vrot.slane %v1631, %v1645
    %v1649 = vpack.c.bf16 %v1642, %v1642
    %v1650 = vpack.c.bf16 %v1646, %v1646
    %v1651 = vld [vmem:[#allocation7] sm:$0xff]
    %v1652 = vld [vmem:[#allocation7 + $0x8] sm:$0xff]
    %v1653 = vld [vmem:[#allocation7 + $0x10] sm:$0xff]
    %v1654 = vld [vmem:[#allocation7 + $0x18] sm:$0xff]
    %v1655 = vld [vmem:[#allocation7 + $0x20] sm:$0xff]
    %v1656 = vld [vmem:[#allocation7 + $0x28] sm:$0xff]
    %v1657 = vld [vmem:[#allocation7 + $0x30] sm:$0xff]
    %v1658 = vld [vmem:[#allocation7 + $0x38] sm:$0xff]
    %v1659 = vld [vmem:[#allocation7 + $0x40] sm:$0xff]
    %v1660 = vld [vmem:[#allocation7 + $0x48] sm:$0xff]
    %v1661 = vld [vmem:[#allocation7 + $0x50] sm:$0xff]
    %v1662 = vld [vmem:[#allocation7 + $0x58] sm:$0xff]
    %v1663 = vld [vmem:[#allocation7 + $0x60] sm:$0xff]
    %v1664 = vld [vmem:[#allocation7 + $0x68] sm:$0xff]
    %v1665 = vld [vmem:[#allocation7 + $0x70] sm:$0xff]
    %v1666 = vld [vmem:[#allocation7 + $0x78] sm:$0xff]
    %v1667 = vld [vmem:[#allocation7 + $0x80] sm:$0xff]
    %v1668 = vld [vmem:[#allocation7 + $0x88] sm:$0xff]
    %v1669 = vld [vmem:[#allocation7 + $0x90] sm:$0xff]
    %v1670 = vld [vmem:[#allocation7 + $0x98] sm:$0xff]
    %v1671 = vld [vmem:[#allocation7 + $0xa0] sm:$0xff]
    %v1672 = vld [vmem:[#allocation7 + $0xa8] sm:$0xff]
    %v1673 = vld [vmem:[#allocation7 + $0xb0] sm:$0xff]
    %v1674 = vld [vmem:[#allocation7 + $0xb8] sm:$0xff]
    %v1675 = vld [vmem:[#allocation7 + $0xc0] sm:$0xff]
    %v1676 = vld [vmem:[#allocation7 + $0xc8] sm:$0xff]
    %v1677 = vld [vmem:[#allocation7 + $0xd0] sm:$0xff]
    %v1678 = vld [vmem:[#allocation7 + $0xd8] sm:$0xff]
    %v1679 = vld [vmem:[#allocation7 + $0xe0] sm:$0xff]
    %v1680 = vld [vmem:[#allocation7 + $0xe8] sm:$0xff]
    %v1681 = vld [vmem:[#allocation7 + $0xf0] sm:$0xff]
    %v1682 = vld [vmem:[#allocation7 + $0xf8] sm:$0xff]
    %v1683 = vld [vmem:[#allocation7 + $0x100] sm:$0xff]
    %v1684 = vld [vmem:[#allocation7 + $0x108] sm:$0xff]
    %v1685 = vld [vmem:[#allocation7 + $0x110] sm:$0xff]
    %v1686 = vld [vmem:[#allocation7 + $0x118] sm:$0xff]
    %v1687 = vld [vmem:[#allocation7 + $0x120] sm:$0xff]
    %v1688 = vld [vmem:[#allocation7 + $0x128] sm:$0xff]
    %v1689 = vld [vmem:[#allocation7 + $0x130] sm:$0xff]
    %v1690 = vld [vmem:[#allocation7 + $0x138] sm:$0xff]
    %v1691 = vld [vmem:[#allocation7 + $0x140] sm:$0xff]
    %v1692 = vld [vmem:[#allocation7 + $0x148] sm:$0xff]
    %v1693 = vld [vmem:[#allocation7 + $0x150] sm:$0xff]
    %v1694 = vld [vmem:[#allocation7 + $0x158] sm:$0xff]
    %v1695 = vld [vmem:[#allocation7 + $0x160] sm:$0xff]
    %v1696 = vld [vmem:[#allocation7 + $0x168] sm:$0xff]
    %v1697 = vld [vmem:[#allocation7 + $0x170] sm:$0xff]
    %v1698 = vld [vmem:[#allocation7 + $0x178] sm:$0xff]
    %v1699 = vld [vmem:[#allocation7 + $0x180] sm:$0xff]
    %v1700 = vld [vmem:[#allocation7 + $0x188] sm:$0xff]
    %v1701 = vld [vmem:[#allocation7 + $0x190] sm:$0xff]
    %v1702 = vld [vmem:[#allocation7 + $0x198] sm:$0xff]
    %v1703 = vld [vmem:[#allocation7 + $0x1a0] sm:$0xff]
    %v1704 = vld [vmem:[#allocation7 + $0x1a8] sm:$0xff]
    %v1705 = vld [vmem:[#allocation7 + $0x1b0] sm:$0xff]
    %v1706 = vld [vmem:[#allocation7 + $0x1b8] sm:$0xff]
    %v1707 = vld [vmem:[#allocation7 + $0x1c0] sm:$0xff]
    %v1708 = vld [vmem:[#allocation7 + $0x1c8] sm:$0xff]
    %v1709 = vld [vmem:[#allocation7 + $0x1d0] sm:$0xff]
    %v1710 = vld [vmem:[#allocation7 + $0x1d8] sm:$0xff]
    %v1711 = vld [vmem:[#allocation7 + $0x1e0] sm:$0xff]
    %v1712 = vld [vmem:[#allocation7 + $0x1e8] sm:$0xff]
    %v1713 = vld [vmem:[#allocation7 + $0x1f0] sm:$0xff]
    %v1714 = vld [vmem:[#allocation7 + $0x1f8] sm:$0xff]
    %v1715 = vld [vmem:[#allocation7 + $0x200] sm:$0xff]
    %v1716 = vld [vmem:[#allocation7 + $0x208] sm:$0xff]
    %v1717 = vld [vmem:[#allocation7 + $0x210] sm:$0xff]
    %v1718 = vld [vmem:[#allocation7 + $0x218] sm:$0xff]
    %v1719 = vld [vmem:[#allocation7 + $0x220] sm:$0xff]
    %v1720 = vld [vmem:[#allocation7 + $0x228] sm:$0xff]
    %v1721 = vld [vmem:[#allocation7 + $0x230] sm:$0xff]
    %v1722 = vld [vmem:[#allocation7 + $0x238] sm:$0xff]
    %v1723 = vld [vmem:[#allocation7 + $0x240] sm:$0xff]
    %v1724 = vld [vmem:[#allocation7 + $0x248] sm:$0xff]
    %v1725 = vld [vmem:[#allocation7 + $0x250] sm:$0xff]
    %v1726 = vld [vmem:[#allocation7 + $0x258] sm:$0xff]
    %v1727 = vld [vmem:[#allocation7 + $0x260] sm:$0xff]
    %v1728 = vld [vmem:[#allocation7 + $0x268] sm:$0xff]
    %v1729 = vld [vmem:[#allocation7 + $0x270] sm:$0xff]
    %v1730 = vld [vmem:[#allocation7 + $0x278] sm:$0xff]
    %v1731 = vld [vmem:[#allocation7 + $0x280] sm:$0xff]
    %v1732 = vld [vmem:[#allocation7 + $0x288] sm:$0xff]
    %v1733 = vld [vmem:[#allocation7 + $0x290] sm:$0xff]
    %v1734 = vld [vmem:[#allocation7 + $0x298] sm:$0xff]
    %v1735 = vld [vmem:[#allocation7 + $0x2a0] sm:$0xff]
    %v1736 = vld [vmem:[#allocation7 + $0x2a8] sm:$0xff]
    %v1737 = vld [vmem:[#allocation7 + $0x2b0] sm:$0xff]
    %v1738 = vld [vmem:[#allocation7 + $0x2b8] sm:$0xff]
    %v1739 = vld [vmem:[#allocation7 + $0x2c0] sm:$0xff]
    %v1740 = vld [vmem:[#allocation7 + $0x2c8] sm:$0xff]
    %v1741 = vld [vmem:[#allocation7 + $0x2d0] sm:$0xff]
    %v1742 = vld [vmem:[#allocation7 + $0x2d8] sm:$0xff]
    %v1743 = vld [vmem:[#allocation7 + $0x2e0] sm:$0xff]
    %v1744 = vld [vmem:[#allocation7 + $0x2e8] sm:$0xff]
    %v1745 = vld [vmem:[#allocation7 + $0x2f0] sm:$0xff]
    %v1746 = vld [vmem:[#allocation7 + $0x2f8] sm:$0xff]
    %v1843 = vunpack.c.l.b16 %v1651
    %v1844 = vunpack.c.h.b16 %v1651
    %v1845 = vunpack.c.l.b16 %v1652
    %v1846 = vunpack.c.h.b16 %v1652
    %v1847 = vunpack.c.l.b16 %v1653
    %v1848 = vunpack.c.h.b16 %v1653
    %v1849 = vunpack.c.l.b16 %v1654
    %v1850 = vunpack.c.h.b16 %v1654
    %v1851 = vunpack.c.l.b16 %v1655
    %v1852 = vunpack.c.h.b16 %v1655
    %v1853 = vunpack.c.l.b16 %v1656
    %v1854 = vunpack.c.h.b16 %v1656
    %v1855 = vunpack.c.l.b16 %v1657
    %v1856 = vunpack.c.h.b16 %v1657
    %v1857 = vunpack.c.l.b16 %v1658
    %v1858 = vunpack.c.h.b16 %v1658
    %v1859 = vunpack.c.l.b16 %v1659
    %v1860 = vunpack.c.h.b16 %v1659
    %v1861 = vunpack.c.l.b16 %v1660
    %v1862 = vunpack.c.h.b16 %v1660
    %v1863 = vunpack.c.l.b16 %v1661
    %v1864 = vunpack.c.h.b16 %v1661
    %v1865 = vunpack.c.l.b16 %v1662
    %v1866 = vunpack.c.h.b16 %v1662
    %v1867 = vunpack.c.l.b16 %v1663
    %v1868 = vunpack.c.h.b16 %v1663
    %v1869 = vunpack.c.l.b16 %v1664
    %v1870 = vunpack.c.h.b16 %v1664
    %v1871 = vunpack.c.l.b16 %v1665
    %v1872 = vunpack.c.h.b16 %v1665
    %v1873 = vunpack.c.l.b16 %v1666
    %v1874 = vunpack.c.h.b16 %v1666
    %v1875 = vunpack.c.l.b16 %v1667
    %v1876 = vunpack.c.h.b16 %v1667
    %v1877 = vunpack.c.l.b16 %v1668
    %v1878 = vunpack.c.h.b16 %v1668
    %v1879 = vunpack.c.l.b16 %v1669
    %v1880 = vunpack.c.h.b16 %v1669
    %v1881 = vunpack.c.l.b16 %v1670
    %v1882 = vunpack.c.h.b16 %v1670
    %v1883 = vunpack.c.l.b16 %v1671
    %v1884 = vunpack.c.h.b16 %v1671
    %v1885 = vunpack.c.l.b16 %v1672
    %v1886 = vunpack.c.h.b16 %v1672
    %v1887 = vunpack.c.l.b16 %v1673
    %v1888 = vunpack.c.h.b16 %v1673
    %v1889 = vunpack.c.l.b16 %v1674
    %v1890 = vunpack.c.h.b16 %v1674
    %v1891 = vunpack.c.l.b16 %v1675
    %v1892 = vunpack.c.h.b16 %v1675
    %v1893 = vunpack.c.l.b16 %v1676
    %v1894 = vunpack.c.h.b16 %v1676
    %v1895 = vunpack.c.l.b16 %v1677
    %v1896 = vunpack.c.h.b16 %v1677
    %v1897 = vunpack.c.l.b16 %v1678
    %v1898 = vunpack.c.h.b16 %v1678
    %v1899 = vunpack.c.l.b16 %v1679
    %v1900 = vunpack.c.h.b16 %v1679
    %v1901 = vunpack.c.l.b16 %v1680
    %v1902 = vunpack.c.h.b16 %v1680
    %v1903 = vunpack.c.l.b16 %v1681
    %v1904 = vunpack.c.h.b16 %v1681
    %v1905 = vunpack.c.l.b16 %v1682
    %v1906 = vunpack.c.h.b16 %v1682
    %v1907 = vunpack.c.l.b16 %v1683
    %v1908 = vunpack.c.h.b16 %v1683
    %v1909 = vunpack.c.l.b16 %v1684
    %v1910 = vunpack.c.h.b16 %v1684
    %v1911 = vunpack.c.l.b16 %v1685
    %v1912 = vunpack.c.h.b16 %v1685
    %v1913 = vunpack.c.l.b16 %v1686
    %v1914 = vunpack.c.h.b16 %v1686
    %v1915 = vunpack.c.l.b16 %v1687
    %v1916 = vunpack.c.h.b16 %v1687
    %v1917 = vunpack.c.l.b16 %v1688
    %v1918 = vunpack.c.h.b16 %v1688
    %v1919 = vunpack.c.l.b16 %v1689
    %v1920 = vunpack.c.h.b16 %v1689
    %v1921 = vunpack.c.l.b16 %v1690
    %v1922 = vunpack.c.h.b16 %v1690
    %v1923 = vunpack.c.l.b16 %v1691
    %v1924 = vunpack.c.h.b16 %v1691
    %v1925 = vunpack.c.l.b16 %v1692
    %v1926 = vunpack.c.h.b16 %v1692
    %v1927 = vunpack.c.l.b16 %v1693
    %v1928 = vunpack.c.h.b16 %v1693
    %v1929 = vunpack.c.l.b16 %v1694
    %v1930 = vunpack.c.h.b16 %v1694
    %v1931 = vunpack.c.l.b16 %v1695
    %v1932 = vunpack.c.h.b16 %v1695
    %v1933 = vunpack.c.l.b16 %v1696
    %v1934 = vunpack.c.h.b16 %v1696
    %v1935 = vunpack.c.l.b16 %v1697
    %v1936 = vunpack.c.h.b16 %v1697
    %v1937 = vunpack.c.l.b16 %v1698
    %v1938 = vunpack.c.h.b16 %v1698
    %v1939 = vunpack.c.l.b16 %v1699
    %v1940 = vunpack.c.h.b16 %v1699
    %v1941 = vunpack.c.l.b16 %v1700
    %v1942 = vunpack.c.h.b16 %v1700
    %v1943 = vunpack.c.l.b16 %v1701
    %v1944 = vunpack.c.h.b16 %v1701
    %v1945 = vunpack.c.l.b16 %v1702
    %v1946 = vunpack.c.h.b16 %v1702
    %v1947 = vunpack.c.l.b16 %v1703
    %v1948 = vunpack.c.h.b16 %v1703
    %v1949 = vunpack.c.l.b16 %v1704
    %v1950 = vunpack.c.h.b16 %v1704
    %v1951 = vunpack.c.l.b16 %v1705
    %v1952 = vunpack.c.h.b16 %v1705
    %v1953 = vunpack.c.l.b16 %v1706
    %v1954 = vunpack.c.h.b16 %v1706
    %v1955 = vunpack.c.l.b16 %v1707
    %v1956 = vunpack.c.h.b16 %v1707
    %v1957 = vunpack.c.l.b16 %v1708
    %v1958 = vunpack.c.h.b16 %v1708
    %v1959 = vunpack.c.l.b16 %v1709
    %v1960 = vunpack.c.h.b16 %v1709
    %v1961 = vunpack.c.l.b16 %v1710
    %v1962 = vunpack.c.h.b16 %v1710
    %v1963 = vunpack.c.l.b16 %v1711
    %v1964 = vunpack.c.h.b16 %v1711
    %v1965 = vunpack.c.l.b16 %v1712
    %v1966 = vunpack.c.h.b16 %v1712
    %v1967 = vunpack.c.l.b16 %v1713
    %v1968 = vunpack.c.h.b16 %v1713
    %v1969 = vunpack.c.l.b16 %v1714
    %v1970 = vunpack.c.h.b16 %v1714
    %v1971 = vunpack.c.l.b16 %v1715
    %v1972 = vunpack.c.h.b16 %v1715
    %v1973 = vunpack.c.l.b16 %v1716
    %v1974 = vunpack.c.h.b16 %v1716
    %v1975 = vunpack.c.l.b16 %v1717
    %v1976 = vunpack.c.h.b16 %v1717
    %v1977 = vunpack.c.l.b16 %v1718
    %v1978 = vunpack.c.h.b16 %v1718
    %v1979 = vunpack.c.l.b16 %v1719
    %v1980 = vunpack.c.h.b16 %v1719
    %v1981 = vunpack.c.l.b16 %v1720
    %v1982 = vunpack.c.h.b16 %v1720
    %v1983 = vunpack.c.l.b16 %v1721
    %v1984 = vunpack.c.h.b16 %v1721
    %v1985 = vunpack.c.l.b16 %v1722
    %v1986 = vunpack.c.h.b16 %v1722
    %v1987 = vunpack.c.l.b16 %v1723
    %v1988 = vunpack.c.h.b16 %v1723
    %v1989 = vunpack.c.l.b16 %v1724
    %v1990 = vunpack.c.h.b16 %v1724
    %v1991 = vunpack.c.l.b16 %v1725
    %v1992 = vunpack.c.h.b16 %v1725
    %v1993 = vunpack.c.l.b16 %v1726
    %v1994 = vunpack.c.h.b16 %v1726
    %v1995 = vunpack.c.l.b16 %v1727
    %v1996 = vunpack.c.h.b16 %v1727
    %v1997 = vunpack.c.l.b16 %v1728
    %v1998 = vunpack.c.h.b16 %v1728
    %v1999 = vunpack.c.l.b16 %v1729
    %v2000 = vunpack.c.h.b16 %v1729
    %v2001 = vunpack.c.l.b16 %v1730
    %v2002 = vunpack.c.h.b16 %v1730
    %v2003 = vunpack.c.l.b16 %v1731
    %v2004 = vunpack.c.h.b16 %v1731
    %v2005 = vunpack.c.l.b16 %v1732
    %v2006 = vunpack.c.h.b16 %v1732
    %v2007 = vunpack.c.l.b16 %v1733
    %v2008 = vunpack.c.h.b16 %v1733
    %v2009 = vunpack.c.l.b16 %v1734
    %v2010 = vunpack.c.h.b16 %v1734
    %v2011 = vunpack.c.l.b16 %v1735
    %v2012 = vunpack.c.h.b16 %v1735
    %v2013 = vunpack.c.l.b16 %v1736
    %v2014 = vunpack.c.h.b16 %v1736
    %v2015 = vunpack.c.l.b16 %v1737
    %v2016 = vunpack.c.h.b16 %v1737
    %v2017 = vunpack.c.l.b16 %v1738
    %v2018 = vunpack.c.h.b16 %v1738
    %v2019 = vunpack.c.l.b16 %v1739
    %v2020 = vunpack.c.h.b16 %v1739
    %v2021 = vunpack.c.l.b16 %v1740
    %v2022 = vunpack.c.h.b16 %v1740
    %v2023 = vunpack.c.l.b16 %v1741
    %v2024 = vunpack.c.h.b16 %v1741
    %v2025 = vunpack.c.l.b16 %v1742
    %v2026 = vunpack.c.h.b16 %v1742
    %v2027 = vunpack.c.l.b16 %v1743
    %v2028 = vunpack.c.h.b16 %v1743
    %v2029 = vunpack.c.l.b16 %v1744
    %v2030 = vunpack.c.h.b16 %v1744
    %v2031 = vunpack.c.l.b16 %v1745
    %v2032 = vunpack.c.h.b16 %v1745
    %v2033 = vunpack.c.l.b16 %v1746
    %v2034 = vunpack.c.h.b16 %v1746
    %v2035 = vpack.c.b16 %v1849, %v1843
    %v2036 = vpack.c.b16 %v1850, %v1844
    %v2037 = vpack.c.b16 %v1851, %v1845
    %v2038 = vpack.c.b16 %v1852, %v1846
    %v2039 = vpack.c.b16 %v1853, %v1847
    %v2040 = vpack.c.b16 %v1854, %v1848
    %v2041 = vpack.c.b16 %v1861, %v1855
    %v2042 = vpack.c.b16 %v1862, %v1856
    %v2043 = vpack.c.b16 %v1863, %v1857
    %v2044 = vpack.c.b16 %v1864, %v1858
    %v2045 = vpack.c.b16 %v1865, %v1859
    %v2046 = vpack.c.b16 %v1866, %v1860
    %v2047 = vpack.c.b16 %v1873, %v1867
    %v2048 = vpack.c.b16 %v1874, %v1868
    %v2049 = vpack.c.b16 %v1875, %v1869
    %v2050 = vpack.c.b16 %v1876, %v1870
    %v2051 = vpack.c.b16 %v1877, %v1871
    %v2052 = vpack.c.b16 %v1878, %v1872
    %v2053 = vpack.c.b16 %v1885, %v1879
    %v2054 = vpack.c.b16 %v1886, %v1880
    %v2055 = vpack.c.b16 %v1887, %v1881
    %v2056 = vpack.c.b16 %v1888, %v1882
    %v2057 = vpack.c.b16 %v1889, %v1883
    %v2058 = vpack.c.b16 %v1890, %v1884
    %v2059 = vpack.c.b16 %v1897, %v1891
    %v2060 = vpack.c.b16 %v1898, %v1892
    %v2061 = vpack.c.b16 %v1899, %v1893
    %v2062 = vpack.c.b16 %v1900, %v1894
    %v2063 = vpack.c.b16 %v1901, %v1895
    %v2064 = vpack.c.b16 %v1902, %v1896
    %v2065 = vpack.c.b16 %v1909, %v1903
    %v2066 = vpack.c.b16 %v1910, %v1904
    %v2067 = vpack.c.b16 %v1911, %v1905
    %v2068 = vpack.c.b16 %v1912, %v1906
    %v2069 = vpack.c.b16 %v1913, %v1907
    %v2070 = vpack.c.b16 %v1914, %v1908
    %v2071 = vpack.c.b16 %v1921, %v1915
    %v2072 = vpack.c.b16 %v1922, %v1916
    %v2073 = vpack.c.b16 %v1923, %v1917
    %v2074 = vpack.c.b16 %v1924, %v1918
    %v2075 = vpack.c.b16 %v1925, %v1919
    %v2076 = vpack.c.b16 %v1926, %v1920
    %v2077 = vpack.c.b16 %v1933, %v1927
    %v2078 = vpack.c.b16 %v1934, %v1928
    %v2079 = vpack.c.b16 %v1935, %v1929
    %v2080 = vpack.c.b16 %v1936, %v1930
    %v2081 = vpack.c.b16 %v1937, %v1931
    %v2082 = vpack.c.b16 %v1938, %v1932
    %v2083 = vpack.c.b16 %v1945, %v1939
    %v2084 = vpack.c.b16 %v1946, %v1940
    %v2085 = vpack.c.b16 %v1947, %v1941
    %v2086 = vpack.c.b16 %v1948, %v1942
    %v2087 = vpack.c.b16 %v1949, %v1943
    %v2088 = vpack.c.b16 %v1950, %v1944
    %v2089 = vpack.c.b16 %v1957, %v1951
    %v2090 = vpack.c.b16 %v1958, %v1952
    %v2091 = vpack.c.b16 %v1959, %v1953
    %v2092 = vpack.c.b16 %v1960, %v1954
    %v2093 = vpack.c.b16 %v1961, %v1955
    %v2094 = vpack.c.b16 %v1962, %v1956
    %v2095 = vpack.c.b16 %v1969, %v1963
    %v2096 = vpack.c.b16 %v1970, %v1964
    %v2097 = vpack.c.b16 %v1971, %v1965
    %v2098 = vpack.c.b16 %v1972, %v1966
    %v2099 = vpack.c.b16 %v1973, %v1967
    %v2100 = vpack.c.b16 %v1974, %v1968
    %v2101 = vpack.c.b16 %v1981, %v1975
    %v2102 = vpack.c.b16 %v1982, %v1976
    %v2103 = vpack.c.b16 %v1983, %v1977
    %v2104 = vpack.c.b16 %v1984, %v1978
    %v2105 = vpack.c.b16 %v1985, %v1979
    %v2106 = vpack.c.b16 %v1986, %v1980
    %v2107 = vpack.c.b16 %v1993, %v1987
    %v2108 = vpack.c.b16 %v1994, %v1988
    %v2109 = vpack.c.b16 %v1995, %v1989
    %v2110 = vpack.c.b16 %v1996, %v1990
    %v2111 = vpack.c.b16 %v1997, %v1991
    %v2112 = vpack.c.b16 %v1998, %v1992
    %v2113 = vpack.c.b16 %v2005, %v1999
    %v2114 = vpack.c.b16 %v2006, %v2000
    %v2115 = vpack.c.b16 %v2007, %v2001
    %v2116 = vpack.c.b16 %v2008, %v2002
    %v2117 = vpack.c.b16 %v2009, %v2003
    %v2118 = vpack.c.b16 %v2010, %v2004
    %v2119 = vpack.c.b16 %v2017, %v2011
    %v2120 = vpack.c.b16 %v2018, %v2012
    %v2121 = vpack.c.b16 %v2019, %v2013
    %v2122 = vpack.c.b16 %v2020, %v2014
    %v2123 = vpack.c.b16 %v2021, %v2015
    %v2124 = vpack.c.b16 %v2022, %v2016
    %v2125 = vpack.c.b16 %v2029, %v2023
    %v2126 = vpack.c.b16 %v2030, %v2024
    %v2127 = vpack.c.b16 %v2031, %v2025
    %v2128 = vpack.c.b16 %v2032, %v2026
    %v2129 = vpack.c.b16 %v2033, %v2027
    %v2130 = vpack.c.b16 %v2034, %v2028
    %2227 = vmatprep.subr.bf16.mxu0 %v2036
    %2228 = vmatpush1.bf16.msra.mxu0 %v2035
    %2229 = vmatprep.subr.bf16.mxu0 %v2042
    %2230 = vmatpush1.bf16.msra.mxu0 %v2041
    %2231 = vmatprep.subr.bf16.mxu0 %v2048
    %2232 = vmatpush1.bf16.msra.mxu0 %v2047
    %2233 = vmatprep.subr.bf16.mxu0 %v2054
    %2234 = vmatpush1.bf16.msra.mxu0 %v2053
    %2235 = vmatprep.subr.bf16.mxu0 %v2060
    %2236 = vmatpush1.bf16.msra.mxu0 %v2059
    %2237 = vmatprep.subr.bf16.mxu0 %v2066
    %2238 = vmatpush1.bf16.msra.mxu0 %v2065
    %2239 = vmatprep.subr.bf16.mxu0 %v2072
    %2240 = vmatpush1.bf16.msra.mxu0 %v2071
    %2241 = vmatprep.subr.bf16.mxu0 %v2078
    %2242 = vmatpush1.bf16.msra.mxu0 %v2077
    %2243 = vmatprep.subr.bf16.mxu0 %v2084
    %2244 = vmatpush1.bf16.msra.mxu0 %v2083
    %2245 = vmatprep.subr.bf16.mxu0 %v2090
    %2246 = vmatpush1.bf16.msra.mxu0 %v2089
    %2247 = vmatprep.subr.bf16.mxu0 %v2096
    %2248 = vmatpush1.bf16.msra.mxu0 %v2095
    %2249 = vmatprep.subr.bf16.mxu0 %v2102
    %2250 = vmatpush1.bf16.msra.mxu0 %v2101
    %2251 = vmatprep.subr.bf16.mxu0 %v2108
    %2252 = vmatpush1.bf16.msra.mxu0 %v2107
    %2253 = vmatprep.subr.bf16.mxu0 %v2114
    %2254 = vmatpush1.bf16.msra.mxu0 %v2113
    %2255 = vmatprep.subr.bf16.mxu0 %v2120
    %2256 = vmatpush1.bf16.msra.mxu0 %v2119
    %2257 = vmatprep.subr.bf16.mxu0 %v2126
    %2258 = vmatpush1.bf16.msra.mxu0 %v2125
    %2259 = vmatprep.mubr.bf16.mxu0 %v1650
    %2260 = vmatmul.mubr.bf16.gmra.mrb[0].mxu0 %v1649
    %v2261 = vpop.f32.mrb[0].mxu0
    %v2262 = vadd.f32 0.0, %v2261
    %v2263 = vpop.f32.mrb[0].mxu0
    %v2264 = vadd.f32 0.0, %v2263
    %v2265 = vpop.f32.mrb[0].mxu0
    %v2266 = vpop.f32.mrb[0].mxu0
    %2267 = vdwg.mxu0
    %2268 = vmatprep.subr.bf16.mxu0 %v2038
    %2269 = vmatpush1.bf16.msra.mxu0 %v2037
    %2270 = vmatprep.subr.bf16.mxu0 %v2044
    %2271 = vmatpush1.bf16.msra.mxu0 %v2043
    %2272 = vmatprep.subr.bf16.mxu0 %v2050
    %2273 = vmatpush1.bf16.msra.mxu0 %v2049
    %2274 = vmatprep.subr.bf16.mxu0 %v2056
    %2275 = vmatpush1.bf16.msra.mxu0 %v2055
    %2276 = vmatprep.subr.bf16.mxu0 %v2062
    %2277 = vmatpush1.bf16.msra.mxu0 %v2061
    %2278 = vmatprep.subr.bf16.mxu0 %v2068
    %2279 = vmatpush1.bf16.msra.mxu0 %v2067
    %2280 = vmatprep.subr.bf16.mxu0 %v2074
    %2281 = vmatpush1.bf16.msra.mxu0 %v2073
    %2282 = vmatprep.subr.bf16.mxu0 %v2080
    %2283 = vmatpush1.bf16.msra.mxu0 %v2079
    %2284 = vmatprep.subr.bf16.mxu0 %v2086
    %2285 = vmatpush1.bf16.msra.mxu0 %v2085
    %2286 = vmatprep.subr.bf16.mxu0 %v2092
    %2287 = vmatpush1.bf16.msra.mxu0 %v2091
    %2288 = vmatprep.subr.bf16.mxu0 %v2098
    %2289 = vmatpush1.bf16.msra.mxu0 %v2097
    %2290 = vmatprep.subr.bf16.mxu0 %v2104
    %2291 = vmatpush1.bf16.msra.mxu0 %v2103
    %2292 = vmatprep.subr.bf16.mxu0 %v2110
    %2293 = vmatpush1.bf16.msra.mxu0 %v2109
    %2294 = vmatprep.subr.bf16.mxu0 %v2116
    %2295 = vmatpush1.bf16.msra.mxu0 %v2115
    %2296 = vmatprep.subr.bf16.mxu0 %v2122
    %2297 = vmatpush1.bf16.msra.mxu0 %v2121
    %2298 = vmatprep.subr.bf16.mxu0 %v2128
    %2299 = vmatpush1.bf16.msra.mxu0 %v2127
    %2300 = vmatprep.mubr.bf16.mxu0 %v1650
    %2301 = vmatmul.mubr.bf16.gmra.mrb[0].mxu0 %v1649
    %v2302 = vpop.f32.mrb[0].mxu0
    %v2303 = vadd.f32 0.0, %v2302
    %v2304 = vpop.f32.mrb[0].mxu0
    %v2305 = vadd.f32 0.0, %v2304
    %v2306 = vpop.f32.mrb[0].mxu0
    %v2307 = vpop.f32.mrb[0].mxu0
    %2308 = vdwg.mxu0
    %2309 = vmatprep.subr.bf16.mxu0 %v2040
    %2310 = vmatpush1.bf16.msra.mxu0 %v2039
    %2311 = vmatprep.subr.bf16.mxu0 %v2046
    %2312 = vmatpush1.bf16.msra.mxu0 %v2045
    %2313 = vmatprep.subr.bf16.mxu0 %v2052
    %2314 = vmatpush1.bf16.msra.mxu0 %v2051
    %2315 = vmatprep.subr.bf16.mxu0 %v2058
    %2316 = vmatpush1.bf16.msra.mxu0 %v2057
    %2317 = vmatprep.subr.bf16.mxu0 %v2064
    %2318 = vmatpush1.bf16.msra.mxu0 %v2063
    %2319 = vmatprep.subr.bf16.mxu0 %v2070
    %2320 = vmatpush1.bf16.msra.mxu0 %v2069
    %2321 = vmatprep.subr.bf16.mxu0 %v2076
    %2322 = vmatpush1.bf16.msra.mxu0 %v2075
    %2323 = vmatprep.subr.bf16.mxu0 %v2082
    %2324 = vmatpush1.bf16.msra.mxu0 %v2081
    %2325 = vmatprep.subr.bf16.mxu0 %v2088
    %2326 = vmatpush1.bf16.msra.mxu0 %v2087
    %2327 = vmatprep.subr.bf16.mxu0 %v2094
    %2328 = vmatpush1.bf16.msra.mxu0 %v2093
    %2329 = vmatprep.subr.bf16.mxu0 %v2100
    %2330 = vmatpush1.bf16.msra.mxu0 %v2099
    %2331 = vmatprep.subr.bf16.mxu0 %v2106
    %2332 = vmatpush1.bf16.msra.mxu0 %v2105
    %2333 = vmatprep.subr.bf16.mxu0 %v2112
    %2334 = vmatpush1.bf16.msra.mxu0 %v2111
    %2335 = vmatprep.subr.bf16.mxu0 %v2118
    %2336 = vmatpush1.bf16.msra.mxu0 %v2117
    %2337 = vmatprep.subr.bf16.mxu0 %v2124
    %2338 = vmatpush1.bf16.msra.mxu0 %v2123
    %2339 = vmatprep.subr.bf16.mxu0 %v2130
    %2340 = vmatpush1.bf16.msra.mxu0 %v2129
    %2341 = vmatprep.mubr.bf16.mxu0 %v1650
    %2342 = vmatmul.mubr.bf16.gmra.mrb[0].mxu0 %v1649
    %v2343 = vpop.f32.mrb[0].mxu0
    %v2344 = vadd.f32 0.0, %v2343
    %v2345 = vpop.f32.mrb[0].mxu0
    %v2346 = vadd.f32 0.0, %v2345
    %v2347 = vpop.f32.mrb[0].mxu0
    %v2348 = vpop.f32.mrb[0].mxu0
    %2349 = vdwg.mxu0
    %s2350 = scalar_lea.vmem [#allocation3], 1
    %v2351 = vld [vmem:[%s2350] ss:$8 sm:$0xf]
    %v2352 = vld [vmem:[%s2350] ss:$8 sm:$0x30]
    %v2353 = vor.u32 %v2351, %v2352
    %v2356 = vcombine.low %v2262, %v2264
    %v2358 = vunpack.c.l.s4 1966171168
    %v2359 = vunpack.c.0.s8 %v2358
    %v2360 = vlaneseq
    %v2361 = vshrl.u32 %v2360, 7
    %v2362 = vsub.s32 %v2359, %v2361
    %v2363 = vrot.slane %v2356, %v2362
    %v2365 = vunpack.c.l.s4 1966171168
    %v2366 = vunpack.c.0.s8 %v2365
    %v2367 = vlaneseq
    %v2368 = vshrl.u32 %v2367, 7
    %v2369 = vsub.s32 %v2366, %v2368
    %v2370 = vrot.slane %v2363, %v2369
    %v2372 = vadd.f32 %v2353, %v2370
    %v2373 = vxor.u32 %v2372, 2147483648
    %v2374 = vmul.f32 %v2373, 1.442695
    %v2375 = vpow.pop %v2374
    %v2376 = vadd.f32 %v2375, 1.0
    %v2377 = vrcp.pop %v2376
    %v2378 = vmul.f32 1.0, %v2377
    %v2380 = vrot.slane %v2353, 2
    %v2384 = vcombine.low %v2303, %v2305
    %v2386 = vunpack.c.l.s4 1966171168
    %v2387 = vunpack.c.0.s8 %v2386
    %v2388 = vlaneseq
    %v2389 = vshrl.u32 %v2388, 7
    %v2390 = vsub.s32 %v2387, %v2389
    %v2391 = vrot.slane %v2384, %v2390
    %v2393 = vunpack.c.l.s4 1966171168
    %v2394 = vunpack.c.0.s8 %v2393
    %v2395 = vlaneseq
    %v2396 = vshrl.u32 %v2395, 7
    %v2397 = vsub.s32 %v2394, %v2396
    %v2398 = vrot.slane %v2391, %v2397
    %v2400 = vadd.f32 %v2380, %v2398
    %v2401 = vxor.u32 %v2400, 2147483648
    %v2402 = vmul.f32 %v2401, 1.442695
    %v2403 = vpow.pop %v2402
    %v2404 = vadd.f32 %v2403, 1.0
    %v2405 = vrcp.pop %v2404
    %v2406 = vmul.f32 1.0, %v2405
    %v2407 = vld [vmem:[%s5] sm:$0x3]
    %v2409 = vlaneseq
    %v2410 = vshrl.u32 %v2409, 7
    %v2411 = vsub.s32 0, %v2410
    %v2412 = vrot.slane %v2407, %v2411
    %v2413 = vlaneseq
    %v2414 = vshrl.u32 %v2413, 7
    %v2415 = vsub.s32 1, %v2414
    %v2416 = vrot.slane %v2407, %v2415
    %v2419 = vadd.f32 %v2344, %v2412
    %v2420 = vadd.f32 %v2346, %v2416
    %v2423 = vcombine.low %v2419, %v2420
    %v2425 = vunpack.c.l.s4 1966171168
    %v2426 = vunpack.c.0.s8 %v2425
    %v2427 = vlaneseq
    %v2428 = vshrl.u32 %v2427, 7
    %v2429 = vsub.s32 %v2426, %v2428
    %v2430 = vrot.slane %v2423, %v2429
    %v2432 = vunpack.c.l.s4 1966171168
    %v2433 = vunpack.c.0.s8 %v2432
    %v2434 = vlaneseq
    %v2435 = vshrl.u32 %v2434, 7
    %v2436 = vsub.s32 %v2433, %v2435
    %v2437 = vrot.slane %v2430, %v2436
    %v2439 = vmul.f32 %v2378, %v2437
    %v2440 = vrot.slane %v2353, 4
    %v2442 = vadd.f32 %v2440, %v2439
    %v2443 = vtanh.pop %v2442
    %v2444 = vsub.f32 %v1631, %v2443
    %v2445 = vmul.f32 %v2406, %v2444
    %v2446 = vadd.f32 %v2443, %v2445
    %s2447 = scalar_lea.vmem [#allocation9], 1
    %2448 = vst.msk [vmem:[%s2447] ss:$8 sm:$0x3] %vm1635, %v2446
    %2449 = vst.msk [vmem:[%s2447] ss:$8 sm:$0x0] %vm1635, %v2446
    %v2451 = vlaneseq
    %v2452 = vshrl.u32 %v2451, 7
    %v2453 = vsub.s32 0, %v2452
    %v2454 = vrot.slane %v2446, %v2453
    %v2455 = vlaneseq
    %v2456 = vshrl.u32 %v2455, 7
    %v2457 = vsub.s32 1, %v2456
    %v2458 = vrot.slane %v2446, %v2457
    %v2461 = vpack.c.bf16 %v2454, %v2454
    %v2462 = vpack.c.bf16 %v2458, %v2458
    %v2463 = vld [vmem:[#allocation7] sm:$0xff]
    %v2464 = vld [vmem:[#allocation7 + $0x8] sm:$0xff]
    %v2465 = vld [vmem:[#allocation7 + $0x10] sm:$0xff]
    %v2466 = vld [vmem:[#allocation7 + $0x18] sm:$0xff]
    %v2467 = vld [vmem:[#allocation7 + $0x20] sm:$0xff]
    %v2468 = vld [vmem:[#allocation7 + $0x28] sm:$0xff]
    %v2469 = vld [vmem:[#allocation7 + $0x30] sm:$0xff]
    %v2470 = vld [vmem:[#allocation7 + $0x38] sm:$0xff]
    %v2471 = vld [vmem:[#allocation7 + $0x40] sm:$0xff]
    %v2472 = vld [vmem:[#allocation7 + $0x48] sm:$0xff]
    %v2473 = vld [vmem:[#allocation7 + $0x50] sm:$0xff]
    %v2474 = vld [vmem:[#allocation7 + $0x58] sm:$0xff]
    %v2475 = vld [vmem:[#allocation7 + $0x60] sm:$0xff]
    %v2476 = vld [vmem:[#allocation7 + $0x68] sm:$0xff]
    %v2477 = vld [vmem:[#allocation7 + $0x70] sm:$0xff]
    %v2478 = vld [vmem:[#allocation7 + $0x78] sm:$0xff]
    %v2479 = vld [vmem:[#allocation7 + $0x80] sm:$0xff]
    %v2480 = vld [vmem:[#allocation7 + $0x88] sm:$0xff]
    %v2481 = vld [vmem:[#allocation7 + $0x90] sm:$0xff]
    %v2482 = vld [vmem:[#allocation7 + $0x98] sm:$0xff]
    %v2483 = vld [vmem:[#allocation7 + $0xa0] sm:$0xff]
    %v2484 = vld [vmem:[#allocation7 + $0xa8] sm:$0xff]
    %v2485 = vld [vmem:[#allocation7 + $0xb0] sm:$0xff]
    %v2486 = vld [vmem:[#allocation7 + $0xb8] sm:$0xff]
    %v2487 = vld [vmem:[#allocation7 + $0xc0] sm:$0xff]
    %v2488 = vld [vmem:[#allocation7 + $0xc8] sm:$0xff]
    %v2489 = vld [vmem:[#allocation7 + $0xd0] sm:$0xff]
    %v2490 = vld [vmem:[#allocation7 + $0xd8] sm:$0xff]
    %v2491 = vld [vmem:[#allocation7 + $0xe0] sm:$0xff]
    %v2492 = vld [vmem:[#allocation7 + $0xe8] sm:$0xff]
    %v2493 = vld [vmem:[#allocation7 + $0xf0] sm:$0xff]
    %v2494 = vld [vmem:[#allocation7 + $0xf8] sm:$0xff]
    %v2495 = vld [vmem:[#allocation7 + $0x100] sm:$0xff]
    %v2496 = vld [vmem:[#allocation7 + $0x108] sm:$0xff]
    %v2497 = vld [vmem:[#allocation7 + $0x110] sm:$0xff]
    %v2498 = vld [vmem:[#allocation7 + $0x118] sm:$0xff]
    %v2499 = vld [vmem:[#allocation7 + $0x120] sm:$0xff]
    %v2500 = vld [vmem:[#allocation7 + $0x128] sm:$0xff]
    %v2501 = vld [vmem:[#allocation7 + $0x130] sm:$0xff]
    %v2502 = vld [vmem:[#allocation7 + $0x138] sm:$0xff]
    %v2503 = vld [vmem:[#allocation7 + $0x140] sm:$0xff]
    %v2504 = vld [vmem:[#allocation7 + $0x148] sm:$0xff]
    %v2505 = vld [vmem:[#allocation7 + $0x150] sm:$0xff]
    %v2506 = vld [vmem:[#allocation7 + $0x158] sm:$0xff]
    %v2507 = vld [vmem:[#allocation7 + $0x160] sm:$0xff]
    %v2508 = vld [vmem:[#allocation7 + $0x168] sm:$0xff]
    %v2509 = vld [vmem:[#allocation7 + $0x170] sm:$0xff]
    %v2510 = vld [vmem:[#allocation7 + $0x178] sm:$0xff]
    %v2511 = vld [vmem:[#allocation7 + $0x180] sm:$0xff]
    %v2512 = vld [vmem:[#allocation7 + $0x188] sm:$0xff]
    %v2513 = vld [vmem:[#allocation7 + $0x190] sm:$0xff]
    %v2514 = vld [vmem:[#allocation7 + $0x198] sm:$0xff]
    %v2515 = vld [vmem:[#allocation7 + $0x1a0] sm:$0xff]
    %v2516 = vld [vmem:[#allocation7 + $0x1a8] sm:$0xff]
    %v2517 = vld [vmem:[#allocation7 + $0x1b0] sm:$0xff]
    %v2518 = vld [vmem:[#allocation7 + $0x1b8] sm:$0xff]
    %v2519 = vld [vmem:[#allocation7 + $0x1c0] sm:$0xff]
    %v2520 = vld [vmem:[#allocation7 + $0x1c8] sm:$0xff]
    %v2521 = vld [vmem:[#allocation7 + $0x1d0] sm:$0xff]
    %v2522 = vld [vmem:[#allocation7 + $0x1d8] sm:$0xff]
    %v2523 = vld [vmem:[#allocation7 + $0x1e0] sm:$0xff]
    %v2524 = vld [vmem:[#allocation7 + $0x1e8] sm:$0xff]
    %v2525 = vld [vmem:[#allocation7 + $0x1f0] sm:$0xff]
    %v2526 = vld [vmem:[#allocation7 + $0x1f8] sm:$0xff]
    %v2527 = vld [vmem:[#allocation7 + $0x200] sm:$0xff]
    %v2528 = vld [vmem:[#allocation7 + $0x208] sm:$0xff]
    %v2529 = vld [vmem:[#allocation7 + $0x210] sm:$0xff]
    %v2530 = vld [vmem:[#allocation7 + $0x218] sm:$0xff]
    %v2531 = vld [vmem:[#allocation7 + $0x220] sm:$0xff]
    %v2532 = vld [vmem:[#allocation7 + $0x228] sm:$0xff]
    %v2533 = vld [vmem:[#allocation7 + $0x230] sm:$0xff]
    %v2534 = vld [vmem:[#allocation7 + $0x238] sm:$0xff]
    %v2535 = vld [vmem:[#allocation7 + $0x240] sm:$0xff]
    %v2536 = vld [vmem:[#allocation7 + $0x248] sm:$0xff]
    %v2537 = vld [vmem:[#allocation7 + $0x250] sm:$0xff]
    %v2538 = vld [vmem:[#allocation7 + $0x258] sm:$0xff]
    %v2539 = vld [vmem:[#allocation7 + $0x260] sm:$0xff]
    %v2540 = vld [vmem:[#allocation7 + $0x268] sm:$0xff]
    %v2541 = vld [vmem:[#allocation7 + $0x270] sm:$0xff]
    %v2542 = vld [vmem:[#allocation7 + $0x278] sm:$0xff]
    %v2543 = vld [vmem:[#allocation7 + $0x280] sm:$0xff]
    %v2544 = vld [vmem:[#allocation7 + $0x288] sm:$0xff]
    %v2545 = vld [vmem:[#allocation7 + $0x290] sm:$0xff]
    %v2546 = vld [vmem:[#allocation7 + $0x298] sm:$0xff]
    %v2547 = vld [vmem:[#allocation7 + $0x2a0] sm:$0xff]
    %v2548 = vld [vmem:[#allocation7 + $0x2a8] sm:$0xff]
    %v2549 = vld [vmem:[#allocation7 + $0x2b0] sm:$0xff]
    %v2550 = vld [vmem:[#allocation7 + $0x2b8] sm:$0xff]
    %v2551 = vld [vmem:[#allocation7 + $0x2c0] sm:$0xff]
    %v2552 = vld [vmem:[#allocation7 + $0x2c8] sm:$0xff]
    %v2553 = vld [vmem:[#allocation7 + $0x2d0] sm:$0xff]
    %v2554 = vld [vmem:[#allocation7 + $0x2d8] sm:$0xff]
    %v2555 = vld [vmem:[#allocation7 + $0x2e0] sm:$0xff]
    %v2556 = vld [vmem:[#allocation7 + $0x2e8] sm:$0xff]
    %v2557 = vld [vmem:[#allocation7 + $0x2f0] sm:$0xff]
    %v2558 = vld [vmem:[#allocation7 + $0x2f8] sm:$0xff]
    %v2655 = vunpack.c.l.b16 %v2463
    %v2656 = vunpack.c.h.b16 %v2463
    %v2657 = vunpack.c.l.b16 %v2464
    %v2658 = vunpack.c.h.b16 %v2464
    %v2659 = vunpack.c.l.b16 %v2465
    %v2660 = vunpack.c.h.b16 %v2465
    %v2661 = vunpack.c.l.b16 %v2466
    %v2662 = vunpack.c.h.b16 %v2466
    %v2663 = vunpack.c.l.b16 %v2467
    %v2664 = vunpack.c.h.b16 %v2467
    %v2665 = vunpack.c.l.b16 %v2468
    %v2666 = vunpack.c.h.b16 %v2468
    %v2667 = vunpack.c.l.b16 %v2469
    %v2668 = vunpack.c.h.b16 %v2469
    %v2669 = vunpack.c.l.b16 %v2470
    %v2670 = vunpack.c.h.b16 %v2470
    %v2671 = vunpack.c.l.b16 %v2471
    %v2672 = vunpack.c.h.b16 %v2471
    %v2673 = vunpack.c.l.b16 %v2472
    %v2674 = vunpack.c.h.b16 %v2472
    %v2675 = vunpack.c.l.b16 %v2473
    %v2676 = vunpack.c.h.b16 %v2473
    %v2677 = vunpack.c.l.b16 %v2474
    %v2678 = vunpack.c.h.b16 %v2474
    %v2679 = vunpack.c.l.b16 %v2475
    %v2680 = vunpack.c.h.b16 %v2475
    %v2681 = vunpack.c.l.b16 %v2476
    %v2682 = vunpack.c.h.b16 %v2476
    %v2683 = vunpack.c.l.b16 %v2477
    %v2684 = vunpack.c.h.b16 %v2477
    %v2685 = vunpack.c.l.b16 %v2478
    %v2686 = vunpack.c.h.b16 %v2478
    %v2687 = vunpack.c.l.b16 %v2479
    %v2688 = vunpack.c.h.b16 %v2479
    %v2689 = vunpack.c.l.b16 %v2480
    %v2690 = vunpack.c.h.b16 %v2480
    %v2691 = vunpack.c.l.b16 %v2481
    %v2692 = vunpack.c.h.b16 %v2481
    %v2693 = vunpack.c.l.b16 %v2482
    %v2694 = vunpack.c.h.b16 %v2482
    %v2695 = vunpack.c.l.b16 %v2483
    %v2696 = vunpack.c.h.b16 %v2483
    %v2697 = vunpack.c.l.b16 %v2484
    %v2698 = vunpack.c.h.b16 %v2484
    %v2699 = vunpack.c.l.b16 %v2485
    %v2700 = vunpack.c.h.b16 %v2485
    %v2701 = vunpack.c.l.b16 %v2486
    %v2702 = vunpack.c.h.b16 %v2486
    %v2703 = vunpack.c.l.b16 %v2487
    %v2704 = vunpack.c.h.b16 %v2487
    %v2705 = vunpack.c.l.b16 %v2488
    %v2706 = vunpack.c.h.b16 %v2488
    %v2707 = vunpack.c.l.b16 %v2489
    %v2708 = vunpack.c.h.b16 %v2489
    %v2709 = vunpack.c.l.b16 %v2490
    %v2710 = vunpack.c.h.b16 %v2490
    %v2711 = vunpack.c.l.b16 %v2491
    %v2712 = vunpack.c.h.b16 %v2491
    %v2713 = vunpack.c.l.b16 %v2492
    %v2714 = vunpack.c.h.b16 %v2492
    %v2715 = vunpack.c.l.b16 %v2493
    %v2716 = vunpack.c.h.b16 %v2493
    %v2717 = vunpack.c.l.b16 %v2494
    %v2718 = vunpack.c.h.b16 %v2494
    %v2719 = vunpack.c.l.b16 %v2495
    %v2720 = vunpack.c.h.b16 %v2495
    %v2721 = vunpack.c.l.b16 %v2496
    %v2722 = vunpack.c.h.b16 %v2496
    %v2723 = vunpack.c.l.b16 %v2497
    %v2724 = vunpack.c.h.b16 %v2497
    %v2725 = vunpack.c.l.b16 %v2498
    %v2726 = vunpack.c.h.b16 %v2498
    %v2727 = vunpack.c.l.b16 %v2499
    %v2728 = vunpack.c.h.b16 %v2499
    %v2729 = vunpack.c.l.b16 %v2500
    %v2730 = vunpack.c.h.b16 %v2500
    %v2731 = vunpack.c.l.b16 %v2501
    %v2732 = vunpack.c.h.b16 %v2501
    %v2733 = vunpack.c.l.b16 %v2502
    %v2734 = vunpack.c.h.b16 %v2502
    %v2735 = vunpack.c.l.b16 %v2503
    %v2736 = vunpack.c.h.b16 %v2503
    %v2737 = vunpack.c.l.b16 %v2504
    %v2738 = vunpack.c.h.b16 %v2504
    %v2739 = vunpack.c.l.b16 %v2505
    %v2740 = vunpack.c.h.b16 %v2505
    %v2741 = vunpack.c.l.b16 %v2506
    %v2742 = vunpack.c.h.b16 %v2506
    %v2743 = vunpack.c.l.b16 %v2507
    %v2744 = vunpack.c.h.b16 %v2507
    %v2745 = vunpack.c.l.b16 %v2508
    %v2746 = vunpack.c.h.b16 %v2508
    %v2747 = vunpack.c.l.b16 %v2509
    %v2748 = vunpack.c.h.b16 %v2509
    %v2749 = vunpack.c.l.b16 %v2510
    %v2750 = vunpack.c.h.b16 %v2510
    %v2751 = vunpack.c.l.b16 %v2511
    %v2752 = vunpack.c.h.b16 %v2511
    %v2753 = vunpack.c.l.b16 %v2512
    %v2754 = vunpack.c.h.b16 %v2512
    %v2755 = vunpack.c.l.b16 %v2513
    %v2756 = vunpack.c.h.b16 %v2513
    %v2757 = vunpack.c.l.b16 %v2514
    %v2758 = vunpack.c.h.b16 %v2514
    %v2759 = vunpack.c.l.b16 %v2515
    %v2760 = vunpack.c.h.b16 %v2515
    %v2761 = vunpack.c.l.b16 %v2516
    %v2762 = vunpack.c.h.b16 %v2516
    %v2763 = vunpack.c.l.b16 %v2517
    %v2764 = vunpack.c.h.b16 %v2517
    %v2765 = vunpack.c.l.b16 %v2518
    %v2766 = vunpack.c.h.b16 %v2518
    %v2767 = vunpack.c.l.b16 %v2519
    %v2768 = vunpack.c.h.b16 %v2519
    %v2769 = vunpack.c.l.b16 %v2520
    %v2770 = vunpack.c.h.b16 %v2520
    %v2771 = vunpack.c.l.b16 %v2521
    %v2772 = vunpack.c.h.b16 %v2521
    %v2773 = vunpack.c.l.b16 %v2522
    %v2774 = vunpack.c.h.b16 %v2522
    %v2775 = vunpack.c.l.b16 %v2523
    %v2776 = vunpack.c.h.b16 %v2523
    %v2777 = vunpack.c.l.b16 %v2524
    %v2778 = vunpack.c.h.b16 %v2524
    %v2779 = vunpack.c.l.b16 %v2525
    %v2780 = vunpack.c.h.b16 %v2525
    %v2781 = vunpack.c.l.b16 %v2526
    %v2782 = vunpack.c.h.b16 %v2526
    %v2783 = vunpack.c.l.b16 %v2527
    %v2784 = vunpack.c.h.b16 %v2527
    %v2785 = vunpack.c.l.b16 %v2528
    %v2786 = vunpack.c.h.b16 %v2528
    %v2787 = vunpack.c.l.b16 %v2529
    %v2788 = vunpack.c.h.b16 %v2529
    %v2789 = vunpack.c.l.b16 %v2530
    %v2790 = vunpack.c.h.b16 %v2530
    %v2791 = vunpack.c.l.b16 %v2531
    %v2792 = vunpack.c.h.b16 %v2531
    %v2793 = vunpack.c.l.b16 %v2532
    %v2794 = vunpack.c.h.b16 %v2532
    %v2795 = vunpack.c.l.b16 %v2533
    %v2796 = vunpack.c.h.b16 %v2533
    %v2797 = vunpack.c.l.b16 %v2534
    %v2798 = vunpack.c.h.b16 %v2534
    %v2799 = vunpack.c.l.b16 %v2535
    %v2800 = vunpack.c.h.b16 %v2535
    %v2801 = vunpack.c.l.b16 %v2536
    %v2802 = vunpack.c.h.b16 %v2536
    %v2803 = vunpack.c.l.b16 %v2537
    %v2804 = vunpack.c.h.b16 %v2537
    %v2805 = vunpack.c.l.b16 %v2538
    %v2806 = vunpack.c.h.b16 %v2538
    %v2807 = vunpack.c.l.b16 %v2539
    %v2808 = vunpack.c.h.b16 %v2539
    %v2809 = vunpack.c.l.b16 %v2540
    %v2810 = vunpack.c.h.b16 %v2540
    %v2811 = vunpack.c.l.b16 %v2541
    %v2812 = vunpack.c.h.b16 %v2541
    %v2813 = vunpack.c.l.b16 %v2542
    %v2814 = vunpack.c.h.b16 %v2542
    %v2815 = vunpack.c.l.b16 %v2543
    %v2816 = vunpack.c.h.b16 %v2543
    %v2817 = vunpack.c.l.b16 %v2544
    %v2818 = vunpack.c.h.b16 %v2544
    %v2819 = vunpack.c.l.b16 %v2545
    %v2820 = vunpack.c.h.b16 %v2545
    %v2821 = vunpack.c.l.b16 %v2546
    %v2822 = vunpack.c.h.b16 %v2546
    %v2823 = vunpack.c.l.b16 %v2547
    %v2824 = vunpack.c.h.b16 %v2547
    %v2825 = vunpack.c.l.b16 %v2548
    %v2826 = vunpack.c.h.b16 %v2548
    %v2827 = vunpack.c.l.b16 %v2549
    %v2828 = vunpack.c.h.b16 %v2549
    %v2829 = vunpack.c.l.b16 %v2550
    %v2830 = vunpack.c.h.b16 %v2550
    %v2831 = vunpack.c.l.b16 %v2551
    %v2832 = vunpack.c.h.b16 %v2551
    %v2833 = vunpack.c.l.b16 %v2552
    %v2834 = vunpack.c.h.b16 %v2552
    %v2835 = vunpack.c.l.b16 %v2553
    %v2836 = vunpack.c.h.b16 %v2553
    %v2837 = vunpack.c.l.b16 %v2554
    %v2838 = vunpack.c.h.b16 %v2554
    %v2839 = vunpack.c.l.b16 %v2555
    %v2840 = vunpack.c.h.b16 %v2555
    %v2841 = vunpack.c.l.b16 %v2556
    %v2842 = vunpack.c.h.b16 %v2556
    %v2843 = vunpack.c.l.b16 %v2557
    %v2844 = vunpack.c.h.b16 %v2557
    %v2845 = vunpack.c.l.b16 %v2558
    %v2846 = vunpack.c.h.b16 %v2558
    %v2847 = vpack.c.b16 %v2661, %v2655
    %v2848 = vpack.c.b16 %v2662, %v2656
    %v2849 = vpack.c.b16 %v2663, %v2657
    %v2850 = vpack.c.b16 %v2664, %v2658
    %v2851 = vpack.c.b16 %v2665, %v2659
    %v2852 = vpack.c.b16 %v2666, %v2660
    %v2853 = vpack.c.b16 %v2673, %v2667
    %v2854 = vpack.c.b16 %v2674, %v2668
    %v2855 = vpack.c.b16 %v2675, %v2669
    %v2856 = vpack.c.b16 %v2676, %v2670
    %v2857 = vpack.c.b16 %v2677, %v2671
    %v2858 = vpack.c.b16 %v2678, %v2672
    %v2859 = vpack.c.b16 %v2685, %v2679
    %v2860 = vpack.c.b16 %v2686, %v2680
    %v2861 = vpack.c.b16 %v2687, %v2681
    %v2862 = vpack.c.b16 %v2688, %v2682
    %v2863 = vpack.c.b16 %v2689, %v2683
    %v2864 = vpack.c.b16 %v2690, %v2684
    %v2865 = vpack.c.b16 %v2697, %v2691
    %v2866 = vpack.c.b16 %v2698, %v2692
    %v2867 = vpack.c.b16 %v2699, %v2693
    %v2868 = vpack.c.b16 %v2700, %v2694
    %v2869 = vpack.c.b16 %v2701, %v2695
    %v2870 = vpack.c.b16 %v2702, %v2696
    %v2871 = vpack.c.b16 %v2709, %v2703
    %v2872 = vpack.c.b16 %v2710, %v2704
    %v2873 = vpack.c.b16 %v2711, %v2705
    %v2874 = vpack.c.b16 %v2712, %v2706
    %v2875 = vpack.c.b16 %v2713, %v2707
    %v2876 = vpack.c.b16 %v2714, %v2708
    %v2877 = vpack.c.b16 %v2721, %v2715
    %v2878 = vpack.c.b16 %v2722, %v2716
    %v2879 = vpack.c.b16 %v2723, %v2717
    %v2880 = vpack.c.b16 %v2724, %v2718
    %v2881 = vpack.c.b16 %v2725, %v2719
    %v2882 = vpack.c.b16 %v2726, %v2720
    %v2883 = vpack.c.b16 %v2733, %v2727
    %v2884 = vpack.c.b16 %v2734, %v2728
    %v2885 = vpack.c.b16 %v2735, %v2729
    %v2886 = vpack.c.b16 %v2736, %v2730
    %v2887 = vpack.c.b16 %v2737, %v2731
    %v2888 = vpack.c.b16 %v2738, %v2732
    %v2889 = vpack.c.b16 %v2745, %v2739
    %v2890 = vpack.c.b16 %v2746, %v2740
    %v2891 = vpack.c.b16 %v2747, %v2741
    %v2892 = vpack.c.b16 %v2748, %v2742
    %v2893 = vpack.c.b16 %v2749, %v2743
    %v2894 = vpack.c.b16 %v2750, %v2744
    %v2895 = vpack.c.b16 %v2757, %v2751
    %v2896 = vpack.c.b16 %v2758, %v2752
    %v2897 = vpack.c.b16 %v2759, %v2753
    %v2898 = vpack.c.b16 %v2760, %v2754
    %v2899 = vpack.c.b16 %v2761, %v2755
    %v2900 = vpack.c.b16 %v2762, %v2756
    %v2901 = vpack.c.b16 %v2769, %v2763
    %v2902 = vpack.c.b16 %v2770, %v2764
    %v2903 = vpack.c.b16 %v2771, %v2765
    %v2904 = vpack.c.b16 %v2772, %v2766
    %v2905 = vpack.c.b16 %v2773, %v2767
    %v2906 = vpack.c.b16 %v2774, %v2768
    %v2907 = vpack.c.b16 %v2781, %v2775
    %v2908 = vpack.c.b16 %v2782, %v2776
    %v2909 = vpack.c.b16 %v2783, %v2777
    %v2910 = vpack.c.b16 %v2784, %v2778
    %v2911 = vpack.c.b16 %v2785, %v2779
    %v2912 = vpack.c.b16 %v2786, %v2780
    %v2913 = vpack.c.b16 %v2793, %v2787
    %v2914 = vpack.c.b16 %v2794, %v2788
    %v2915 = vpack.c.b16 %v2795, %v2789
    %v2916 = vpack.c.b16 %v2796, %v2790
    %v2917 = vpack.c.b16 %v2797, %v2791
    %v2918 = vpack.c.b16 %v2798, %v2792
    %v2919 = vpack.c.b16 %v2805, %v2799
    %v2920 = vpack.c.b16 %v2806, %v2800
    %v2921 = vpack.c.b16 %v2807, %v2801
    %v2922 = vpack.c.b16 %v2808, %v2802
    %v2923 = vpack.c.b16 %v2809, %v2803
    %v2924 = vpack.c.b16 %v2810, %v2804
    %v2925 = vpack.c.b16 %v2817, %v2811
    %v2926 = vpack.c.b16 %v2818, %v2812
    %v2927 = vpack.c.b16 %v2819, %v2813
    %v2928 = vpack.c.b16 %v2820, %v2814
    %v2929 = vpack.c.b16 %v2821, %v2815
    %v2930 = vpack.c.b16 %v2822, %v2816
    %v2931 = vpack.c.b16 %v2829, %v2823
    %v2932 = vpack.c.b16 %v2830, %v2824
    %v2933 = vpack.c.b16 %v2831, %v2825
    %v2934 = vpack.c.b16 %v2832, %v2826
    %v2935 = vpack.c.b16 %v2833, %v2827
    %v2936 = vpack.c.b16 %v2834, %v2828
    %v2937 = vpack.c.b16 %v2841, %v2835
    %v2938 = vpack.c.b16 %v2842, %v2836
    %v2939 = vpack.c.b16 %v2843, %v2837
    %v2940 = vpack.c.b16 %v2844, %v2838
    %v2941 = vpack.c.b16 %v2845, %v2839
    %v2942 = vpack.c.b16 %v2846, %v2840
    %3039 = vmatprep.subr.bf16.mxu0 %v2848
    %3040 = vmatpush1.bf16.msra.mxu0 %v2847
    %3041 = vmatprep.subr.bf16.mxu0 %v2854
    %3042 = vmatpush1.bf16.msra.mxu0 %v2853
    %3043 = vmatprep.subr.bf16.mxu0 %v2860
    %3044 = vmatpush1.bf16.msra.mxu0 %v2859
    %3045 = vmatprep.subr.bf16.mxu0 %v2866
    %3046 = vmatpush1.bf16.msra.mxu0 %v2865
    %3047 = vmatprep.subr.bf16.mxu0 %v2872
    %3048 = vmatpush1.bf16.msra.mxu0 %v2871
    %3049 = vmatprep.subr.bf16.mxu0 %v2878
    %3050 = vmatpush1.bf16.msra.mxu0 %v2877
    %3051 = vmatprep.subr.bf16.mxu0 %v2884
    %3052 = vmatpush1.bf16.msra.mxu0 %v2883
    %3053 = vmatprep.subr.bf16.mxu0 %v2890
    %3054 = vmatpush1.bf16.msra.mxu0 %v2889
    %3055 = vmatprep.subr.bf16.mxu0 %v2896
    %3056 = vmatpush1.bf16.msra.mxu0 %v2895
    %3057 = vmatprep.subr.bf16.mxu0 %v2902
    %3058 = vmatpush1.bf16.msra.mxu0 %v2901
    %3059 = vmatprep.subr.bf16.mxu0 %v2908
    %3060 = vmatpush1.bf16.msra.mxu0 %v2907
    %3061 = vmatprep.subr.bf16.mxu0 %v2914
    %3062 = vmatpush1.bf16.msra.mxu0 %v2913
    %3063 = vmatprep.subr.bf16.mxu0 %v2920
    %3064 = vmatpush1.bf16.msra.mxu0 %v2919
    %3065 = vmatprep.subr.bf16.mxu0 %v2926
    %3066 = vmatpush1.bf16.msra.mxu0 %v2925
    %3067 = vmatprep.subr.bf16.mxu0 %v2932
    %3068 = vmatpush1.bf16.msra.mxu0 %v2931
    %3069 = vmatprep.subr.bf16.mxu0 %v2938
    %3070 = vmatpush1.bf16.msra.mxu0 %v2937
    %3071 = vmatprep.mubr.bf16.mxu0 %v2462
    %3072 = vmatmul.mubr.bf16.gmra.mrb[0].mxu0 %v2461
    %v3073 = vpop.f32.mrb[0].mxu0
    %v3074 = vadd.f32 0.0, %v3073
    %v3075 = vpop.f32.mrb[0].mxu0
    %v3076 = vadd.f32 0.0, %v3075
    %v3077 = vpop.f32.mrb[0].mxu0
    %v3078 = vpop.f32.mrb[0].mxu0
    %3079 = vdwg.mxu0
    %3080 = vmatprep.subr.bf16.mxu0 %v2850
    %3081 = vmatpush1.bf16.msra.mxu0 %v2849
    %3082 = vmatprep.subr.bf16.mxu0 %v2856
    %3083 = vmatpush1.bf16.msra.mxu0 %v2855
    %3084 = vmatprep.subr.bf16.mxu0 %v2862
    %3085 = vmatpush1.bf16.msra.mxu0 %v2861
    %3086 = vmatprep.subr.bf16.mxu0 %v2868
    %3087 = vmatpush1.bf16.msra.mxu0 %v2867
    %3088 = vmatprep.subr.bf16.mxu0 %v2874
    %3089 = vmatpush1.bf16.msra.mxu0 %v2873
    %3090 = vmatprep.subr.bf16.mxu0 %v2880
    %3091 = vmatpush1.bf16.msra.mxu0 %v2879
    %3092 = vmatprep.subr.bf16.mxu0 %v2886
    %3093 = vmatpush1.bf16.msra.mxu0 %v2885
    %3094 = vmatprep.subr.bf16.mxu0 %v2892
    %3095 = vmatpush1.bf16.msra.mxu0 %v2891
    %3096 = vmatprep.subr.bf16.mxu0 %v2898
    %3097 = vmatpush1.bf16.msra.mxu0 %v2897
    %3098 = vmatprep.subr.bf16.mxu0 %v2904
    %3099 = vmatpush1.bf16.msra.mxu0 %v2903
    %3100 = vmatprep.subr.bf16.mxu0 %v2910
    %3101 = vmatpush1.bf16.msra.mxu0 %v2909
    %3102 = vmatprep.subr.bf16.mxu0 %v2916
    %3103 = vmatpush1.bf16.msra.mxu0 %v2915
    %3104 = vmatprep.subr.bf16.mxu0 %v2922
    %3105 = vmatpush1.bf16.msra.mxu0 %v2921
    %3106 = vmatprep.subr.bf16.mxu0 %v2928
    %3107 = vmatpush1.bf16.msra.mxu0 %v2927
    %3108 = vmatprep.subr.bf16.mxu0 %v2934
    %3109 = vmatpush1.bf16.msra.mxu0 %v2933
    %3110 = vmatprep.subr.bf16.mxu0 %v2940
    %3111 = vmatpush1.bf16.msra.mxu0 %v2939
    %3112 = vmatprep.mubr.bf16.mxu0 %v2462
    %3113 = vmatmul.mubr.bf16.gmra.mrb[0].mxu0 %v2461
    %v3114 = vpop.f32.mrb[0].mxu0
    %v3115 = vadd.f32 0.0, %v3114
    %v3116 = vpop.f32.mrb[0].mxu0
    %v3117 = vadd.f32 0.0, %v3116
    %v3118 = vpop.f32.mrb[0].mxu0
    %v3119 = vpop.f32.mrb[0].mxu0
    %3120 = vdwg.mxu0
    %3121 = vmatprep.subr.bf16.mxu0 %v2852
    %3122 = vmatpush1.bf16.msra.mxu0 %v2851
    %3123 = vmatprep.subr.bf16.mxu0 %v2858
    %3124 = vmatpush1.bf16.msra.mxu0 %v2857
    %3125 = vmatprep.subr.bf16.mxu0 %v2864
    %3126 = vmatpush1.bf16.msra.mxu0 %v2863
    %3127 = vmatprep.subr.bf16.mxu0 %v2870
    %3128 = vmatpush1.bf16.msra.mxu0 %v2869
    %3129 = vmatprep.subr.bf16.mxu0 %v2876
    %3130 = vmatpush1.bf16.msra.mxu0 %v2875
    %3131 = vmatprep.subr.bf16.mxu0 %v2882
    %3132 = vmatpush1.bf16.msra.mxu0 %v2881
    %3133 = vmatprep.subr.bf16.mxu0 %v2888
    %3134 = vmatpush1.bf16.msra.mxu0 %v2887
    %3135 = vmatprep.subr.bf16.mxu0 %v2894
    %3136 = vmatpush1.bf16.msra.mxu0 %v2893
    %3137 = vmatprep.subr.bf16.mxu0 %v2900
    %3138 = vmatpush1.bf16.msra.mxu0 %v2899
    %3139 = vmatprep.subr.bf16.mxu0 %v2906
    %3140 = vmatpush1.bf16.msra.mxu0 %v2905
    %3141 = vmatprep.subr.bf16.mxu0 %v2912
    %3142 = vmatpush1.bf16.msra.mxu0 %v2911
    %3143 = vmatprep.subr.bf16.mxu0 %v2918
    %3144 = vmatpush1.bf16.msra.mxu0 %v2917
    %3145 = vmatprep.subr.bf16.mxu0 %v2924
    %3146 = vmatpush1.bf16.msra.mxu0 %v2923
    %3147 = vmatprep.subr.bf16.mxu0 %v2930
    %3148 = vmatpush1.bf16.msra.mxu0 %v2929
    %3149 = vmatprep.subr.bf16.mxu0 %v2936
    %3150 = vmatpush1.bf16.msra.mxu0 %v2935
    %3151 = vmatprep.subr.bf16.mxu0 %v2942
    %3152 = vmatpush1.bf16.msra.mxu0 %v2941
    %3153 = vmatprep.mubr.bf16.mxu0 %v2462
    %3154 = vmatmul.mubr.bf16.gmra.mrb[0].mxu0 %v2461
    %v3155 = vpop.f32.mrb[0].mxu0
    %v3156 = vadd.f32 0.0, %v3155
    %v3157 = vpop.f32.mrb[0].mxu0
    %v3158 = vadd.f32 0.0, %v3157
    %v3159 = vpop.f32.mrb[0].mxu0
    %v3160 = vpop.f32.mrb[0].mxu0
    %3161 = vdwg.mxu0
    %s3162 = scalar_lea.vmem [#allocation3], 2
    %v3163 = vld [vmem:[%s3162] ss:$8 sm:$0xf]
    %v3164 = vld [vmem:[%s3162] ss:$8 sm:$0x30]
    %v3165 = vor.u32 %v3163, %v3164
    %v3168 = vcombine.low %v3074, %v3076
    %v3170 = vunpack.c.l.s4 1966171168
    %v3171 = vunpack.c.0.s8 %v3170
    %v3172 = vlaneseq
    %v3173 = vshrl.u32 %v3172, 7
    %v3174 = vsub.s32 %v3171, %v3173
    %v3175 = vrot.slane %v3168, %v3174
    %v3177 = vunpack.c.l.s4 1966171168
    %v3178 = vunpack.c.0.s8 %v3177
    %v3179 = vlaneseq
    %v3180 = vshrl.u32 %v3179, 7
    %v3181 = vsub.s32 %v3178, %v3180
    %v3182 = vrot.slane %v3175, %v3181
    %v3184 = vadd.f32 %v3165, %v3182
    %v3185 = vxor.u32 %v3184, 2147483648
    %v3186 = vmul.f32 %v3185, 1.442695
    %v3187 = vpow.pop %v3186
    %v3188 = vadd.f32 %v3187, 1.0
    %v3189 = vrcp.pop %v3188
    %v3190 = vmul.f32 1.0, %v3189
    %v3192 = vrot.slane %v3165, 2
    %v3196 = vcombine.low %v3115, %v3117
    %v3198 = vunpack.c.l.s4 1966171168
    %v3199 = vunpack.c.0.s8 %v3198
    %v3200 = vlaneseq
    %v3201 = vshrl.u32 %v3200, 7
    %v3202 = vsub.s32 %v3199, %v3201
    %v3203 = vrot.slane %v3196, %v3202
    %v3205 = vunpack.c.l.s4 1966171168
    %v3206 = vunpack.c.0.s8 %v3205
    %v3207 = vlaneseq
    %v3208 = vshrl.u32 %v3207, 7
    %v3209 = vsub.s32 %v3206, %v3208
    %v3210 = vrot.slane %v3203, %v3209
    %v3212 = vadd.f32 %v3192, %v3210
    %v3213 = vxor.u32 %v3212, 2147483648
    %v3214 = vmul.f32 %v3213, 1.442695
    %v3215 = vpow.pop %v3214
    %v3216 = vadd.f32 %v3215, 1.0
    %v3217 = vrcp.pop %v3216
    %v3218 = vmul.f32 1.0, %v3217
    %v3219 = vld [vmem:[%s5] sm:$0x3]
    %v3221 = vlaneseq
    %v3222 = vshrl.u32 %v3221, 7
    %v3223 = vsub.s32 0, %v3222
    %v3224 = vrot.slane %v3219, %v3223
    %v3225 = vlaneseq
    %v3226 = vshrl.u32 %v3225, 7
    %v3227 = vsub.s32 1, %v3226
    %v3228 = vrot.slane %v3219, %v3227
    %v3231 = vadd.f32 %v3156, %v3224
    %v3232 = vadd.f32 %v3158, %v3228
    %v3235 = vcombine.low %v3231, %v3232
    %v3237 = vunpack.c.l.s4 1966171168
    %v3238 = vunpack.c.0.s8 %v3237
    %v3239 = vlaneseq
    %v3240 = vshrl.u32 %v3239, 7
    %v3241 = vsub.s32 %v3238, %v3240
    %v3242 = vrot.slane %v3235, %v3241
    %v3244 = vunpack.c.l.s4 1966171168
    %v3245 = vunpack.c.0.s8 %v3244
    %v3246 = vlaneseq
    %v3247 = vshrl.u32 %v3246, 7
    %v3248 = vsub.s32 %v3245, %v3247
    %v3249 = vrot.slane %v3242, %v3248
    %v3251 = vmul.f32 %v3190, %v3249
    %v3252 = vrot.slane %v3165, 4
    %v3254 = vadd.f32 %v3252, %v3251
    %v3255 = vtanh.pop %v3254
    %v3256 = vsub.f32 %v2446, %v3255
    %v3257 = vmul.f32 %v3218, %v3256
    %v3258 = vadd.f32 %v3255, %v3257
    %s3259 = scalar_lea.vmem [#allocation9], 2
    %3260 = vst.msk [vmem:[%s3259] ss:$8 sm:$0x3] %vm1635, %v3258
    %3261 = vst.msk [vmem:[%s3259] ss:$8 sm:$0x0] %vm1635, %v3258
    %v3263 = vlaneseq
    %v3264 = vshrl.u32 %v3263, 7
    %v3265 = vsub.s32 0, %v3264
    %v3266 = vrot.slane %v3258, %v3265
    %v3267 = vlaneseq
    %v3268 = vshrl.u32 %v3267, 7
    %v3269 = vsub.s32 1, %v3268
    %v3270 = vrot.slane %v3258, %v3269
    %v3273 = vpack.c.bf16 %v3266, %v3266
    %v3274 = vpack.c.bf16 %v3270, %v3270
    %v3275 = vld [vmem:[#allocation7] sm:$0xff]
    %v3276 = vld [vmem:[#allocation7 + $0x8] sm:$0xff]
    %v3277 = vld [vmem:[#allocation7 + $0x10] sm:$0xff]
    %v3278 = vld [vmem:[#allocation7 + $0x18] sm:$0xff]
    %v3279 = vld [vmem:[#allocation7 + $0x20] sm:$0xff]
    %v3280 = vld [vmem:[#allocation7 + $0x28] sm:$0xff]
    %v3281 = vld [vmem:[#allocation7 + $0x30] sm:$0xff]
    %v3282 = vld [vmem:[#allocation7 + $0x38] sm:$0xff]
    %v3283 = vld [vmem:[#allocation7 + $0x40] sm:$0xff]
    %v3284 = vld [vmem:[#allocation7 + $0x48] sm:$0xff]
    %v3285 = vld [vmem:[#allocation7 + $0x50] sm:$0xff]
    %v3286 = vld [vmem:[#allocation7 + $0x58] sm:$0xff]
    %v3287 = vld [vmem:[#allocation7 + $0x60] sm:$0xff]
    %v3288 = vld [vmem:[#allocation7 + $0x68] sm:$0xff]
    %v3289 = vld [vmem:[#allocation7 + $0x70] sm:$0xff]
    %v3290 = vld [vmem:[#allocation7 + $0x78] sm:$0xff]
    %v3291 = vld [vmem:[#allocation7 + $0x80] sm:$0xff]
    %v3292 = vld [vmem:[#allocation7 + $0x88] sm:$0xff]
    %v3293 = vld [vmem:[#allocation7 + $0x90] sm:$0xff]
    %v3294 = vld [vmem:[#allocation7 + $0x98] sm:$0xff]
    %v3295 = vld [vmem:[#allocation7 + $0xa0] sm:$0xff]
    %v3296 = vld [vmem:[#allocation7 + $0xa8] sm:$0xff]
    %v3297 = vld [vmem:[#allocation7 + $0xb0] sm:$0xff]
    %v3298 = vld [vmem:[#allocation7 + $0xb8] sm:$0xff]
    %v3299 = vld [vmem:[#allocation7 + $0xc0] sm:$0xff]
    %v3300 = vld [vmem:[#allocation7 + $0xc8] sm:$0xff]
    %v3301 = vld [vmem:[#allocation7 + $0xd0] sm:$0xff]
    %v3302 = vld [vmem:[#allocation7 + $0xd8] sm:$0xff]
    %v3303 = vld [vmem:[#allocation7 + $0xe0] sm:$0xff]
    %v3304 = vld [vmem:[#allocation7 + $0xe8] sm:$0xff]
    %v3305 = vld [vmem:[#allocation7 + $0xf0] sm:$0xff]
    %v3306 = vld [vmem:[#allocation7 + $0xf8] sm:$0xff]
    %v3307 = vld [vmem:[#allocation7 + $0x100] sm:$0xff]
    %v3308 = vld [vmem:[#allocation7 + $0x108] sm:$0xff]
    %v3309 = vld [vmem:[#allocation7 + $0x110] sm:$0xff]
    %v3310 = vld [vmem:[#allocation7 + $0x118] sm:$0xff]
    %v3311 = vld [vmem:[#allocation7 + $0x120] sm:$0xff]
    %v3312 = vld [vmem:[#allocation7 + $0x128] sm:$0xff]
    %v3313 = vld [vmem:[#allocation7 + $0x130] sm:$0xff]
    %v3314 = vld [vmem:[#allocation7 + $0x138] sm:$0xff]
    %v3315 = vld [vmem:[#allocation7 + $0x140] sm:$0xff]
    %v3316 = vld [vmem:[#allocation7 + $0x148] sm:$0xff]
    %v3317 = vld [vmem:[#allocation7 + $0x150] sm:$0xff]
    %v3318 = vld [vmem:[#allocation7 + $0x158] sm:$0xff]
    %v3319 = vld [vmem:[#allocation7 + $0x160] sm:$0xff]
    %v3320 = vld [vmem:[#allocation7 + $0x168] sm:$0xff]
    %v3321 = vld [vmem:[#allocation7 + $0x170] sm:$0xff]
    %v3322 = vld [vmem:[#allocation7 + $0x178] sm:$0xff]
    %v3323 = vld [vmem:[#allocation7 + $0x180] sm:$0xff]
    %v3324 = vld [vmem:[#allocation7 + $0x188] sm:$0xff]
    %v3325 = vld [vmem:[#allocation7 + $0x190] sm:$0xff]
    %v3326 = vld [vmem:[#allocation7 + $0x198] sm:$0xff]
    %v3327 = vld [vmem:[#allocation7 + $0x1a0] sm:$0xff]
    %v3328 = vld [vmem:[#allocation7 + $0x1a8] sm:$0xff]
    %v3329 = vld [vmem:[#allocation7 + $0x1b0] sm:$0xff]
    %v3330 = vld [vmem:[#allocation7 + $0x1b8] sm:$0xff]
    %v3331 = vld [vmem:[#allocation7 + $0x1c0] sm:$0xff]
    %v3332 = vld [vmem:[#allocation7 + $0x1c8] sm:$0xff]
    %v3333 = vld [vmem:[#allocation7 + $0x1d0] sm:$0xff]
    %v3334 = vld [vmem:[#allocation7 + $0x1d8] sm:$0xff]
    %v3335 = vld [vmem:[#allocation7 + $0x1e0] sm:$0xff]
    %v3336 = vld [vmem:[#allocation7 + $0x1e8] sm:$0xff]
    %v3337 = vld [vmem:[#allocation7 + $0x1f0] sm:$0xff]
    %v3338 = vld [vmem:[#allocation7 + $0x1f8] sm:$0xff]
    %v3339 = vld [vmem:[#allocation7 + $0x200] sm:$0xff]
    %v3340 = vld [vmem:[#allocation7 + $0x208] sm:$0xff]
    %v3341 = vld [vmem:[#allocation7 + $0x210] sm:$0xff]
    %v3342 = vld [vmem:[#allocation7 + $0x218] sm:$0xff]
    %v3343 = vld [vmem:[#allocation7 + $0x220] sm:$0xff]
    %v3344 = vld [vmem:[#allocation7 + $0x228] sm:$0xff]
    %v3345 = vld [vmem:[#allocation7 + $0x230] sm:$0xff]
    %v3346 = vld [vmem:[#allocation7 + $0x238] sm:$0xff]
    %v3347 = vld [vmem:[#allocation7 + $0x240] sm:$0xff]
    %v3348 = vld [vmem:[#allocation7 + $0x248] sm:$0xff]
    %v3349 = vld [vmem:[#allocation7 + $0x250] sm:$0xff]
    %v3350 = vld [vmem:[#allocation7 + $0x258] sm:$0xff]
    %v3351 = vld [vmem:[#allocation7 + $0x260] sm:$0xff]
    %v3352 = vld [vmem:[#allocation7 + $0x268] sm:$0xff]
    %v3353 = vld [vmem:[#allocation7 + $0x270] sm:$0xff]
    %v3354 = vld [vmem:[#allocation7 + $0x278] sm:$0xff]
    %v3355 = vld [vmem:[#allocation7 + $0x280] sm:$0xff]
    %v3356 = vld [vmem:[#allocation7 + $0x288] sm:$0xff]
    %v3357 = vld [vmem:[#allocation7 + $0x290] sm:$0xff]
    %v3358 = vld [vmem:[#allocation7 + $0x298] sm:$0xff]
    %v3359 = vld [vmem:[#allocation7 + $0x2a0] sm:$0xff]
    %v3360 = vld [vmem:[#allocation7 + $0x2a8] sm:$0xff]
    %v3361 = vld [vmem:[#allocation7 + $0x2b0] sm:$0xff]
    %v3362 = vld [vmem:[#allocation7 + $0x2b8] sm:$0xff]
    %v3363 = vld [vmem:[#allocation7 + $0x2c0] sm:$0xff]
    %v3364 = vld [vmem:[#allocation7 + $0x2c8] sm:$0xff]
    %v3365 = vld [vmem:[#allocation7 + $0x2d0] sm:$0xff]
    %v3366 = vld [vmem:[#allocation7 + $0x2d8] sm:$0xff]
    %v3367 = vld [vmem:[#allocation7 + $0x2e0] sm:$0xff]
    %v3368 = vld [vmem:[#allocation7 + $0x2e8] sm:$0xff]
    %v3369 = vld [vmem:[#allocation7 + $0x2f0] sm:$0xff]
    %v3370 = vld [vmem:[#allocation7 + $0x2f8] sm:$0xff]
    %v3467 = vunpack.c.l.b16 %v3275
    %v3468 = vunpack.c.h.b16 %v3275
    %v3469 = vunpack.c.l.b16 %v3276
    %v3470 = vunpack.c.h.b16 %v3276
    %v3471 = vunpack.c.l.b16 %v3277
    %v3472 = vunpack.c.h.b16 %v3277
    %v3473 = vunpack.c.l.b16 %v3278
    %v3474 = vunpack.c.h.b16 %v3278
    %v3475 = vunpack.c.l.b16 %v3279
    %v3476 = vunpack.c.h.b16 %v3279
    %v3477 = vunpack.c.l.b16 %v3280
    %v3478 = vunpack.c.h.b16 %v3280
    %v3479 = vunpack.c.l.b16 %v3281
    %v3480 = vunpack.c.h.b16 %v3281
    %v3481 = vunpack.c.l.b16 %v3282
    %v3482 = vunpack.c.h.b16 %v3282
    %v3483 = vunpack.c.l.b16 %v3283
    %v3484 = vunpack.c.h.b16 %v3283
    %v3485 = vunpack.c.l.b16 %v3284
    %v3486 = vunpack.c.h.b16 %v3284
    %v3487 = vunpack.c.l.b16 %v3285
    %v3488 = vunpack.c.h.b16 %v3285
    %v3489 = vunpack.c.l.b16 %v3286
    %v3490 = vunpack.c.h.b16 %v3286
    %v3491 = vunpack.c.l.b16 %v3287
    %v3492 = vunpack.c.h.b16 %v3287
    %v3493 = vunpack.c.l.b16 %v3288
    %v3494 = vunpack.c.h.b16 %v3288
    %v3495 = vunpack.c.l.b16 %v3289
    %v3496 = vunpack.c.h.b16 %v3289
    %v3497 = vunpack.c.l.b16 %v3290
    %v3498 = vunpack.c.h.b16 %v3290
    %v3499 = vunpack.c.l.b16 %v3291
    %v3500 = vunpack.c.h.b16 %v3291
    %v3501 = vunpack.c.l.b16 %v3292
    %v3502 = vunpack.c.h.b16 %v3292
    %v3503 = vunpack.c.l.b16 %v3293
    %v3504 = vunpack.c.h.b16 %v3293
    %v3505 = vunpack.c.l.b16 %v3294
    %v3506 = vunpack.c.h.b16 %v3294
    %v3507 = vunpack.c.l.b16 %v3295
    %v3508 = vunpack.c.h.b16 %v3295
    %v3509 = vunpack.c.l.b16 %v3296
    %v3510 = vunpack.c.h.b16 %v3296
    %v3511 = vunpack.c.l.b16 %v3297
    %v3512 = vunpack.c.h.b16 %v3297
    %v3513 = vunpack.c.l.b16 %v3298
    %v3514 = vunpack.c.h.b16 %v3298
    %v3515 = vunpack.c.l.b16 %v3299
    %v3516 = vunpack.c.h.b16 %v3299
    %v3517 = vunpack.c.l.b16 %v3300
    %v3518 = vunpack.c.h.b16 %v3300
    %v3519 = vunpack.c.l.b16 %v3301
    %v3520 = vunpack.c.h.b16 %v3301
    %v3521 = vunpack.c.l.b16 %v3302
    %v3522 = vunpack.c.h.b16 %v3302
    %v3523 = vunpack.c.l.b16 %v3303
    %v3524 = vunpack.c.h.b16 %v3303
    %v3525 = vunpack.c.l.b16 %v3304
    %v3526 = vunpack.c.h.b16 %v3304
    %v3527 = vunpack.c.l.b16 %v3305
    %v3528 = vunpack.c.h.b16 %v3305
    %v3529 = vunpack.c.l.b16 %v3306
    %v3530 = vunpack.c.h.b16 %v3306
    %v3531 = vunpack.c.l.b16 %v3307
    %v3532 = vunpack.c.h.b16 %v3307
    %v3533 = vunpack.c.l.b16 %v3308
    %v3534 = vunpack.c.h.b16 %v3308
    %v3535 = vunpack.c.l.b16 %v3309
    %v3536 = vunpack.c.h.b16 %v3309
    %v3537 = vunpack.c.l.b16 %v3310
    %v3538 = vunpack.c.h.b16 %v3310
    %v3539 = vunpack.c.l.b16 %v3311
    %v3540 = vunpack.c.h.b16 %v3311
    %v3541 = vunpack.c.l.b16 %v3312
    %v3542 = vunpack.c.h.b16 %v3312
    %v3543 = vunpack.c.l.b16 %v3313
    %v3544 = vunpack.c.h.b16 %v3313
    %v3545 = vunpack.c.l.b16 %v3314
    %v3546 = vunpack.c.h.b16 %v3314
    %v3547 = vunpack.c.l.b16 %v3315
    %v3548 = vunpack.c.h.b16 %v3315
    %v3549 = vunpack.c.l.b16 %v3316
    %v3550 = vunpack.c.h.b16 %v3316
    %v3551 = vunpack.c.l.b16 %v3317
    %v3552 = vunpack.c.h.b16 %v3317
    %v3553 = vunpack.c.l.b16 %v3318
    %v3554 = vunpack.c.h.b16 %v3318
    %v3555 = vunpack.c.l.b16 %v3319
    %v3556 = vunpack.c.h.b16 %v3319
    %v3557 = vunpack.c.l.b16 %v3320
    %v3558 = vunpack.c.h.b16 %v3320
    %v3559 = vunpack.c.l.b16 %v3321
    %v3560 = vunpack.c.h.b16 %v3321
    %v3561 = vunpack.c.l.b16 %v3322
    %v3562 = vunpack.c.h.b16 %v3322
    %v3563 = vunpack.c.l.b16 %v3323
    %v3564 = vunpack.c.h.b16 %v3323
    %v3565 = vunpack.c.l.b16 %v3324
    %v3566 = vunpack.c.h.b16 %v3324
    %v3567 = vunpack.c.l.b16 %v3325
    %v3568 = vunpack.c.h.b16 %v3325
    %v3569 = vunpack.c.l.b16 %v3326
    %v3570 = vunpack.c.h.b16 %v3326
    %v3571 = vunpack.c.l.b16 %v3327
    %v3572 = vunpack.c.h.b16 %v3327
    %v3573 = vunpack.c.l.b16 %v3328
    %v3574 = vunpack.c.h.b16 %v3328
    %v3575 = vunpack.c.l.b16 %v3329
    %v3576 = vunpack.c.h.b16 %v3329
    %v3577 = vunpack.c.l.b16 %v3330
    %v3578 = vunpack.c.h.b16 %v3330
    %v3579 = vunpack.c.l.b16 %v3331
    %v3580 = vunpack.c.h.b16 %v3331
    %v3581 = vunpack.c.l.b16 %v3332
    %v3582 = vunpack.c.h.b16 %v3332
    %v3583 = vunpack.c.l.b16 %v3333
    %v3584 = vunpack.c.h.b16 %v3333
    %v3585 = vunpack.c.l.b16 %v3334
    %v3586 = vunpack.c.h.b16 %v3334
    %v3587 = vunpack.c.l.b16 %v3335
    %v3588 = vunpack.c.h.b16 %v3335
    %v3589 = vunpack.c.l.b16 %v3336
    %v3590 = vunpack.c.h.b16 %v3336
    %v3591 = vunpack.c.l.b16 %v3337
    %v3592 = vunpack.c.h.b16 %v3337
    %v3593 = vunpack.c.l.b16 %v3338
    %v3594 = vunpack.c.h.b16 %v3338
    %v3595 = vunpack.c.l.b16 %v3339
    %v3596 = vunpack.c.h.b16 %v3339
    %v3597 = vunpack.c.l.b16 %v3340
    %v3598 = vunpack.c.h.b16 %v3340
    %v3599 = vunpack.c.l.b16 %v3341
    %v3600 = vunpack.c.h.b16 %v3341
    %v3601 = vunpack.c.l.b16 %v3342
    %v3602 = vunpack.c.h.b16 %v3342
    %v3603 = vunpack.c.l.b16 %v3343
    %v3604 = vunpack.c.h.b16 %v3343
    %v3605 = vunpack.c.l.b16 %v3344
    %v3606 = vunpack.c.h.b16 %v3344
    %v3607 = vunpack.c.l.b16 %v3345
    %v3608 = vunpack.c.h.b16 %v3345
    %v3609 = vunpack.c.l.b16 %v3346
    %v3610 = vunpack.c.h.b16 %v3346
    %v3611 = vunpack.c.l.b16 %v3347
    %v3612 = vunpack.c.h.b16 %v3347
    %v3613 = vunpack.c.l.b16 %v3348
    %v3614 = vunpack.c.h.b16 %v3348
    %v3615 = vunpack.c.l.b16 %v3349
    %v3616 = vunpack.c.h.b16 %v3349
    %v3617 = vunpack.c.l.b16 %v3350
    %v3618 = vunpack.c.h.b16 %v3350
    %v3619 = vunpack.c.l.b16 %v3351
    %v3620 = vunpack.c.h.b16 %v3351
    %v3621 = vunpack.c.l.b16 %v3352
    %v3622 = vunpack.c.h.b16 %v3352
    %v3623 = vunpack.c.l.b16 %v3353
    %v3624 = vunpack.c.h.b16 %v3353
    %v3625 = vunpack.c.l.b16 %v3354
    %v3626 = vunpack.c.h.b16 %v3354
    %v3627 = vunpack.c.l.b16 %v3355
    %v3628 = vunpack.c.h.b16 %v3355
    %v3629 = vunpack.c.l.b16 %v3356
    %v3630 = vunpack.c.h.b16 %v3356
    %v3631 = vunpack.c.l.b16 %v3357
    %v3632 = vunpack.c.h.b16 %v3357
    %v3633 = vunpack.c.l.b16 %v3358
    %v3634 = vunpack.c.h.b16 %v3358
    %v3635 = vunpack.c.l.b16 %v3359
    %v3636 = vunpack.c.h.b16 %v3359
    %v3637 = vunpack.c.l.b16 %v3360
    %v3638 = vunpack.c.h.b16 %v3360
    %v3639 = vunpack.c.l.b16 %v3361
    %v3640 = vunpack.c.h.b16 %v3361
    %v3641 = vunpack.c.l.b16 %v3362
    %v3642 = vunpack.c.h.b16 %v3362
    %v3643 = vunpack.c.l.b16 %v3363
    %v3644 = vunpack.c.h.b16 %v3363
    %v3645 = vunpack.c.l.b16 %v3364
    %v3646 = vunpack.c.h.b16 %v3364
    %v3647 = vunpack.c.l.b16 %v3365
    %v3648 = vunpack.c.h.b16 %v3365
    %v3649 = vunpack.c.l.b16 %v3366
    %v3650 = vunpack.c.h.b16 %v3366
    %v3651 = vunpack.c.l.b16 %v3367
    %v3652 = vunpack.c.h.b16 %v3367
    %v3653 = vunpack.c.l.b16 %v3368
    %v3654 = vunpack.c.h.b16 %v3368
    %v3655 = vunpack.c.l.b16 %v3369
    %v3656 = vunpack.c.h.b16 %v3369
    %v3657 = vunpack.c.l.b16 %v3370
    %v3658 = vunpack.c.h.b16 %v3370
    %v3659 = vpack.c.b16 %v3473, %v3467
    %v3660 = vpack.c.b16 %v3474, %v3468
    %v3661 = vpack.c.b16 %v3475, %v3469
    %v3662 = vpack.c.b16 %v3476, %v3470
    %v3663 = vpack.c.b16 %v3477, %v3471
    %v3664 = vpack.c.b16 %v3478, %v3472
    %v3665 = vpack.c.b16 %v3485, %v3479
    %v3666 = vpack.c.b16 %v3486, %v3480
    %v3667 = vpack.c.b16 %v3487, %v3481
    %v3668 = vpack.c.b16 %v3488, %v3482
    %v3669 = vpack.c.b16 %v3489, %v3483
    %v3670 = vpack.c.b16 %v3490, %v3484
    %v3671 = vpack.c.b16 %v3497, %v3491
    %v3672 = vpack.c.b16 %v3498, %v3492
    %v3673 = vpack.c.b16 %v3499, %v3493
    %v3674 = vpack.c.b16 %v3500, %v3494
    %v3675 = vpack.c.b16 %v3501, %v3495
    %v3676 = vpack.c.b16 %v3502, %v3496
    %v3677 = vpack.c.b16 %v3509, %v3503
    %v3678 = vpack.c.b16 %v3510, %v3504
    %v3679 = vpack.c.b16 %v3511, %v3505
    %v3680 = vpack.c.b16 %v3512, %v3506
    %v3681 = vpack.c.b16 %v3513, %v3507
    %v3682 = vpack.c.b16 %v3514, %v3508
    %v3683 = vpack.c.b16 %v3521, %v3515
    %v3684 = vpack.c.b16 %v3522, %v3516
    %v3685 = vpack.c.b16 %v3523, %v3517
    %v3686 = vpack.c.b16 %v3524, %v3518
    %v3687 = vpack.c.b16 %v3525, %v3519
    %v3688 = vpack.c.b16 %v3526, %v3520
    %v3689 = vpack.c.b16 %v3533, %v3527
    %v3690 = vpack.c.b16 %v3534, %v3528
    %v3691 = vpack.c.b16 %v3535, %v3529
    %v3692 = vpack.c.b16 %v3536, %v3530
    %v3693 = vpack.c.b16 %v3537, %v3531
    %v3694 = vpack.c.b16 %v3538, %v3532
    %v3695 = vpack.c.b16 %v3545, %v3539
    %v3696 = vpack.c.b16 %v3546, %v3540
    %v3697 = vpack.c.b16 %v3547, %v3541
    %v3698 = vpack.c.b16 %v3548, %v3542
    %v3699 = vpack.c.b16 %v3549, %v3543
    %v3700 = vpack.c.b16 %v3550, %v3544
    %v3701 = vpack.c.b16 %v3557, %v3551
    %v3702 = vpack.c.b16 %v3558, %v3552
    %v3703 = vpack.c.b16 %v3559, %v3553
    %v3704 = vpack.c.b16 %v3560, %v3554
    %v3705 = vpack.c.b16 %v3561, %v3555
    %v3706 = vpack.c.b16 %v3562, %v3556
    %v3707 = vpack.c.b16 %v3569, %v3563
    %v3708 = vpack.c.b16 %v3570, %v3564
    %v3709 = vpack.c.b16 %v3571, %v3565
    %v3710 = vpack.c.b16 %v3572, %v3566
    %v3711 = vpack.c.b16 %v3573, %v3567
    %v3712 = vpack.c.b16 %v3574, %v3568
    %v3713 = vpack.c.b16 %v3581, %v3575
    %v3714 = vpack.c.b16 %v3582, %v3576
    %v3715 = vpack.c.b16 %v3583, %v3577
    %v3716 = vpack.c.b16 %v3584, %v3578
    %v3717 = vpack.c.b16 %v3585, %v3579
    %v3718 = vpack.c.b16 %v3586, %v3580
    %v3719 = vpack.c.b16 %v3593, %v3587
    %v3720 = vpack.c.b16 %v3594, %v3588
    %v3721 = vpack.c.b16 %v3595, %v3589
    %v3722 = vpack.c.b16 %v3596, %v3590
    %v3723 = vpack.c.b16 %v3597, %v3591
    %v3724 = vpack.c.b16 %v3598, %v3592
    %v3725 = vpack.c.b16 %v3605, %v3599
    %v3726 = vpack.c.b16 %v3606, %v3600
    %v3727 = vpack.c.b16 %v3607, %v3601
    %v3728 = vpack.c.b16 %v3608, %v3602
    %v3729 = vpack.c.b16 %v3609, %v3603
    %v3730 = vpack.c.b16 %v3610, %v3604
    %v3731 = vpack.c.b16 %v3617, %v3611
    %v3732 = vpack.c.b16 %v3618, %v3612
    %v3733 = vpack.c.b16 %v3619, %v3613
    %v3734 = vpack.c.b16 %v3620, %v3614
    %v3735 = vpack.c.b16 %v3621, %v3615
    %v3736 = vpack.c.b16 %v3622, %v3616
    %v3737 = vpack.c.b16 %v3629, %v3623
    %v3738 = vpack.c.b16 %v3630, %v3624
    %v3739 = vpack.c.b16 %v3631, %v3625
    %v3740 = vpack.c.b16 %v3632, %v3626
    %v3741 = vpack.c.b16 %v3633, %v3627
    %v3742 = vpack.c.b16 %v3634, %v3628
    %v3743 = vpack.c.b16 %v3641, %v3635
    %v3744 = vpack.c.b16 %v3642, %v3636
    %v3745 = vpack.c.b16 %v3643, %v3637
    %v3746 = vpack.c.b16 %v3644, %v3638
    %v3747 = vpack.c.b16 %v3645, %v3639
    %v3748 = vpack.c.b16 %v3646, %v3640
    %v3749 = vpack.c.b16 %v3653, %v3647
    %v3750 = vpack.c.b16 %v3654, %v3648
    %v3751 = vpack.c.b16 %v3655, %v3649
    %v3752 = vpack.c.b16 %v3656, %v3650
    %v3753 = vpack.c.b16 %v3657, %v3651
    %v3754 = vpack.c.b16 %v3658, %v3652
    %3851 = vmatprep.subr.bf16.mxu0 %v3660
    %3852 = vmatpush1.bf16.msra.mxu0 %v3659
    %3853 = vmatprep.subr.bf16.mxu0 %v3666
    %3854 = vmatpush1.bf16.msra.mxu0 %v3665
    %3855 = vmatprep.subr.bf16.mxu0 %v3672
    %3856 = vmatpush1.bf16.msra.mxu0 %v3671
    %3857 = vmatprep.subr.bf16.mxu0 %v3678
    %3858 = vmatpush1.bf16.msra.mxu0 %v3677
    %3859 = vmatprep.subr.bf16.mxu0 %v3684
    %3860 = vmatpush1.bf16.msra.mxu0 %v3683
    %3861 = vmatprep.subr.bf16.mxu0 %v3690
    %3862 = vmatpush1.bf16.msra.mxu0 %v3689
    %3863 = vmatprep.subr.bf16.mxu0 %v3696
    %3864 = vmatpush1.bf16.msra.mxu0 %v3695
    %3865 = vmatprep.subr.bf16.mxu0 %v3702
    %3866 = vmatpush1.bf16.msra.mxu0 %v3701
    %3867 = vmatprep.subr.bf16.mxu0 %v3708
    %3868 = vmatpush1.bf16.msra.mxu0 %v3707
    %3869 = vmatprep.subr.bf16.mxu0 %v3714
    %3870 = vmatpush1.bf16.msra.mxu0 %v3713
    %3871 = vmatprep.subr.bf16.mxu0 %v3720
    %3872 = vmatpush1.bf16.msra.mxu0 %v3719
    %3873 = vmatprep.subr.bf16.mxu0 %v3726
    %3874 = vmatpush1.bf16.msra.mxu0 %v3725
    %3875 = vmatprep.subr.bf16.mxu0 %v3732
    %3876 = vmatpush1.bf16.msra.mxu0 %v3731
    %3877 = vmatprep.subr.bf16.mxu0 %v3738
    %3878 = vmatpush1.bf16.msra.mxu0 %v3737
    %3879 = vmatprep.subr.bf16.mxu0 %v3744
    %3880 = vmatpush1.bf16.msra.mxu0 %v3743
    %3881 = vmatprep.subr.bf16.mxu0 %v3750
    %3882 = vmatpush1.bf16.msra.mxu0 %v3749
    %3883 = vmatprep.mubr.bf16.mxu0 %v3274
    %3884 = vmatmul.mubr.bf16.gmra.mrb[0].mxu0 %v3273
    %v3885 = vpop.f32.mrb[0].mxu0
    %v3886 = vadd.f32 0.0, %v3885
    %v3887 = vpop.f32.mrb[0].mxu0
    %v3888 = vadd.f32 0.0, %v3887
    %v3889 = vpop.f32.mrb[0].mxu0
    %v3890 = vpop.f32.mrb[0].mxu0
    %3891 = vdwg.mxu0
    %3892 = vmatprep.subr.bf16.mxu0 %v3662
    %3893 = vmatpush1.bf16.msra.mxu0 %v3661
    %3894 = vmatprep.subr.bf16.mxu0 %v3668
    %3895 = vmatpush1.bf16.msra.mxu0 %v3667
    %3896 = vmatprep.subr.bf16.mxu0 %v3674
    %3897 = vmatpush1.bf16.msra.mxu0 %v3673
    %3898 = vmatprep.subr.bf16.mxu0 %v3680
    %3899 = vmatpush1.bf16.msra.mxu0 %v3679
    %3900 = vmatprep.subr.bf16.mxu0 %v3686
    %3901 = vmatpush1.bf16.msra.mxu0 %v3685
    %3902 = vmatprep.subr.bf16.mxu0 %v3692
    %3903 = vmatpush1.bf16.msra.mxu0 %v3691
    %3904 = vmatprep.subr.bf16.mxu0 %v3698
    %3905 = vmatpush1.bf16.msra.mxu0 %v3697
    %3906 = vmatprep.subr.bf16.mxu0 %v3704
    %3907 = vmatpush1.bf16.msra.mxu0 %v3703
    %3908 = vmatprep.subr.bf16.mxu0 %v3710
    %3909 = vmatpush1.bf16.msra.mxu0 %v3709
    %3910 = vmatprep.subr.bf16.mxu0 %v3716
    %3911 = vmatpush1.bf16.msra.mxu0 %v3715
    %3912 = vmatprep.subr.bf16.mxu0 %v3722
    %3913 = vmatpush1.bf16.msra.mxu0 %v3721
    %3914 = vmatprep.subr.bf16.mxu0 %v3728
    %3915 = vmatpush1.bf16.msra.mxu0 %v3727
    %3916 = vmatprep.subr.bf16.mxu0 %v3734
    %3917 = vmatpush1.bf16.msra.mxu0 %v3733
    %3918 = vmatprep.subr.bf16.mxu0 %v3740
    %3919 = vmatpush1.bf16.msra.mxu0 %v3739
    %3920 = vmatprep.subr.bf16.mxu0 %v3746
    %3921 = vmatpush1.bf16.msra.mxu0 %v3745
    %3922 = vmatprep.subr.bf16.mxu0 %v3752
    %3923 = vmatpush1.bf16.msra.mxu0 %v3751
    %3924 = vmatprep.mubr.bf16.mxu0 %v3274
    %3925 = vmatmul.mubr.bf16.gmra.mrb[0].mxu0 %v3273
    %v3926 = vpop.f32.mrb[0].mxu0
    %v3927 = vadd.f32 0.0, %v3926
    %v3928 = vpop.f32.mrb[0].mxu0
    %v3929 = vadd.f32 0.0, %v3928
    %v3930 = vpop.f32.mrb[0].mxu0
    %v3931 = vpop.f32.mrb[0].mxu0
    %3932 = vdwg.mxu0
    %3933 = vmatprep.subr.bf16.mxu0 %v3664
    %3934 = vmatpush1.bf16.msra.mxu0 %v3663
    %3935 = vmatprep.subr.bf16.mxu0 %v3670
    %3936 = vmatpush1.bf16.msra.mxu0 %v3669
    %3937 = vmatprep.subr.bf16.mxu0 %v3676
    %3938 = vmatpush1.bf16.msra.mxu0 %v3675
    %3939 = vmatprep.subr.bf16.mxu0 %v3682
    %3940 = vmatpush1.bf16.msra.mxu0 %v3681
    %3941 = vmatprep.subr.bf16.mxu0 %v3688
    %3942 = vmatpush1.bf16.msra.mxu0 %v3687
    %3943 = vmatprep.subr.bf16.mxu0 %v3694
    %3944 = vmatpush1.bf16.msra.mxu0 %v3693
    %3945 = vmatprep.subr.bf16.mxu0 %v3700
    %3946 = vmatpush1.bf16.msra.mxu0 %v3699
    %3947 = vmatprep.subr.bf16.mxu0 %v3706
    %3948 = vmatpush1.bf16.msra.mxu0 %v3705
    %3949 = vmatprep.subr.bf16.mxu0 %v3712
    %3950 = vmatpush1.bf16.msra.mxu0 %v3711
    %3951 = vmatprep.subr.bf16.mxu0 %v3718
    %3952 = vmatpush1.bf16.msra.mxu0 %v3717
    %3953 = vmatprep.subr.bf16.mxu0 %v3724
    %3954 = vmatpush1.bf16.msra.mxu0 %v3723
    %3955 = vmatprep.subr.bf16.mxu0 %v3730
    %3956 = vmatpush1.bf16.msra.mxu0 %v3729
    %3957 = vmatprep.subr.bf16.mxu0 %v3736
    %3958 = vmatpush1.bf16.msra.mxu0 %v3735
    %3959 = vmatprep.subr.bf16.mxu0 %v3742
    %3960 = vmatpush1.bf16.msra.mxu0 %v3741
    %3961 = vmatprep.subr.bf16.mxu0 %v3748
    %3962 = vmatpush1.bf16.msra.mxu0 %v3747
    %3963 = vmatprep.subr.bf16.mxu0 %v3754
    %3964 = vmatpush1.bf16.msra.mxu0 %v3753
    %3965 = vmatprep.mubr.bf16.mxu0 %v3274
    %3966 = vmatmul.mubr.bf16.gmra.mrb[0].mxu0 %v3273
    %v3967 = vpop.f32.mrb[0].mxu0
    %v3968 = vadd.f32 0.0, %v3967
    %v3969 = vpop.f32.mrb[0].mxu0
    %v3970 = vadd.f32 0.0, %v3969
    %v3971 = vpop.f32.mrb[0].mxu0
    %v3972 = vpop.f32.mrb[0].mxu0
    %3973 = vdwg.mxu0
    %s3974 = scalar_lea.vmem [#allocation3], 3
    %v3975 = vld [vmem:[%s3974] ss:$8 sm:$0xf]
    %v3976 = vld [vmem:[%s3974] ss:$8 sm:$0x30]
    %v3977 = vor.u32 %v3975, %v3976
    %v3980 = vcombine.low %v3886, %v3888
    %v3982 = vunpack.c.l.s4 1966171168
    %v3983 = vunpack.c.0.s8 %v3982
    %v3984 = vlaneseq
    %v3985 = vshrl.u32 %v3984, 7
    %v3986 = vsub.s32 %v3983, %v3985
    %v3987 = vrot.slane %v3980, %v3986
    %v3989 = vunpack.c.l.s4 1966171168
    %v3990 = vunpack.c.0.s8 %v3989
    %v3991 = vlaneseq
    %v3992 = vshrl.u32 %v3991, 7
    %v3993 = vsub.s32 %v3990, %v3992
    %v3994 = vrot.slane %v3987, %v3993
    %v3996 = vadd.f32 %v3977, %v3994
    %v3997 = vxor.u32 %v3996, 2147483648
    %v3998 = vmul.f32 %v3997, 1.442695
    %v3999 = vpow.pop %v3998
    %v4000 = vadd.f32 %v3999, 1.0
    %v4001 = vrcp.pop %v4000
    %v4002 = vmul.f32 1.0, %v4001
    %v4004 = vrot.slane %v3977, 2
    %v4008 = vcombine.low %v3927, %v3929
    %v4010 = vunpack.c.l.s4 1966171168
    %v4011 = vunpack.c.0.s8 %v4010
    %v4012 = vlaneseq
    %v4013 = vshrl.u32 %v4012, 7
    %v4014 = vsub.s32 %v4011, %v4013
    %v4015 = vrot.slane %v4008, %v4014
    %v4017 = vunpack.c.l.s4 1966171168
    %v4018 = vunpack.c.0.s8 %v4017
    %v4019 = vlaneseq
    %v4020 = vshrl.u32 %v4019, 7
    %v4021 = vsub.s32 %v4018, %v4020
    %v4022 = vrot.slane %v4015, %v4021
    %v4024 = vadd.f32 %v4004, %v4022
    %v4025 = vxor.u32 %v4024, 2147483648
    %v4026 = vmul.f32 %v4025, 1.442695
    %v4027 = vpow.pop %v4026
    %v4028 = vadd.f32 %v4027, 1.0
    %v4029 = vrcp.pop %v4028
    %v4030 = vmul.f32 1.0, %v4029
    %v4031 = vld [vmem:[%s5] sm:$0x3]
    %v4033 = vlaneseq
    %v4034 = vshrl.u32 %v4033, 7
    %v4035 = vsub.s32 0, %v4034
    %v4036 = vrot.slane %v4031, %v4035
    %v4037 = vlaneseq
    %v4038 = vshrl.u32 %v4037, 7
    %v4039 = vsub.s32 1, %v4038
    %v4040 = vrot.slane %v4031, %v4039
    %v4043 = vadd.f32 %v3968, %v4036
    %v4044 = vadd.f32 %v3970, %v4040
    %v4047 = vcombine.low %v4043, %v4044
    %v4049 = vunpack.c.l.s4 1966171168
    %v4050 = vunpack.c.0.s8 %v4049
    %v4051 = vlaneseq
    %v4052 = vshrl.u32 %v4051, 7
    %v4053 = vsub.s32 %v4050, %v4052
    %v4054 = vrot.slane %v4047, %v4053
    %v4056 = vunpack.c.l.s4 1966171168
    %v4057 = vunpack.c.0.s8 %v4056
    %v4058 = vlaneseq
    %v4059 = vshrl.u32 %v4058, 7
    %v4060 = vsub.s32 %v4057, %v4059
    %v4061 = vrot.slane %v4054, %v4060
    %v4063 = vmul.f32 %v4002, %v4061
    %v4064 = vrot.slane %v3977, 4
    %v4066 = vadd.f32 %v4064, %v4063
    %v4067 = vtanh.pop %v4066
    %v4068 = vsub.f32 %v3258, %v4067
    %v4069 = vmul.f32 %v4030, %v4068
    %v4070 = vadd.f32 %v4067, %v4069
    %s4071 = scalar_lea.vmem [#allocation9], 3
    %4072 = vst.msk [vmem:[%s4071] ss:$8 sm:$0x3] %vm1635, %v4070
    %4073 = vst.msk [vmem:[%s4071] ss:$8 sm:$0x0] %vm1635, %v4070
    %v4075 = vlaneseq
    %v4076 = vshrl.u32 %v4075, 7
    %v4077 = vsub.s32 0, %v4076
    %v4078 = vrot.slane %v4070, %v4077
    %v4079 = vlaneseq
    %v4080 = vshrl.u32 %v4079, 7
    %v4081 = vsub.s32 1, %v4080
    %v4082 = vrot.slane %v4070, %v4081
    %v4085 = vpack.c.bf16 %v4078, %v4078
    %v4086 = vpack.c.bf16 %v4082, %v4082
    %v4087 = vld [vmem:[#allocation7] sm:$0xff]
    %v4088 = vld [vmem:[#allocation7 + $0x8] sm:$0xff]
    %v4089 = vld [vmem:[#allocation7 + $0x10] sm:$0xff]
    %v4090 = vld [vmem:[#allocation7 + $0x18] sm:$0xff]
    %v4091 = vld [vmem:[#allocation7 + $0x20] sm:$0xff]
    %v4092 = vld [vmem:[#allocation7 + $0x28] sm:$0xff]
    %v4093 = vld [vmem:[#allocation7 + $0x30] sm:$0xff]
    %v4094 = vld [vmem:[#allocation7 + $0x38] sm:$0xff]
    %v4095 = vld [vmem:[#allocation7 + $0x40] sm:$0xff]
    %v4096 = vld [vmem:[#allocation7 + $0x48] sm:$0xff]
    %v4097 = vld [vmem:[#allocation7 + $0x50] sm:$0xff]
    %v4098 = vld [vmem:[#allocation7 + $0x58] sm:$0xff]
    %v4099 = vld [vmem:[#allocation7 + $0x60] sm:$0xff]
    %v4100 = vld [vmem:[#allocation7 + $0x68] sm:$0xff]
    %v4101 = vld [vmem:[#allocation7 + $0x70] sm:$0xff]
    %v4102 = vld [vmem:[#allocation7 + $0x78] sm:$0xff]
    %v4103 = vld [vmem:[#allocation7 + $0x80] sm:$0xff]
    %v4104 = vld [vmem:[#allocation7 + $0x88] sm:$0xff]
    %v4105 = vld [vmem:[#allocation7 + $0x90] sm:$0xff]
    %v4106 = vld [vmem:[#allocation7 + $0x98] sm:$0xff]
    %v4107 = vld [vmem:[#allocation7 + $0xa0] sm:$0xff]
    %v4108 = vld [vmem:[#allocation7 + $0xa8] sm:$0xff]
    %v4109 = vld [vmem:[#allocation7 + $0xb0] sm:$0xff]
    %v4110 = vld [vmem:[#allocation7 + $0xb8] sm:$0xff]
    %v4111 = vld [vmem:[#allocation7 + $0xc0] sm:$0xff]
    %v4112 = vld [vmem:[#allocation7 + $0xc8] sm:$0xff]
    %v4113 = vld [vmem:[#allocation7 + $0xd0] sm:$0xff]
    %v4114 = vld [vmem:[#allocation7 + $0xd8] sm:$0xff]
    %v4115 = vld [vmem:[#allocation7 + $0xe0] sm:$0xff]
    %v4116 = vld [vmem:[#allocation7 + $0xe8] sm:$0xff]
    %v4117 = vld [vmem:[#allocation7 + $0xf0] sm:$0xff]
    %v4118 = vld [vmem:[#allocation7 + $0xf8] sm:$0xff]
    %v4119 = vld [vmem:[#allocation7 + $0x100] sm:$0xff]
    %v4120 = vld [vmem:[#allocation7 + $0x108] sm:$0xff]
    %v4121 = vld [vmem:[#allocation7 + $0x110] sm:$0xff]
    %v4122 = vld [vmem:[#allocation7 + $0x118] sm:$0xff]
    %v4123 = vld [vmem:[#allocation7 + $0x120] sm:$0xff]
    %v4124 = vld [vmem:[#allocation7 + $0x128] sm:$0xff]
    %v4125 = vld [vmem:[#allocation7 + $0x130] sm:$0xff]
    %v4126 = vld [vmem:[#allocation7 + $0x138] sm:$0xff]
    %v4127 = vld [vmem:[#allocation7 + $0x140] sm:$0xff]
    %v4128 = vld [vmem:[#allocation7 + $0x148] sm:$0xff]
    %v4129 = vld [vmem:[#allocation7 + $0x150] sm:$0xff]
    %v4130 = vld [vmem:[#allocation7 + $0x158] sm:$0xff]
    %v4131 = vld [vmem:[#allocation7 + $0x160] sm:$0xff]
    %v4132 = vld [vmem:[#allocation7 + $0x168] sm:$0xff]
    %v4133 = vld [vmem:[#allocation7 + $0x170] sm:$0xff]
    %v4134 = vld [vmem:[#allocation7 + $0x178] sm:$0xff]
    %v4135 = vld [vmem:[#allocation7 + $0x180] sm:$0xff]
    %v4136 = vld [vmem:[#allocation7 + $0x188] sm:$0xff]
    %v4137 = vld [vmem:[#allocation7 + $0x190] sm:$0xff]
    %v4138 = vld [vmem:[#allocation7 + $0x198] sm:$0xff]
    %v4139 = vld [vmem:[#allocation7 + $0x1a0] sm:$0xff]
    %v4140 = vld [vmem:[#allocation7 + $0x1a8] sm:$0xff]
    %v4141 = vld [vmem:[#allocation7 + $0x1b0] sm:$0xff]
    %v4142 = vld [vmem:[#allocation7 + $0x1b8] sm:$0xff]
    %v4143 = vld [vmem:[#allocation7 + $0x1c0] sm:$0xff]
    %v4144 = vld [vmem:[#allocation7 + $0x1c8] sm:$0xff]
    %v4145 = vld [vmem:[#allocation7 + $0x1d0] sm:$0xff]
    %v4146 = vld [vmem:[#allocation7 + $0x1d8] sm:$0xff]
    %v4147 = vld [vmem:[#allocation7 + $0x1e0] sm:$0xff]
    %v4148 = vld [vmem:[#allocation7 + $0x1e8] sm:$0xff]
    %v4149 = vld [vmem:[#allocation7 + $0x1f0] sm:$0xff]
    %v4150 = vld [vmem:[#allocation7 + $0x1f8] sm:$0xff]
    %v4151 = vld [vmem:[#allocation7 + $0x200] sm:$0xff]
    %v4152 = vld [vmem:[#allocation7 + $0x208] sm:$0xff]
    %v4153 = vld [vmem:[#allocation7 + $0x210] sm:$0xff]
    %v4154 = vld [vmem:[#allocation7 + $0x218] sm:$0xff]
    %v4155 = vld [vmem:[#allocation7 + $0x220] sm:$0xff]
    %v4156 = vld [vmem:[#allocation7 + $0x228] sm:$0xff]
    %v4157 = vld [vmem:[#allocation7 + $0x230] sm:$0xff]
    %v4158 = vld [vmem:[#allocation7 + $0x238] sm:$0xff]
    %v4159 = vld [vmem:[#allocation7 + $0x240] sm:$0xff]
    %v4160 = vld [vmem:[#allocation7 + $0x248] sm:$0xff]
    %v4161 = vld [vmem:[#allocation7 + $0x250] sm:$0xff]
    %v4162 = vld [vmem:[#allocation7 + $0x258] sm:$0xff]
    %v4163 = vld [vmem:[#allocation7 + $0x260] sm:$0xff]
    %v4164 = vld [vmem:[#allocation7 + $0x268] sm:$0xff]
    %v4165 = vld [vmem:[#allocation7 + $0x270] sm:$0xff]
    %v4166 = vld [vmem:[#allocation7 + $0x278] sm:$0xff]
    %v4167 = vld [vmem:[#allocation7 + $0x280] sm:$0xff]
    %v4168 = vld [vmem:[#allocation7 + $0x288] sm:$0xff]
    %v4169 = vld [vmem:[#allocation7 + $0x290] sm:$0xff]
    %v4170 = vld [vmem:[#allocation7 + $0x298] sm:$0xff]
    %v4171 = vld [vmem:[#allocation7 + $0x2a0] sm:$0xff]
    %v4172 = vld [vmem:[#allocation7 + $0x2a8] sm:$0xff]
    %v4173 = vld [vmem:[#allocation7 + $0x2b0] sm:$0xff]
    %v4174 = vld [vmem:[#allocation7 + $0x2b8] sm:$0xff]
    %v4175 = vld [vmem:[#allocation7 + $0x2c0] sm:$0xff]
    %v4176 = vld [vmem:[#allocation7 + $0x2c8] sm:$0xff]
    %v4177 = vld [vmem:[#allocation7 + $0x2d0] sm:$0xff]
    %v4178 = vld [vmem:[#allocation7 + $0x2d8] sm:$0xff]
    %v4179 = vld [vmem:[#allocation7 + $0x2e0] sm:$0xff]
    %v4180 = vld [vmem:[#allocation7 + $0x2e8] sm:$0xff]
    %v4181 = vld [vmem:[#allocation7 + $0x2f0] sm:$0xff]
    %v4182 = vld [vmem:[#allocation7 + $0x2f8] sm:$0xff]
    %v4279 = vunpack.c.l.b16 %v4087
    %v4280 = vunpack.c.h.b16 %v4087
    %v4281 = vunpack.c.l.b16 %v4088
    %v4282 = vunpack.c.h.b16 %v4088
    %v4283 = vunpack.c.l.b16 %v4089
    %v4284 = vunpack.c.h.b16 %v4089
    %v4285 = vunpack.c.l.b16 %v4090
    %v4286 = vunpack.c.h.b16 %v4090
    %v4287 = vunpack.c.l.b16 %v4091
    %v4288 = vunpack.c.h.b16 %v4091
    %v4289 = vunpack.c.l.b16 %v4092
    %v4290 = vunpack.c.h.b16 %v4092
    %v4291 = vunpack.c.l.b16 %v4093
    %v4292 = vunpack.c.h.b16 %v4093
    %v4293 = vunpack.c.l.b16 %v4094
    %v4294 = vunpack.c.h.b16 %v4094
    %v4295 = vunpack.c.l.b16 %v4095
    %v4296 = vunpack.c.h.b16 %v4095
    %v4297 = vunpack.c.l.b16 %v4096
    %v4298 = vunpack.c.h.b16 %v4096
    %v4299 = vunpack.c.l.b16 %v4097
    %v4300 = vunpack.c.h.b16 %v4097
    %v4301 = vunpack.c.l.b16 %v4098
    %v4302 = vunpack.c.h.b16 %v4098
    %v4303 = vunpack.c.l.b16 %v4099
    %v4304 = vunpack.c.h.b16 %v4099
    %v4305 = vunpack.c.l.b16 %v4100
    %v4306 = vunpack.c.h.b16 %v4100
    %v4307 = vunpack.c.l.b16 %v4101
    %v4308 = vunpack.c.h.b16 %v4101
    %v4309 = vunpack.c.l.b16 %v4102
    %v4310 = vunpack.c.h.b16 %v4102
    %v4311 = vunpack.c.l.b16 %v4103
    %v4312 = vunpack.c.h.b16 %v4103
    %v4313 = vunpack.c.l.b16 %v4104
    %v4314 = vunpack.c.h.b16 %v4104
    %v4315 = vunpack.c.l.b16 %v4105
    %v4316 = vunpack.c.h.b16 %v4105
    %v4317 = vunpack.c.l.b16 %v4106
    %v4318 = vunpack.c.h.b16 %v4106
    %v4319 = vunpack.c.l.b16 %v4107
    %v4320 = vunpack.c.h.b16 %v4107
    %v4321 = vunpack.c.l.b16 %v4108
    %v4322 = vunpack.c.h.b16 %v4108
    %v4323 = vunpack.c.l.b16 %v4109
    %v4324 = vunpack.c.h.b16 %v4109
    %v4325 = vunpack.c.l.b16 %v4110
    %v4326 = vunpack.c.h.b16 %v4110
    %v4327 = vunpack.c.l.b16 %v4111
    %v4328 = vunpack.c.h.b16 %v4111
    %v4329 = vunpack.c.l.b16 %v4112
    %v4330 = vunpack.c.h.b16 %v4112
    %v4331 = vunpack.c.l.b16 %v4113
    %v4332 = vunpack.c.h.b16 %v4113
    %v4333 = vunpack.c.l.b16 %v4114
    %v4334 = vunpack.c.h.b16 %v4114
    %v4335 = vunpack.c.l.b16 %v4115
    %v4336 = vunpack.c.h.b16 %v4115
    %v4337 = vunpack.c.l.b16 %v4116
    %v4338 = vunpack.c.h.b16 %v4116
    %v4339 = vunpack.c.l.b16 %v4117
    %v4340 = vunpack.c.h.b16 %v4117
    %v4341 = vunpack.c.l.b16 %v4118
    %v4342 = vunpack.c.h.b16 %v4118
    %v4343 = vunpack.c.l.b16 %v4119
    %v4344 = vunpack.c.h.b16 %v4119
    %v4345 = vunpack.c.l.b16 %v4120
    %v4346 = vunpack.c.h.b16 %v4120
    %v4347 = vunpack.c.l.b16 %v4121
    %v4348 = vunpack.c.h.b16 %v4121
    %v4349 = vunpack.c.l.b16 %v4122
    %v4350 = vunpack.c.h.b16 %v4122
    %v4351 = vunpack.c.l.b16 %v4123
    %v4352 = vunpack.c.h.b16 %v4123
    %v4353 = vunpack.c.l.b16 %v4124
    %v4354 = vunpack.c.h.b16 %v4124
    %v4355 = vunpack.c.l.b16 %v4125
    %v4356 = vunpack.c.h.b16 %v4125
    %v4357 = vunpack.c.l.b16 %v4126
    %v4358 = vunpack.c.h.b16 %v4126
    %v4359 = vunpack.c.l.b16 %v4127
    %v4360 = vunpack.c.h.b16 %v4127
    %v4361 = vunpack.c.l.b16 %v4128
    %v4362 = vunpack.c.h.b16 %v4128
    %v4363 = vunpack.c.l.b16 %v4129
    %v4364 = vunpack.c.h.b16 %v4129
    %v4365 = vunpack.c.l.b16 %v4130
    %v4366 = vunpack.c.h.b16 %v4130
    %v4367 = vunpack.c.l.b16 %v4131
    %v4368 = vunpack.c.h.b16 %v4131
    %v4369 = vunpack.c.l.b16 %v4132
    %v4370 = vunpack.c.h.b16 %v4132
    %v4371 = vunpack.c.l.b16 %v4133
    %v4372 = vunpack.c.h.b16 %v4133
    %v4373 = vunpack.c.l.b16 %v4134
    %v4374 = vunpack.c.h.b16 %v4134
    %v4375 = vunpack.c.l.b16 %v4135
    %v4376 = vunpack.c.h.b16 %v4135
    %v4377 = vunpack.c.l.b16 %v4136
    %v4378 = vunpack.c.h.b16 %v4136
    %v4379 = vunpack.c.l.b16 %v4137
    %v4380 = vunpack.c.h.b16 %v4137
    %v4381 = vunpack.c.l.b16 %v4138
    %v4382 = vunpack.c.h.b16 %v4138
    %v4383 = vunpack.c.l.b16 %v4139
    %v4384 = vunpack.c.h.b16 %v4139
    %v4385 = vunpack.c.l.b16 %v4140
    %v4386 = vunpack.c.h.b16 %v4140
    %v4387 = vunpack.c.l.b16 %v4141
    %v4388 = vunpack.c.h.b16 %v4141
    %v4389 = vunpack.c.l.b16 %v4142
    %v4390 = vunpack.c.h.b16 %v4142
    %v4391 = vunpack.c.l.b16 %v4143
    %v4392 = vunpack.c.h.b16 %v4143
    %v4393 = vunpack.c.l.b16 %v4144
    %v4394 = vunpack.c.h.b16 %v4144
    %v4395 = vunpack.c.l.b16 %v4145
    %v4396 = vunpack.c.h.b16 %v4145
    %v4397 = vunpack.c.l.b16 %v4146
    %v4398 = vunpack.c.h.b16 %v4146
    %v4399 = vunpack.c.l.b16 %v4147
    %v4400 = vunpack.c.h.b16 %v4147
    %v4401 = vunpack.c.l.b16 %v4148
    %v4402 = vunpack.c.h.b16 %v4148
    %v4403 = vunpack.c.l.b16 %v4149
    %v4404 = vunpack.c.h.b16 %v4149
    %v4405 = vunpack.c.l.b16 %v4150
    %v4406 = vunpack.c.h.b16 %v4150
    %v4407 = vunpack.c.l.b16 %v4151
    %v4408 = vunpack.c.h.b16 %v4151
    %v4409 = vunpack.c.l.b16 %v4152
    %v4410 = vunpack.c.h.b16 %v4152
    %v4411 = vunpack.c.l.b16 %v4153
    %v4412 = vunpack.c.h.b16 %v4153
    %v4413 = vunpack.c.l.b16 %v4154
    %v4414 = vunpack.c.h.b16 %v4154
    %v4415 = vunpack.c.l.b16 %v4155
    %v4416 = vunpack.c.h.b16 %v4155
    %v4417 = vunpack.c.l.b16 %v4156
    %v4418 = vunpack.c.h.b16 %v4156
    %v4419 = vunpack.c.l.b16 %v4157
    %v4420 = vunpack.c.h.b16 %v4157
    %v4421 = vunpack.c.l.b16 %v4158
    %v4422 = vunpack.c.h.b16 %v4158
    %v4423 = vunpack.c.l.b16 %v4159
    %v4424 = vunpack.c.h.b16 %v4159
    %v4425 = vunpack.c.l.b16 %v4160
    %v4426 = vunpack.c.h.b16 %v4160
    %v4427 = vunpack.c.l.b16 %v4161
    %v4428 = vunpack.c.h.b16 %v4161
    %v4429 = vunpack.c.l.b16 %v4162
    %v4430 = vunpack.c.h.b16 %v4162
    %v4431 = vunpack.c.l.b16 %v4163
    %v4432 = vunpack.c.h.b16 %v4163
    %v4433 = vunpack.c.l.b16 %v4164
    %v4434 = vunpack.c.h.b16 %v4164
    %v4435 = vunpack.c.l.b16 %v4165
    %v4436 = vunpack.c.h.b16 %v4165
    %v4437 = vunpack.c.l.b16 %v4166
    %v4438 = vunpack.c.h.b16 %v4166
    %v4439 = vunpack.c.l.b16 %v4167
    %v4440 = vunpack.c.h.b16 %v4167
    %v4441 = vunpack.c.l.b16 %v4168
    %v4442 = vunpack.c.h.b16 %v4168
    %v4443 = vunpack.c.l.b16 %v4169
    %v4444 = vunpack.c.h.b16 %v4169
    %v4445 = vunpack.c.l.b16 %v4170
    %v4446 = vunpack.c.h.b16 %v4170
    %v4447 = vunpack.c.l.b16 %v4171
    %v4448 = vunpack.c.h.b16 %v4171
    %v4449 = vunpack.c.l.b16 %v4172
    %v4450 = vunpack.c.h.b16 %v4172
    %v4451 = vunpack.c.l.b16 %v4173
    %v4452 = vunpack.c.h.b16 %v4173
    %v4453 = vunpack.c.l.b16 %v4174
    %v4454 = vunpack.c.h.b16 %v4174
    %v4455 = vunpack.c.l.b16 %v4175
    %v4456 = vunpack.c.h.b16 %v4175
    %v4457 = vunpack.c.l.b16 %v4176
    %v4458 = vunpack.c.h.b16 %v4176
    %v4459 = vunpack.c.l.b16 %v4177
    %v4460 = vunpack.c.h.b16 %v4177
    %v4461 = vunpack.c.l.b16 %v4178
    %v4462 = vunpack.c.h.b16 %v4178
    %v4463 = vunpack.c.l.b16 %v4179
    %v4464 = vunpack.c.h.b16 %v4179
    %v4465 = vunpack.c.l.b16 %v4180
    %v4466 = vunpack.c.h.b16 %v4180
    %v4467 = vunpack.c.l.b16 %v4181
    %v4468 = vunpack.c.h.b16 %v4181
    %v4469 = vunpack.c.l.b16 %v4182
    %v4470 = vunpack.c.h.b16 %v4182
    %v4471 = vpack.c.b16 %v4285, %v4279
    %v4472 = vpack.c.b16 %v4286, %v4280
    %v4473 = vpack.c.b16 %v4287, %v4281
    %v4474 = vpack.c.b16 %v4288, %v4282
    %v4475 = vpack.c.b16 %v4289, %v4283
    %v4476 = vpack.c.b16 %v4290, %v4284
    %v4477 = vpack.c.b16 %v4297, %v4291
    %v4478 = vpack.c.b16 %v4298, %v4292
    %v4479 = vpack.c.b16 %v4299, %v4293
    %v4480 = vpack.c.b16 %v4300, %v4294
    %v4481 = vpack.c.b16 %v4301, %v4295
    %v4482 = vpack.c.b16 %v4302, %v4296
    %v4483 = vpack.c.b16 %v4309, %v4303
    %v4484 = vpack.c.b16 %v4310, %v4304
    %v4485 = vpack.c.b16 %v4311, %v4305
    %v4486 = vpack.c.b16 %v4312, %v4306
    %v4487 = vpack.c.b16 %v4313, %v4307
    %v4488 = vpack.c.b16 %v4314, %v4308
    %v4489 = vpack.c.b16 %v4321, %v4315
    %v4490 = vpack.c.b16 %v4322, %v4316
    %v4491 = vpack.c.b16 %v4323, %v4317
    %v4492 = vpack.c.b16 %v4324, %v4318
    %v4493 = vpack.c.b16 %v4325, %v4319
    %v4494 = vpack.c.b16 %v4326, %v4320
    %v4495 = vpack.c.b16 %v4333, %v4327
    %v4496 = vpack.c.b16 %v4334, %v4328
    %v4497 = vpack.c.b16 %v4335, %v4329
    %v4498 = vpack.c.b16 %v4336, %v4330
    %v4499 = vpack.c.b16 %v4337, %v4331
    %v4500 = vpack.c.b16 %v4338, %v4332
    %v4501 = vpack.c.b16 %v4345, %v4339
    %v4502 = vpack.c.b16 %v4346, %v4340
    %v4503 = vpack.c.b16 %v4347, %v4341
    %v4504 = vpack.c.b16 %v4348, %v4342
    %v4505 = vpack.c.b16 %v4349, %v4343
    %v4506 = vpack.c.b16 %v4350, %v4344
    %v4507 = vpack.c.b16 %v4357, %v4351
    %v4508 = vpack.c.b16 %v4358, %v4352
    %v4509 = vpack.c.b16 %v4359, %v4353
    %v4510 = vpack.c.b16 %v4360, %v4354
    %v4511 = vpack.c.b16 %v4361, %v4355
    %v4512 = vpack.c.b16 %v4362, %v4356
    %v4513 = vpack.c.b16 %v4369, %v4363
    %v4514 = vpack.c.b16 %v4370, %v4364
    %v4515 = vpack.c.b16 %v4371, %v4365
    %v4516 = vpack.c.b16 %v4372, %v4366
    %v4517 = vpack.c.b16 %v4373, %v4367
    %v4518 = vpack.c.b16 %v4374, %v4368
    %v4519 = vpack.c.b16 %v4381, %v4375
    %v4520 = vpack.c.b16 %v4382, %v4376
    %v4521 = vpack.c.b16 %v4383, %v4377
    %v4522 = vpack.c.b16 %v4384, %v4378
    %v4523 = vpack.c.b16 %v4385, %v4379
    %v4524 = vpack.c.b16 %v4386, %v4380
    %v4525 = vpack.c.b16 %v4393, %v4387
    %v4526 = vpack.c.b16 %v4394, %v4388
    %v4527 = vpack.c.b16 %v4395, %v4389
    %v4528 = vpack.c.b16 %v4396, %v4390
    %v4529 = vpack.c.b16 %v4397, %v4391
    %v4530 = vpack.c.b16 %v4398, %v4392
    %v4531 = vpack.c.b16 %v4405, %v4399
    %v4532 = vpack.c.b16 %v4406, %v4400
    %v4533 = vpack.c.b16 %v4407, %v4401
    %v4534 = vpack.c.b16 %v4408, %v4402
    %v4535 = vpack.c.b16 %v4409, %v4403
    %v4536 = vpack.c.b16 %v4410, %v4404
    %v4537 = vpack.c.b16 %v4417, %v4411
    %v4538 = vpack.c.b16 %v4418, %v4412
    %v4539 = vpack.c.b16 %v4419, %v4413
    %v4540 = vpack.c.b16 %v4420, %v4414
    %v4541 = vpack.c.b16 %v4421, %v4415
    %v4542 = vpack.c.b16 %v4422, %v4416
    %v4543 = vpack.c.b16 %v4429, %v4423
    %v4544 = vpack.c.b16 %v4430, %v4424
    %v4545 = vpack.c.b16 %v4431, %v4425
    %v4546 = vpack.c.b16 %v4432, %v4426
    %v4547 = vpack.c.b16 %v4433, %v4427
    %v4548 = vpack.c.b16 %v4434, %v4428
    %v4549 = vpack.c.b16 %v4441, %v4435
    %v4550 = vpack.c.b16 %v4442, %v4436
    %v4551 = vpack.c.b16 %v4443, %v4437
    %v4552 = vpack.c.b16 %v4444, %v4438
    %v4553 = vpack.c.b16 %v4445, %v4439
    %v4554 = vpack.c.b16 %v4446, %v4440
    %v4555 = vpack.c.b16 %v4453, %v4447
    %v4556 = vpack.c.b16 %v4454, %v4448
    %v4557 = vpack.c.b16 %v4455, %v4449
    %v4558 = vpack.c.b16 %v4456, %v4450
    %v4559 = vpack.c.b16 %v4457, %v4451
    %v4560 = vpack.c.b16 %v4458, %v4452
    %v4561 = vpack.c.b16 %v4465, %v4459
    %v4562 = vpack.c.b16 %v4466, %v4460
    %v4563 = vpack.c.b16 %v4467, %v4461
    %v4564 = vpack.c.b16 %v4468, %v4462
    %v4565 = vpack.c.b16 %v4469, %v4463
    %v4566 = vpack.c.b16 %v4470, %v4464
    %4663 = vmatprep.subr.bf16.mxu0 %v4472
    %4664 = vmatpush1.bf16.msra.mxu0 %v4471
    %4665 = vmatprep.subr.bf16.mxu0 %v4478
    %4666 = vmatpush1.bf16.msra.mxu0 %v4477
    %4667 = vmatprep.subr.bf16.mxu0 %v4484
    %4668 = vmatpush1.bf16.msra.mxu0 %v4483
    %4669 = vmatprep.subr.bf16.mxu0 %v4490
    %4670 = vmatpush1.bf16.msra.mxu0 %v4489
    %4671 = vmatprep.subr.bf16.mxu0 %v4496
    %4672 = vmatpush1.bf16.msra.mxu0 %v4495
    %4673 = vmatprep.subr.bf16.mxu0 %v4502
    %4674 = vmatpush1.bf16.msra.mxu0 %v4501
    %4675 = vmatprep.subr.bf16.mxu0 %v4508
    %4676 = vmatpush1.bf16.msra.mxu0 %v4507
    %4677 = vmatprep.subr.bf16.mxu0 %v4514
    %4678 = vmatpush1.bf16.msra.mxu0 %v4513
    %4679 = vmatprep.subr.bf16.mxu0 %v4520
    %4680 = vmatpush1.bf16.msra.mxu0 %v4519
    %4681 = vmatprep.subr.bf16.mxu0 %v4526
    %4682 = vmatpush1.bf16.msra.mxu0 %v4525
    %4683 = vmatprep.subr.bf16.mxu0 %v4532
    %4684 = vmatpush1.bf16.msra.mxu0 %v4531
    %4685 = vmatprep.subr.bf16.mxu0 %v4538
    %4686 = vmatpush1.bf16.msra.mxu0 %v4537
    %4687 = vmatprep.subr.bf16.mxu0 %v4544
    %4688 = vmatpush1.bf16.msra.mxu0 %v4543
    %4689 = vmatprep.subr.bf16.mxu0 %v4550
    %4690 = vmatpush1.bf16.msra.mxu0 %v4549
    %4691 = vmatprep.subr.bf16.mxu0 %v4556
    %4692 = vmatpush1.bf16.msra.mxu0 %v4555
    %4693 = vmatprep.subr.bf16.mxu0 %v4562
    %4694 = vmatpush1.bf16.msra.mxu0 %v4561
    %4695 = vmatprep.mubr.bf16.mxu0 %v4086
    %4696 = vmatmul.mubr.bf16.gmra.mrb[0].mxu0 %v4085
    %v4697 = vpop.f32.mrb[0].mxu0
    %v4698 = vadd.f32 0.0, %v4697
    %v4699 = vpop.f32.mrb[0].mxu0
    %v4700 = vadd.f32 0.0, %v4699
    %v4701 = vpop.f32.mrb[0].mxu0
    %v4702 = vpop.f32.mrb[0].mxu0
    %4703 = vdwg.mxu0
    %4704 = vmatprep.subr.bf16.mxu0 %v4474
    %4705 = vmatpush1.bf16.msra.mxu0 %v4473
    %4706 = vmatprep.subr.bf16.mxu0 %v4480
    %4707 = vmatpush1.bf16.msra.mxu0 %v4479
    %4708 = vmatprep.subr.bf16.mxu0 %v4486
    %4709 = vmatpush1.bf16.msra.mxu0 %v4485
    %4710 = vmatprep.subr.bf16.mxu0 %v4492
    %4711 = vmatpush1.bf16.msra.mxu0 %v4491
    %4712 = vmatprep.subr.bf16.mxu0 %v4498
    %4713 = vmatpush1.bf16.msra.mxu0 %v4497
    %4714 = vmatprep.subr.bf16.mxu0 %v4504
    %4715 = vmatpush1.bf16.msra.mxu0 %v4503
    %4716 = vmatprep.subr.bf16.mxu0 %v4510
    %4717 = vmatpush1.bf16.msra.mxu0 %v4509
    %4718 = vmatprep.subr.bf16.mxu0 %v4516
    %4719 = vmatpush1.bf16.msra.mxu0 %v4515
    %4720 = vmatprep.subr.bf16.mxu0 %v4522
    %4721 = vmatpush1.bf16.msra.mxu0 %v4521
    %4722 = vmatprep.subr.bf16.mxu0 %v4528
    %4723 = vmatpush1.bf16.msra.mxu0 %v4527
    %4724 = vmatprep.subr.bf16.mxu0 %v4534
    %4725 = vmatpush1.bf16.msra.mxu0 %v4533
    %4726 = vmatprep.subr.bf16.mxu0 %v4540
    %4727 = vmatpush1.bf16.msra.mxu0 %v4539
    %4728 = vmatprep.subr.bf16.mxu0 %v4546
    %4729 = vmatpush1.bf16.msra.mxu0 %v4545
    %4730 = vmatprep.subr.bf16.mxu0 %v4552
    %4731 = vmatpush1.bf16.msra.mxu0 %v4551
    %4732 = vmatprep.subr.bf16.mxu0 %v4558
    %4733 = vmatpush1.bf16.msra.mxu0 %v4557
    %4734 = vmatprep.subr.bf16.mxu0 %v4564
    %4735 = vmatpush1.bf16.msra.mxu0 %v4563
    %4736 = vmatprep.mubr.bf16.mxu0 %v4086
    %4737 = vmatmul.mubr.bf16.gmra.mrb[0].mxu0 %v4085
    %v4738 = vpop.f32.mrb[0].mxu0
    %v4739 = vadd.f32 0.0, %v4738
    %v4740 = vpop.f32.mrb[0].mxu0
    %v4741 = vadd.f32 0.0, %v4740
    %v4742 = vpop.f32.mrb[0].mxu0
    %v4743 = vpop.f32.mrb[0].mxu0
    %4744 = vdwg.mxu0
    %4745 = vmatprep.subr.bf16.mxu0 %v4476
    %4746 = vmatpush1.bf16.msra.mxu0 %v4475
    %4747 = vmatprep.subr.bf16.mxu0 %v4482
    %4748 = vmatpush1.bf16.msra.mxu0 %v4481
    %4749 = vmatprep.subr.bf16.mxu0 %v4488
    %4750 = vmatpush1.bf16.msra.mxu0 %v4487
    %4751 = vmatprep.subr.bf16.mxu0 %v4494
    %4752 = vmatpush1.bf16.msra.mxu0 %v4493
    %4753 = vmatprep.subr.bf16.mxu0 %v4500
    %4754 = vmatpush1.bf16.msra.mxu0 %v4499
    %4755 = vmatprep.subr.bf16.mxu0 %v4506
    %4756 = vmatpush1.bf16.msra.mxu0 %v4505
    %4757 = vmatprep.subr.bf16.mxu0 %v4512
    %4758 = vmatpush1.bf16.msra.mxu0 %v4511
    %4759 = vmatprep.subr.bf16.mxu0 %v4518
    %4760 = vmatpush1.bf16.msra.mxu0 %v4517
    %4761 = vmatprep.subr.bf16.mxu0 %v4524
    %4762 = vmatpush1.bf16.msra.mxu0 %v4523
    %4763 = vmatprep.subr.bf16.mxu0 %v4530
    %4764 = vmatpush1.bf16.msra.mxu0 %v4529
    %4765 = vmatprep.subr.bf16.mxu0 %v4536
    %4766 = vmatpush1.bf16.msra.mxu0 %v4535
    %4767 = vmatprep.subr.bf16.mxu0 %v4542
    %4768 = vmatpush1.bf16.msra.mxu0 %v4541
    %4769 = vmatprep.subr.bf16.mxu0 %v4548
    %4770 = vmatpush1.bf16.msra.mxu0 %v4547
    %4771 = vmatprep.subr.bf16.mxu0 %v4554
    %4772 = vmatpush1.bf16.msra.mxu0 %v4553
    %4773 = vmatprep.subr.bf16.mxu0 %v4560
    %4774 = vmatpush1.bf16.msra.mxu0 %v4559
    %4775 = vmatprep.subr.bf16.mxu0 %v4566
    %4776 = vmatpush1.bf16.msra.mxu0 %v4565
    %4777 = vmatprep.mubr.bf16.mxu0 %v4086
    %4778 = vmatmul.mubr.bf16.gmra.mrb[0].mxu0 %v4085
    %v4779 = vpop.f32.mrb[0].mxu0
    %v4780 = vadd.f32 0.0, %v4779
    %v4781 = vpop.f32.mrb[0].mxu0
    %v4782 = vadd.f32 0.0, %v4781
    %v4783 = vpop.f32.mrb[0].mxu0
    %v4784 = vpop.f32.mrb[0].mxu0
    %4785 = vdwg.mxu0
    %s4786 = scalar_lea.vmem [#allocation3], 4
    %v4787 = vld [vmem:[%s4786] ss:$8 sm:$0xf]
    %v4788 = vld [vmem:[%s4786] ss:$8 sm:$0x30]
    %v4789 = vor.u32 %v4787, %v4788
    %v4792 = vcombine.low %v4698, %v4700
    %v4794 = vunpack.c.l.s4 1966171168
    %v4795 = vunpack.c.0.s8 %v4794
    %v4796 = vlaneseq
    %v4797 = vshrl.u32 %v4796, 7
    %v4798 = vsub.s32 %v4795, %v4797
    %v4799 = vrot.slane %v4792, %v4798
    %v4801 = vunpack.c.l.s4 1966171168
    %v4802 = vunpack.c.0.s8 %v4801
    %v4803 = vlaneseq
    %v4804 = vshrl.u32 %v4803, 7
    %v4805 = vsub.s32 %v4802, %v4804
    %v4806 = vrot.slane %v4799, %v4805
    %v4808 = vadd.f32 %v4789, %v4806
    %v4809 = vxor.u32 %v4808, 2147483648
    %v4810 = vmul.f32 %v4809, 1.442695
    %v4811 = vpow.pop %v4810
    %v4812 = vadd.f32 %v4811, 1.0
    %v4813 = vrcp.pop %v4812
    %v4814 = vmul.f32 1.0, %v4813
    %v4816 = vrot.slane %v4789, 2
    %v4820 = vcombine.low %v4739, %v4741
    %v4822 = vunpack.c.l.s4 1966171168
    %v4823 = vunpack.c.0.s8 %v4822
    %v4824 = vlaneseq
    %v4825 = vshrl.u32 %v4824, 7
    %v4826 = vsub.s32 %v4823, %v4825
    %v4827 = vrot.slane %v4820, %v4826
    %v4829 = vunpack.c.l.s4 1966171168
    %v4830 = vunpack.c.0.s8 %v4829
    %v4831 = vlaneseq
    %v4832 = vshrl.u32 %v4831, 7
    %v4833 = vsub.s32 %v4830, %v4832
    %v4834 = vrot.slane %v4827, %v4833
    %v4836 = vadd.f32 %v4816, %v4834
    %v4837 = vxor.u32 %v4836, 2147483648
    %v4838 = vmul.f32 %v4837, 1.442695
    %v4839 = vpow.pop %v4838
    %v4840 = vadd.f32 %v4839, 1.0
    %v4841 = vrcp.pop %v4840
    %v4842 = vmul.f32 1.0, %v4841
    %v4843 = vld [vmem:[%s5] sm:$0x3]
    %v4845 = vlaneseq
    %v4846 = vshrl.u32 %v4845, 7
    %v4847 = vsub.s32 0, %v4846
    %v4848 = vrot.slane %v4843, %v4847
    %v4849 = vlaneseq
    %v4850 = vshrl.u32 %v4849, 7
    %v4851 = vsub.s32 1, %v4850
    %v4852 = vrot.slane %v4843, %v4851
    %v4855 = vadd.f32 %v4780, %v4848
    %v4856 = vadd.f32 %v4782, %v4852
    %v4859 = vcombine.low %v4855, %v4856
    %v4861 = vunpack.c.l.s4 1966171168
    %v4862 = vunpack.c.0.s8 %v4861
    %v4863 = vlaneseq
    %v4864 = vshrl.u32 %v4863, 7
    %v4865 = vsub.s32 %v4862, %v4864
    %v4866 = vrot.slane %v4859, %v4865
    %v4868 = vunpack.c.l.s4 1966171168
    %v4869 = vunpack.c.0.s8 %v4868
    %v4870 = vlaneseq
    %v4871 = vshrl.u32 %v4870, 7
    %v4872 = vsub.s32 %v4869, %v4871
    %v4873 = vrot.slane %v4866, %v4872
    %v4875 = vmul.f32 %v4814, %v4873
    %v4876 = vrot.slane %v4789, 4
    %v4878 = vadd.f32 %v4876, %v4875
    %v4879 = vtanh.pop %v4878
    %v4880 = vsub.f32 %v4070, %v4879
    %v4881 = vmul.f32 %v4842, %v4880
    %v4882 = vadd.f32 %v4879, %v4881
    %s4883 = scalar_lea.vmem [#allocation9], 4
    %4884 = vst.msk [vmem:[%s4883] ss:$8 sm:$0x3] %vm1635, %v4882
    %4885 = vst.msk [vmem:[%s4883] ss:$8 sm:$0x0] %vm1635, %v4882
    %v4887 = vlaneseq
    %v4888 = vshrl.u32 %v4887, 7
    %v4889 = vsub.s32 0, %v4888
    %v4890 = vrot.slane %v4882, %v4889
    %v4891 = vlaneseq
    %v4892 = vshrl.u32 %v4891, 7
    %v4893 = vsub.s32 1, %v4892
    %v4894 = vrot.slane %v4882, %v4893
    %v4897 = vpack.c.bf16 %v4890, %v4890
    %v4898 = vpack.c.bf16 %v4894, %v4894
    %v4899 = vld [vmem:[#allocation7] sm:$0xff]
    %v4900 = vld [vmem:[#allocation7 + $0x8] sm:$0xff]
    %v4901 = vld [vmem:[#allocation7 + $0x10] sm:$0xff]
    %v4902 = vld [vmem:[#allocation7 + $0x18] sm:$0xff]
    %v4903 = vld [vmem:[#allocation7 + $0x20] sm:$0xff]
    %v4904 = vld [vmem:[#allocation7 + $0x28] sm:$0xff]
    %v4905 = vld [vmem:[#allocation7 + $0x30] sm:$0xff]
    %v4906 = vld [vmem:[#allocation7 + $0x38] sm:$0xff]
    %v4907 = vld [vmem:[#allocation7 + $0x40] sm:$0xff]
    %v4908 = vld [vmem:[#allocation7 + $0x48] sm:$0xff]
    %v4909 = vld [vmem:[#allocation7 + $0x50] sm:$0xff]
    %v4910 = vld [vmem:[#allocation7 + $0x58] sm:$0xff]
    %v4911 = vld [vmem:[#allocation7 + $0x60] sm:$0xff]
    %v4912 = vld [vmem:[#allocation7 + $0x68] sm:$0xff]
    %v4913 = vld [vmem:[#allocation7 + $0x70] sm:$0xff]
    %v4914 = vld [vmem:[#allocation7 + $0x78] sm:$0xff]
    %v4915 = vld [vmem:[#allocation7 + $0x80] sm:$0xff]
    %v4916 = vld [vmem:[#allocation7 + $0x88] sm:$0xff]
    %v4917 = vld [vmem:[#allocation7 + $0x90] sm:$0xff]
    %v4918 = vld [vmem:[#allocation7 + $0x98] sm:$0xff]
    %v4919 = vld [vmem:[#allocation7 + $0xa0] sm:$0xff]
    %v4920 = vld [vmem:[#allocation7 + $0xa8] sm:$0xff]
    %v4921 = vld [vmem:[#allocation7 + $0xb0] sm:$0xff]
    %v4922 = vld [vmem:[#allocation7 + $0xb8] sm:$0xff]
    %v4923 = vld [vmem:[#allocation7 + $0xc0] sm:$0xff]
    %v4924 = vld [vmem:[#allocation7 + $0xc8] sm:$0xff]
    %v4925 = vld [vmem:[#allocation7 + $0xd0] sm:$0xff]
    %v4926 = vld [vmem:[#allocation7 + $0xd8] sm:$0xff]
    %v4927 = vld [vmem:[#allocation7 + $0xe0] sm:$0xff]
    %v4928 = vld [vmem:[#allocation7 + $0xe8] sm:$0xff]
    %v4929 = vld [vmem:[#allocation7 + $0xf0] sm:$0xff]
    %v4930 = vld [vmem:[#allocation7 + $0xf8] sm:$0xff]
    %v4931 = vld [vmem:[#allocation7 + $0x100] sm:$0xff]
    %v4932 = vld [vmem:[#allocation7 + $0x108] sm:$0xff]
    %v4933 = vld [vmem:[#allocation7 + $0x110] sm:$0xff]
    %v4934 = vld [vmem:[#allocation7 + $0x118] sm:$0xff]
    %v4935 = vld [vmem:[#allocation7 + $0x120] sm:$0xff]
    %v4936 = vld [vmem:[#allocation7 + $0x128] sm:$0xff]
    %v4937 = vld [vmem:[#allocation7 + $0x130] sm:$0xff]
    %v4938 = vld [vmem:[#allocation7 + $0x138] sm:$0xff]
    %v4939 = vld [vmem:[#allocation7 + $0x140] sm:$0xff]
    %v4940 = vld [vmem:[#allocation7 + $0x148] sm:$0xff]
    %v4941 = vld [vmem:[#allocation7 + $0x150] sm:$0xff]
    %v4942 = vld [vmem:[#allocation7 + $0x158] sm:$0xff]
    %v4943 = vld [vmem:[#allocation7 + $0x160] sm:$0xff]
    %v4944 = vld [vmem:[#allocation7 + $0x168] sm:$0xff]
    %v4945 = vld [vmem:[#allocation7 + $0x170] sm:$0xff]
    %v4946 = vld [vmem:[#allocation7 + $0x178] sm:$0xff]
    %v4947 = vld [vmem:[#allocation7 + $0x180] sm:$0xff]
    %v4948 = vld [vmem:[#allocation7 + $0x188] sm:$0xff]
    %v4949 = vld [vmem:[#allocation7 + $0x190] sm:$0xff]
    %v4950 = vld [vmem:[#allocation7 + $0x198] sm:$0xff]
    %v4951 = vld [vmem:[#allocation7 + $0x1a0] sm:$0xff]
    %v4952 = vld [vmem:[#allocation7 + $0x1a8] sm:$0xff]
    %v4953 = vld [vmem:[#allocation7 + $0x1b0] sm:$0xff]
    %v4954 = vld [vmem:[#allocation7 + $0x1b8] sm:$0xff]
    %v4955 = vld [vmem:[#allocation7 + $0x1c0] sm:$0xff]
    %v4956 = vld [vmem:[#allocation7 + $0x1c8] sm:$0xff]
    %v4957 = vld [vmem:[#allocation7 + $0x1d0] sm:$0xff]
    %v4958 = vld [vmem:[#allocation7 + $0x1d8] sm:$0xff]
    %v4959 = vld [vmem:[#allocation7 + $0x1e0] sm:$0xff]
    %v4960 = vld [vmem:[#allocation7 + $0x1e8] sm:$0xff]
    %v4961 = vld [vmem:[#allocation7 + $0x1f0] sm:$0xff]
    %v4962 = vld [vmem:[#allocation7 + $0x1f8] sm:$0xff]
    %v4963 = vld [vmem:[#allocation7 + $0x200] sm:$0xff]
    %v4964 = vld [vmem:[#allocation7 + $0x208] sm:$0xff]
    %v4965 = vld [vmem:[#allocation7 + $0x210] sm:$0xff]
    %v4966 = vld [vmem:[#allocation7 + $0x218] sm:$0xff]
    %v4967 = vld [vmem:[#allocation7 + $0x220] sm:$0xff]
    %v4968 = vld [vmem:[#allocation7 + $0x228] sm:$0xff]
    %v4969 = vld [vmem:[#allocation7 + $0x230] sm:$0xff]
    %v4970 = vld [vmem:[#allocation7 + $0x238] sm:$0xff]
    %v4971 = vld [vmem:[#allocation7 + $0x240] sm:$0xff]
    %v4972 = vld [vmem:[#allocation7 + $0x248] sm:$0xff]
    %v4973 = vld [vmem:[#allocation7 + $0x250] sm:$0xff]
    %v4974 = vld [vmem:[#allocation7 + $0x258] sm:$0xff]
    %v4975 = vld [vmem:[#allocation7 + $0x260] sm:$0xff]
    %v4976 = vld [vmem:[#allocation7 + $0x268] sm:$0xff]
    %v4977 = vld [vmem:[#allocation7 + $0x270] sm:$0xff]
    %v4978 = vld [vmem:[#allocation7 + $0x278] sm:$0xff]
    %v4979 = vld [vmem:[#allocation7 + $0x280] sm:$0xff]
    %v4980 = vld [vmem:[#allocation7 + $0x288] sm:$0xff]
    %v4981 = vld [vmem:[#allocation7 + $0x290] sm:$0xff]
    %v4982 = vld [vmem:[#allocation7 + $0x298] sm:$0xff]
    %v4983 = vld [vmem:[#allocation7 + $0x2a0] sm:$0xff]
    %v4984 = vld [vmem:[#allocation7 + $0x2a8] sm:$0xff]
    %v4985 = vld [vmem:[#allocation7 + $0x2b0] sm:$0xff]
    %v4986 = vld [vmem:[#allocation7 + $0x2b8] sm:$0xff]
    %v4987 = vld [vmem:[#allocation7 + $0x2c0] sm:$0xff]
    %v4988 = vld [vmem:[#allocation7 + $0x2c8] sm:$0xff]
    %v4989 = vld [vmem:[#allocation7 + $0x2d0] sm:$0xff]
    %v4990 = vld [vmem:[#allocation7 + $0x2d8] sm:$0xff]
    %v4991 = vld [vmem:[#allocation7 + $0x2e0] sm:$0xff]
    %v4992 = vld [vmem:[#allocation7 + $0x2e8] sm:$0xff]
    %v4993 = vld [vmem:[#allocation7 + $0x2f0] sm:$0xff]
    %v4994 = vld [vmem:[#allocation7 + $0x2f8] sm:$0xff]
    %v5091 = vunpack.c.l.b16 %v4899
    %v5092 = vunpack.c.h.b16 %v4899
    %v5093 = vunpack.c.l.b16 %v4900
    %v5094 = vunpack.c.h.b16 %v4900
    %v5095 = vunpack.c.l.b16 %v4901
    %v5096 = vunpack.c.h.b16 %v4901
    %v5097 = vunpack.c.l.b16 %v4902
    %v5098 = vunpack.c.h.b16 %v4902
    %v5099 = vunpack.c.l.b16 %v4903
    %v5100 = vunpack.c.h.b16 %v4903
    %v5101 = vunpack.c.l.b16 %v4904
    %v5102 = vunpack.c.h.b16 %v4904
    %v5103 = vunpack.c.l.b16 %v4905
    %v5104 = vunpack.c.h.b16 %v4905
    %v5105 = vunpack.c.l.b16 %v4906
    %v5106 = vunpack.c.h.b16 %v4906
    %v5107 = vunpack.c.l.b16 %v4907
    %v5108 = vunpack.c.h.b16 %v4907
    %v5109 = vunpack.c.l.b16 %v4908
    %v5110 = vunpack.c.h.b16 %v4908
    %v5111 = vunpack.c.l.b16 %v4909
    %v5112 = vunpack.c.h.b16 %v4909
    %v5113 = vunpack.c.l.b16 %v4910
    %v5114 = vunpack.c.h.b16 %v4910
    %v5115 = vunpack.c.l.b16 %v4911
    %v5116 = vunpack.c.h.b16 %v4911
    %v5117 = vunpack.c.l.b16 %v4912
    %v5118 = vunpack.c.h.b16 %v4912
    %v5119 = vunpack.c.l.b16 %v4913
    %v5120 = vunpack.c.h.b16 %v4913
    %v5121 = vunpack.c.l.b16 %v4914
    %v5122 = vunpack.c.h.b16 %v4914
    %v5123 = vunpack.c.l.b16 %v4915
    %v5124 = vunpack.c.h.b16 %v4915
    %v5125 = vunpack.c.l.b16 %v4916
    %v5126 = vunpack.c.h.b16 %v4916
    %v5127 = vunpack.c.l.b16 %v4917
    %v5128 = vunpack.c.h.b16 %v4917
    %v5129 = vunpack.c.l.b16 %v4918
    %v5130 = vunpack.c.h.b16 %v4918
    %v5131 = vunpack.c.l.b16 %v4919
    %v5132 = vunpack.c.h.b16 %v4919
    %v5133 = vunpack.c.l.b16 %v4920
    %v5134 = vunpack.c.h.b16 %v4920
    %v5135 = vunpack.c.l.b16 %v4921
    %v5136 = vunpack.c.h.b16 %v4921
    %v5137 = vunpack.c.l.b16 %v4922
    %v5138 = vunpack.c.h.b16 %v4922
    %v5139 = vunpack.c.l.b16 %v4923
    %v5140 = vunpack.c.h.b16 %v4923
    %v5141 = vunpack.c.l.b16 %v4924
    %v5142 = vunpack.c.h.b16 %v4924
    %v5143 = vunpack.c.l.b16 %v4925
    %v5144 = vunpack.c.h.b16 %v4925
    %v5145 = vunpack.c.l.b16 %v4926
    %v5146 = vunpack.c.h.b16 %v4926
    %v5147 = vunpack.c.l.b16 %v4927
    %v5148 = vunpack.c.h.b16 %v4927
    %v5149 = vunpack.c.l.b16 %v4928
    %v5150 = vunpack.c.h.b16 %v4928
    %v5151 = vunpack.c.l.b16 %v4929
    %v5152 = vunpack.c.h.b16 %v4929
    %v5153 = vunpack.c.l.b16 %v4930
    %v5154 = vunpack.c.h.b16 %v4930
    %v5155 = vunpack.c.l.b16 %v4931
    %v5156 = vunpack.c.h.b16 %v4931
    %v5157 = vunpack.c.l.b16 %v4932
    %v5158 = vunpack.c.h.b16 %v4932
    %v5159 = vunpack.c.l.b16 %v4933
    %v5160 = vunpack.c.h.b16 %v4933
    %v5161 = vunpack.c.l.b16 %v4934
    %v5162 = vunpack.c.h.b16 %v4934
    %v5163 = vunpack.c.l.b16 %v4935
    %v5164 = vunpack.c.h.b16 %v4935
    %v5165 = vunpack.c.l.b16 %v4936
    %v5166 = vunpack.c.h.b16 %v4936
    %v5167 = vunpack.c.l.b16 %v4937
    %v5168 = vunpack.c.h.b16 %v4937
    %v5169 = vunpack.c.l.b16 %v4938
    %v5170 = vunpack.c.h.b16 %v4938
    %v5171 = vunpack.c.l.b16 %v4939
    %v5172 = vunpack.c.h.b16 %v4939
    %v5173 = vunpack.c.l.b16 %v4940
    %v5174 = vunpack.c.h.b16 %v4940
    %v5175 = vunpack.c.l.b16 %v4941
    %v5176 = vunpack.c.h.b16 %v4941
    %v5177 = vunpack.c.l.b16 %v4942
    %v5178 = vunpack.c.h.b16 %v4942
    %v5179 = vunpack.c.l.b16 %v4943
    %v5180 = vunpack.c.h.b16 %v4943
    %v5181 = vunpack.c.l.b16 %v4944
    %v5182 = vunpack.c.h.b16 %v4944
    %v5183 = vunpack.c.l.b16 %v4945
    %v5184 = vunpack.c.h.b16 %v4945
    %v5185 = vunpack.c.l.b16 %v4946
    %v5186 = vunpack.c.h.b16 %v4946
    %v5187 = vunpack.c.l.b16 %v4947
    %v5188 = vunpack.c.h.b16 %v4947
    %v5189 = vunpack.c.l.b16 %v4948
    %v5190 = vunpack.c.h.b16 %v4948
    %v5191 = vunpack.c.l.b16 %v4949
    %v5192 = vunpack.c.h.b16 %v4949
    %v5193 = vunpack.c.l.b16 %v4950
    %v5194 = vunpack.c.h.b16 %v4950
    %v5195 = vunpack.c.l.b16 %v4951
    %v5196 = vunpack.c.h.b16 %v4951
    %v5197 = vunpack.c.l.b16 %v4952
    %v5198 = vunpack.c.h.b16 %v4952
    %v5199 = vunpack.c.l.b16 %v4953
    %v5200 = vunpack.c.h.b16 %v4953
    %v5201 = vunpack.c.l.b16 %v4954
    %v5202 = vunpack.c.h.b16 %v4954
    %v5203 = vunpack.c.l.b16 %v4955
    %v5204 = vunpack.c.h.b16 %v4955
    %v5205 = vunpack.c.l.b16 %v4956
    %v5206 = vunpack.c.h.b16 %v4956
    %v5207 = vunpack.c.l.b16 %v4957
    %v5208 = vunpack.c.h.b16 %v4957
    %v5209 = vunpack.c.l.b16 %v4958
    %v5210 = vunpack.c.h.b16 %v4958
    %v5211 = vunpack.c.l.b16 %v4959
    %v5212 = vunpack.c.h.b16 %v4959
    %v5213 = vunpack.c.l.b16 %v4960
    %v5214 = vunpack.c.h.b16 %v4960
    %v5215 = vunpack.c.l.b16 %v4961
    %v5216 = vunpack.c.h.b16 %v4961
    %v5217 = vunpack.c.l.b16 %v4962
    %v5218 = vunpack.c.h.b16 %v4962
    %v5219 = vunpack.c.l.b16 %v4963
    %v5220 = vunpack.c.h.b16 %v4963
    %v5221 = vunpack.c.l.b16 %v4964
    %v5222 = vunpack.c.h.b16 %v4964
    %v5223 = vunpack.c.l.b16 %v4965
    %v5224 = vunpack.c.h.b16 %v4965
    %v5225 = vunpack.c.l.b16 %v4966
    %v5226 = vunpack.c.h.b16 %v4966
    %v5227 = vunpack.c.l.b16 %v4967
    %v5228 = vunpack.c.h.b16 %v4967
    %v5229 = vunpack.c.l.b16 %v4968
    %v5230 = vunpack.c.h.b16 %v4968
    %v5231 = vunpack.c.l.b16 %v4969
    %v5232 = vunpack.c.h.b16 %v4969
    %v5233 = vunpack.c.l.b16 %v4970
    %v5234 = vunpack.c.h.b16 %v4970
    %v5235 = vunpack.c.l.b16 %v4971
    %v5236 = vunpack.c.h.b16 %v4971
    %v5237 = vunpack.c.l.b16 %v4972
    %v5238 = vunpack.c.h.b16 %v4972
    %v5239 = vunpack.c.l.b16 %v4973
    %v5240 = vunpack.c.h.b16 %v4973
    %v5241 = vunpack.c.l.b16 %v4974
    %v5242 = vunpack.c.h.b16 %v4974
    %v5243 = vunpack.c.l.b16 %v4975
    %v5244 = vunpack.c.h.b16 %v4975
    %v5245 = vunpack.c.l.b16 %v4976
    %v5246 = vunpack.c.h.b16 %v4976
    %v5247 = vunpack.c.l.b16 %v4977
    %v5248 = vunpack.c.h.b16 %v4977
    %v5249 = vunpack.c.l.b16 %v4978
    %v5250 = vunpack.c.h.b16 %v4978
    %v5251 = vunpack.c.l.b16 %v4979
    %v5252 = vunpack.c.h.b16 %v4979
    %v5253 = vunpack.c.l.b16 %v4980
    %v5254 = vunpack.c.h.b16 %v4980
    %v5255 = vunpack.c.l.b16 %v4981
    %v5256 = vunpack.c.h.b16 %v4981
    %v5257 = vunpack.c.l.b16 %v4982
    %v5258 = vunpack.c.h.b16 %v4982
    %v5259 = vunpack.c.l.b16 %v4983
    %v5260 = vunpack.c.h.b16 %v4983
    %v5261 = vunpack.c.l.b16 %v4984
    %v5262 = vunpack.c.h.b16 %v4984
    %v5263 = vunpack.c.l.b16 %v4985
    %v5264 = vunpack.c.h.b16 %v4985
    %v5265 = vunpack.c.l.b16 %v4986
    %v5266 = vunpack.c.h.b16 %v4986
    %v5267 = vunpack.c.l.b16 %v4987
    %v5268 = vunpack.c.h.b16 %v4987
    %v5269 = vunpack.c.l.b16 %v4988
    %v5270 = vunpack.c.h.b16 %v4988
    %v5271 = vunpack.c.l.b16 %v4989
    %v5272 = vunpack.c.h.b16 %v4989
    %v5273 = vunpack.c.l.b16 %v4990
    %v5274 = vunpack.c.h.b16 %v4990
    %v5275 = vunpack.c.l.b16 %v4991
    %v5276 = vunpack.c.h.b16 %v4991
    %v5277 = vunpack.c.l.b16 %v4992
    %v5278 = vunpack.c.h.b16 %v4992
    %v5279 = vunpack.c.l.b16 %v4993
    %v5280 = vunpack.c.h.b16 %v4993
    %v5281 = vunpack.c.l.b16 %v4994
    %v5282 = vunpack.c.h.b16 %v4994
    %v5283 = vpack.c.b16 %v5097, %v5091
    %v5284 = vpack.c.b16 %v5098, %v5092
    %v5285 = vpack.c.b16 %v5099, %v5093
    %v5286 = vpack.c.b16 %v5100, %v5094
    %v5287 = vpack.c.b16 %v5101, %v5095
    %v5288 = vpack.c.b16 %v5102, %v5096
    %v5289 = vpack.c.b16 %v5109, %v5103
    %v5290 = vpack.c.b16 %v5110, %v5104
    %v5291 = vpack.c.b16 %v5111, %v5105
    %v5292 = vpack.c.b16 %v5112, %v5106
    %v5293 = vpack.c.b16 %v5113, %v5107
    %v5294 = vpack.c.b16 %v5114, %v5108
    %v5295 = vpack.c.b16 %v5121, %v5115
    %v5296 = vpack.c.b16 %v5122, %v5116
    %v5297 = vpack.c.b16 %v5123, %v5117
    %v5298 = vpack.c.b16 %v5124, %v5118
    %v5299 = vpack.c.b16 %v5125, %v5119
    %v5300 = vpack.c.b16 %v5126, %v5120
    %v5301 = vpack.c.b16 %v5133, %v5127
    %v5302 = vpack.c.b16 %v5134, %v5128
    %v5303 = vpack.c.b16 %v5135, %v5129
    %v5304 = vpack.c.b16 %v5136, %v5130
    %v5305 = vpack.c.b16 %v5137, %v5131
    %v5306 = vpack.c.b16 %v5138, %v5132
    %v5307 = vpack.c.b16 %v5145, %v5139
    %v5308 = vpack.c.b16 %v5146, %v5140
    %v5309 = vpack.c.b16 %v5147, %v5141
    %v5310 = vpack.c.b16 %v5148, %v5142
    %v5311 = vpack.c.b16 %v5149, %v5143
    %v5312 = vpack.c.b16 %v5150, %v5144
    %v5313 = vpack.c.b16 %v5157, %v5151
    %v5314 = vpack.c.b16 %v5158, %v5152
    %v5315 = vpack.c.b16 %v5159, %v5153
    %v5316 = vpack.c.b16 %v5160, %v5154
    %v5317 = vpack.c.b16 %v5161, %v5155
    %v5318 = vpack.c.b16 %v5162, %v5156
    %v5319 = vpack.c.b16 %v5169, %v5163
    %v5320 = vpack.c.b16 %v5170, %v5164
    %v5321 = vpack.c.b16 %v5171, %v5165
    %v5322 = vpack.c.b16 %v5172, %v5166
    %v5323 = vpack.c.b16 %v5173, %v5167
    %v5324 = vpack.c.b16 %v5174, %v5168
    %v5325 = vpack.c.b16 %v5181, %v5175
    %v5326 = vpack.c.b16 %v5182, %v5176
    %v5327 = vpack.c.b16 %v5183, %v5177
    %v5328 = vpack.c.b16 %v5184, %v5178
    %v5329 = vpack.c.b16 %v5185, %v5179
    %v5330 = vpack.c.b16 %v5186, %v5180
    %v5331 = vpack.c.b16 %v5193, %v5187
    %v5332 = vpack.c.b16 %v5194, %v5188
    %v5333 = vpack.c.b16 %v5195, %v5189
    %v5334 = vpack.c.b16 %v5196, %v5190
    %v5335 = vpack.c.b16 %v5197, %v5191
    %v5336 = vpack.c.b16 %v5198, %v5192
    %v5337 = vpack.c.b16 %v5205, %v5199
    %v5338 = vpack.c.b16 %v5206, %v5200
    %v5339 = vpack.c.b16 %v5207, %v5201
    %v5340 = vpack.c.b16 %v5208, %v5202
    %v5341 = vpack.c.b16 %v5209, %v5203
    %v5342 = vpack.c.b16 %v5210, %v5204
    %v5343 = vpack.c.b16 %v5217, %v5211
    %v5344 = vpack.c.b16 %v5218, %v5212
    %v5345 = vpack.c.b16 %v5219, %v5213
    %v5346 = vpack.c.b16 %v5220, %v5214
    %v5347 = vpack.c.b16 %v5221, %v5215
    %v5348 = vpack.c.b16 %v5222, %v5216
    %v5349 = vpack.c.b16 %v5229, %v5223
    %v5350 = vpack.c.b16 %v5230, %v5224
    %v5351 = vpack.c.b16 %v5231, %v5225
    %v5352 = vpack.c.b16 %v5232, %v5226
    %v5353 = vpack.c.b16 %v5233, %v5227
    %v5354 = vpack.c.b16 %v5234, %v5228
    %v5355 = vpack.c.b16 %v5241, %v5235
    %v5356 = vpack.c.b16 %v5242, %v5236
    %v5357 = vpack.c.b16 %v5243, %v5237
    %v5358 = vpack.c.b16 %v5244, %v5238
    %v5359 = vpack.c.b16 %v5245, %v5239
    %v5360 = vpack.c.b16 %v5246, %v5240
    %v5361 = vpack.c.b16 %v5253, %v5247
    %v5362 = vpack.c.b16 %v5254, %v5248
    %v5363 = vpack.c.b16 %v5255, %v5249
    %v5364 = vpack.c.b16 %v5256, %v5250
    %v5365 = vpack.c.b16 %v5257, %v5251
    %v5366 = vpack.c.b16 %v5258, %v5252
    %v5367 = vpack.c.b16 %v5265, %v5259
    %v5368 = vpack.c.b16 %v5266, %v5260
    %v5369 = vpack.c.b16 %v5267, %v5261
    %v5370 = vpack.c.b16 %v5268, %v5262
    %v5371 = vpack.c.b16 %v5269, %v5263
    %v5372 = vpack.c.b16 %v5270, %v5264
    %v5373 = vpack.c.b16 %v5277, %v5271
    %v5374 = vpack.c.b16 %v5278, %v5272
    %v5375 = vpack.c.b16 %v5279, %v5273
    %v5376 = vpack.c.b16 %v5280, %v5274
    %v5377 = vpack.c.b16 %v5281, %v5275
    %v5378 = vpack.c.b16 %v5282, %v5276
    %5475 = vmatprep.subr.bf16.mxu0 %v5284
    %5476 = vmatpush1.bf16.msra.mxu0 %v5283
    %5477 = vmatprep.subr.bf16.mxu0 %v5290
    %5478 = vmatpush1.bf16.msra.mxu0 %v5289
    %5479 = vmatprep.subr.bf16.mxu0 %v5296
    %5480 = vmatpush1.bf16.msra.mxu0 %v5295
    %5481 = vmatprep.subr.bf16.mxu0 %v5302
    %5482 = vmatpush1.bf16.msra.mxu0 %v5301
    %5483 = vmatprep.subr.bf16.mxu0 %v5308
    %5484 = vmatpush1.bf16.msra.mxu0 %v5307
    %5485 = vmatprep.subr.bf16.mxu0 %v5314
    %5486 = vmatpush1.bf16.msra.mxu0 %v5313
    %5487 = vmatprep.subr.bf16.mxu0 %v5320
    %5488 = vmatpush1.bf16.msra.mxu0 %v5319
    %5489 = vmatprep.subr.bf16.mxu0 %v5326
    %5490 = vmatpush1.bf16.msra.mxu0 %v5325
    %5491 = vmatprep.subr.bf16.mxu0 %v5332
    %5492 = vmatpush1.bf16.msra.mxu0 %v5331
    %5493 = vmatprep.subr.bf16.mxu0 %v5338
    %5494 = vmatpush1.bf16.msra.mxu0 %v5337
    %5495 = vmatprep.subr.bf16.mxu0 %v5344
    %5496 = vmatpush1.bf16.msra.mxu0 %v5343
    %5497 = vmatprep.subr.bf16.mxu0 %v5350
    %5498 = vmatpush1.bf16.msra.mxu0 %v5349
    %5499 = vmatprep.subr.bf16.mxu0 %v5356
    %5500 = vmatpush1.bf16.msra.mxu0 %v5355
    %5501 = vmatprep.subr.bf16.mxu0 %v5362
    %5502 = vmatpush1.bf16.msra.mxu0 %v5361
    %5503 = vmatprep.subr.bf16.mxu0 %v5368
    %5504 = vmatpush1.bf16.msra.mxu0 %v5367
    %5505 = vmatprep.subr.bf16.mxu0 %v5374
    %5506 = vmatpush1.bf16.msra.mxu0 %v5373
    %5507 = vmatprep.mubr.bf16.mxu0 %v4898
    %5508 = vmatmul.mubr.bf16.gmra.mrb[0].mxu0 %v4897
    %v5509 = vpop.f32.mrb[0].mxu0
    %v5510 = vadd.f32 0.0, %v5509
    %v5511 = vpop.f32.mrb[0].mxu0
    %v5512 = vadd.f32 0.0, %v5511
    %v5513 = vpop.f32.mrb[0].mxu0
    %v5514 = vpop.f32.mrb[0].mxu0
    %5515 = vdwg.mxu0
    %5516 = vmatprep.subr.bf16.mxu0 %v5286
    %5517 = vmatpush1.bf16.msra.mxu0 %v5285
    %5518 = vmatprep.subr.bf16.mxu0 %v5292
    %5519 = vmatpush1.bf16.msra.mxu0 %v5291
    %5520 = vmatprep.subr.bf16.mxu0 %v5298
    %5521 = vmatpush1.bf16.msra.mxu0 %v5297
    %5522 = vmatprep.subr.bf16.mxu0 %v5304
    %5523 = vmatpush1.bf16.msra.mxu0 %v5303
    %5524 = vmatprep.subr.bf16.mxu0 %v5310
    %5525 = vmatpush1.bf16.msra.mxu0 %v5309
    %5526 = vmatprep.subr.bf16.mxu0 %v5316
    %5527 = vmatpush1.bf16.msra.mxu0 %v5315
    %5528 = vmatprep.subr.bf16.mxu0 %v5322
    %5529 = vmatpush1.bf16.msra.mxu0 %v5321
    %5530 = vmatprep.subr.bf16.mxu0 %v5328
    %5531 = vmatpush1.bf16.msra.mxu0 %v5327
    %5532 = vmatprep.subr.bf16.mxu0 %v5334
    %5533 = vmatpush1.bf16.msra.mxu0 %v5333
    %5534 = vmatprep.subr.bf16.mxu0 %v5340
    %5535 = vmatpush1.bf16.msra.mxu0 %v5339
    %5536 = vmatprep.subr.bf16.mxu0 %v5346
    %5537 = vmatpush1.bf16.msra.mxu0 %v5345
    %5538 = vmatprep.subr.bf16.mxu0 %v5352
    %5539 = vmatpush1.bf16.msra.mxu0 %v5351
    %5540 = vmatprep.subr.bf16.mxu0 %v5358
    %5541 = vmatpush1.bf16.msra.mxu0 %v5357
    %5542 = vmatprep.subr.bf16.mxu0 %v5364
    %5543 = vmatpush1.bf16.msra.mxu0 %v5363
    %5544 = vmatprep.subr.bf16.mxu0 %v5370
    %5545 = vmatpush1.bf16.msra.mxu0 %v5369
    %5546 = vmatprep.subr.bf16.mxu0 %v5376
    %5547 = vmatpush1.bf16.msra.mxu0 %v5375
    %5548 = vmatprep.mubr.bf16.mxu0 %v4898
    %5549 = vmatmul.mubr.bf16.gmra.mrb[0].mxu0 %v4897
    %v5550 = vpop.f32.mrb[0].mxu0
    %v5551 = vadd.f32 0.0, %v5550
    %v5552 = vpop.f32.mrb[0].mxu0
    %v5553 = vadd.f32 0.0, %v5552
    %v5554 = vpop.f32.mrb[0].mxu0
    %v5555 = vpop.f32.mrb[0].mxu0
    %5556 = vdwg.mxu0
    %5557 = vmatprep.subr.bf16.mxu0 %v5288
    %5558 = vmatpush1.bf16.msra.mxu0 %v5287
    %5559 = vmatprep.subr.bf16.mxu0 %v5294
    %5560 = vmatpush1.bf16.msra.mxu0 %v5293
    %5561 = vmatprep.subr.bf16.mxu0 %v5300
    %5562 = vmatpush1.bf16.msra.mxu0 %v5299
    %5563 = vmatprep.subr.bf16.mxu0 %v5306
    %5564 = vmatpush1.bf16.msra.mxu0 %v5305
    %5565 = vmatprep.subr.bf16.mxu0 %v5312
    %5566 = vmatpush1.bf16.msra.mxu0 %v5311
    %5567 = vmatprep.subr.bf16.mxu0 %v5318
    %5568 = vmatpush1.bf16.msra.mxu0 %v5317
    %5569 = vmatprep.subr.bf16.mxu0 %v5324
    %5570 = vmatpush1.bf16.msra.mxu0 %v5323
    %5571 = vmatprep.subr.bf16.mxu0 %v5330
    %5572 = vmatpush1.bf16.msra.mxu0 %v5329
    %5573 = vmatprep.subr.bf16.mxu0 %v5336
    %5574 = vmatpush1.bf16.msra.mxu0 %v5335
    %5575 = vmatprep.subr.bf16.mxu0 %v5342
    %5576 = vmatpush1.bf16.msra.mxu0 %v5341
    %5577 = vmatprep.subr.bf16.mxu0 %v5348
    %5578 = vmatpush1.bf16.msra.mxu0 %v5347
    %5579 = vmatprep.subr.bf16.mxu0 %v5354
    %5580 = vmatpush1.bf16.msra.mxu0 %v5353
    %5581 = vmatprep.subr.bf16.mxu0 %v5360
    %5582 = vmatpush1.bf16.msra.mxu0 %v5359
    %5583 = vmatprep.subr.bf16.mxu0 %v5366
    %5584 = vmatpush1.bf16.msra.mxu0 %v5365
    %5585 = vmatprep.subr.bf16.mxu0 %v5372
    %5586 = vmatpush1.bf16.msra.mxu0 %v5371
    %5587 = vmatprep.subr.bf16.mxu0 %v5378
    %5588 = vmatpush1.bf16.msra.mxu0 %v5377
    %5589 = vmatprep.mubr.bf16.mxu0 %v4898
    %5590 = vmatmul.mubr.bf16.gmra.mrb[0].mxu0 %v4897
    %v5591 = vpop.f32.mrb[0].mxu0
    %v5592 = vadd.f32 0.0, %v5591
    %v5593 = vpop.f32.mrb[0].mxu0
    %v5594 = vadd.f32 0.0, %v5593
    %v5595 = vpop.f32.mrb[0].mxu0
    %v5596 = vpop.f32.mrb[0].mxu0
    %5597 = vdwg.mxu0
    %s5598 = scalar_lea.vmem [#allocation3], 5
    %v5599 = vld [vmem:[%s5598] ss:$8 sm:$0xf]
    %v5600 = vld [vmem:[%s5598] ss:$8 sm:$0x30]
    %v5601 = vor.u32 %v5599, %v5600
    %v5604 = vcombine.low %v5510, %v5512
    %v5606 = vunpack.c.l.s4 1966171168
    %v5607 = vunpack.c.0.s8 %v5606
    %v5608 = vlaneseq
    %v5609 = vshrl.u32 %v5608, 7
    %v5610 = vsub.s32 %v5607, %v5609
    %v5611 = vrot.slane %v5604, %v5610
    %v5613 = vunpack.c.l.s4 1966171168
    %v5614 = vunpack.c.0.s8 %v5613
    %v5615 = vlaneseq
    %v5616 = vshrl.u32 %v5615, 7
    %v5617 = vsub.s32 %v5614, %v5616
    %v5618 = vrot.slane %v5611, %v5617
    %v5620 = vadd.f32 %v5601, %v5618
    %v5621 = vxor.u32 %v5620, 2147483648
    %v5622 = vmul.f32 %v5621, 1.442695
    %v5623 = vpow.pop %v5622
    %v5624 = vadd.f32 %v5623, 1.0
    %v5625 = vrcp.pop %v5624
    %v5626 = vmul.f32 1.0, %v5625
    %v5628 = vrot.slane %v5601, 2
    %v5632 = vcombine.low %v5551, %v5553
    %v5634 = vunpack.c.l.s4 1966171168
    %v5635 = vunpack.c.0.s8 %v5634
    %v5636 = vlaneseq
    %v5637 = vshrl.u32 %v5636, 7
    %v5638 = vsub.s32 %v5635, %v5637
    %v5639 = vrot.slane %v5632, %v5638
    %v5641 = vunpack.c.l.s4 1966171168
    %v5642 = vunpack.c.0.s8 %v5641
    %v5643 = vlaneseq
    %v5644 = vshrl.u32 %v5643, 7
    %v5645 = vsub.s32 %v5642, %v5644
    %v5646 = vrot.slane %v5639, %v5645
    %v5648 = vadd.f32 %v5628, %v5646
    %v5649 = vxor.u32 %v5648, 2147483648
    %v5650 = vmul.f32 %v5649, 1.442695
    %v5651 = vpow.pop %v5650
    %v5652 = vadd.f32 %v5651, 1.0
    %v5653 = vrcp.pop %v5652
    %v5654 = vmul.f32 1.0, %v5653
    %v5655 = vld [vmem:[%s5] sm:$0x3]
    %v5657 = vlaneseq
    %v5658 = vshrl.u32 %v5657, 7
    %v5659 = vsub.s32 0, %v5658
    %v5660 = vrot.slane %v5655, %v5659
    %v5661 = vlaneseq
    %v5662 = vshrl.u32 %v5661, 7
    %v5663 = vsub.s32 1, %v5662
    %v5664 = vrot.slane %v5655, %v5663
    %v5667 = vadd.f32 %v5592, %v5660
    %v5668 = vadd.f32 %v5594, %v5664
    %v5671 = vcombine.low %v5667, %v5668
    %v5673 = vunpack.c.l.s4 1966171168
    %v5674 = vunpack.c.0.s8 %v5673
    %v5675 = vlaneseq
    %v5676 = vshrl.u32 %v5675, 7
    %v5677 = vsub.s32 %v5674, %v5676
    %v5678 = vrot.slane %v5671, %v5677
    %v5680 = vunpack.c.l.s4 1966171168
    %v5681 = vunpack.c.0.s8 %v5680
    %v5682 = vlaneseq
    %v5683 = vshrl.u32 %v5682, 7
    %v5684 = vsub.s32 %v5681, %v5683
    %v5685 = vrot.slane %v5678, %v5684
    %v5687 = vmul.f32 %v5626, %v5685
    %v5688 = vrot.slane %v5601, 4
    %v5690 = vadd.f32 %v5688, %v5687
    %v5691 = vtanh.pop %v5690
    %v5692 = vsub.f32 %v4882, %v5691
    %v5693 = vmul.f32 %v5654, %v5692
    %v5694 = vadd.f32 %v5691, %v5693
    %s5695 = scalar_lea.vmem [#allocation9], 5
    %5696 = vst.msk [vmem:[%s5695] ss:$8 sm:$0x3] %vm1635, %v5694
    %5697 = vst.msk [vmem:[%s5695] ss:$8 sm:$0x0] %vm1635, %v5694
    %v5699 = vlaneseq
    %v5700 = vshrl.u32 %v5699, 7
    %v5701 = vsub.s32 0, %v5700
    %v5702 = vrot.slane %v5694, %v5701
    %v5703 = vlaneseq
    %v5704 = vshrl.u32 %v5703, 7
    %v5705 = vsub.s32 1, %v5704
    %v5706 = vrot.slane %v5694, %v5705
    %v5709 = vpack.c.bf16 %v5702, %v5702
    %v5710 = vpack.c.bf16 %v5706, %v5706
    %v5711 = vld [vmem:[#allocation7] sm:$0xff]
    %v5712 = vld [vmem:[#allocation7 + $0x8] sm:$0xff]
    %v5713 = vld [vmem:[#allocation7 + $0x10] sm:$0xff]
    %v5714 = vld [vmem:[#allocation7 + $0x18] sm:$0xff]
    %v5715 = vld [vmem:[#allocation7 + $0x20] sm:$0xff]
    %v5716 = vld [vmem:[#allocation7 + $0x28] sm:$0xff]
    %v5717 = vld [vmem:[#allocation7 + $0x30] sm:$0xff]
    %v5718 = vld [vmem:[#allocation7 + $0x38] sm:$0xff]
    %v5719 = vld [vmem:[#allocation7 + $0x40] sm:$0xff]
    %v5720 = vld [vmem:[#allocation7 + $0x48] sm:$0xff]
    %v5721 = vld [vmem:[#allocation7 + $0x50] sm:$0xff]
    %v5722 = vld [vmem:[#allocation7 + $0x58] sm:$0xff]
    %v5723 = vld [vmem:[#allocation7 + $0x60] sm:$0xff]
    %v5724 = vld [vmem:[#allocation7 + $0x68] sm:$0xff]
    %v5725 = vld [vmem:[#allocation7 + $0x70] sm:$0xff]
    %v5726 = vld [vmem:[#allocation7 + $0x78] sm:$0xff]
    %v5727 = vld [vmem:[#allocation7 + $0x80] sm:$0xff]
    %v5728 = vld [vmem:[#allocation7 + $0x88] sm:$0xff]
    %v5729 = vld [vmem:[#allocation7 + $0x90] sm:$0xff]
    %v5730 = vld [vmem:[#allocation7 + $0x98] sm:$0xff]
    %v5731 = vld [vmem:[#allocation7 + $0xa0] sm:$0xff]
    %v5732 = vld [vmem:[#allocation7 + $0xa8] sm:$0xff]
    %v5733 = vld [vmem:[#allocation7 + $0xb0] sm:$0xff]
    %v5734 = vld [vmem:[#allocation7 + $0xb8] sm:$0xff]
    %v5735 = vld [vmem:[#allocation7 + $0xc0] sm:$0xff]
    %v5736 = vld [vmem:[#allocation7 + $0xc8] sm:$0xff]
    %v5737 = vld [vmem:[#allocation7 + $0xd0] sm:$0xff]
    %v5738 = vld [vmem:[#allocation7 + $0xd8] sm:$0xff]
    %v5739 = vld [vmem:[#allocation7 + $0xe0] sm:$0xff]
    %v5740 = vld [vmem:[#allocation7 + $0xe8] sm:$0xff]
    %v5741 = vld [vmem:[#allocation7 + $0xf0] sm:$0xff]
    %v5742 = vld [vmem:[#allocation7 + $0xf8] sm:$0xff]
    %v5743 = vld [vmem:[#allocation7 + $0x100] sm:$0xff]
    %v5744 = vld [vmem:[#allocation7 + $0x108] sm:$0xff]
    %v5745 = vld [vmem:[#allocation7 + $0x110] sm:$0xff]
    %v5746 = vld [vmem:[#allocation7 + $0x118] sm:$0xff]
    %v5747 = vld [vmem:[#allocation7 + $0x120] sm:$0xff]
    %v5748 = vld [vmem:[#allocation7 + $0x128] sm:$0xff]
    %v5749 = vld [vmem:[#allocation7 + $0x130] sm:$0xff]
    %v5750 = vld [vmem:[#allocation7 + $0x138] sm:$0xff]
    %v5751 = vld [vmem:[#allocation7 + $0x140] sm:$0xff]
    %v5752 = vld [vmem:[#allocation7 + $0x148] sm:$0xff]
    %v5753 = vld [vmem:[#allocation7 + $0x150] sm:$0xff]
    %v5754 = vld [vmem:[#allocation7 + $0x158] sm:$0xff]
    %v5755 = vld [vmem:[#allocation7 + $0x160] sm:$0xff]
    %v5756 = vld [vmem:[#allocation7 + $0x168] sm:$0xff]
    %v5757 = vld [vmem:[#allocation7 + $0x170] sm:$0xff]
    %v5758 = vld [vmem:[#allocation7 + $0x178] sm:$0xff]
    %v5759 = vld [vmem:[#allocation7 + $0x180] sm:$0xff]
    %v5760 = vld [vmem:[#allocation7 + $0x188] sm:$0xff]
    %v5761 = vld [vmem:[#allocation7 + $0x190] sm:$0xff]
    %v5762 = vld [vmem:[#allocation7 + $0x198] sm:$0xff]
    %v5763 = vld [vmem:[#allocation7 + $0x1a0] sm:$0xff]
    %v5764 = vld [vmem:[#allocation7 + $0x1a8] sm:$0xff]
    %v5765 = vld [vmem:[#allocation7 + $0x1b0] sm:$0xff]
    %v5766 = vld [vmem:[#allocation7 + $0x1b8] sm:$0xff]
    %v5767 = vld [vmem:[#allocation7 + $0x1c0] sm:$0xff]
    %v5768 = vld [vmem:[#allocation7 + $0x1c8] sm:$0xff]
    %v5769 = vld [vmem:[#allocation7 + $0x1d0] sm:$0xff]
    %v5770 = vld [vmem:[#allocation7 + $0x1d8] sm:$0xff]
    %v5771 = vld [vmem:[#allocation7 + $0x1e0] sm:$0xff]
    %v5772 = vld [vmem:[#allocation7 + $0x1e8] sm:$0xff]
    %v5773 = vld [vmem:[#allocation7 + $0x1f0] sm:$0xff]
    %v5774 = vld [vmem:[#allocation7 + $0x1f8] sm:$0xff]
    %v5775 = vld [vmem:[#allocation7 + $0x200] sm:$0xff]
    %v5776 = vld [vmem:[#allocation7 + $0x208] sm:$0xff]
    %v5777 = vld [vmem:[#allocation7 + $0x210] sm:$0xff]
    %v5778 = vld [vmem:[#allocation7 + $0x218] sm:$0xff]
    %v5779 = vld [vmem:[#allocation7 + $0x220] sm:$0xff]
    %v5780 = vld [vmem:[#allocation7 + $0x228] sm:$0xff]
    %v5781 = vld [vmem:[#allocation7 + $0x230] sm:$0xff]
    %v5782 = vld [vmem:[#allocation7 + $0x238] sm:$0xff]
    %v5783 = vld [vmem:[#allocation7 + $0x240] sm:$0xff]
    %v5784 = vld [vmem:[#allocation7 + $0x248] sm:$0xff]
    %v5785 = vld [vmem:[#allocation7 + $0x250] sm:$0xff]
    %v5786 = vld [vmem:[#allocation7 + $0x258] sm:$0xff]
    %v5787 = vld [vmem:[#allocation7 + $0x260] sm:$0xff]
    %v5788 = vld [vmem:[#allocation7 + $0x268] sm:$0xff]
    %v5789 = vld [vmem:[#allocation7 + $0x270] sm:$0xff]
    %v5790 = vld [vmem:[#allocation7 + $0x278] sm:$0xff]
    %v5791 = vld [vmem:[#allocation7 + $0x280] sm:$0xff]
    %v5792 = vld [vmem:[#allocation7 + $0x288] sm:$0xff]
    %v5793 = vld [vmem:[#allocation7 + $0x290] sm:$0xff]
    %v5794 = vld [vmem:[#allocation7 + $0x298] sm:$0xff]
    %v5795 = vld [vmem:[#allocation7 + $0x2a0] sm:$0xff]
    %v5796 = vld [vmem:[#allocation7 + $0x2a8] sm:$0xff]
    %v5797 = vld [vmem:[#allocation7 + $0x2b0] sm:$0xff]
    %v5798 = vld [vmem:[#allocation7 + $0x2b8] sm:$0xff]
    %v5799 = vld [vmem:[#allocation7 + $0x2c0] sm:$0xff]
    %v5800 = vld [vmem:[#allocation7 + $0x2c8] sm:$0xff]
    %v5801 = vld [vmem:[#allocation7 + $0x2d0] sm:$0xff]
    %v5802 = vld [vmem:[#allocation7 + $0x2d8] sm:$0xff]
    %v5803 = vld [vmem:[#allocation7 + $0x2e0] sm:$0xff]
    %v5804 = vld [vmem:[#allocation7 + $0x2e8] sm:$0xff]
    %v5805 = vld [vmem:[#allocation7 + $0x2f0] sm:$0xff]
    %v5806 = vld [vmem:[#allocation7 + $0x2f8] sm:$0xff]
    %v5903 = vunpack.c.l.b16 %v5711
    %v5904 = vunpack.c.h.b16 %v5711
    %v5905 = vunpack.c.l.b16 %v5712
    %v5906 = vunpack.c.h.b16 %v5712
    %v5907 = vunpack.c.l.b16 %v5713
    %v5908 = vunpack.c.h.b16 %v5713
    %v5909 = vunpack.c.l.b16 %v5714
    %v5910 = vunpack.c.h.b16 %v5714
    %v5911 = vunpack.c.l.b16 %v5715
    %v5912 = vunpack.c.h.b16 %v5715
    %v5913 = vunpack.c.l.b16 %v5716
    %v5914 = vunpack.c.h.b16 %v5716
    %v5915 = vunpack.c.l.b16 %v5717
    %v5916 = vunpack.c.h.b16 %v5717
    %v5917 = vunpack.c.l.b16 %v5718
    %v5918 = vunpack.c.h.b16 %v5718
    %v5919 = vunpack.c.l.b16 %v5719
    %v5920 = vunpack.c.h.b16 %v5719
    %v5921 = vunpack.c.l.b16 %v5720
    %v5922 = vunpack.c.h.b16 %v5720
    %v5923 = vunpack.c.l.b16 %v5721
    %v5924 = vunpack.c.h.b16 %v5721
    %v5925 = vunpack.c.l.b16 %v5722
    %v5926 = vunpack.c.h.b16 %v5722
    %v5927 = vunpack.c.l.b16 %v5723
    %v5928 = vunpack.c.h.b16 %v5723
    %v5929 = vunpack.c.l.b16 %v5724
    %v5930 = vunpack.c.h.b16 %v5724
    %v5931 = vunpack.c.l.b16 %v5725
    %v5932 = vunpack.c.h.b16 %v5725
    %v5933 = vunpack.c.l.b16 %v5726
    %v5934 = vunpack.c.h.b16 %v5726
    %v5935 = vunpack.c.l.b16 %v5727
    %v5936 = vunpack.c.h.b16 %v5727
    %v5937 = vunpack.c.l.b16 %v5728
    %v5938 = vunpack.c.h.b16 %v5728
    %v5939 = vunpack.c.l.b16 %v5729
    %v5940 = vunpack.c.h.b16 %v5729
    %v5941 = vunpack.c.l.b16 %v5730
    %v5942 = vunpack.c.h.b16 %v5730
    %v5943 = vunpack.c.l.b16 %v5731
    %v5944 = vunpack.c.h.b16 %v5731
    %v5945 = vunpack.c.l.b16 %v5732
    %v5946 = vunpack.c.h.b16 %v5732
    %v5947 = vunpack.c.l.b16 %v5733
    %v5948 = vunpack.c.h.b16 %v5733
    %v5949 = vunpack.c.l.b16 %v5734
    %v5950 = vunpack.c.h.b16 %v5734
    %v5951 = vunpack.c.l.b16 %v5735
    %v5952 = vunpack.c.h.b16 %v5735
    %v5953 = vunpack.c.l.b16 %v5736
    %v5954 = vunpack.c.h.b16 %v5736
    %v5955 = vunpack.c.l.b16 %v5737
    %v5956 = vunpack.c.h.b16 %v5737
    %v5957 = vunpack.c.l.b16 %v5738
    %v5958 = vunpack.c.h.b16 %v5738
    %v5959 = vunpack.c.l.b16 %v5739
    %v5960 = vunpack.c.h.b16 %v5739
    %v5961 = vunpack.c.l.b16 %v5740
    %v5962 = vunpack.c.h.b16 %v5740
    %v5963 = vunpack.c.l.b16 %v5741
    %v5964 = vunpack.c.h.b16 %v5741
    %v5965 = vunpack.c.l.b16 %v5742
    %v5966 = vunpack.c.h.b16 %v5742
    %v5967 = vunpack.c.l.b16 %v5743
    %v5968 = vunpack.c.h.b16 %v5743
    %v5969 = vunpack.c.l.b16 %v5744
    %v5970 = vunpack.c.h.b16 %v5744
    %v5971 = vunpack.c.l.b16 %v5745
    %v5972 = vunpack.c.h.b16 %v5745
    %v5973 = vunpack.c.l.b16 %v5746
    %v5974 = vunpack.c.h.b16 %v5746
    %v5975 = vunpack.c.l.b16 %v5747
    %v5976 = vunpack.c.h.b16 %v5747
    %v5977 = vunpack.c.l.b16 %v5748
    %v5978 = vunpack.c.h.b16 %v5748
    %v5979 = vunpack.c.l.b16 %v5749
    %v5980 = vunpack.c.h.b16 %v5749
    %v5981 = vunpack.c.l.b16 %v5750
    %v5982 = vunpack.c.h.b16 %v5750
    %v5983 = vunpack.c.l.b16 %v5751
    %v5984 = vunpack.c.h.b16 %v5751
    %v5985 = vunpack.c.l.b16 %v5752
    %v5986 = vunpack.c.h.b16 %v5752
    %v5987 = vunpack.c.l.b16 %v5753
    %v5988 = vunpack.c.h.b16 %v5753
    %v5989 = vunpack.c.l.b16 %v5754
    %v5990 = vunpack.c.h.b16 %v5754
    %v5991 = vunpack.c.l.b16 %v5755
    %v5992 = vunpack.c.h.b16 %v5755
    %v5993 = vunpack.c.l.b16 %v5756
    %v5994 = vunpack.c.h.b16 %v5756
    %v5995 = vunpack.c.l.b16 %v5757
    %v5996 = vunpack.c.h.b16 %v5757
    %v5997 = vunpack.c.l.b16 %v5758
    %v5998 = vunpack.c.h.b16 %v5758
    %v5999 = vunpack.c.l.b16 %v5759
    %v6000 = vunpack.c.h.b16 %v5759
    %v6001 = vunpack.c.l.b16 %v5760
    %v6002 = vunpack.c.h.b16 %v5760
    %v6003 = vunpack.c.l.b16 %v5761
    %v6004 = vunpack.c.h.b16 %v5761
    %v6005 = vunpack.c.l.b16 %v5762
    %v6006 = vunpack.c.h.b16 %v5762
    %v6007 = vunpack.c.l.b16 %v5763
    %v6008 = vunpack.c.h.b16 %v5763
    %v6009 = vunpack.c.l.b16 %v5764
    %v6010 = vunpack.c.h.b16 %v5764
    %v6011 = vunpack.c.l.b16 %v5765
    %v6012 = vunpack.c.h.b16 %v5765
    %v6013 = vunpack.c.l.b16 %v5766
    %v6014 = vunpack.c.h.b16 %v5766
    %v6015 = vunpack.c.l.b16 %v5767
    %v6016 = vunpack.c.h.b16 %v5767
    %v6017 = vunpack.c.l.b16 %v5768
    %v6018 = vunpack.c.h.b16 %v5768
    %v6019 = vunpack.c.l.b16 %v5769
    %v6020 = vunpack.c.h.b16 %v5769
    %v6021 = vunpack.c.l.b16 %v5770
    %v6022 = vunpack.c.h.b16 %v5770
    %v6023 = vunpack.c.l.b16 %v5771
    %v6024 = vunpack.c.h.b16 %v5771
    %v6025 = vunpack.c.l.b16 %v5772
    %v6026 = vunpack.c.h.b16 %v5772
    %v6027 = vunpack.c.l.b16 %v5773
    %v6028 = vunpack.c.h.b16 %v5773
    %v6029 = vunpack.c.l.b16 %v5774
    %v6030 = vunpack.c.h.b16 %v5774
    %v6031 = vunpack.c.l.b16 %v5775
    %v6032 = vunpack.c.h.b16 %v5775
    %v6033 = vunpack.c.l.b16 %v5776
    %v6034 = vunpack.c.h.b16 %v5776
    %v6035 = vunpack.c.l.b16 %v5777
    %v6036 = vunpack.c.h.b16 %v5777
    %v6037 = vunpack.c.l.b16 %v5778
    %v6038 = vunpack.c.h.b16 %v5778
    %v6039 = vunpack.c.l.b16 %v5779
    %v6040 = vunpack.c.h.b16 %v5779
    %v6041 = vunpack.c.l.b16 %v5780
    %v6042 = vunpack.c.h.b16 %v5780
    %v6043 = vunpack.c.l.b16 %v5781
    %v6044 = vunpack.c.h.b16 %v5781
    %v6045 = vunpack.c.l.b16 %v5782
    %v6046 = vunpack.c.h.b16 %v5782
    %v6047 = vunpack.c.l.b16 %v5783
    %v6048 = vunpack.c.h.b16 %v5783
    %v6049 = vunpack.c.l.b16 %v5784
    %v6050 = vunpack.c.h.b16 %v5784
    %v6051 = vunpack.c.l.b16 %v5785
    %v6052 = vunpack.c.h.b16 %v5785
    %v6053 = vunpack.c.l.b16 %v5786
    %v6054 = vunpack.c.h.b16 %v5786
    %v6055 = vunpack.c.l.b16 %v5787
    %v6056 = vunpack.c.h.b16 %v5787
    %v6057 = vunpack.c.l.b16 %v5788
    %v6058 = vunpack.c.h.b16 %v5788
    %v6059 = vunpack.c.l.b16 %v5789
    %v6060 = vunpack.c.h.b16 %v5789
    %v6061 = vunpack.c.l.b16 %v5790
    %v6062 = vunpack.c.h.b16 %v5790
    %v6063 = vunpack.c.l.b16 %v5791
    %v6064 = vunpack.c.h.b16 %v5791
    %v6065 = vunpack.c.l.b16 %v5792
    %v6066 = vunpack.c.h.b16 %v5792
    %v6067 = vunpack.c.l.b16 %v5793
    %v6068 = vunpack.c.h.b16 %v5793
    %v6069 = vunpack.c.l.b16 %v5794
    %v6070 = vunpack.c.h.b16 %v5794
    %v6071 = vunpack.c.l.b16 %v5795
    %v6072 = vunpack.c.h.b16 %v5795
    %v6073 = vunpack.c.l.b16 %v5796
    %v6074 = vunpack.c.h.b16 %v5796
    %v6075 = vunpack.c.l.b16 %v5797
    %v6076 = vunpack.c.h.b16 %v5797
    %v6077 = vunpack.c.l.b16 %v5798
    %v6078 = vunpack.c.h.b16 %v5798
    %v6079 = vunpack.c.l.b16 %v5799
    %v6080 = vunpack.c.h.b16 %v5799
    %v6081 = vunpack.c.l.b16 %v5800
    %v6082 = vunpack.c.h.b16 %v5800
    %v6083 = vunpack.c.l.b16 %v5801
    %v6084 = vunpack.c.h.b16 %v5801
    %v6085 = vunpack.c.l.b16 %v5802
    %v6086 = vunpack.c.h.b16 %v5802
    %v6087 = vunpack.c.l.b16 %v5803
    %v6088 = vunpack.c.h.b16 %v5803
    %v6089 = vunpack.c.l.b16 %v5804
    %v6090 = vunpack.c.h.b16 %v5804
    %v6091 = vunpack.c.l.b16 %v5805
    %v6092 = vunpack.c.h.b16 %v5805
    %v6093 = vunpack.c.l.b16 %v5806
    %v6094 = vunpack.c.h.b16 %v5806
    %v6095 = vpack.c.b16 %v5909, %v5903
    %v6096 = vpack.c.b16 %v5910, %v5904
    %v6097 = vpack.c.b16 %v5911, %v5905
    %v6098 = vpack.c.b16 %v5912, %v5906
    %v6099 = vpack.c.b16 %v5913, %v5907
    %v6100 = vpack.c.b16 %v5914, %v5908
    %v6101 = vpack.c.b16 %v5921, %v5915
    %v6102 = vpack.c.b16 %v5922, %v5916
    %v6103 = vpack.c.b16 %v5923, %v5917
    %v6104 = vpack.c.b16 %v5924, %v5918
    %v6105 = vpack.c.b16 %v5925, %v5919
    %v6106 = vpack.c.b16 %v5926, %v5920
    %v6107 = vpack.c.b16 %v5933, %v5927
    %v6108 = vpack.c.b16 %v5934, %v5928
    %v6109 = vpack.c.b16 %v5935, %v5929
    %v6110 = vpack.c.b16 %v5936, %v5930
    %v6111 = vpack.c.b16 %v5937, %v5931
    %v6112 = vpack.c.b16 %v5938, %v5932
    %v6113 = vpack.c.b16 %v5945, %v5939
    %v6114 = vpack.c.b16 %v5946, %v5940
    %v6115 = vpack.c.b16 %v5947, %v5941
    %v6116 = vpack.c.b16 %v5948, %v5942
    %v6117 = vpack.c.b16 %v5949, %v5943
    %v6118 = vpack.c.b16 %v5950, %v5944
    %v6119 = vpack.c.b16 %v5957, %v5951
    %v6120 = vpack.c.b16 %v5958, %v5952
    %v6121 = vpack.c.b16 %v5959, %v5953
    %v6122 = vpack.c.b16 %v5960, %v5954
    %v6123 = vpack.c.b16 %v5961, %v5955
    %v6124 = vpack.c.b16 %v5962, %v5956
    %v6125 = vpack.c.b16 %v5969, %v5963
    %v6126 = vpack.c.b16 %v5970, %v5964
    %v6127 = vpack.c.b16 %v5971, %v5965
    %v6128 = vpack.c.b16 %v5972, %v5966
    %v6129 = vpack.c.b16 %v5973, %v5967
    %v6130 = vpack.c.b16 %v5974, %v5968
    %v6131 = vpack.c.b16 %v5981, %v5975
    %v6132 = vpack.c.b16 %v5982, %v5976
    %v6133 = vpack.c.b16 %v5983, %v5977
    %v6134 = vpack.c.b16 %v5984, %v5978
    %v6135 = vpack.c.b16 %v5985, %v5979
    %v6136 = vpack.c.b16 %v5986, %v5980
    %v6137 = vpack.c.b16 %v5993, %v5987
    %v6138 = vpack.c.b16 %v5994, %v5988
    %v6139 = vpack.c.b16 %v5995, %v5989
    %v6140 = vpack.c.b16 %v5996, %v5990
    %v6141 = vpack.c.b16 %v5997, %v5991
    %v6142 = vpack.c.b16 %v5998, %v5992
    %v6143 = vpack.c.b16 %v6005, %v5999
    %v6144 = vpack.c.b16 %v6006, %v6000
    %v6145 = vpack.c.b16 %v6007, %v6001
    %v6146 = vpack.c.b16 %v6008, %v6002
    %v6147 = vpack.c.b16 %v6009, %v6003
    %v6148 = vpack.c.b16 %v6010, %v6004
    %v6149 = vpack.c.b16 %v6017, %v6011
    %v6150 = vpack.c.b16 %v6018, %v6012
    %v6151 = vpack.c.b16 %v6019, %v6013
    %v6152 = vpack.c.b16 %v6020, %v6014
    %v6153 = vpack.c.b16 %v6021, %v6015
    %v6154 = vpack.c.b16 %v6022, %v6016
    %v6155 = vpack.c.b16 %v6029, %v6023
    %v6156 = vpack.c.b16 %v6030, %v6024
    %v6157 = vpack.c.b16 %v6031, %v6025
    %v6158 = vpack.c.b16 %v6032, %v6026
    %v6159 = vpack.c.b16 %v6033, %v6027
    %v6160 = vpack.c.b16 %v6034, %v6028
    %v6161 = vpack.c.b16 %v6041, %v6035
    %v6162 = vpack.c.b16 %v6042, %v6036
    %v6163 = vpack.c.b16 %v6043, %v6037
    %v6164 = vpack.c.b16 %v6044, %v6038
    %v6165 = vpack.c.b16 %v6045, %v6039
    %v6166 = vpack.c.b16 %v6046, %v6040
    %v6167 = vpack.c.b16 %v6053, %v6047
    %v6168 = vpack.c.b16 %v6054, %v6048
    %v6169 = vpack.c.b16 %v6055, %v6049
    %v6170 = vpack.c.b16 %v6056, %v6050
    %v6171 = vpack.c.b16 %v6057, %v6051
    %v6172 = vpack.c.b16 %v6058, %v6052
    %v6173 = vpack.c.b16 %v6065, %v6059
    %v6174 = vpack.c.b16 %v6066, %v6060
    %v6175 = vpack.c.b16 %v6067, %v6061
    %v6176 = vpack.c.b16 %v6068, %v6062
    %v6177 = vpack.c.b16 %v6069, %v6063
    %v6178 = vpack.c.b16 %v6070, %v6064
    %v6179 = vpack.c.b16 %v6077, %v6071
    %v6180 = vpack.c.b16 %v6078, %v6072
    %v6181 = vpack.c.b16 %v6079, %v6073
    %v6182 = vpack.c.b16 %v6080, %v6074
    %v6183 = vpack.c.b16 %v6081, %v6075
    %v6184 = vpack.c.b16 %v6082, %v6076
    %v6185 = vpack.c.b16 %v6089, %v6083
    %v6186 = vpack.c.b16 %v6090, %v6084
    %v6187 = vpack.c.b16 %v6091, %v6085
    %v6188 = vpack.c.b16 %v6092, %v6086
    %v6189 = vpack.c.b16 %v6093, %v6087
    %v6190 = vpack.c.b16 %v6094, %v6088
    %6287 = vmatprep.subr.bf16.mxu0 %v6096
    %6288 = vmatpush1.bf16.msra.mxu0 %v6095
    %6289 = vmatprep.subr.bf16.mxu0 %v6102
    %6290 = vmatpush1.bf16.msra.mxu0 %v6101
    %6291 = vmatprep.subr.bf16.mxu0 %v6108
    %6292 = vmatpush1.bf16.msra.mxu0 %v6107
    %6293 = vmatprep.subr.bf16.mxu0 %v6114
    %6294 = vmatpush1.bf16.msra.mxu0 %v6113
    %6295 = vmatprep.subr.bf16.mxu0 %v6120
    %6296 = vmatpush1.bf16.msra.mxu0 %v6119
    %6297 = vmatprep.subr.bf16.mxu0 %v6126
    %6298 = vmatpush1.bf16.msra.mxu0 %v6125
    %6299 = vmatprep.subr.bf16.mxu0 %v6132
    %6300 = vmatpush1.bf16.msra.mxu0 %v6131
    %6301 = vmatprep.subr.bf16.mxu0 %v6138
    %6302 = vmatpush1.bf16.msra.mxu0 %v6137
    %6303 = vmatprep.subr.bf16.mxu0 %v6144
    %6304 = vmatpush1.bf16.msra.mxu0 %v6143
    %6305 = vmatprep.subr.bf16.mxu0 %v6150
    %6306 = vmatpush1.bf16.msra.mxu0 %v6149
    %6307 = vmatprep.subr.bf16.mxu0 %v6156
    %6308 = vmatpush1.bf16.msra.mxu0 %v6155
    %6309 = vmatprep.subr.bf16.mxu0 %v6162
    %6310 = vmatpush1.bf16.msra.mxu0 %v6161
    %6311 = vmatprep.subr.bf16.mxu0 %v6168
    %6312 = vmatpush1.bf16.msra.mxu0 %v6167
    %6313 = vmatprep.subr.bf16.mxu0 %v6174
    %6314 = vmatpush1.bf16.msra.mxu0 %v6173
    %6315 = vmatprep.subr.bf16.mxu0 %v6180
    %6316 = vmatpush1.bf16.msra.mxu0 %v6179
    %6317 = vmatprep.subr.bf16.mxu0 %v6186
    %6318 = vmatpush1.bf16.msra.mxu0 %v6185
    %6319 = vmatprep.mubr.bf16.mxu0 %v5710
    %6320 = vmatmul.mubr.bf16.gmra.mrb[0].mxu0 %v5709
    %v6321 = vpop.f32.mrb[0].mxu0
    %v6322 = vadd.f32 0.0, %v6321
    %v6323 = vpop.f32.mrb[0].mxu0
    %v6324 = vadd.f32 0.0, %v6323
    %v6325 = vpop.f32.mrb[0].mxu0
    %v6326 = vpop.f32.mrb[0].mxu0
    %6327 = vdwg.mxu0
    %6328 = vmatprep.subr.bf16.mxu0 %v6098
    %6329 = vmatpush1.bf16.msra.mxu0 %v6097
    %6330 = vmatprep.subr.bf16.mxu0 %v6104
    %6331 = vmatpush1.bf16.msra.mxu0 %v6103
    %6332 = vmatprep.subr.bf16.mxu0 %v6110
    %6333 = vmatpush1.bf16.msra.mxu0 %v6109
    %6334 = vmatprep.subr.bf16.mxu0 %v6116
    %6335 = vmatpush1.bf16.msra.mxu0 %v6115
    %6336 = vmatprep.subr.bf16.mxu0 %v6122
    %6337 = vmatpush1.bf16.msra.mxu0 %v6121
    %6338 = vmatprep.subr.bf16.mxu0 %v6128
    %6339 = vmatpush1.bf16.msra.mxu0 %v6127
    %6340 = vmatprep.subr.bf16.mxu0 %v6134
    %6341 = vmatpush1.bf16.msra.mxu0 %v6133
    %6342 = vmatprep.subr.bf16.mxu0 %v6140
    %6343 = vmatpush1.bf16.msra.mxu0 %v6139
    %6344 = vmatprep.subr.bf16.mxu0 %v6146
    %6345 = vmatpush1.bf16.msra.mxu0 %v6145
    %6346 = vmatprep.subr.bf16.mxu0 %v6152
    %6347 = vmatpush1.bf16.msra.mxu0 %v6151
    %6348 = vmatprep.subr.bf16.mxu0 %v6158
    %6349 = vmatpush1.bf16.msra.mxu0 %v6157
    %6350 = vmatprep.subr.bf16.mxu0 %v6164
    %6351 = vmatpush1.bf16.msra.mxu0 %v6163
    %6352 = vmatprep.subr.bf16.mxu0 %v6170
    %6353 = vmatpush1.bf16.msra.mxu0 %v6169
    %6354 = vmatprep.subr.bf16.mxu0 %v6176
    %6355 = vmatpush1.bf16.msra.mxu0 %v6175
    %6356 = vmatprep.subr.bf16.mxu0 %v6182
    %6357 = vmatpush1.bf16.msra.mxu0 %v6181
    %6358 = vmatprep.subr.bf16.mxu0 %v6188
    %6359 = vmatpush1.bf16.msra.mxu0 %v6187
    %6360 = vmatprep.mubr.bf16.mxu0 %v5710
    %6361 = vmatmul.mubr.bf16.gmra.mrb[0].mxu0 %v5709
    %v6362 = vpop.f32.mrb[0].mxu0
    %v6363 = vadd.f32 0.0, %v6362
    %v6364 = vpop.f32.mrb[0].mxu0
    %v6365 = vadd.f32 0.0, %v6364
    %v6366 = vpop.f32.mrb[0].mxu0
    %v6367 = vpop.f32.mrb[0].mxu0
    %6368 = vdwg.mxu0
    %6369 = vmatprep.subr.bf16.mxu0 %v6100
    %6370 = vmatpush1.bf16.msra.mxu0 %v6099
    %6371 = vmatprep.subr.bf16.mxu0 %v6106
    %6372 = vmatpush1.bf16.msra.mxu0 %v6105
    %6373 = vmatprep.subr.bf16.mxu0 %v6112
    %6374 = vmatpush1.bf16.msra.mxu0 %v6111
    %6375 = vmatprep.subr.bf16.mxu0 %v6118
    %6376 = vmatpush1.bf16.msra.mxu0 %v6117
    %6377 = vmatprep.subr.bf16.mxu0 %v6124
    %6378 = vmatpush1.bf16.msra.mxu0 %v6123
    %6379 = vmatprep.subr.bf16.mxu0 %v6130
    %6380 = vmatpush1.bf16.msra.mxu0 %v6129
    %6381 = vmatprep.subr.bf16.mxu0 %v6136
    %6382 = vmatpush1.bf16.msra.mxu0 %v6135
    %6383 = vmatprep.subr.bf16.mxu0 %v6142
    %6384 = vmatpush1.bf16.msra.mxu0 %v6141
    %6385 = vmatprep.subr.bf16.mxu0 %v6148
    %6386 = vmatpush1.bf16.msra.mxu0 %v6147
    %6387 = vmatprep.subr.bf16.mxu0 %v6154
    %6388 = vmatpush1.bf16.msra.mxu0 %v6153
    %6389 = vmatprep.subr.bf16.mxu0 %v6160
    %6390 = vmatpush1.bf16.msra.mxu0 %v6159
    %6391 = vmatprep.subr.bf16.mxu0 %v6166
    %6392 = vmatpush1.bf16.msra.mxu0 %v6165
    %6393 = vmatprep.subr.bf16.mxu0 %v6172
    %6394 = vmatpush1.bf16.msra.mxu0 %v6171
    %6395 = vmatprep.subr.bf16.mxu0 %v6178
    %6396 = vmatpush1.bf16.msra.mxu0 %v6177
    %6397 = vmatprep.subr.bf16.mxu0 %v6184
    %6398 = vmatpush1.bf16.msra.mxu0 %v6183
    %6399 = vmatprep.subr.bf16.mxu0 %v6190
    %6400 = vmatpush1.bf16.msra.mxu0 %v6189
    %6401 = vmatprep.mubr.bf16.mxu0 %v5710
    %6402 = vmatmul.mubr.bf16.gmra.mrb[0].mxu0 %v5709
    %v6403 = vpop.f32.mrb[0].mxu0
    %v6404 = vadd.f32 0.0, %v6403
    %v6405 = vpop.f32.mrb[0].mxu0
    %v6406 = vadd.f32 0.0, %v6405
    %v6407 = vpop.f32.mrb[0].mxu0
    %v6408 = vpop.f32.mrb[0].mxu0
    %6409 = vdwg.mxu0
    %s6410 = scalar_lea.vmem [#allocation3], 6
    %v6411 = vld [vmem:[%s6410] ss:$8 sm:$0xf]
    %v6412 = vld [vmem:[%s6410] ss:$8 sm:$0x30]
    %v6413 = vor.u32 %v6411, %v6412
    %v6416 = vcombine.low %v6322, %v6324
    %v6418 = vunpack.c.l.s4 1966171168
    %v6419 = vunpack.c.0.s8 %v6418
    %v6420 = vlaneseq
    %v6421 = vshrl.u32 %v6420, 7
    %v6422 = vsub.s32 %v6419, %v6421
    %v6423 = vrot.slane %v6416, %v6422
    %v6425 = vunpack.c.l.s4 1966171168
    %v6426 = vunpack.c.0.s8 %v6425
    %v6427 = vlaneseq
    %v6428 = vshrl.u32 %v6427, 7
    %v6429 = vsub.s32 %v6426, %v6428
    %v6430 = vrot.slane %v6423, %v6429
    %v6432 = vadd.f32 %v6413, %v6430
    %v6433 = vxor.u32 %v6432, 2147483648
    %v6434 = vmul.f32 %v6433, 1.442695
    %v6435 = vpow.pop %v6434
    %v6436 = vadd.f32 %v6435, 1.0
    %v6437 = vrcp.pop %v6436
    %v6438 = vmul.f32 1.0, %v6437
    %v6440 = vrot.slane %v6413, 2
    %v6444 = vcombine.low %v6363, %v6365
    %v6446 = vunpack.c.l.s4 1966171168
    %v6447 = vunpack.c.0.s8 %v6446
    %v6448 = vlaneseq
    %v6449 = vshrl.u32 %v6448, 7
    %v6450 = vsub.s32 %v6447, %v6449
    %v6451 = vrot.slane %v6444, %v6450
    %v6453 = vunpack.c.l.s4 1966171168
    %v6454 = vunpack.c.0.s8 %v6453
    %v6455 = vlaneseq
    %v6456 = vshrl.u32 %v6455, 7
    %v6457 = vsub.s32 %v6454, %v6456
    %v6458 = vrot.slane %v6451, %v6457
    %v6460 = vadd.f32 %v6440, %v6458
    %v6461 = vxor.u32 %v6460, 2147483648
    %v6462 = vmul.f32 %v6461, 1.442695
    %v6463 = vpow.pop %v6462
    %v6464 = vadd.f32 %v6463, 1.0
    %v6465 = vrcp.pop %v6464
    %v6466 = vmul.f32 1.0, %v6465
    %v6467 = vld [vmem:[%s5] sm:$0x3]
    %v6469 = vlaneseq
    %v6470 = vshrl.u32 %v6469, 7
    %v6471 = vsub.s32 0, %v6470
    %v6472 = vrot.slane %v6467, %v6471
    %v6473 = vlaneseq
    %v6474 = vshrl.u32 %v6473, 7
    %v6475 = vsub.s32 1, %v6474
    %v6476 = vrot.slane %v6467, %v6475
    %v6479 = vadd.f32 %v6404, %v6472
    %v6480 = vadd.f32 %v6406, %v6476
    %v6483 = vcombine.low %v6479, %v6480
    %v6485 = vunpack.c.l.s4 1966171168
    %v6486 = vunpack.c.0.s8 %v6485
    %v6487 = vlaneseq
    %v6488 = vshrl.u32 %v6487, 7
    %v6489 = vsub.s32 %v6486, %v6488
    %v6490 = vrot.slane %v6483, %v6489
    %v6492 = vunpack.c.l.s4 1966171168
    %v6493 = vunpack.c.0.s8 %v6492
    %v6494 = vlaneseq
    %v6495 = vshrl.u32 %v6494, 7
    %v6496 = vsub.s32 %v6493, %v6495
    %v6497 = vrot.slane %v6490, %v6496
    %v6499 = vmul.f32 %v6438, %v6497
    %v6500 = vrot.slane %v6413, 4
    %v6502 = vadd.f32 %v6500, %v6499
    %v6503 = vtanh.pop %v6502
    %v6504 = vsub.f32 %v5694, %v6503
    %v6505 = vmul.f32 %v6466, %v6504
    %v6506 = vadd.f32 %v6503, %v6505
    %s6507 = scalar_lea.vmem [#allocation9], 6
    %6508 = vst.msk [vmem:[%s6507] ss:$8 sm:$0x3] %vm1635, %v6506
    %6509 = vst.msk [vmem:[%s6507] ss:$8 sm:$0x0] %vm1635, %v6506
    %v6511 = vlaneseq
    %v6512 = vshrl.u32 %v6511, 7
    %v6513 = vsub.s32 0, %v6512
    %v6514 = vrot.slane %v6506, %v6513
    %v6515 = vlaneseq
    %v6516 = vshrl.u32 %v6515, 7
    %v6517 = vsub.s32 1, %v6516
    %v6518 = vrot.slane %v6506, %v6517
    %v6521 = vpack.c.bf16 %v6514, %v6514
    %v6522 = vpack.c.bf16 %v6518, %v6518
    %v6523 = vld [vmem:[#allocation7] sm:$0xff]
    %v6524 = vld [vmem:[#allocation7 + $0x8] sm:$0xff]
    %v6525 = vld [vmem:[#allocation7 + $0x10] sm:$0xff]
    %v6526 = vld [vmem:[#allocation7 + $0x18] sm:$0xff]
    %v6527 = vld [vmem:[#allocation7 + $0x20] sm:$0xff]
    %v6528 = vld [vmem:[#allocation7 + $0x28] sm:$0xff]
    %v6529 = vld [vmem:[#allocation7 + $0x30] sm:$0xff]
    %v6530 = vld [vmem:[#allocation7 + $0x38] sm:$0xff]
    %v6531 = vld [vmem:[#allocation7 + $0x40] sm:$0xff]
    %v6532 = vld [vmem:[#allocation7 + $0x48] sm:$0xff]
    %v6533 = vld [vmem:[#allocation7 + $0x50] sm:$0xff]
    %v6534 = vld [vmem:[#allocation7 + $0x58] sm:$0xff]
    %v6535 = vld [vmem:[#allocation7 + $0x60] sm:$0xff]
    %v6536 = vld [vmem:[#allocation7 + $0x68] sm:$0xff]
    %v6537 = vld [vmem:[#allocation7 + $0x70] sm:$0xff]
    %v6538 = vld [vmem:[#allocation7 + $0x78] sm:$0xff]
    %v6539 = vld [vmem:[#allocation7 + $0x80] sm:$0xff]
    %v6540 = vld [vmem:[#allocation7 + $0x88] sm:$0xff]
    %v6541 = vld [vmem:[#allocation7 + $0x90] sm:$0xff]
    %v6542 = vld [vmem:[#allocation7 + $0x98] sm:$0xff]
    %v6543 = vld [vmem:[#allocation7 + $0xa0] sm:$0xff]
    %v6544 = vld [vmem:[#allocation7 + $0xa8] sm:$0xff]
    %v6545 = vld [vmem:[#allocation7 + $0xb0] sm:$0xff]
    %v6546 = vld [vmem:[#allocation7 + $0xb8] sm:$0xff]
    %v6547 = vld [vmem:[#allocation7 + $0xc0] sm:$0xff]
    %v6548 = vld [vmem:[#allocation7 + $0xc8] sm:$0xff]
    %v6549 = vld [vmem:[#allocation7 + $0xd0] sm:$0xff]
    %v6550 = vld [vmem:[#allocation7 + $0xd8] sm:$0xff]
    %v6551 = vld [vmem:[#allocation7 + $0xe0] sm:$0xff]
    %v6552 = vld [vmem:[#allocation7 + $0xe8] sm:$0xff]
    %v6553 = vld [vmem:[#allocation7 + $0xf0] sm:$0xff]
    %v6554 = vld [vmem:[#allocation7 + $0xf8] sm:$0xff]
    %v6555 = vld [vmem:[#allocation7 + $0x100] sm:$0xff]
    %v6556 = vld [vmem:[#allocation7 + $0x108] sm:$0xff]
    %v6557 = vld [vmem:[#allocation7 + $0x110] sm:$0xff]
    %v6558 = vld [vmem:[#allocation7 + $0x118] sm:$0xff]
    %v6559 = vld [vmem:[#allocation7 + $0x120] sm:$0xff]
    %v6560 = vld [vmem:[#allocation7 + $0x128] sm:$0xff]
    %v6561 = vld [vmem:[#allocation7 + $0x130] sm:$0xff]
    %v6562 = vld [vmem:[#allocation7 + $0x138] sm:$0xff]
    %v6563 = vld [vmem:[#allocation7 + $0x140] sm:$0xff]
    %v6564 = vld [vmem:[#allocation7 + $0x148] sm:$0xff]
    %v6565 = vld [vmem:[#allocation7 + $0x150] sm:$0xff]
    %v6566 = vld [vmem:[#allocation7 + $0x158] sm:$0xff]
    %v6567 = vld [vmem:[#allocation7 + $0x160] sm:$0xff]
    %v6568 = vld [vmem:[#allocation7 + $0x168] sm:$0xff]
    %v6569 = vld [vmem:[#allocation7 + $0x170] sm:$0xff]
    %v6570 = vld [vmem:[#allocation7 + $0x178] sm:$0xff]
    %v6571 = vld [vmem:[#allocation7 + $0x180] sm:$0xff]
    %v6572 = vld [vmem:[#allocation7 + $0x188] sm:$0xff]
    %v6573 = vld [vmem:[#allocation7 + $0x190] sm:$0xff]
    %v6574 = vld [vmem:[#allocation7 + $0x198] sm:$0xff]
    %v6575 = vld [vmem:[#allocation7 + $0x1a0] sm:$0xff]
    %v6576 = vld [vmem:[#allocation7 + $0x1a8] sm:$0xff]
    %v6577 = vld [vmem:[#allocation7 + $0x1b0] sm:$0xff]
    %v6578 = vld [vmem:[#allocation7 + $0x1b8] sm:$0xff]
    %v6579 = vld [vmem:[#allocation7 + $0x1c0] sm:$0xff]
    %v6580 = vld [vmem:[#allocation7 + $0x1c8] sm:$0xff]
    %v6581 = vld [vmem:[#allocation7 + $0x1d0] sm:$0xff]
    %v6582 = vld [vmem:[#allocation7 + $0x1d8] sm:$0xff]
    %v6583 = vld [vmem:[#allocation7 + $0x1e0] sm:$0xff]
    %v6584 = vld [vmem:[#allocation7 + $0x1e8] sm:$0xff]
    %v6585 = vld [vmem:[#allocation7 + $0x1f0] sm:$0xff]
    %v6586 = vld [vmem:[#allocation7 + $0x1f8] sm:$0xff]
    %v6587 = vld [vmem:[#allocation7 + $0x200] sm:$0xff]
    %v6588 = vld [vmem:[#allocation7 + $0x208] sm:$0xff]
    %v6589 = vld [vmem:[#allocation7 + $0x210] sm:$0xff]
    %v6590 = vld [vmem:[#allocation7 + $0x218] sm:$0xff]
    %v6591 = vld [vmem:[#allocation7 + $0x220] sm:$0xff]
    %v6592 = vld [vmem:[#allocation7 + $0x228] sm:$0xff]
    %v6593 = vld [vmem:[#allocation7 + $0x230] sm:$0xff]
    %v6594 = vld [vmem:[#allocation7 + $0x238] sm:$0xff]
    %v6595 = vld [vmem:[#allocation7 + $0x240] sm:$0xff]
    %v6596 = vld [vmem:[#allocation7 + $0x248] sm:$0xff]
    %v6597 = vld [vmem:[#allocation7 + $0x250] sm:$0xff]
    %v6598 = vld [vmem:[#allocation7 + $0x258] sm:$0xff]
    %v6599 = vld [vmem:[#allocation7 + $0x260] sm:$0xff]
    %v6600 = vld [vmem:[#allocation7 + $0x268] sm:$0xff]
    %v6601 = vld [vmem:[#allocation7 + $0x270] sm:$0xff]
    %v6602 = vld [vmem:[#allocation7 + $0x278] sm:$0xff]
    %v6603 = vld [vmem:[#allocation7 + $0x280] sm:$0xff]
    %v6604 = vld [vmem:[#allocation7 + $0x288] sm:$0xff]
    %v6605 = vld [vmem:[#allocation7 + $0x290] sm:$0xff]
    %v6606 = vld [vmem:[#allocation7 + $0x298] sm:$0xff]
    %v6607 = vld [vmem:[#allocation7 + $0x2a0] sm:$0xff]
    %v6608 = vld [vmem:[#allocation7 + $0x2a8] sm:$0xff]
    %v6609 = vld [vmem:[#allocation7 + $0x2b0] sm:$0xff]
    %v6610 = vld [vmem:[#allocation7 + $0x2b8] sm:$0xff]
    %v6611 = vld [vmem:[#allocation7 + $0x2c0] sm:$0xff]
    %v6612 = vld [vmem:[#allocation7 + $0x2c8] sm:$0xff]
    %v6613 = vld [vmem:[#allocation7 + $0x2d0] sm:$0xff]
    %v6614 = vld [vmem:[#allocation7 + $0x2d8] sm:$0xff]
    %v6615 = vld [vmem:[#allocation7 + $0x2e0] sm:$0xff]
    %v6616 = vld [vmem:[#allocation7 + $0x2e8] sm:$0xff]
    %v6617 = vld [vmem:[#allocation7 + $0x2f0] sm:$0xff]
    %v6618 = vld [vmem:[#allocation7 + $0x2f8] sm:$0xff]
    %v6715 = vunpack.c.l.b16 %v6523
    %v6716 = vunpack.c.h.b16 %v6523
    %v6717 = vunpack.c.l.b16 %v6524
    %v6718 = vunpack.c.h.b16 %v6524
    %v6719 = vunpack.c.l.b16 %v6525
    %v6720 = vunpack.c.h.b16 %v6525
    %v6721 = vunpack.c.l.b16 %v6526
    %v6722 = vunpack.c.h.b16 %v6526
    %v6723 = vunpack.c.l.b16 %v6527
    %v6724 = vunpack.c.h.b16 %v6527
    %v6725 = vunpack.c.l.b16 %v6528
    %v6726 = vunpack.c.h.b16 %v6528
    %v6727 = vunpack.c.l.b16 %v6529
    %v6728 = vunpack.c.h.b16 %v6529
    %v6729 = vunpack.c.l.b16 %v6530
    %v6730 = vunpack.c.h.b16 %v6530
    %v6731 = vunpack.c.l.b16 %v6531
    %v6732 = vunpack.c.h.b16 %v6531
    %v6733 = vunpack.c.l.b16 %v6532
    %v6734 = vunpack.c.h.b16 %v6532
    %v6735 = vunpack.c.l.b16 %v6533
    %v6736 = vunpack.c.h.b16 %v6533
    %v6737 = vunpack.c.l.b16 %v6534
    %v6738 = vunpack.c.h.b16 %v6534
    %v6739 = vunpack.c.l.b16 %v6535
    %v6740 = vunpack.c.h.b16 %v6535
    %v6741 = vunpack.c.l.b16 %v6536
    %v6742 = vunpack.c.h.b16 %v6536
    %v6743 = vunpack.c.l.b16 %v6537
    %v6744 = vunpack.c.h.b16 %v6537
    %v6745 = vunpack.c.l.b16 %v6538
    %v6746 = vunpack.c.h.b16 %v6538
    %v6747 = vunpack.c.l.b16 %v6539
    %v6748 = vunpack.c.h.b16 %v6539
    %v6749 = vunpack.c.l.b16 %v6540
    %v6750 = vunpack.c.h.b16 %v6540
    %v6751 = vunpack.c.l.b16 %v6541
    %v6752 = vunpack.c.h.b16 %v6541
    %v6753 = vunpack.c.l.b16 %v6542
    %v6754 = vunpack.c.h.b16 %v6542
    %v6755 = vunpack.c.l.b16 %v6543
    %v6756 = vunpack.c.h.b16 %v6543
    %v6757 = vunpack.c.l.b16 %v6544
    %v6758 = vunpack.c.h.b16 %v6544
    %v6759 = vunpack.c.l.b16 %v6545
    %v6760 = vunpack.c.h.b16 %v6545
    %v6761 = vunpack.c.l.b16 %v6546
    %v6762 = vunpack.c.h.b16 %v6546
    %v6763 = vunpack.c.l.b16 %v6547
    %v6764 = vunpack.c.h.b16 %v6547
    %v6765 = vunpack.c.l.b16 %v6548
    %v6766 = vunpack.c.h.b16 %v6548
    %v6767 = vunpack.c.l.b16 %v6549
    %v6768 = vunpack.c.h.b16 %v6549
    %v6769 = vunpack.c.l.b16 %v6550
    %v6770 = vunpack.c.h.b16 %v6550
    %v6771 = vunpack.c.l.b16 %v6551
    %v6772 = vunpack.c.h.b16 %v6551
    %v6773 = vunpack.c.l.b16 %v6552
    %v6774 = vunpack.c.h.b16 %v6552
    %v6775 = vunpack.c.l.b16 %v6553
    %v6776 = vunpack.c.h.b16 %v6553
    %v6777 = vunpack.c.l.b16 %v6554
    %v6778 = vunpack.c.h.b16 %v6554
    %v6779 = vunpack.c.l.b16 %v6555
    %v6780 = vunpack.c.h.b16 %v6555
    %v6781 = vunpack.c.l.b16 %v6556
    %v6782 = vunpack.c.h.b16 %v6556
    %v6783 = vunpack.c.l.b16 %v6557
    %v6784 = vunpack.c.h.b16 %v6557
    %v6785 = vunpack.c.l.b16 %v6558
    %v6786 = vunpack.c.h.b16 %v6558
    %v6787 = vunpack.c.l.b16 %v6559
    %v6788 = vunpack.c.h.b16 %v6559
    %v6789 = vunpack.c.l.b16 %v6560
    %v6790 = vunpack.c.h.b16 %v6560
    %v6791 = vunpack.c.l.b16 %v6561
    %v6792 = vunpack.c.h.b16 %v6561
    %v6793 = vunpack.c.l.b16 %v6562
    %v6794 = vunpack.c.h.b16 %v6562
    %v6795 = vunpack.c.l.b16 %v6563
    %v6796 = vunpack.c.h.b16 %v6563
    %v6797 = vunpack.c.l.b16 %v6564
    %v6798 = vunpack.c.h.b16 %v6564
    %v6799 = vunpack.c.l.b16 %v6565
    %v6800 = vunpack.c.h.b16 %v6565
    %v6801 = vunpack.c.l.b16 %v6566
    %v6802 = vunpack.c.h.b16 %v6566
    %v6803 = vunpack.c.l.b16 %v6567
    %v6804 = vunpack.c.h.b16 %v6567
    %v6805 = vunpack.c.l.b16 %v6568
    %v6806 = vunpack.c.h.b16 %v6568
    %v6807 = vunpack.c.l.b16 %v6569
    %v6808 = vunpack.c.h.b16 %v6569
    %v6809 = vunpack.c.l.b16 %v6570
    %v6810 = vunpack.c.h.b16 %v6570
    %v6811 = vunpack.c.l.b16 %v6571
    %v6812 = vunpack.c.h.b16 %v6571
    %v6813 = vunpack.c.l.b16 %v6572
    %v6814 = vunpack.c.h.b16 %v6572
    %v6815 = vunpack.c.l.b16 %v6573
    %v6816 = vunpack.c.h.b16 %v6573
    %v6817 = vunpack.c.l.b16 %v6574
    %v6818 = vunpack.c.h.b16 %v6574
    %v6819 = vunpack.c.l.b16 %v6575
    %v6820 = vunpack.c.h.b16 %v6575
    %v6821 = vunpack.c.l.b16 %v6576
    %v6822 = vunpack.c.h.b16 %v6576
    %v6823 = vunpack.c.l.b16 %v6577
    %v6824 = vunpack.c.h.b16 %v6577
    %v6825 = vunpack.c.l.b16 %v6578
    %v6826 = vunpack.c.h.b16 %v6578
    %v6827 = vunpack.c.l.b16 %v6579
    %v6828 = vunpack.c.h.b16 %v6579
    %v6829 = vunpack.c.l.b16 %v6580
    %v6830 = vunpack.c.h.b16 %v6580
    %v6831 = vunpack.c.l.b16 %v6581
    %v6832 = vunpack.c.h.b16 %v6581
    %v6833 = vunpack.c.l.b16 %v6582
    %v6834 = vunpack.c.h.b16 %v6582
    %v6835 = vunpack.c.l.b16 %v6583
    %v6836 = vunpack.c.h.b16 %v6583
    %v6837 = vunpack.c.l.b16 %v6584
    %v6838 = vunpack.c.h.b16 %v6584
    %v6839 = vunpack.c.l.b16 %v6585
    %v6840 = vunpack.c.h.b16 %v6585
    %v6841 = vunpack.c.l.b16 %v6586
    %v6842 = vunpack.c.h.b16 %v6586
    %v6843 = vunpack.c.l.b16 %v6587
    %v6844 = vunpack.c.h.b16 %v6587
    %v6845 = vunpack.c.l.b16 %v6588
    %v6846 = vunpack.c.h.b16 %v6588
    %v6847 = vunpack.c.l.b16 %v6589
    %v6848 = vunpack.c.h.b16 %v6589
    %v6849 = vunpack.c.l.b16 %v6590
    %v6850 = vunpack.c.h.b16 %v6590
    %v6851 = vunpack.c.l.b16 %v6591
    %v6852 = vunpack.c.h.b16 %v6591
    %v6853 = vunpack.c.l.b16 %v6592
    %v6854 = vunpack.c.h.b16 %v6592
    %v6855 = vunpack.c.l.b16 %v6593
    %v6856 = vunpack.c.h.b16 %v6593
    %v6857 = vunpack.c.l.b16 %v6594
    %v6858 = vunpack.c.h.b16 %v6594
    %v6859 = vunpack.c.l.b16 %v6595
    %v6860 = vunpack.c.h.b16 %v6595
    %v6861 = vunpack.c.l.b16 %v6596
    %v6862 = vunpack.c.h.b16 %v6596
    %v6863 = vunpack.c.l.b16 %v6597
    %v6864 = vunpack.c.h.b16 %v6597
    %v6865 = vunpack.c.l.b16 %v6598
    %v6866 = vunpack.c.h.b16 %v6598
    %v6867 = vunpack.c.l.b16 %v6599
    %v6868 = vunpack.c.h.b16 %v6599
    %v6869 = vunpack.c.l.b16 %v6600
    %v6870 = vunpack.c.h.b16 %v6600
    %v6871 = vunpack.c.l.b16 %v6601
    %v6872 = vunpack.c.h.b16 %v6601
    %v6873 = vunpack.c.l.b16 %v6602
    %v6874 = vunpack.c.h.b16 %v6602
    %v6875 = vunpack.c.l.b16 %v6603
    %v6876 = vunpack.c.h.b16 %v6603
    %v6877 = vunpack.c.l.b16 %v6604
    %v6878 = vunpack.c.h.b16 %v6604
    %v6879 = vunpack.c.l.b16 %v6605
    %v6880 = vunpack.c.h.b16 %v6605
    %v6881 = vunpack.c.l.b16 %v6606
    %v6882 = vunpack.c.h.b16 %v6606
    %v6883 = vunpack.c.l.b16 %v6607
    %v6884 = vunpack.c.h.b16 %v6607
    %v6885 = vunpack.c.l.b16 %v6608
    %v6886 = vunpack.c.h.b16 %v6608
    %v6887 = vunpack.c.l.b16 %v6609
    %v6888 = vunpack.c.h.b16 %v6609
    %v6889 = vunpack.c.l.b16 %v6610
    %v6890 = vunpack.c.h.b16 %v6610
    %v6891 = vunpack.c.l.b16 %v6611
    %v6892 = vunpack.c.h.b16 %v6611
    %v6893 = vunpack.c.l.b16 %v6612
    %v6894 = vunpack.c.h.b16 %v6612
    %v6895 = vunpack.c.l.b16 %v6613
    %v6896 = vunpack.c.h.b16 %v6613
    %v6897 = vunpack.c.l.b16 %v6614
    %v6898 = vunpack.c.h.b16 %v6614
    %v6899 = vunpack.c.l.b16 %v6615
    %v6900 = vunpack.c.h.b16 %v6615
    %v6901 = vunpack.c.l.b16 %v6616
    %v6902 = vunpack.c.h.b16 %v6616
    %v6903 = vunpack.c.l.b16 %v6617
    %v6904 = vunpack.c.h.b16 %v6617
    %v6905 = vunpack.c.l.b16 %v6618
    %v6906 = vunpack.c.h.b16 %v6618
    %v6907 = vpack.c.b16 %v6721, %v6715
    %v6908 = vpack.c.b16 %v6722, %v6716
    %v6909 = vpack.c.b16 %v6723, %v6717
    %v6910 = vpack.c.b16 %v6724, %v6718
    %v6911 = vpack.c.b16 %v6725, %v6719
    %v6912 = vpack.c.b16 %v6726, %v6720
    %v6913 = vpack.c.b16 %v6733, %v6727
    %v6914 = vpack.c.b16 %v6734, %v6728
    %v6915 = vpack.c.b16 %v6735, %v6729
    %v6916 = vpack.c.b16 %v6736, %v6730
    %v6917 = vpack.c.b16 %v6737, %v6731
    %v6918 = vpack.c.b16 %v6738, %v6732
    %v6919 = vpack.c.b16 %v6745, %v6739
    %v6920 = vpack.c.b16 %v6746, %v6740
    %v6921 = vpack.c.b16 %v6747, %v6741
    %v6922 = vpack.c.b16 %v6748, %v6742
    %v6923 = vpack.c.b16 %v6749, %v6743
    %v6924 = vpack.c.b16 %v6750, %v6744
    %v6925 = vpack.c.b16 %v6757, %v6751
    %v6926 = vpack.c.b16 %v6758, %v6752
    %v6927 = vpack.c.b16 %v6759, %v6753
    %v6928 = vpack.c.b16 %v6760, %v6754
    %v6929 = vpack.c.b16 %v6761, %v6755
    %v6930 = vpack.c.b16 %v6762, %v6756
    %v6931 = vpack.c.b16 %v6769, %v6763
    %v6932 = vpack.c.b16 %v6770, %v6764
    %v6933 = vpack.c.b16 %v6771, %v6765
    %v6934 = vpack.c.b16 %v6772, %v6766
    %v6935 = vpack.c.b16 %v6773, %v6767
    %v6936 = vpack.c.b16 %v6774, %v6768
    %v6937 = vpack.c.b16 %v6781, %v6775
    %v6938 = vpack.c.b16 %v6782, %v6776
    %v6939 = vpack.c.b16 %v6783, %v6777
    %v6940 = vpack.c.b16 %v6784, %v6778
    %v6941 = vpack.c.b16 %v6785, %v6779
    %v6942 = vpack.c.b16 %v6786, %v6780
    %v6943 = vpack.c.b16 %v6793, %v6787
    %v6944 = vpack.c.b16 %v6794, %v6788
    %v6945 = vpack.c.b16 %v6795, %v6789
    %v6946 = vpack.c.b16 %v6796, %v6790
    %v6947 = vpack.c.b16 %v6797, %v6791
    %v6948 = vpack.c.b16 %v6798, %v6792
    %v6949 = vpack.c.b16 %v6805, %v6799
    %v6950 = vpack.c.b16 %v6806, %v6800
    %v6951 = vpack.c.b16 %v6807, %v6801
    %v6952 = vpack.c.b16 %v6808, %v6802
    %v6953 = vpack.c.b16 %v6809, %v6803
    %v6954 = vpack.c.b16 %v6810, %v6804
    %v6955 = vpack.c.b16 %v6817, %v6811
    %v6956 = vpack.c.b16 %v6818, %v6812
    %v6957 = vpack.c.b16 %v6819, %v6813
    %v6958 = vpack.c.b16 %v6820, %v6814
    %v6959 = vpack.c.b16 %v6821, %v6815
    %v6960 = vpack.c.b16 %v6822, %v6816
    %v6961 = vpack.c.b16 %v6829, %v6823
    %v6962 = vpack.c.b16 %v6830, %v6824
    %v6963 = vpack.c.b16 %v6831, %v6825
    %v6964 = vpack.c.b16 %v6832, %v6826
    %v6965 = vpack.c.b16 %v6833, %v6827
    %v6966 = vpack.c.b16 %v6834, %v6828
    %v6967 = vpack.c.b16 %v6841, %v6835
    %v6968 = vpack.c.b16 %v6842, %v6836
    %v6969 = vpack.c.b16 %v6843, %v6837
    %v6970 = vpack.c.b16 %v6844, %v6838
    %v6971 = vpack.c.b16 %v6845, %v6839
    %v6972 = vpack.c.b16 %v6846, %v6840
    %v6973 = vpack.c.b16 %v6853, %v6847
    %v6974 = vpack.c.b16 %v6854, %v6848
    %v6975 = vpack.c.b16 %v6855, %v6849
    %v6976 = vpack.c.b16 %v6856, %v6850
    %v6977 = vpack.c.b16 %v6857, %v6851
    %v6978 = vpack.c.b16 %v6858, %v6852
    %v6979 = vpack.c.b16 %v6865, %v6859
    %v6980 = vpack.c.b16 %v6866, %v6860
    %v6981 = vpack.c.b16 %v6867, %v6861
    %v6982 = vpack.c.b16 %v6868, %v6862
    %v6983 = vpack.c.b16 %v6869, %v6863
    %v6984 = vpack.c.b16 %v6870, %v6864
    %v6985 = vpack.c.b16 %v6877, %v6871
    %v6986 = vpack.c.b16 %v6878, %v6872
    %v6987 = vpack.c.b16 %v6879, %v6873
    %v6988 = vpack.c.b16 %v6880, %v6874
    %v6989 = vpack.c.b16 %v6881, %v6875
    %v6990 = vpack.c.b16 %v6882, %v6876
    %v6991 = vpack.c.b16 %v6889, %v6883
    %v6992 = vpack.c.b16 %v6890, %v6884
    %v6993 = vpack.c.b16 %v6891, %v6885
    %v6994 = vpack.c.b16 %v6892, %v6886
    %v6995 = vpack.c.b16 %v6893, %v6887
    %v6996 = vpack.c.b16 %v6894, %v6888
    %v6997 = vpack.c.b16 %v6901, %v6895
    %v6998 = vpack.c.b16 %v6902, %v6896
    %v6999 = vpack.c.b16 %v6903, %v6897
    %v7000 = vpack.c.b16 %v6904, %v6898
    %v7001 = vpack.c.b16 %v6905, %v6899
    %v7002 = vpack.c.b16 %v6906, %v6900
    %7099 = vmatprep.subr.bf16.mxu0 %v6908
    %7100 = vmatpush1.bf16.msra.mxu0 %v6907
    %7101 = vmatprep.subr.bf16.mxu0 %v6914
    %7102 = vmatpush1.bf16.msra.mxu0 %v6913
    %7103 = vmatprep.subr.bf16.mxu0 %v6920
    %7104 = vmatpush1.bf16.msra.mxu0 %v6919
    %7105 = vmatprep.subr.bf16.mxu0 %v6926
    %7106 = vmatpush1.bf16.msra.mxu0 %v6925
    %7107 = vmatprep.subr.bf16.mxu0 %v6932
    %7108 = vmatpush1.bf16.msra.mxu0 %v6931
    %7109 = vmatprep.subr.bf16.mxu0 %v6938
    %7110 = vmatpush1.bf16.msra.mxu0 %v6937
    %7111 = vmatprep.subr.bf16.mxu0 %v6944
    %7112 = vmatpush1.bf16.msra.mxu0 %v6943
    %7113 = vmatprep.subr.bf16.mxu0 %v6950
    %7114 = vmatpush1.bf16.msra.mxu0 %v6949
    %7115 = vmatprep.subr.bf16.mxu0 %v6956
    %7116 = vmatpush1.bf16.msra.mxu0 %v6955
    %7117 = vmatprep.subr.bf16.mxu0 %v6962
    %7118 = vmatpush1.bf16.msra.mxu0 %v6961
    %7119 = vmatprep.subr.bf16.mxu0 %v6968
    %7120 = vmatpush1.bf16.msra.mxu0 %v6967
    %7121 = vmatprep.subr.bf16.mxu0 %v6974
    %7122 = vmatpush1.bf16.msra.mxu0 %v6973
    %7123 = vmatprep.subr.bf16.mxu0 %v6980
    %7124 = vmatpush1.bf16.msra.mxu0 %v6979
    %7125 = vmatprep.subr.bf16.mxu0 %v6986
    %7126 = vmatpush1.bf16.msra.mxu0 %v6985
    %7127 = vmatprep.subr.bf16.mxu0 %v6992
    %7128 = vmatpush1.bf16.msra.mxu0 %v6991
    %7129 = vmatprep.subr.bf16.mxu0 %v6998
    %7130 = vmatpush1.bf16.msra.mxu0 %v6997
    %7131 = vmatprep.mubr.bf16.mxu0 %v6522
    %7132 = vmatmul.mubr.bf16.gmra.mrb[0].mxu0 %v6521
    %v7133 = vpop.f32.mrb[0].mxu0
    %v7134 = vadd.f32 0.0, %v7133
    %v7135 = vpop.f32.mrb[0].mxu0
    %v7136 = vadd.f32 0.0, %v7135
    %v7137 = vpop.f32.mrb[0].mxu0
    %v7138 = vpop.f32.mrb[0].mxu0
    %7139 = vdwg.mxu0
    %7140 = vmatprep.subr.bf16.mxu0 %v6910
    %7141 = vmatpush1.bf16.msra.mxu0 %v6909
    %7142 = vmatprep.subr.bf16.mxu0 %v6916
    %7143 = vmatpush1.bf16.msra.mxu0 %v6915
    %7144 = vmatprep.subr.bf16.mxu0 %v6922
    %7145 = vmatpush1.bf16.msra.mxu0 %v6921
    %7146 = vmatprep.subr.bf16.mxu0 %v6928
    %7147 = vmatpush1.bf16.msra.mxu0 %v6927
    %7148 = vmatprep.subr.bf16.mxu0 %v6934
    %7149 = vmatpush1.bf16.msra.mxu0 %v6933
    %7150 = vmatprep.subr.bf16.mxu0 %v6940
    %7151 = vmatpush1.bf16.msra.mxu0 %v6939
    %7152 = vmatprep.subr.bf16.mxu0 %v6946
    %7153 = vmatpush1.bf16.msra.mxu0 %v6945
    %7154 = vmatprep.subr.bf16.mxu0 %v6952
    %7155 = vmatpush1.bf16.msra.mxu0 %v6951
    %7156 = vmatprep.subr.bf16.mxu0 %v6958
    %7157 = vmatpush1.bf16.msra.mxu0 %v6957
    %7158 = vmatprep.subr.bf16.mxu0 %v6964
    %7159 = vmatpush1.bf16.msra.mxu0 %v6963
    %7160 = vmatprep.subr.bf16.mxu0 %v6970
    %7161 = vmatpush1.bf16.msra.mxu0 %v6969
    %7162 = vmatprep.subr.bf16.mxu0 %v6976
    %7163 = vmatpush1.bf16.msra.mxu0 %v6975
    %7164 = vmatprep.subr.bf16.mxu0 %v6982
    %7165 = vmatpush1.bf16.msra.mxu0 %v6981
    %7166 = vmatprep.subr.bf16.mxu0 %v6988
    %7167 = vmatpush1.bf16.msra.mxu0 %v6987
    %7168 = vmatprep.subr.bf16.mxu0 %v6994
    %7169 = vmatpush1.bf16.msra.mxu0 %v6993
    %7170 = vmatprep.subr.bf16.mxu0 %v7000
    %7171 = vmatpush1.bf16.msra.mxu0 %v6999
    %7172 = vmatprep.mubr.bf16.mxu0 %v6522
    %7173 = vmatmul.mubr.bf16.gmra.mrb[0].mxu0 %v6521
    %v7174 = vpop.f32.mrb[0].mxu0
    %v7175 = vadd.f32 0.0, %v7174
    %v7176 = vpop.f32.mrb[0].mxu0
    %v7177 = vadd.f32 0.0, %v7176
    %v7178 = vpop.f32.mrb[0].mxu0
    %v7179 = vpop.f32.mrb[0].mxu0
    %7180 = vdwg.mxu0
    %7181 = vmatprep.subr.bf16.mxu0 %v6912
    %7182 = vmatpush1.bf16.msra.mxu0 %v6911
    %7183 = vmatprep.subr.bf16.mxu0 %v6918
    %7184 = vmatpush1.bf16.msra.mxu0 %v6917
    %7185 = vmatprep.subr.bf16.mxu0 %v6924
    %7186 = vmatpush1.bf16.msra.mxu0 %v6923
    %7187 = vmatprep.subr.bf16.mxu0 %v6930
    %7188 = vmatpush1.bf16.msra.mxu0 %v6929
    %7189 = vmatprep.subr.bf16.mxu0 %v6936
    %7190 = vmatpush1.bf16.msra.mxu0 %v6935
    %7191 = vmatprep.subr.bf16.mxu0 %v6942
    %7192 = vmatpush1.bf16.msra.mxu0 %v6941
    %7193 = vmatprep.subr.bf16.mxu0 %v6948
    %7194 = vmatpush1.bf16.msra.mxu0 %v6947
    %7195 = vmatprep.subr.bf16.mxu0 %v6954
    %7196 = vmatpush1.bf16.msra.mxu0 %v6953
    %7197 = vmatprep.subr.bf16.mxu0 %v6960
    %7198 = vmatpush1.bf16.msra.mxu0 %v6959
    %7199 = vmatprep.subr.bf16.mxu0 %v6966
    %7200 = vmatpush1.bf16.msra.mxu0 %v6965
    %7201 = vmatprep.subr.bf16.mxu0 %v6972
    %7202 = vmatpush1.bf16.msra.mxu0 %v6971
    %7203 = vmatprep.subr.bf16.mxu0 %v6978
    %7204 = vmatpush1.bf16.msra.mxu0 %v6977
    %7205 = vmatprep.subr.bf16.mxu0 %v6984
    %7206 = vmatpush1.bf16.msra.mxu0 %v6983
    %7207 = vmatprep.subr.bf16.mxu0 %v6990
    %7208 = vmatpush1.bf16.msra.mxu0 %v6989
    %7209 = vmatprep.subr.bf16.mxu0 %v6996
    %7210 = vmatpush1.bf16.msra.mxu0 %v6995
    %7211 = vmatprep.subr.bf16.mxu0 %v7002
    %7212 = vmatpush1.bf16.msra.mxu0 %v7001
    %7213 = vmatprep.mubr.bf16.mxu0 %v6522
    %7214 = vmatmul.mubr.bf16.gmra.mrb[0].mxu0 %v6521
    %v7215 = vpop.f32.mrb[0].mxu0
    %v7216 = vadd.f32 0.0, %v7215
    %v7217 = vpop.f32.mrb[0].mxu0
    %v7218 = vadd.f32 0.0, %v7217
    %v7219 = vpop.f32.mrb[0].mxu0
    %v7220 = vpop.f32.mrb[0].mxu0
    %7221 = vdwg.mxu0
    %s7222 = scalar_lea.vmem [#allocation3], 7
    %v7223 = vld [vmem:[%s7222] ss:$8 sm:$0xf]
    %v7224 = vld [vmem:[%s7222] ss:$8 sm:$0x30]
    %v7225 = vor.u32 %v7223, %v7224
    %v7228 = vcombine.low %v7134, %v7136
    %v7230 = vunpack.c.l.s4 1966171168
    %v7231 = vunpack.c.0.s8 %v7230
    %v7232 = vlaneseq
    %v7233 = vshrl.u32 %v7232, 7
    %v7234 = vsub.s32 %v7231, %v7233
    %v7235 = vrot.slane %v7228, %v7234
    %v7237 = vunpack.c.l.s4 1966171168
    %v7238 = vunpack.c.0.s8 %v7237
    %v7239 = vlaneseq
    %v7240 = vshrl.u32 %v7239, 7
    %v7241 = vsub.s32 %v7238, %v7240
    %v7242 = vrot.slane %v7235, %v7241
    %v7244 = vadd.f32 %v7225, %v7242
    %v7245 = vxor.u32 %v7244, 2147483648
    %v7246 = vmul.f32 %v7245, 1.442695
    %v7247 = vpow.pop %v7246
    %v7248 = vadd.f32 %v7247, 1.0
    %v7249 = vrcp.pop %v7248
    %v7250 = vmul.f32 1.0, %v7249
    %v7252 = vrot.slane %v7225, 2
    %v7256 = vcombine.low %v7175, %v7177
    %v7258 = vunpack.c.l.s4 1966171168
    %v7259 = vunpack.c.0.s8 %v7258
    %v7260 = vlaneseq
    %v7261 = vshrl.u32 %v7260, 7
    %v7262 = vsub.s32 %v7259, %v7261
    %v7263 = vrot.slane %v7256, %v7262
    %v7265 = vunpack.c.l.s4 1966171168
    %v7266 = vunpack.c.0.s8 %v7265
    %v7267 = vlaneseq
    %v7268 = vshrl.u32 %v7267, 7
    %v7269 = vsub.s32 %v7266, %v7268
    %v7270 = vrot.slane %v7263, %v7269
    %v7272 = vadd.f32 %v7252, %v7270
    %v7273 = vxor.u32 %v7272, 2147483648
    %v7274 = vmul.f32 %v7273, 1.442695
    %v7275 = vpow.pop %v7274
    %v7276 = vadd.f32 %v7275, 1.0
    %v7277 = vrcp.pop %v7276
    %v7278 = vmul.f32 1.0, %v7277
    %v7279 = vld [vmem:[%s5] sm:$0x3]
    %v7281 = vlaneseq
    %v7282 = vshrl.u32 %v7281, 7
    %v7283 = vsub.s32 0, %v7282
    %v7284 = vrot.slane %v7279, %v7283
    %v7285 = vlaneseq
    %v7286 = vshrl.u32 %v7285, 7
    %v7287 = vsub.s32 1, %v7286
    %v7288 = vrot.slane %v7279, %v7287
    %v7291 = vadd.f32 %v7216, %v7284
    %v7292 = vadd.f32 %v7218, %v7288
    %v7295 = vcombine.low %v7291, %v7292
    %v7297 = vunpack.c.l.s4 1966171168
    %v7298 = vunpack.c.0.s8 %v7297
    %v7299 = vlaneseq
    %v7300 = vshrl.u32 %v7299, 7
    %v7301 = vsub.s32 %v7298, %v7300
    %v7302 = vrot.slane %v7295, %v7301
    %v7304 = vunpack.c.l.s4 1966171168
    %v7305 = vunpack.c.0.s8 %v7304
    %v7306 = vlaneseq
    %v7307 = vshrl.u32 %v7306, 7
    %v7308 = vsub.s32 %v7305, %v7307
    %v7309 = vrot.slane %v7302, %v7308
    %v7311 = vmul.f32 %v7250, %v7309
    %v7312 = vrot.slane %v7225, 4
    %v7314 = vadd.f32 %v7312, %v7311
    %v7315 = vtanh.pop %v7314
    %v7316 = vsub.f32 %v6506, %v7315
    %v7317 = vmul.f32 %v7278, %v7316
    %v7318 = vadd.f32 %v7315, %v7317
    %s7319 = scalar_lea.vmem [#allocation9], 7
    %7320 = vst.msk [vmem:[%s7319] ss:$8 sm:$0x3] %vm1635, %v7318
    %7321 = vst.msk [vmem:[%s7319] ss:$8 sm:$0x0] %vm1635, %v7318
    %v7323 = vlaneseq
    %v7324 = vshrl.u32 %v7323, 7
    %v7325 = vsub.s32 0, %v7324
    %v7326 = vrot.slane %v7318, %v7325
    %v7327 = vlaneseq
    %v7328 = vshrl.u32 %v7327, 7
    %v7329 = vsub.s32 1, %v7328
    %v7330 = vrot.slane %v7318, %v7329
    %v7333 = vpack.c.bf16 %v7326, %v7326
    %v7334 = vpack.c.bf16 %v7330, %v7330
    %v7335 = vld [vmem:[#allocation7] sm:$0xff]
    %v7336 = vld [vmem:[#allocation7 + $0x8] sm:$0xff]
    %v7337 = vld [vmem:[#allocation7 + $0x10] sm:$0xff]
    %v7338 = vld [vmem:[#allocation7 + $0x18] sm:$0xff]
    %v7339 = vld [vmem:[#allocation7 + $0x20] sm:$0xff]
    %v7340 = vld [vmem:[#allocation7 + $0x28] sm:$0xff]
    %v7341 = vld [vmem:[#allocation7 + $0x30] sm:$0xff]
    %v7342 = vld [vmem:[#allocation7 + $0x38] sm:$0xff]
    %v7343 = vld [vmem:[#allocation7 + $0x40] sm:$0xff]
    %v7344 = vld [vmem:[#allocation7 + $0x48] sm:$0xff]
    %v7345 = vld [vmem:[#allocation7 + $0x50] sm:$0xff]
    %v7346 = vld [vmem:[#allocation7 + $0x58] sm:$0xff]
    %v7347 = vld [vmem:[#allocation7 + $0x60] sm:$0xff]
    %v7348 = vld [vmem:[#allocation7 + $0x68] sm:$0xff]
    %v7349 = vld [vmem:[#allocation7 + $0x70] sm:$0xff]
    %v7350 = vld [vmem:[#allocation7 + $0x78] sm:$0xff]
    %v7351 = vld [vmem:[#allocation7 + $0x80] sm:$0xff]
    %v7352 = vld [vmem:[#allocation7 + $0x88] sm:$0xff]
    %v7353 = vld [vmem:[#allocation7 + $0x90] sm:$0xff]
    %v7354 = vld [vmem:[#allocation7 + $0x98] sm:$0xff]
    %v7355 = vld [vmem:[#allocation7 + $0xa0] sm:$0xff]
    %v7356 = vld [vmem:[#allocation7 + $0xa8] sm:$0xff]
    %v7357 = vld [vmem:[#allocation7 + $0xb0] sm:$0xff]
    %v7358 = vld [vmem:[#allocation7 + $0xb8] sm:$0xff]
    %v7359 = vld [vmem:[#allocation7 + $0xc0] sm:$0xff]
    %v7360 = vld [vmem:[#allocation7 + $0xc8] sm:$0xff]
    %v7361 = vld [vmem:[#allocation7 + $0xd0] sm:$0xff]
    %v7362 = vld [vmem:[#allocation7 + $0xd8] sm:$0xff]
    %v7363 = vld [vmem:[#allocation7 + $0xe0] sm:$0xff]
    %v7364 = vld [vmem:[#allocation7 + $0xe8] sm:$0xff]
    %v7365 = vld [vmem:[#allocation7 + $0xf0] sm:$0xff]
    %v7366 = vld [vmem:[#allocation7 + $0xf8] sm:$0xff]
    %v7367 = vld [vmem:[#allocation7 + $0x100] sm:$0xff]
    %v7368 = vld [vmem:[#allocation7 + $0x108] sm:$0xff]
    %v7369 = vld [vmem:[#allocation7 + $0x110] sm:$0xff]
    %v7370 = vld [vmem:[#allocation7 + $0x118] sm:$0xff]
    %v7371 = vld [vmem:[#allocation7 + $0x120] sm:$0xff]
    %v7372 = vld [vmem:[#allocation7 + $0x128] sm:$0xff]
    %v7373 = vld [vmem:[#allocation7 + $0x130] sm:$0xff]
    %v7374 = vld [vmem:[#allocation7 + $0x138] sm:$0xff]
    %v7375 = vld [vmem:[#allocation7 + $0x140] sm:$0xff]
    %v7376 = vld [vmem:[#allocation7 + $0x148] sm:$0xff]
    %v7377 = vld [vmem:[#allocation7 + $0x150] sm:$0xff]
    %v7378 = vld [vmem:[#allocation7 + $0x158] sm:$0xff]
    %v7379 = vld [vmem:[#allocation7 + $0x160] sm:$0xff]
    %v7380 = vld [vmem:[#allocation7 + $0x168] sm:$0xff]
    %v7381 = vld [vmem:[#allocation7 + $0x170] sm:$0xff]
    %v7382 = vld [vmem:[#allocation7 + $0x178] sm:$0xff]
    %v7383 = vld [vmem:[#allocation7 + $0x180] sm:$0xff]
    %v7384 = vld [vmem:[#allocation7 + $0x188] sm:$0xff]
    %v7385 = vld [vmem:[#allocation7 + $0x190] sm:$0xff]
    %v7386 = vld [vmem:[#allocation7 + $0x198] sm:$0xff]
    %v7387 = vld [vmem:[#allocation7 + $0x1a0] sm:$0xff]
    %v7388 = vld [vmem:[#allocation7 + $0x1a8] sm:$0xff]
    %v7389 = vld [vmem:[#allocation7 + $0x1b0] sm:$0xff]
    %v7390 = vld [vmem:[#allocation7 + $0x1b8] sm:$0xff]
    %v7391 = vld [vmem:[#allocation7 + $0x1c0] sm:$0xff]
    %v7392 = vld [vmem:[#allocation7 + $0x1c8] sm:$0xff]
    %v7393 = vld [vmem:[#allocation7 + $0x1d0] sm:$0xff]
    %v7394 = vld [vmem:[#allocation7 + $0x1d8] sm:$0xff]
    %v7395 = vld [vmem:[#allocation7 + $0x1e0] sm:$0xff]
    %v7396 = vld [vmem:[#allocation7 + $0x1e8] sm:$0xff]
    %v7397 = vld [vmem:[#allocation7 + $0x1f0] sm:$0xff]
    %v7398 = vld [vmem:[#allocation7 + $0x1f8] sm:$0xff]
    %v7399 = vld [vmem:[#allocation7 + $0x200] sm:$0xff]
    %v7400 = vld [vmem:[#allocation7 + $0x208] sm:$0xff]
    %v7401 = vld [vmem:[#allocation7 + $0x210] sm:$0xff]
    %v7402 = vld [vmem:[#allocation7 + $0x218] sm:$0xff]
    %v7403 = vld [vmem:[#allocation7 + $0x220] sm:$0xff]
    %v7404 = vld [vmem:[#allocation7 + $0x228] sm:$0xff]
    %v7405 = vld [vmem:[#allocation7 + $0x230] sm:$0xff]
    %v7406 = vld [vmem:[#allocation7 + $0x238] sm:$0xff]
    %v7407 = vld [vmem:[#allocation7 + $0x240] sm:$0xff]
    %v7408 = vld [vmem:[#allocation7 + $0x248] sm:$0xff]
    %v7409 = vld [vmem:[#allocation7 + $0x250] sm:$0xff]
    %v7410 = vld [vmem:[#allocation7 + $0x258] sm:$0xff]
    %v7411 = vld [vmem:[#allocation7 + $0x260] sm:$0xff]
    %v7412 = vld [vmem:[#allocation7 + $0x268] sm:$0xff]
    %v7413 = vld [vmem:[#allocation7 + $0x270] sm:$0xff]
    %v7414 = vld [vmem:[#allocation7 + $0x278] sm:$0xff]
    %v7415 = vld [vmem:[#allocation7 + $0x280] sm:$0xff]
    %v7416 = vld [vmem:[#allocation7 + $0x288] sm:$0xff]
    %v7417 = vld [vmem:[#allocation7 + $0x290] sm:$0xff]
    %v7418 = vld [vmem:[#allocation7 + $0x298] sm:$0xff]
    %v7419 = vld [vmem:[#allocation7 + $0x2a0] sm:$0xff]
    %v7420 = vld [vmem:[#allocation7 + $0x2a8] sm:$0xff]
    %v7421 = vld [vmem:[#allocation7 + $0x2b0] sm:$0xff]
    %v7422 = vld [vmem:[#allocation7 + $0x2b8] sm:$0xff]
    %v7423 = vld [vmem:[#allocation7 + $0x2c0] sm:$0xff]
    %v7424 = vld [vmem:[#allocation7 + $0x2c8] sm:$0xff]
    %v7425 = vld [vmem:[#allocation7 + $0x2d0] sm:$0xff]
    %v7426 = vld [vmem:[#allocation7 + $0x2d8] sm:$0xff]
    %v7427 = vld [vmem:[#allocation7 + $0x2e0] sm:$0xff]
    %v7428 = vld [vmem:[#allocation7 + $0x2e8] sm:$0xff]
    %v7429 = vld [vmem:[#allocation7 + $0x2f0] sm:$0xff]
    %v7430 = vld [vmem:[#allocation7 + $0x2f8] sm:$0xff]
    %v7527 = vunpack.c.l.b16 %v7335
    %v7528 = vunpack.c.h.b16 %v7335
    %v7529 = vunpack.c.l.b16 %v7336
    %v7530 = vunpack.c.h.b16 %v7336
    %v7531 = vunpack.c.l.b16 %v7337
    %v7532 = vunpack.c.h.b16 %v7337
    %v7533 = vunpack.c.l.b16 %v7338
    %v7534 = vunpack.c.h.b16 %v7338
    %v7535 = vunpack.c.l.b16 %v7339
    %v7536 = vunpack.c.h.b16 %v7339
    %v7537 = vunpack.c.l.b16 %v7340
    %v7538 = vunpack.c.h.b16 %v7340
    %v7539 = vunpack.c.l.b16 %v7341
    %v7540 = vunpack.c.h.b16 %v7341
    %v7541 = vunpack.c.l.b16 %v7342
    %v7542 = vunpack.c.h.b16 %v7342
    %v7543 = vunpack.c.l.b16 %v7343
    %v7544 = vunpack.c.h.b16 %v7343
    %v7545 = vunpack.c.l.b16 %v7344
    %v7546 = vunpack.c.h.b16 %v7344
    %v7547 = vunpack.c.l.b16 %v7345
    %v7548 = vunpack.c.h.b16 %v7345
    %v7549 = vunpack.c.l.b16 %v7346
    %v7550 = vunpack.c.h.b16 %v7346
    %v7551 = vunpack.c.l.b16 %v7347
    %v7552 = vunpack.c.h.b16 %v7347
    %v7553 = vunpack.c.l.b16 %v7348
    %v7554 = vunpack.c.h.b16 %v7348
    %v7555 = vunpack.c.l.b16 %v7349
    %v7556 = vunpack.c.h.b16 %v7349
    %v7557 = vunpack.c.l.b16 %v7350
    %v7558 = vunpack.c.h.b16 %v7350
    %v7559 = vunpack.c.l.b16 %v7351
    %v7560 = vunpack.c.h.b16 %v7351
    %v7561 = vunpack.c.l.b16 %v7352
    %v7562 = vunpack.c.h.b16 %v7352
    %v7563 = vunpack.c.l.b16 %v7353
    %v7564 = vunpack.c.h.b16 %v7353
    %v7565 = vunpack.c.l.b16 %v7354
    %v7566 = vunpack.c.h.b16 %v7354
    %v7567 = vunpack.c.l.b16 %v7355
    %v7568 = vunpack.c.h.b16 %v7355
    %v7569 = vunpack.c.l.b16 %v7356
    %v7570 = vunpack.c.h.b16 %v7356
    %v7571 = vunpack.c.l.b16 %v7357
    %v7572 = vunpack.c.h.b16 %v7357
    %v7573 = vunpack.c.l.b16 %v7358
    %v7574 = vunpack.c.h.b16 %v7358
    %v7575 = vunpack.c.l.b16 %v7359
    %v7576 = vunpack.c.h.b16 %v7359
    %v7577 = vunpack.c.l.b16 %v7360
    %v7578 = vunpack.c.h.b16 %v7360
    %v7579 = vunpack.c.l.b16 %v7361
    %v7580 = vunpack.c.h.b16 %v7361
    %v7581 = vunpack.c.l.b16 %v7362
    %v7582 = vunpack.c.h.b16 %v7362
    %v7583 = vunpack.c.l.b16 %v7363
    %v7584 = vunpack.c.h.b16 %v7363
    %v7585 = vunpack.c.l.b16 %v7364
    %v7586 = vunpack.c.h.b16 %v7364
    %v7587 = vunpack.c.l.b16 %v7365
    %v7588 = vunpack.c.h.b16 %v7365
    %v7589 = vunpack.c.l.b16 %v7366
    %v7590 = vunpack.c.h.b16 %v7366
    %v7591 = vunpack.c.l.b16 %v7367
    %v7592 = vunpack.c.h.b16 %v7367
    %v7593 = vunpack.c.l.b16 %v7368
    %v7594 = vunpack.c.h.b16 %v7368
    %v7595 = vunpack.c.l.b16 %v7369
    %v7596 = vunpack.c.h.b16 %v7369
    %v7597 = vunpack.c.l.b16 %v7370
    %v7598 = vunpack.c.h.b16 %v7370
    %v7599 = vunpack.c.l.b16 %v7371
    %v7600 = vunpack.c.h.b16 %v7371
    %v7601 = vunpack.c.l.b16 %v7372
    %v7602 = vunpack.c.h.b16 %v7372
    %v7603 = vunpack.c.l.b16 %v7373
    %v7604 = vunpack.c.h.b16 %v7373
    %v7605 = vunpack.c.l.b16 %v7374
    %v7606 = vunpack.c.h.b16 %v7374
    %v7607 = vunpack.c.l.b16 %v7375
    %v7608 = vunpack.c.h.b16 %v7375
    %v7609 = vunpack.c.l.b16 %v7376
    %v7610 = vunpack.c.h.b16 %v7376
    %v7611 = vunpack.c.l.b16 %v7377
    %v7612 = vunpack.c.h.b16 %v7377
    %v7613 = vunpack.c.l.b16 %v7378
    %v7614 = vunpack.c.h.b16 %v7378
    %v7615 = vunpack.c.l.b16 %v7379
    %v7616 = vunpack.c.h.b16 %v7379
    %v7617 = vunpack.c.l.b16 %v7380
    %v7618 = vunpack.c.h.b16 %v7380
    %v7619 = vunpack.c.l.b16 %v7381
    %v7620 = vunpack.c.h.b16 %v7381
    %v7621 = vunpack.c.l.b16 %v7382
    %v7622 = vunpack.c.h.b16 %v7382
    %v7623 = vunpack.c.l.b16 %v7383
    %v7624 = vunpack.c.h.b16 %v7383
    %v7625 = vunpack.c.l.b16 %v7384
    %v7626 = vunpack.c.h.b16 %v7384
    %v7627 = vunpack.c.l.b16 %v7385
    %v7628 = vunpack.c.h.b16 %v7385
    %v7629 = vunpack.c.l.b16 %v7386
    %v7630 = vunpack.c.h.b16 %v7386
    %v7631 = vunpack.c.l.b16 %v7387
    %v7632 = vunpack.c.h.b16 %v7387
    %v7633 = vunpack.c.l.b16 %v7388
    %v7634 = vunpack.c.h.b16 %v7388
    %v7635 = vunpack.c.l.b16 %v7389
    %v7636 = vunpack.c.h.b16 %v7389
    %v7637 = vunpack.c.l.b16 %v7390
    %v7638 = vunpack.c.h.b16 %v7390
    %v7639 = vunpack.c.l.b16 %v7391
    %v7640 = vunpack.c.h.b16 %v7391
    %v7641 = vunpack.c.l.b16 %v7392
    %v7642 = vunpack.c.h.b16 %v7392
    %v7643 = vunpack.c.l.b16 %v7393
    %v7644 = vunpack.c.h.b16 %v7393
    %v7645 = vunpack.c.l.b16 %v7394
    %v7646 = vunpack.c.h.b16 %v7394
    %v7647 = vunpack.c.l.b16 %v7395
    %v7648 = vunpack.c.h.b16 %v7395
    %v7649 = vunpack.c.l.b16 %v7396
    %v7650 = vunpack.c.h.b16 %v7396
    %v7651 = vunpack.c.l.b16 %v7397
    %v7652 = vunpack.c.h.b16 %v7397
    %v7653 = vunpack.c.l.b16 %v7398
    %v7654 = vunpack.c.h.b16 %v7398
    %v7655 = vunpack.c.l.b16 %v7399
    %v7656 = vunpack.c.h.b16 %v7399
    %v7657 = vunpack.c.l.b16 %v7400
    %v7658 = vunpack.c.h.b16 %v7400
    %v7659 = vunpack.c.l.b16 %v7401
    %v7660 = vunpack.c.h.b16 %v7401
    %v7661 = vunpack.c.l.b16 %v7402
    %v7662 = vunpack.c.h.b16 %v7402
    %v7663 = vunpack.c.l.b16 %v7403
    %v7664 = vunpack.c.h.b16 %v7403
    %v7665 = vunpack.c.l.b16 %v7404
    %v7666 = vunpack.c.h.b16 %v7404
    %v7667 = vunpack.c.l.b16 %v7405
    %v7668 = vunpack.c.h.b16 %v7405
    %v7669 = vunpack.c.l.b16 %v7406
    %v7670 = vunpack.c.h.b16 %v7406
    %v7671 = vunpack.c.l.b16 %v7407
    %v7672 = vunpack.c.h.b16 %v7407
    %v7673 = vunpack.c.l.b16 %v7408
    %v7674 = vunpack.c.h.b16 %v7408
    %v7675 = vunpack.c.l.b16 %v7409
    %v7676 = vunpack.c.h.b16 %v7409
    %v7677 = vunpack.c.l.b16 %v7410
    %v7678 = vunpack.c.h.b16 %v7410
    %v7679 = vunpack.c.l.b16 %v7411
    %v7680 = vunpack.c.h.b16 %v7411
    %v7681 = vunpack.c.l.b16 %v7412
    %v7682 = vunpack.c.h.b16 %v7412
    %v7683 = vunpack.c.l.b16 %v7413
    %v7684 = vunpack.c.h.b16 %v7413
    %v7685 = vunpack.c.l.b16 %v7414
    %v7686 = vunpack.c.h.b16 %v7414
    %v7687 = vunpack.c.l.b16 %v7415
    %v7688 = vunpack.c.h.b16 %v7415
    %v7689 = vunpack.c.l.b16 %v7416
    %v7690 = vunpack.c.h.b16 %v7416
    %v7691 = vunpack.c.l.b16 %v7417
    %v7692 = vunpack.c.h.b16 %v7417
    %v7693 = vunpack.c.l.b16 %v7418
    %v7694 = vunpack.c.h.b16 %v7418
    %v7695 = vunpack.c.l.b16 %v7419
    %v7696 = vunpack.c.h.b16 %v7419
    %v7697 = vunpack.c.l.b16 %v7420
    %v7698 = vunpack.c.h.b16 %v7420
    %v7699 = vunpack.c.l.b16 %v7421
    %v7700 = vunpack.c.h.b16 %v7421
    %v7701 = vunpack.c.l.b16 %v7422
    %v7702 = vunpack.c.h.b16 %v7422
    %v7703 = vunpack.c.l.b16 %v7423
    %v7704 = vunpack.c.h.b16 %v7423
    %v7705 = vunpack.c.l.b16 %v7424
    %v7706 = vunpack.c.h.b16 %v7424
    %v7707 = vunpack.c.l.b16 %v7425
    %v7708 = vunpack.c.h.b16 %v7425
    %v7709 = vunpack.c.l.b16 %v7426
    %v7710 = vunpack.c.h.b16 %v7426
    %v7711 = vunpack.c.l.b16 %v7427
    %v7712 = vunpack.c.h.b16 %v7427
    %v7713 = vunpack.c.l.b16 %v7428
    %v7714 = vunpack.c.h.b16 %v7428
    %v7715 = vunpack.c.l.b16 %v7429
    %v7716 = vunpack.c.h.b16 %v7429
    %v7717 = vunpack.c.l.b16 %v7430
    %v7718 = vunpack.c.h.b16 %v7430
    %v7719 = vpack.c.b16 %v7533, %v7527
    %v7720 = vpack.c.b16 %v7534, %v7528
    %v7721 = vpack.c.b16 %v7535, %v7529
    %v7722 = vpack.c.b16 %v7536, %v7530
    %v7723 = vpack.c.b16 %v7537, %v7531
    %v7724 = vpack.c.b16 %v7538, %v7532
    %v7725 = vpack.c.b16 %v7545, %v7539
    %v7726 = vpack.c.b16 %v7546, %v7540
    %v7727 = vpack.c.b16 %v7547, %v7541
    %v7728 = vpack.c.b16 %v7548, %v7542
    %v7729 = vpack.c.b16 %v7549, %v7543
    %v7730 = vpack.c.b16 %v7550, %v7544
    %v7731 = vpack.c.b16 %v7557, %v7551
    %v7732 = vpack.c.b16 %v7558, %v7552
    %v7733 = vpack.c.b16 %v7559, %v7553
    %v7734 = vpack.c.b16 %v7560, %v7554
    %v7735 = vpack.c.b16 %v7561, %v7555
    %v7736 = vpack.c.b16 %v7562, %v7556
    %v7737 = vpack.c.b16 %v7569, %v7563
    %v7738 = vpack.c.b16 %v7570, %v7564
    %v7739 = vpack.c.b16 %v7571, %v7565
    %v7740 = vpack.c.b16 %v7572, %v7566
    %v7741 = vpack.c.b16 %v7573, %v7567
    %v7742 = vpack.c.b16 %v7574, %v7568
    %v7743 = vpack.c.b16 %v7581, %v7575
    %v7744 = vpack.c.b16 %v7582, %v7576
    %v7745 = vpack.c.b16 %v7583, %v7577
    %v7746 = vpack.c.b16 %v7584, %v7578
    %v7747 = vpack.c.b16 %v7585, %v7579
    %v7748 = vpack.c.b16 %v7586, %v7580
    %v7749 = vpack.c.b16 %v7593, %v7587
    %v7750 = vpack.c.b16 %v7594, %v7588
    %v7751 = vpack.c.b16 %v7595, %v7589
    %v7752 = vpack.c.b16 %v7596, %v7590
    %v7753 = vpack.c.b16 %v7597, %v7591
    %v7754 = vpack.c.b16 %v7598, %v7592
    %v7755 = vpack.c.b16 %v7605, %v7599
    %v7756 = vpack.c.b16 %v7606, %v7600
    %v7757 = vpack.c.b16 %v7607, %v7601
    %v7758 = vpack.c.b16 %v7608, %v7602
    %v7759 = vpack.c.b16 %v7609, %v7603
    %v7760 = vpack.c.b16 %v7610, %v7604
    %v7761 = vpack.c.b16 %v7617, %v7611
    %v7762 = vpack.c.b16 %v7618, %v7612
    %v7763 = vpack.c.b16 %v7619, %v7613
    %v7764 = vpack.c.b16 %v7620, %v7614
    %v7765 = vpack.c.b16 %v7621, %v7615
    %v7766 = vpack.c.b16 %v7622, %v7616
    %v7767 = vpack.c.b16 %v7629, %v7623
    %v7768 = vpack.c.b16 %v7630, %v7624
    %v7769 = vpack.c.b16 %v7631, %v7625
    %v7770 = vpack.c.b16 %v7632, %v7626
    %v7771 = vpack.c.b16 %v7633, %v7627
    %v7772 = vpack.c.b16 %v7634, %v7628
    %v7773 = vpack.c.b16 %v7641, %v7635
    %v7774 = vpack.c.b16 %v7642, %v7636
    %v7775 = vpack.c.b16 %v7643, %v7637
    %v7776 = vpack.c.b16 %v7644, %v7638
    %v7777 = vpack.c.b16 %v7645, %v7639
    %v7778 = vpack.c.b16 %v7646, %v7640
    %v7779 = vpack.c.b16 %v7653, %v7647
    %v7780 = vpack.c.b16 %v7654, %v7648
    %v7781 = vpack.c.b16 %v7655, %v7649
    %v7782 = vpack.c.b16 %v7656, %v7650
    %v7783 = vpack.c.b16 %v7657, %v7651
    %v7784 = vpack.c.b16 %v7658, %v7652
    %v7785 = vpack.c.b16 %v7665, %v7659
    %v7786 = vpack.c.b16 %v7666, %v7660
    %v7787 = vpack.c.b16 %v7667, %v7661
    %v7788 = vpack.c.b16 %v7668, %v7662
    %v7789 = vpack.c.b16 %v7669, %v7663
    %v7790 = vpack.c.b16 %v7670, %v7664
    %v7791 = vpack.c.b16 %v7677, %v7671
    %v7792 = vpack.c.b16 %v7678, %v7672
    %v7793 = vpack.c.b16 %v7679, %v7673
    %v7794 = vpack.c.b16 %v7680, %v7674
    %v7795 = vpack.c.b16 %v7681, %v7675
    %v7796 = vpack.c.b16 %v7682, %v7676
    %v7797 = vpack.c.b16 %v7689, %v7683
    %v7798 = vpack.c.b16 %v7690, %v7684
    %v7799 = vpack.c.b16 %v7691, %v7685
    %v7800 = vpack.c.b16 %v7692, %v7686
    %v7801 = vpack.c.b16 %v7693, %v7687
    %v7802 = vpack.c.b16 %v7694, %v7688
    %v7803 = vpack.c.b16 %v7701, %v7695
    %v7804 = vpack.c.b16 %v7702, %v7696
    %v7805 = vpack.c.b16 %v7703, %v7697
    %v7806 = vpack.c.b16 %v7704, %v7698
    %v7807 = vpack.c.b16 %v7705, %v7699
    %v7808 = vpack.c.b16 %v7706, %v7700
    %v7809 = vpack.c.b16 %v7713, %v7707
    %v7810 = vpack.c.b16 %v7714, %v7708
    %v7811 = vpack.c.b16 %v7715, %v7709
    %v7812 = vpack.c.b16 %v7716, %v7710
    %v7813 = vpack.c.b16 %v7717, %v7711
    %v7814 = vpack.c.b16 %v7718, %v7712
    %7911 = vmatprep.subr.bf16.mxu0 %v7720
    %7912 = vmatpush1.bf16.msra.mxu0 %v7719
    %7913 = vmatprep.subr.bf16.mxu0 %v7726
    %7914 = vmatpush1.bf16.msra.mxu0 %v7725
    %7915 = vmatprep.subr.bf16.mxu0 %v7732
    %7916 = vmatpush1.bf16.msra.mxu0 %v7731
    %7917 = vmatprep.subr.bf16.mxu0 %v7738
    %7918 = vmatpush1.bf16.msra.mxu0 %v7737
    %7919 = vmatprep.subr.bf16.mxu0 %v7744
    %7920 = vmatpush1.bf16.msra.mxu0 %v7743
    %7921 = vmatprep.subr.bf16.mxu0 %v7750
    %7922 = vmatpush1.bf16.msra.mxu0 %v7749
    %7923 = vmatprep.subr.bf16.mxu0 %v7756
    %7924 = vmatpush1.bf16.msra.mxu0 %v7755
    %7925 = vmatprep.subr.bf16.mxu0 %v7762
    %7926 = vmatpush1.bf16.msra.mxu0 %v7761
    %7927 = vmatprep.subr.bf16.mxu0 %v7768
    %7928 = vmatpush1.bf16.msra.mxu0 %v7767
    %7929 = vmatprep.subr.bf16.mxu0 %v7774
    %7930 = vmatpush1.bf16.msra.mxu0 %v7773
    %7931 = vmatprep.subr.bf16.mxu0 %v7780
    %7932 = vmatpush1.bf16.msra.mxu0 %v7779
    %7933 = vmatprep.subr.bf16.mxu0 %v7786
    %7934 = vmatpush1.bf16.msra.mxu0 %v7785
    %7935 = vmatprep.subr.bf16.mxu0 %v7792
    %7936 = vmatpush1.bf16.msra.mxu0 %v7791
    %7937 = vmatprep.subr.bf16.mxu0 %v7798
    %7938 = vmatpush1.bf16.msra.mxu0 %v7797
    %7939 = vmatprep.subr.bf16.mxu0 %v7804
    %7940 = vmatpush1.bf16.msra.mxu0 %v7803
    %7941 = vmatprep.subr.bf16.mxu0 %v7810
    %7942 = vmatpush1.bf16.msra.mxu0 %v7809
    %7943 = vmatprep.mubr.bf16.mxu0 %v7334
    %7944 = vmatmul.mubr.bf16.gmra.mrb[0].mxu0 %v7333
    %v7945 = vpop.f32.mrb[0].mxu0
    %v7946 = vadd.f32 0.0, %v7945
    %v7947 = vpop.f32.mrb[0].mxu0
    %v7948 = vadd.f32 0.0, %v7947
    %v7949 = vpop.f32.mrb[0].mxu0
    %v7950 = vpop.f32.mrb[0].mxu0
    %7951 = vdwg.mxu0
    %7952 = vmatprep.subr.bf16.mxu0 %v7722
    %7953 = vmatpush1.bf16.msra.mxu0 %v7721
    %7954 = vmatprep.subr.bf16.mxu0 %v7728
    %7955 = vmatpush1.bf16.msra.mxu0 %v7727
    %7956 = vmatprep.subr.bf16.mxu0 %v7734
    %7957 = vmatpush1.bf16.msra.mxu0 %v7733
    %7958 = vmatprep.subr.bf16.mxu0 %v7740
    %7959 = vmatpush1.bf16.msra.mxu0 %v7739
    %7960 = vmatprep.subr.bf16.mxu0 %v7746
    %7961 = vmatpush1.bf16.msra.mxu0 %v7745
    %7962 = vmatprep.subr.bf16.mxu0 %v7752
    %7963 = vmatpush1.bf16.msra.mxu0 %v7751
    %7964 = vmatprep.subr.bf16.mxu0 %v7758
    %7965 = vmatpush1.bf16.msra.mxu0 %v7757
    %7966 = vmatprep.subr.bf16.mxu0 %v7764
    %7967 = vmatpush1.bf16.msra.mxu0 %v7763
    %7968 = vmatprep.subr.bf16.mxu0 %v7770
    %7969 = vmatpush1.bf16.msra.mxu0 %v7769
    %7970 = vmatprep.subr.bf16.mxu0 %v7776
    %7971 = vmatpush1.bf16.msra.mxu0 %v7775
    %7972 = vmatprep.subr.bf16.mxu0 %v7782
    %7973 = vmatpush1.bf16.msra.mxu0 %v7781
    %7974 = vmatprep.subr.bf16.mxu0 %v7788
    %7975 = vmatpush1.bf16.msra.mxu0 %v7787
    %7976 = vmatprep.subr.bf16.mxu0 %v7794
    %7977 = vmatpush1.bf16.msra.mxu0 %v7793
    %7978 = vmatprep.subr.bf16.mxu0 %v7800
    %7979 = vmatpush1.bf16.msra.mxu0 %v7799
    %7980 = vmatprep.subr.bf16.mxu0 %v7806
    %7981 = vmatpush1.bf16.msra.mxu0 %v7805
    %7982 = vmatprep.subr.bf16.mxu0 %v7812
    %7983 = vmatpush1.bf16.msra.mxu0 %v7811
    %7984 = vmatprep.mubr.bf16.mxu0 %v7334
    %7985 = vmatmul.mubr.bf16.gmra.mrb[0].mxu0 %v7333
    %v7986 = vpop.f32.mrb[0].mxu0
    %v7987 = vadd.f32 0.0, %v7986
    %v7988 = vpop.f32.mrb[0].mxu0
    %v7989 = vadd.f32 0.0, %v7988
    %v7990 = vpop.f32.mrb[0].mxu0
    %v7991 = vpop.f32.mrb[0].mxu0
    %7992 = vdwg.mxu0
    %7993 = vmatprep.subr.bf16.mxu0 %v7724
    %7994 = vmatpush1.bf16.msra.mxu0 %v7723
    %7995 = vmatprep.subr.bf16.mxu0 %v7730
    %7996 = vmatpush1.bf16.msra.mxu0 %v7729
    %7997 = vmatprep.subr.bf16.mxu0 %v7736
    %7998 = vmatpush1.bf16.msra.mxu0 %v7735
    %7999 = vmatprep.subr.bf16.mxu0 %v7742
    %8000 = vmatpush1.bf16.msra.mxu0 %v7741
    %8001 = vmatprep.subr.bf16.mxu0 %v7748
    %8002 = vmatpush1.bf16.msra.mxu0 %v7747
    %8003 = vmatprep.subr.bf16.mxu0 %v7754
    %8004 = vmatpush1.bf16.msra.mxu0 %v7753
    %8005 = vmatprep.subr.bf16.mxu0 %v7760
    %8006 = vmatpush1.bf16.msra.mxu0 %v7759
    %8007 = vmatprep.subr.bf16.mxu0 %v7766
    %8008 = vmatpush1.bf16.msra.mxu0 %v7765
    %8009 = vmatprep.subr.bf16.mxu0 %v7772
    %8010 = vmatpush1.bf16.msra.mxu0 %v7771
    %8011 = vmatprep.subr.bf16.mxu0 %v7778
    %8012 = vmatpush1.bf16.msra.mxu0 %v7777
    %8013 = vmatprep.subr.bf16.mxu0 %v7784
    %8014 = vmatpush1.bf16.msra.mxu0 %v7783
    %8015 = vmatprep.subr.bf16.mxu0 %v7790
    %8016 = vmatpush1.bf16.msra.mxu0 %v7789
    %8017 = vmatprep.subr.bf16.mxu0 %v7796
    %8018 = vmatpush1.bf16.msra.mxu0 %v7795
    %8019 = vmatprep.subr.bf16.mxu0 %v7802
    %8020 = vmatpush1.bf16.msra.mxu0 %v7801
    %8021 = vmatprep.subr.bf16.mxu0 %v7808
    %8022 = vmatpush1.bf16.msra.mxu0 %v7807
    %8023 = vmatprep.subr.bf16.mxu0 %v7814
    %8024 = vmatpush1.bf16.msra.mxu0 %v7813
    %8025 = vmatprep.mubr.bf16.mxu0 %v7334
    %8026 = vmatmul.mubr.bf16.gmra.mrb[0].mxu0 %v7333
    %v8027 = vpop.f32.mrb[0].mxu0
    %v8028 = vadd.f32 0.0, %v8027
    %v8029 = vpop.f32.mrb[0].mxu0
    %v8030 = vadd.f32 0.0, %v8029
    %v8031 = vpop.f32.mrb[0].mxu0
    %v8032 = vpop.f32.mrb[0].mxu0
    %8033 = vdwg.mxu0
    %s8034 = scalar_lea.vmem [#allocation3], 48
    %v8035 = vld [vmem:[%s8034] ss:$8 sm:$0xf]
    %v8036 = vld [vmem:[%s8034] ss:$8 sm:$0x30]
    %v8037 = vor.u32 %v8035, %v8036
    %v8040 = vcombine.low %v7946, %v7948
    %v8042 = vunpack.c.l.s4 1966171168
    %v8043 = vunpack.c.0.s8 %v8042
    %v8044 = vlaneseq
    %v8045 = vshrl.u32 %v8044, 7
    %v8046 = vsub.s32 %v8043, %v8045
    %v8047 = vrot.slane %v8040, %v8046
    %v8049 = vunpack.c.l.s4 1966171168
    %v8050 = vunpack.c.0.s8 %v8049
    %v8051 = vlaneseq
    %v8052 = vshrl.u32 %v8051, 7
    %v8053 = vsub.s32 %v8050, %v8052
    %v8054 = vrot.slane %v8047, %v8053
    %v8056 = vadd.f32 %v8037, %v8054
    %v8057 = vxor.u32 %v8056, 2147483648
    %v8058 = vmul.f32 %v8057, 1.442695
    %v8059 = vpow.pop %v8058
    %v8060 = vadd.f32 %v8059, 1.0
    %v8061 = vrcp.pop %v8060
    %v8062 = vmul.f32 1.0, %v8061
    %v8064 = vrot.slane %v8037, 2
    %v8068 = vcombine.low %v7987, %v7989
    %v8070 = vunpack.c.l.s4 1966171168
    %v8071 = vunpack.c.0.s8 %v8070
    %v8072 = vlaneseq
    %v8073 = vshrl.u32 %v8072, 7
    %v8074 = vsub.s32 %v8071, %v8073
    %v8075 = vrot.slane %v8068, %v8074
    %v8077 = vunpack.c.l.s4 1966171168
    %v8078 = vunpack.c.0.s8 %v8077
    %v8079 = vlaneseq
    %v8080 = vshrl.u32 %v8079, 7
    %v8081 = vsub.s32 %v8078, %v8080
    %v8082 = vrot.slane %v8075, %v8081
    %v8084 = vadd.f32 %v8064, %v8082
    %v8085 = vxor.u32 %v8084, 2147483648
    %v8086 = vmul.f32 %v8085, 1.442695
    %v8087 = vpow.pop %v8086
    %v8088 = vadd.f32 %v8087, 1.0
    %v8089 = vrcp.pop %v8088
    %v8090 = vmul.f32 1.0, %v8089
    %v8091 = vld [vmem:[%s5] sm:$0x3]
    %v8093 = vlaneseq
    %v8094 = vshrl.u32 %v8093, 7
    %v8095 = vsub.s32 0, %v8094
    %v8096 = vrot.slane %v8091, %v8095
    %v8097 = vlaneseq
    %v8098 = vshrl.u32 %v8097, 7
    %v8099 = vsub.s32 1, %v8098
    %v8100 = vrot.slane %v8091, %v8099
    %v8103 = vadd.f32 %v8028, %v8096
    %v8104 = vadd.f32 %v8030, %v8100
    %v8107 = vcombine.low %v8103, %v8104
    %v8109 = vunpack.c.l.s4 1966171168
    %v8110 = vunpack.c.0.s8 %v8109
    %v8111 = vlaneseq
    %v8112 = vshrl.u32 %v8111, 7
    %v8113 = vsub.s32 %v8110, %v8112
    %v8114 = vrot.slane %v8107, %v8113
    %v8116 = vunpack.c.l.s4 1966171168
    %v8117 = vunpack.c.0.s8 %v8116
    %v8118 = vlaneseq
    %v8119 = vshrl.u32 %v8118, 7
    %v8120 = vsub.s32 %v8117, %v8119
    %v8121 = vrot.slane %v8114, %v8120
    %v8123 = vmul.f32 %v8062, %v8121
    %v8124 = vrot.slane %v8037, 4
    %v8126 = vadd.f32 %v8124, %v8123
    %v8127 = vtanh.pop %v8126
    %v8128 = vsub.f32 %v7318, %v8127
    %v8129 = vmul.f32 %v8090, %v8128
    %v8130 = vadd.f32 %v8127, %v8129
    %s8131 = scalar_lea.vmem [#allocation9], 16
    %8132 = vst.msk [vmem:[%s8131] ss:$8 sm:$0x3] %vm1635, %v8130
    %8133 = vst.msk [vmem:[%s8131] ss:$8 sm:$0x0] %vm1635, %v8130
    %v8135 = vlaneseq
    %v8136 = vshrl.u32 %v8135, 7
    %v8137 = vsub.s32 0, %v8136
    %v8138 = vrot.slane %v8130, %v8137
    %v8139 = vlaneseq
    %v8140 = vshrl.u32 %v8139, 7
    %v8141 = vsub.s32 1, %v8140
    %v8142 = vrot.slane %v8130, %v8141
    %v8145 = vpack.c.bf16 %v8138, %v8138
    %v8146 = vpack.c.bf16 %v8142, %v8142
    %v8147 = vld [vmem:[#allocation7] sm:$0xff]
    %v8148 = vld [vmem:[#allocation7 + $0x8] sm:$0xff]
    %v8149 = vld [vmem:[#allocation7 + $0x10] sm:$0xff]
    %v8150 = vld [vmem:[#allocation7 + $0x18] sm:$0xff]
    %v8151 = vld [vmem:[#allocation7 + $0x20] sm:$0xff]
    %v8152 = vld [vmem:[#allocation7 + $0x28] sm:$0xff]
    %v8153 = vld [vmem:[#allocation7 + $0x30] sm:$0xff]
    %v8154 = vld [vmem:[#allocation7 + $0x38] sm:$0xff]
    %v8155 = vld [vmem:[#allocation7 + $0x40] sm:$0xff]
    %v8156 = vld [vmem:[#allocation7 + $0x48] sm:$0xff]
    %v8157 = vld [vmem:[#allocation7 + $0x50] sm:$0xff]
    %v8158 = vld [vmem:[#allocation7 + $0x58] sm:$0xff]
    %v8159 = vld [vmem:[#allocation7 + $0x60] sm:$0xff]
    %v8160 = vld [vmem:[#allocation7 + $0x68] sm:$0xff]
    %v8161 = vld [vmem:[#allocation7 + $0x70] sm:$0xff]
    %v8162 = vld [vmem:[#allocation7 + $0x78] sm:$0xff]
    %v8163 = vld [vmem:[#allocation7 + $0x80] sm:$0xff]
    %v8164 = vld [vmem:[#allocation7 + $0x88] sm:$0xff]
    %v8165 = vld [vmem:[#allocation7 + $0x90] sm:$0xff]
    %v8166 = vld [vmem:[#allocation7 + $0x98] sm:$0xff]
    %v8167 = vld [vmem:[#allocation7 + $0xa0] sm:$0xff]
    %v8168 = vld [vmem:[#allocation7 + $0xa8] sm:$0xff]
    %v8169 = vld [vmem:[#allocation7 + $0xb0] sm:$0xff]
    %v8170 = vld [vmem:[#allocation7 + $0xb8] sm:$0xff]
    %v8171 = vld [vmem:[#allocation7 + $0xc0] sm:$0xff]
    %v8172 = vld [vmem:[#allocation7 + $0xc8] sm:$0xff]
    %v8173 = vld [vmem:[#allocation7 + $0xd0] sm:$0xff]
    %v8174 = vld [vmem:[#allocation7 + $0xd8] sm:$0xff]
    %v8175 = vld [vmem:[#allocation7 + $0xe0] sm:$0xff]
    %v8176 = vld [vmem:[#allocation7 + $0xe8] sm:$0xff]
    %v8177 = vld [vmem:[#allocation7 + $0xf0] sm:$0xff]
    %v8178 = vld [vmem:[#allocation7 + $0xf8] sm:$0xff]
    %v8179 = vld [vmem:[#allocation7 + $0x100] sm:$0xff]
    %v8180 = vld [vmem:[#allocation7 + $0x108] sm:$0xff]
    %v8181 = vld [vmem:[#allocation7 + $0x110] sm:$0xff]
    %v8182 = vld [vmem:[#allocation7 + $0x118] sm:$0xff]
    %v8183 = vld [vmem:[#allocation7 + $0x120] sm:$0xff]
    %v8184 = vld [vmem:[#allocation7 + $0x128] sm:$0xff]
    %v8185 = vld [vmem:[#allocation7 + $0x130] sm:$0xff]
    %v8186 = vld [vmem:[#allocation7 + $0x138] sm:$0xff]
    %v8187 = vld [vmem:[#allocation7 + $0x140] sm:$0xff]
    %v8188 = vld [vmem:[#allocation7 + $0x148] sm:$0xff]
    %v8189 = vld [vmem:[#allocation7 + $0x150] sm:$0xff]
    %v8190 = vld [vmem:[#allocation7 + $0x158] sm:$0xff]
    %v8191 = vld [vmem:[#allocation7 + $0x160] sm:$0xff]
    %v8192 = vld [vmem:[#allocation7 + $0x168] sm:$0xff]
    %v8193 = vld [vmem:[#allocation7 + $0x170] sm:$0xff]
    %v8194 = vld [vmem:[#allocation7 + $0x178] sm:$0xff]
    %v8195 = vld [vmem:[#allocation7 + $0x180] sm:$0xff]
    %v8196 = vld [vmem:[#allocation7 + $0x188] sm:$0xff]
    %v8197 = vld [vmem:[#allocation7 + $0x190] sm:$0xff]
    %v8198 = vld [vmem:[#allocation7 + $0x198] sm:$0xff]
    %v8199 = vld [vmem:[#allocation7 + $0x1a0] sm:$0xff]
    %v8200 = vld [vmem:[#allocation7 + $0x1a8] sm:$0xff]
    %v8201 = vld [vmem:[#allocation7 + $0x1b0] sm:$0xff]
    %v8202 = vld [vmem:[#allocation7 + $0x1b8] sm:$0xff]
    %v8203 = vld [vmem:[#allocation7 + $0x1c0] sm:$0xff]
    %v8204 = vld [vmem:[#allocation7 + $0x1c8] sm:$0xff]
    %v8205 = vld [vmem:[#allocation7 + $0x1d0] sm:$0xff]
    %v8206 = vld [vmem:[#allocation7 + $0x1d8] sm:$0xff]
    %v8207 = vld [vmem:[#allocation7 + $0x1e0] sm:$0xff]
    %v8208 = vld [vmem:[#allocation7 + $0x1e8] sm:$0xff]
    %v8209 = vld [vmem:[#allocation7 + $0x1f0] sm:$0xff]
    %v8210 = vld [vmem:[#allocation7 + $0x1f8] sm:$0xff]
    %v8211 = vld [vmem:[#allocation7 + $0x200] sm:$0xff]
    %v8212 = vld [vmem:[#allocation7 + $0x208] sm:$0xff]
    %v8213 = vld [vmem:[#allocation7 + $0x210] sm:$0xff]
    %v8214 = vld [vmem:[#allocation7 + $0x218] sm:$0xff]
    %v8215 = vld [vmem:[#allocation7 + $0x220] sm:$0xff]
    %v8216 = vld [vmem:[#allocation7 + $0x228] sm:$0xff]
    %v8217 = vld [vmem:[#allocation7 + $0x230] sm:$0xff]
    %v8218 = vld [vmem:[#allocation7 + $0x238] sm:$0xff]
    %v8219 = vld [vmem:[#allocation7 + $0x240] sm:$0xff]
    %v8220 = vld [vmem:[#allocation7 + $0x248] sm:$0xff]
    %v8221 = vld [vmem:[#allocation7 + $0x250] sm:$0xff]
    %v8222 = vld [vmem:[#allocation7 + $0x258] sm:$0xff]
    %v8223 = vld [vmem:[#allocation7 + $0x260] sm:$0xff]
    %v8224 = vld [vmem:[#allocation7 + $0x268] sm:$0xff]
    %v8225 = vld [vmem:[#allocation7 + $0x270] sm:$0xff]
    %v8226 = vld [vmem:[#allocation7 + $0x278] sm:$0xff]
    %v8227 = vld [vmem:[#allocation7 + $0x280] sm:$0xff]
    %v8228 = vld [vmem:[#allocation7 + $0x288] sm:$0xff]
    %v8229 = vld [vmem:[#allocation7 + $0x290] sm:$0xff]
    %v8230 = vld [vmem:[#allocation7 + $0x298] sm:$0xff]
    %v8231 = vld [vmem:[#allocation7 + $0x2a0] sm:$0xff]
    %v8232 = vld [vmem:[#allocation7 + $0x2a8] sm:$0xff]
    %v8233 = vld [vmem:[#allocation7 + $0x2b0] sm:$0xff]
    %v8234 = vld [vmem:[#allocation7 + $0x2b8] sm:$0xff]
    %v8235 = vld [vmem:[#allocation7 + $0x2c0] sm:$0xff]
    %v8236 = vld [vmem:[#allocation7 + $0x2c8] sm:$0xff]
    %v8237 = vld [vmem:[#allocation7 + $0x2d0] sm:$0xff]
    %v8238 = vld [vmem:[#allocation7 + $0x2d8] sm:$0xff]
    %v8239 = vld [vmem:[#allocation7 + $0x2e0] sm:$0xff]
    %v8240 = vld [vmem:[#allocation7 + $0x2e8] sm:$0xff]
    %v8241 = vld [vmem:[#allocation7 + $0x2f0] sm:$0xff]
    %v8242 = vld [vmem:[#allocation7 + $0x2f8] sm:$0xff]
    %v8339 = vunpack.c.l.b16 %v8147
    %v8340 = vunpack.c.h.b16 %v8147
    %v8341 = vunpack.c.l.b16 %v8148
    %v8342 = vunpack.c.h.b16 %v8148
    %v8343 = vunpack.c.l.b16 %v8149
    %v8344 = vunpack.c.h.b16 %v8149
    %v8345 = vunpack.c.l.b16 %v8150
    %v8346 = vunpack.c.h.b16 %v8150
    %v8347 = vunpack.c.l.b16 %v8151
    %v8348 = vunpack.c.h.b16 %v8151
    %v8349 = vunpack.c.l.b16 %v8152
    %v8350 = vunpack.c.h.b16 %v8152
    %v8351 = vunpack.c.l.b16 %v8153
    %v8352 = vunpack.c.h.b16 %v8153
    %v8353 = vunpack.c.l.b16 %v8154
    %v8354 = vunpack.c.h.b16 %v8154
    %v8355 = vunpack.c.l.b16 %v8155
    %v8356 = vunpack.c.h.b16 %v8155
    %v8357 = vunpack.c.l.b16 %v8156
    %v8358 = vunpack.c.h.b16 %v8156
    %v8359 = vunpack.c.l.b16 %v8157
    %v8360 = vunpack.c.h.b16 %v8157
    %v8361 = vunpack.c.l.b16 %v8158
    %v8362 = vunpack.c.h.b16 %v8158
    %v8363 = vunpack.c.l.b16 %v8159
    %v8364 = vunpack.c.h.b16 %v8159
    %v8365 = vunpack.c.l.b16 %v8160
    %v8366 = vunpack.c.h.b16 %v8160
    %v8367 = vunpack.c.l.b16 %v8161
    %v8368 = vunpack.c.h.b16 %v8161
    %v8369 = vunpack.c.l.b16 %v8162
    %v8370 = vunpack.c.h.b16 %v8162
    %v8371 = vunpack.c.l.b16 %v8163
    %v8372 = vunpack.c.h.b16 %v8163
    %v8373 = vunpack.c.l.b16 %v8164
    %v8374 = vunpack.c.h.b16 %v8164
    %v8375 = vunpack.c.l.b16 %v8165
    %v8376 = vunpack.c.h.b16 %v8165
    %v8377 = vunpack.c.l.b16 %v8166
    %v8378 = vunpack.c.h.b16 %v8166
    %v8379 = vunpack.c.l.b16 %v8167
    %v8380 = vunpack.c.h.b16 %v8167
    %v8381 = vunpack.c.l.b16 %v8168
    %v8382 = vunpack.c.h.b16 %v8168
    %v8383 = vunpack.c.l.b16 %v8169
    %v8384 = vunpack.c.h.b16 %v8169
    %v8385 = vunpack.c.l.b16 %v8170
    %v8386 = vunpack.c.h.b16 %v8170
    %v8387 = vunpack.c.l.b16 %v8171
    %v8388 = vunpack.c.h.b16 %v8171
    %v8389 = vunpack.c.l.b16 %v8172
    %v8390 = vunpack.c.h.b16 %v8172
    %v8391 = vunpack.c.l.b16 %v8173
    %v8392 = vunpack.c.h.b16 %v8173
    %v8393 = vunpack.c.l.b16 %v8174
    %v8394 = vunpack.c.h.b16 %v8174
    %v8395 = vunpack.c.l.b16 %v8175
    %v8396 = vunpack.c.h.b16 %v8175
    %v8397 = vunpack.c.l.b16 %v8176
    %v8398 = vunpack.c.h.b16 %v8176
    %v8399 = vunpack.c.l.b16 %v8177
    %v8400 = vunpack.c.h.b16 %v8177
    %v8401 = vunpack.c.l.b16 %v8178
    %v8402 = vunpack.c.h.b16 %v8178
    %v8403 = vunpack.c.l.b16 %v8179
    %v8404 = vunpack.c.h.b16 %v8179
    %v8405 = vunpack.c.l.b16 %v8180
    %v8406 = vunpack.c.h.b16 %v8180
    %v8407 = vunpack.c.l.b16 %v8181
    %v8408 = vunpack.c.h.b16 %v8181
    %v8409 = vunpack.c.l.b16 %v8182
    %v8410 = vunpack.c.h.b16 %v8182
    %v8411 = vunpack.c.l.b16 %v8183
    %v8412 = vunpack.c.h.b16 %v8183
    %v8413 = vunpack.c.l.b16 %v8184
    %v8414 = vunpack.c.h.b16 %v8184
    %v8415 = vunpack.c.l.b16 %v8185
    %v8416 = vunpack.c.h.b16 %v8185
    %v8417 = vunpack.c.l.b16 %v8186
    %v8418 = vunpack.c.h.b16 %v8186
    %v8419 = vunpack.c.l.b16 %v8187
    %v8420 = vunpack.c.h.b16 %v8187
    %v8421 = vunpack.c.l.b16 %v8188
    %v8422 = vunpack.c.h.b16 %v8188
    %v8423 = vunpack.c.l.b16 %v8189
    %v8424 = vunpack.c.h.b16 %v8189
    %v8425 = vunpack.c.l.b16 %v8190
    %v8426 = vunpack.c.h.b16 %v8190
    %v8427 = vunpack.c.l.b16 %v8191
    %v8428 = vunpack.c.h.b16 %v8191
    %v8429 = vunpack.c.l.b16 %v8192
    %v8430 = vunpack.c.h.b16 %v8192
    %v8431 = vunpack.c.l.b16 %v8193
    %v8432 = vunpack.c.h.b16 %v8193
    %v8433 = vunpack.c.l.b16 %v8194
    %v8434 = vunpack.c.h.b16 %v8194
    %v8435 = vunpack.c.l.b16 %v8195
    %v8436 = vunpack.c.h.b16 %v8195
    %v8437 = vunpack.c.l.b16 %v8196
    %v8438 = vunpack.c.h.b16 %v8196
    %v8439 = vunpack.c.l.b16 %v8197
    %v8440 = vunpack.c.h.b16 %v8197
    %v8441 = vunpack.c.l.b16 %v8198
    %v8442 = vunpack.c.h.b16 %v8198
    %v8443 = vunpack.c.l.b16 %v8199
    %v8444 = vunpack.c.h.b16 %v8199
    %v8445 = vunpack.c.l.b16 %v8200
    %v8446 = vunpack.c.h.b16 %v8200
    %v8447 = vunpack.c.l.b16 %v8201
    %v8448 = vunpack.c.h.b16 %v8201
    %v8449 = vunpack.c.l.b16 %v8202
    %v8450 = vunpack.c.h.b16 %v8202
    %v8451 = vunpack.c.l.b16 %v8203
    %v8452 = vunpack.c.h.b16 %v8203
    %v8453 = vunpack.c.l.b16 %v8204
    %v8454 = vunpack.c.h.b16 %v8204
    %v8455 = vunpack.c.l.b16 %v8205
    %v8456 = vunpack.c.h.b16 %v8205
    %v8457 = vunpack.c.l.b16 %v8206
    %v8458 = vunpack.c.h.b16 %v8206
    %v8459 = vunpack.c.l.b16 %v8207
    %v8460 = vunpack.c.h.b16 %v8207
    %v8461 = vunpack.c.l.b16 %v8208
    %v8462 = vunpack.c.h.b16 %v8208
    %v8463 = vunpack.c.l.b16 %v8209
    %v8464 = vunpack.c.h.b16 %v8209
    %v8465 = vunpack.c.l.b16 %v8210
    %v8466 = vunpack.c.h.b16 %v8210
    %v8467 = vunpack.c.l.b16 %v8211
    %v8468 = vunpack.c.h.b16 %v8211
    %v8469 = vunpack.c.l.b16 %v8212
    %v8470 = vunpack.c.h.b16 %v8212
    %v8471 = vunpack.c.l.b16 %v8213
    %v8472 = vunpack.c.h.b16 %v8213
    %v8473 = vunpack.c.l.b16 %v8214
    %v8474 = vunpack.c.h.b16 %v8214
    %v8475 = vunpack.c.l.b16 %v8215
    %v8476 = vunpack.c.h.b16 %v8215
    %v8477 = vunpack.c.l.b16 %v8216
    %v8478 = vunpack.c.h.b16 %v8216
    %v8479 = vunpack.c.l.b16 %v8217
    %v8480 = vunpack.c.h.b16 %v8217
    %v8481 = vunpack.c.l.b16 %v8218
    %v8482 = vunpack.c.h.b16 %v8218
    %v8483 = vunpack.c.l.b16 %v8219
    %v8484 = vunpack.c.h.b16 %v8219
    %v8485 = vunpack.c.l.b16 %v8220
    %v8486 = vunpack.c.h.b16 %v8220
    %v8487 = vunpack.c.l.b16 %v8221
    %v8488 = vunpack.c.h.b16 %v8221
    %v8489 = vunpack.c.l.b16 %v8222
    %v8490 = vunpack.c.h.b16 %v8222
    %v8491 = vunpack.c.l.b16 %v8223
    %v8492 = vunpack.c.h.b16 %v8223
    %v8493 = vunpack.c.l.b16 %v8224
    %v8494 = vunpack.c.h.b16 %v8224
    %v8495 = vunpack.c.l.b16 %v8225
    %v8496 = vunpack.c.h.b16 %v8225
    %v8497 = vunpack.c.l.b16 %v8226
    %v8498 = vunpack.c.h.b16 %v8226
    %v8499 = vunpack.c.l.b16 %v8227
    %v8500 = vunpack.c.h.b16 %v8227
    %v8501 = vunpack.c.l.b16 %v8228
    %v8502 = vunpack.c.h.b16 %v8228
    %v8503 = vunpack.c.l.b16 %v8229
    %v8504 = vunpack.c.h.b16 %v8229
    %v8505 = vunpack.c.l.b16 %v8230
    %v8506 = vunpack.c.h.b16 %v8230
    %v8507 = vunpack.c.l.b16 %v8231
    %v8508 = vunpack.c.h.b16 %v8231
    %v8509 = vunpack.c.l.b16 %v8232
    %v8510 = vunpack.c.h.b16 %v8232
    %v8511 = vunpack.c.l.b16 %v8233
    %v8512 = vunpack.c.h.b16 %v8233
    %v8513 = vunpack.c.l.b16 %v8234
    %v8514 = vunpack.c.h.b16 %v8234
    %v8515 = vunpack.c.l.b16 %v8235
    %v8516 = vunpack.c.h.b16 %v8235
    %v8517 = vunpack.c.l.b16 %v8236
    %v8518 = vunpack.c.h.b16 %v8236
    %v8519 = vunpack.c.l.b16 %v8237
    %v8520 = vunpack.c.h.b16 %v8237
    %v8521 = vunpack.c.l.b16 %v8238
    %v8522 = vunpack.c.h.b16 %v8238
    %v8523 = vunpack.c.l.b16 %v8239
    %v8524 = vunpack.c.h.b16 %v8239
    %v8525 = vunpack.c.l.b16 %v8240
    %v8526 = vunpack.c.h.b16 %v8240
    %v8527 = vunpack.c.l.b16 %v8241
    %v8528 = vunpack.c.h.b16 %v8241
    %v8529 = vunpack.c.l.b16 %v8242
    %v8530 = vunpack.c.h.b16 %v8242
    %v8531 = vpack.c.b16 %v8345, %v8339
    %v8532 = vpack.c.b16 %v8346, %v8340
    %v8533 = vpack.c.b16 %v8347, %v8341
    %v8534 = vpack.c.b16 %v8348, %v8342
    %v8535 = vpack.c.b16 %v8349, %v8343
    %v8536 = vpack.c.b16 %v8350, %v8344
    %v8537 = vpack.c.b16 %v8357, %v8351
    %v8538 = vpack.c.b16 %v8358, %v8352
    %v8539 = vpack.c.b16 %v8359, %v8353
    %v8540 = vpack.c.b16 %v8360, %v8354
    %v8541 = vpack.c.b16 %v8361, %v8355
    %v8542 = vpack.c.b16 %v8362, %v8356
    %v8543 = vpack.c.b16 %v8369, %v8363
    %v8544 = vpack.c.b16 %v8370, %v8364
    %v8545 = vpack.c.b16 %v8371, %v8365
    %v8546 = vpack.c.b16 %v8372, %v8366
    %v8547 = vpack.c.b16 %v8373, %v8367
    %v8548 = vpack.c.b16 %v8374, %v8368
    %v8549 = vpack.c.b16 %v8381, %v8375
    %v8550 = vpack.c.b16 %v8382, %v8376
    %v8551 = vpack.c.b16 %v8383, %v8377
    %v8552 = vpack.c.b16 %v8384, %v8378
    %v8553 = vpack.c.b16 %v8385, %v8379
    %v8554 = vpack.c.b16 %v8386, %v8380
    %v8555 = vpack.c.b16 %v8393, %v8387
    %v8556 = vpack.c.b16 %v8394, %v8388
    %v8557 = vpack.c.b16 %v8395, %v8389
    %v8558 = vpack.c.b16 %v8396, %v8390
    %v8559 = vpack.c.b16 %v8397, %v8391
    %v8560 = vpack.c.b16 %v8398, %v8392
    %v8561 = vpack.c.b16 %v8405, %v8399
    %v8562 = vpack.c.b16 %v8406, %v8400
    %v8563 = vpack.c.b16 %v8407, %v8401
    %v8564 = vpack.c.b16 %v8408, %v8402
    %v8565 = vpack.c.b16 %v8409, %v8403
    %v8566 = vpack.c.b16 %v8410, %v8404
    %v8567 = vpack.c.b16 %v8417, %v8411
    %v8568 = vpack.c.b16 %v8418, %v8412
    %v8569 = vpack.c.b16 %v8419, %v8413
    %v8570 = vpack.c.b16 %v8420, %v8414
    %v8571 = vpack.c.b16 %v8421, %v8415
    %v8572 = vpack.c.b16 %v8422, %v8416
    %v8573 = vpack.c.b16 %v8429, %v8423
    %v8574 = vpack.c.b16 %v8430, %v8424
    %v8575 = vpack.c.b16 %v8431, %v8425
    %v8576 = vpack.c.b16 %v8432, %v8426
    %v8577 = vpack.c.b16 %v8433, %v8427
    %v8578 = vpack.c.b16 %v8434, %v8428
    %v8579 = vpack.c.b16 %v8441, %v8435
    %v8580 = vpack.c.b16 %v8442, %v8436
    %v8581 = vpack.c.b16 %v8443, %v8437
    %v8582 = vpack.c.b16 %v8444, %v8438
    %v8583 = vpack.c.b16 %v8445, %v8439
    %v8584 = vpack.c.b16 %v8446, %v8440
    %v8585 = vpack.c.b16 %v8453, %v8447
    %v8586 = vpack.c.b16 %v8454, %v8448
    %v8587 = vpack.c.b16 %v8455, %v8449
    %v8588 = vpack.c.b16 %v8456, %v8450
    %v8589 = vpack.c.b16 %v8457, %v8451
    %v8590 = vpack.c.b16 %v8458, %v8452
    %v8591 = vpack.c.b16 %v8465, %v8459
    %v8592 = vpack.c.b16 %v8466, %v8460
    %v8593 = vpack.c.b16 %v8467, %v8461
    %v8594 = vpack.c.b16 %v8468, %v8462
    %v8595 = vpack.c.b16 %v8469, %v8463
    %v8596 = vpack.c.b16 %v8470, %v8464
    %v8597 = vpack.c.b16 %v8477, %v8471
    %v8598 = vpack.c.b16 %v8478, %v8472
    %v8599 = vpack.c.b16 %v8479, %v8473
    %v8600 = vpack.c.b16 %v8480, %v8474
    %v8601 = vpack.c.b16 %v8481, %v8475
    %v8602 = vpack.c.b16 %v8482, %v8476
    %v8603 = vpack.c.b16 %v8489, %v8483
    %v8604 = vpack.c.b16 %v8490, %v8484
    %v8605 = vpack.c.b16 %v8491, %v8485
    %v8606 = vpack.c.b16 %v8492, %v8486
    %v8607 = vpack.c.b16 %v8493, %v8487
    %v8608 = vpack.c.b16 %v8494, %v8488
    %v8609 = vpack.c.b16 %v8501, %v8495
    %v8610 = vpack.c.b16 %v8502, %v8496
    %v8611 = vpack.c.b16 %v8503, %v8497
    %v8612 = vpack.c.b16 %v8504, %v8498
    %v8613 = vpack.c.b16 %v8505, %v8499
    %v8614 = vpack.c.b16 %v8506, %v8500
    %v8615 = vpack.c.b16 %v8513, %v8507
    %v8616 = vpack.c.b16 %v8514, %v8508
    %v8617 = vpack.c.b16 %v8515, %v8509
    %v8618 = vpack.c.b16 %v8516, %v8510
    %v8619 = vpack.c.b16 %v8517, %v8511
    %v8620 = vpack.c.b16 %v8518, %v8512
    %v8621 = vpack.c.b16 %v8525, %v8519
    %v8622 = vpack.c.b16 %v8526, %v8520
    %v8623 = vpack.c.b16 %v8527, %v8521
    %v8624 = vpack.c.b16 %v8528, %v8522
    %v8625 = vpack.c.b16 %v8529, %v8523
    %v8626 = vpack.c.b16 %v8530, %v8524
    %8723 = vmatprep.subr.bf16.mxu0 %v8532
    %8724 = vmatpush1.bf16.msra.mxu0 %v8531
    %8725 = vmatprep.subr.bf16.mxu0 %v8538
    %8726 = vmatpush1.bf16.msra.mxu0 %v8537
    %8727 = vmatprep.subr.bf16.mxu0 %v8544
    %8728 = vmatpush1.bf16.msra.mxu0 %v8543
    %8729 = vmatprep.subr.bf16.mxu0 %v8550
    %8730 = vmatpush1.bf16.msra.mxu0 %v8549
    %8731 = vmatprep.subr.bf16.mxu0 %v8556
    %8732 = vmatpush1.bf16.msra.mxu0 %v8555
    %8733 = vmatprep.subr.bf16.mxu0 %v8562
    %8734 = vmatpush1.bf16.msra.mxu0 %v8561
    %8735 = vmatprep.subr.bf16.mxu0 %v8568
    %8736 = vmatpush1.bf16.msra.mxu0 %v8567
    %8737 = vmatprep.subr.bf16.mxu0 %v8574
    %8738 = vmatpush1.bf16.msra.mxu0 %v8573
    %8739 = vmatprep.subr.bf16.mxu0 %v8580
    %8740 = vmatpush1.bf16.msra.mxu0 %v8579
    %8741 = vmatprep.subr.bf16.mxu0 %v8586
    %8742 = vmatpush1.bf16.msra.mxu0 %v8585
    %8743 = vmatprep.subr.bf16.mxu0 %v8592
    %8744 = vmatpush1.bf16.msra.mxu0 %v8591
    %8745 = vmatprep.subr.bf16.mxu0 %v8598
    %8746 = vmatpush1.bf16.msra.mxu0 %v8597
    %8747 = vmatprep.subr.bf16.mxu0 %v8604
    %8748 = vmatpush1.bf16.msra.mxu0 %v8603
    %8749 = vmatprep.subr.bf16.mxu0 %v8610
    %8750 = vmatpush1.bf16.msra.mxu0 %v8609
    %8751 = vmatprep.subr.bf16.mxu0 %v8616
    %8752 = vmatpush1.bf16.msra.mxu0 %v8615
    %8753 = vmatprep.subr.bf16.mxu0 %v8622
    %8754 = vmatpush1.bf16.msra.mxu0 %v8621
    %8755 = vmatprep.mubr.bf16.mxu0 %v8146
    %8756 = vmatmul.mubr.bf16.gmra.mrb[0].mxu0 %v8145
    %v8757 = vpop.f32.mrb[0].mxu0
    %v8758 = vadd.f32 0.0, %v8757
    %v8759 = vpop.f32.mrb[0].mxu0
    %v8760 = vadd.f32 0.0, %v8759
    %v8761 = vpop.f32.mrb[0].mxu0
    %v8762 = vpop.f32.mrb[0].mxu0
    %8763 = vdwg.mxu0
    %8764 = vmatprep.subr.bf16.mxu0 %v8534
    %8765 = vmatpush1.bf16.msra.mxu0 %v8533
    %8766 = vmatprep.subr.bf16.mxu0 %v8540
    %8767 = vmatpush1.bf16.msra.mxu0 %v8539
    %8768 = vmatprep.subr.bf16.mxu0 %v8546
    %8769 = vmatpush1.bf16.msra.mxu0 %v8545
    %8770 = vmatprep.subr.bf16.mxu0 %v8552
    %8771 = vmatpush1.bf16.msra.mxu0 %v8551
    %8772 = vmatprep.subr.bf16.mxu0 %v8558
    %8773 = vmatpush1.bf16.msra.mxu0 %v8557
    %8774 = vmatprep.subr.bf16.mxu0 %v8564
    %8775 = vmatpush1.bf16.msra.mxu0 %v8563
    %8776 = vmatprep.subr.bf16.mxu0 %v8570
    %8777 = vmatpush1.bf16.msra.mxu0 %v8569
    %8778 = vmatprep.subr.bf16.mxu0 %v8576
    %8779 = vmatpush1.bf16.msra.mxu0 %v8575
    %8780 = vmatprep.subr.bf16.mxu0 %v8582
    %8781 = vmatpush1.bf16.msra.mxu0 %v8581
    %8782 = vmatprep.subr.bf16.mxu0 %v8588
    %8783 = vmatpush1.bf16.msra.mxu0 %v8587
    %8784 = vmatprep.subr.bf16.mxu0 %v8594
    %8785 = vmatpush1.bf16.msra.mxu0 %v8593
    %8786 = vmatprep.subr.bf16.mxu0 %v8600
    %8787 = vmatpush1.bf16.msra.mxu0 %v8599
    %8788 = vmatprep.subr.bf16.mxu0 %v8606
    %8789 = vmatpush1.bf16.msra.mxu0 %v8605
    %8790 = vmatprep.subr.bf16.mxu0 %v8612
    %8791 = vmatpush1.bf16.msra.mxu0 %v8611
    %8792 = vmatprep.subr.bf16.mxu0 %v8618
    %8793 = vmatpush1.bf16.msra.mxu0 %v8617
    %8794 = vmatprep.subr.bf16.mxu0 %v8624
    %8795 = vmatpush1.bf16.msra.mxu0 %v8623
    %8796 = vmatprep.mubr.bf16.mxu0 %v8146
    %8797 = vmatmul.mubr.bf16.gmra.mrb[0].mxu0 %v8145
    %v8798 = vpop.f32.mrb[0].mxu0
    %v8799 = vadd.f32 0.0, %v8798
    %v8800 = vpop.f32.mrb[0].mxu0
    %v8801 = vadd.f32 0.0, %v8800
    %v8802 = vpop.f32.mrb[0].mxu0
    %v8803 = vpop.f32.mrb[0].mxu0
    %8804 = vdwg.mxu0
    %8805 = vmatprep.subr.bf16.mxu0 %v8536
    %8806 = vmatpush1.bf16.msra.mxu0 %v8535
    %8807 = vmatprep.subr.bf16.mxu0 %v8542
    %8808 = vmatpush1.bf16.msra.mxu0 %v8541
    %8809 = vmatprep.subr.bf16.mxu0 %v8548
    %8810 = vmatpush1.bf16.msra.mxu0 %v8547
    %8811 = vmatprep.subr.bf16.mxu0 %v8554
    %8812 = vmatpush1.bf16.msra.mxu0 %v8553
    %8813 = vmatprep.subr.bf16.mxu0 %v8560
    %8814 = vmatpush1.bf16.msra.mxu0 %v8559
    %8815 = vmatprep.subr.bf16.mxu0 %v8566
    %8816 = vmatpush1.bf16.msra.mxu0 %v8565
    %8817 = vmatprep.subr.bf16.mxu0 %v8572
    %8818 = vmatpush1.bf16.msra.mxu0 %v8571
    %8819 = vmatprep.subr.bf16.mxu0 %v8578
    %8820 = vmatpush1.bf16.msra.mxu0 %v8577
    %8821 = vmatprep.subr.bf16.mxu0 %v8584
    %8822 = vmatpush1.bf16.msra.mxu0 %v8583
    %8823 = vmatprep.subr.bf16.mxu0 %v8590
    %8824 = vmatpush1.bf16.msra.mxu0 %v8589
    %8825 = vmatprep.subr.bf16.mxu0 %v8596
    %8826 = vmatpush1.bf16.msra.mxu0 %v8595
    %8827 = vmatprep.subr.bf16.mxu0 %v8602
    %8828 = vmatpush1.bf16.msra.mxu0 %v8601
    %8829 = vmatprep.subr.bf16.mxu0 %v8608
    %8830 = vmatpush1.bf16.msra.mxu0 %v8607
    %8831 = vmatprep.subr.bf16.mxu0 %v8614
    %8832 = vmatpush1.bf16.msra.mxu0 %v8613
    %8833 = vmatprep.subr.bf16.mxu0 %v8620
    %8834 = vmatpush1.bf16.msra.mxu0 %v8619
    %8835 = vmatprep.subr.bf16.mxu0 %v8626
    %8836 = vmatpush1.bf16.msra.mxu0 %v8625
    %8837 = vmatprep.mubr.bf16.mxu0 %v8146
    %8838 = vmatmul.mubr.bf16.gmra.mrb[0].mxu0 %v8145
    %v8839 = vpop.f32.mrb[0].mxu0
    %v8840 = vadd.f32 0.0, %v8839
    %v8841 = vpop.f32.mrb[0].mxu0
    %v8842 = vadd.f32 0.0, %v8841
    %v8843 = vpop.f32.mrb[0].mxu0
    %v8844 = vpop.f32.mrb[0].mxu0
    %8845 = vdwg.mxu0
    %s8846 = scalar_lea.vmem [#allocation3], 49
    %v8847 = vld [vmem:[%s8846] ss:$8 sm:$0xf]
    %v8848 = vld [vmem:[%s8846] ss:$8 sm:$0x30]
    %v8849 = vor.u32 %v8847, %v8848
    %v8852 = vcombine.low %v8758, %v8760
    %v8854 = vunpack.c.l.s4 1966171168
    %v8855 = vunpack.c.0.s8 %v8854
    %v8856 = vlaneseq
    %v8857 = vshrl.u32 %v8856, 7
    %v8858 = vsub.s32 %v8855, %v8857
    %v8859 = vrot.slane %v8852, %v8858
    %v8861 = vunpack.c.l.s4 1966171168
    %v8862 = vunpack.c.0.s8 %v8861
    %v8863 = vlaneseq
    %v8864 = vshrl.u32 %v8863, 7
    %v8865 = vsub.s32 %v8862, %v8864
    %v8866 = vrot.slane %v8859, %v8865
    %v8868 = vadd.f32 %v8849, %v8866
    %v8869 = vxor.u32 %v8868, 2147483648
    %v8870 = vmul.f32 %v8869, 1.442695
    %v8871 = vpow.pop %v8870
    %v8872 = vadd.f32 %v8871, 1.0
    %v8873 = vrcp.pop %v8872
    %v8874 = vmul.f32 1.0, %v8873
    %v8876 = vrot.slane %v8849, 2
    %v8880 = vcombine.low %v8799, %v8801
    %v8882 = vunpack.c.l.s4 1966171168
    %v8883 = vunpack.c.0.s8 %v8882
    %v8884 = vlaneseq
    %v8885 = vshrl.u32 %v8884, 7
    %v8886 = vsub.s32 %v8883, %v8885
    %v8887 = vrot.slane %v8880, %v8886
    %v8889 = vunpack.c.l.s4 1966171168
    %v8890 = vunpack.c.0.s8 %v8889
    %v8891 = vlaneseq
    %v8892 = vshrl.u32 %v8891, 7
    %v8893 = vsub.s32 %v8890, %v8892
    %v8894 = vrot.slane %v8887, %v8893
    %v8896 = vadd.f32 %v8876, %v8894
    %v8897 = vxor.u32 %v8896, 2147483648
    %v8898 = vmul.f32 %v8897, 1.442695
    %v8899 = vpow.pop %v8898
    %v8900 = vadd.f32 %v8899, 1.0
    %v8901 = vrcp.pop %v8900
    %v8902 = vmul.f32 1.0, %v8901
    %v8903 = vld [vmem:[%s5] sm:$0x3]
    %v8905 = vlaneseq
    %v8906 = vshrl.u32 %v8905, 7
    %v8907 = vsub.s32 0, %v8906
    %v8908 = vrot.slane %v8903, %v8907
    %v8909 = vlaneseq
    %v8910 = vshrl.u32 %v8909, 7
    %v8911 = vsub.s32 1, %v8910
    %v8912 = vrot.slane %v8903, %v8911
    %v8915 = vadd.f32 %v8840, %v8908
    %v8916 = vadd.f32 %v8842, %v8912
    %v8919 = vcombine.low %v8915, %v8916
    %v8921 = vunpack.c.l.s4 1966171168
    %v8922 = vunpack.c.0.s8 %v8921
    %v8923 = vlaneseq
    %v8924 = vshrl.u32 %v8923, 7
    %v8925 = vsub.s32 %v8922, %v8924
    %v8926 = vrot.slane %v8919, %v8925
    %v8928 = vunpack.c.l.s4 1966171168
    %v8929 = vunpack.c.0.s8 %v8928
    %v8930 = vlaneseq
    %v8931 = vshrl.u32 %v8930, 7
    %v8932 = vsub.s32 %v8929, %v8931
    %v8933 = vrot.slane %v8926, %v8932
    %v8935 = vmul.f32 %v8874, %v8933
    %v8936 = vrot.slane %v8849, 4
    %v8938 = vadd.f32 %v8936, %v8935
    %v8939 = vtanh.pop %v8938
    %v8940 = vsub.f32 %v8130, %v8939
    %v8941 = vmul.f32 %v8902, %v8940
    %v8942 = vadd.f32 %v8939, %v8941
    %s8943 = scalar_lea.vmem [#allocation9], 17
    %8944 = vst.msk [vmem:[%s8943] ss:$8 sm:$0x3] %vm1635, %v8942
    %8945 = vst.msk [vmem:[%s8943] ss:$8 sm:$0x0] %vm1635, %v8942
    %v8947 = vlaneseq
    %v8948 = vshrl.u32 %v8947, 7
    %v8949 = vsub.s32 0, %v8948
    %v8950 = vrot.slane %v8942, %v8949
    %v8951 = vlaneseq
    %v8952 = vshrl.u32 %v8951, 7
    %v8953 = vsub.s32 1, %v8952
    %v8954 = vrot.slane %v8942, %v8953
    %v8957 = vpack.c.bf16 %v8950, %v8950
    %v8958 = vpack.c.bf16 %v8954, %v8954
    %v8959 = vld [vmem:[#allocation7] sm:$0xff]
    %v8960 = vld [vmem:[#allocation7 + $0x8] sm:$0xff]
    %v8961 = vld [vmem:[#allocation7 + $0x10] sm:$0xff]
    %v8962 = vld [vmem:[#allocation7 + $0x18] sm:$0xff]
    %v8963 = vld [vmem:[#allocation7 + $0x20] sm:$0xff]
    %v8964 = vld [vmem:[#allocation7 + $0x28] sm:$0xff]
    %v8965 = vld [vmem:[#allocation7 + $0x30] sm:$0xff]
    %v8966 = vld [vmem:[#allocation7 + $0x38] sm:$0xff]
    %v8967 = vld [vmem:[#allocation7 + $0x40] sm:$0xff]
    %v8968 = vld [vmem:[#allocation7 + $0x48] sm:$0xff]
    %v8969 = vld [vmem:[#allocation7 + $0x50] sm:$0xff]
    %v8970 = vld [vmem:[#allocation7 + $0x58] sm:$0xff]
    %v8971 = vld [vmem:[#allocation7 + $0x60] sm:$0xff]
    %v8972 = vld [vmem:[#allocation7 + $0x68] sm:$0xff]
    %v8973 = vld [vmem:[#allocation7 + $0x70] sm:$0xff]
    %v8974 = vld [vmem:[#allocation7 + $0x78] sm:$0xff]
    %v8975 = vld [vmem:[#allocation7 + $0x80] sm:$0xff]
    %v8976 = vld [vmem:[#allocation7 + $0x88] sm:$0xff]
    %v8977 = vld [vmem:[#allocation7 + $0x90] sm:$0xff]
    %v8978 = vld [vmem:[#allocation7 + $0x98] sm:$0xff]
    %v8979 = vld [vmem:[#allocation7 + $0xa0] sm:$0xff]
    %v8980 = vld [vmem:[#allocation7 + $0xa8] sm:$0xff]
    %v8981 = vld [vmem:[#allocation7 + $0xb0] sm:$0xff]
    %v8982 = vld [vmem:[#allocation7 + $0xb8] sm:$0xff]
    %v8983 = vld [vmem:[#allocation7 + $0xc0] sm:$0xff]
    %v8984 = vld [vmem:[#allocation7 + $0xc8] sm:$0xff]
    %v8985 = vld [vmem:[#allocation7 + $0xd0] sm:$0xff]
    %v8986 = vld [vmem:[#allocation7 + $0xd8] sm:$0xff]
    %v8987 = vld [vmem:[#allocation7 + $0xe0] sm:$0xff]
    %v8988 = vld [vmem:[#allocation7 + $0xe8] sm:$0xff]
    %v8989 = vld [vmem:[#allocation7 + $0xf0] sm:$0xff]
    %v8990 = vld [vmem:[#allocation7 + $0xf8] sm:$0xff]
    %v8991 = vld [vmem:[#allocation7 + $0x100] sm:$0xff]
    %v8992 = vld [vmem:[#allocation7 + $0x108] sm:$0xff]
    %v8993 = vld [vmem:[#allocation7 + $0x110] sm:$0xff]
    %v8994 = vld [vmem:[#allocation7 + $0x118] sm:$0xff]
    %v8995 = vld [vmem:[#allocation7 + $0x120] sm:$0xff]
    %v8996 = vld [vmem:[#allocation7 + $0x128] sm:$0xff]
    %v8997 = vld [vmem:[#allocation7 + $0x130] sm:$0xff]
    %v8998 = vld [vmem:[#allocation7 + $0x138] sm:$0xff]
    %v8999 = vld [vmem:[#allocation7 + $0x140] sm:$0xff]
    %v9000 = vld [vmem:[#allocation7 + $0x148] sm:$0xff]
    %v9001 = vld [vmem:[#allocation7 + $0x150] sm:$0xff]
    %v9002 = vld [vmem:[#allocation7 + $0x158] sm:$0xff]
    %v9003 = vld [vmem:[#allocation7 + $0x160] sm:$0xff]
    %v9004 = vld [vmem:[#allocation7 + $0x168] sm:$0xff]
    %v9005 = vld [vmem:[#allocation7 + $0x170] sm:$0xff]
    %v9006 = vld [vmem:[#allocation7 + $0x178] sm:$0xff]
    %v9007 = vld [vmem:[#allocation7 + $0x180] sm:$0xff]
    %v9008 = vld [vmem:[#allocation7 + $0x188] sm:$0xff]
    %v9009 = vld [vmem:[#allocation7 + $0x190] sm:$0xff]
    %v9010 = vld [vmem:[#allocation7 + $0x198] sm:$0xff]
    %v9011 = vld [vmem:[#allocation7 + $0x1a0] sm:$0xff]
    %v9012 = vld [vmem:[#allocation7 + $0x1a8] sm:$0xff]
    %v9013 = vld [vmem:[#allocation7 + $0x1b0] sm:$0xff]
    %v9014 = vld [vmem:[#allocation7 + $0x1b8] sm:$0xff]
    %v9015 = vld [vmem:[#allocation7 + $0x1c0] sm:$0xff]
    %v9016 = vld [vmem:[#allocation7 + $0x1c8] sm:$0xff]
    %v9017 = vld [vmem:[#allocation7 + $0x1d0] sm:$0xff]
    %v9018 = vld [vmem:[#allocation7 + $0x1d8] sm:$0xff]
    %v9019 = vld [vmem:[#allocation7 + $0x1e0] sm:$0xff]
    %v9020 = vld [vmem:[#allocation7 + $0x1e8] sm:$0xff]
    %v9021 = vld [vmem:[#allocation7 + $0x1f0] sm:$0xff]
    %v9022 = vld [vmem:[#allocation7 + $0x1f8] sm:$0xff]
    %v9023 = vld [vmem:[#allocation7 + $0x200] sm:$0xff]
    %v9024 = vld [vmem:[#allocation7 + $0x208] sm:$0xff]
    %v9025 = vld [vmem:[#allocation7 + $0x210] sm:$0xff]
    %v9026 = vld [vmem:[#allocation7 + $0x218] sm:$0xff]
    %v9027 = vld [vmem:[#allocation7 + $0x220] sm:$0xff]
    %v9028 = vld [vmem:[#allocation7 + $0x228] sm:$0xff]
    %v9029 = vld [vmem:[#allocation7 + $0x230] sm:$0xff]
    %v9030 = vld [vmem:[#allocation7 + $0x238] sm:$0xff]
    %v9031 = vld [vmem:[#allocation7 + $0x240] sm:$0xff]
    %v9032 = vld [vmem:[#allocation7 + $0x248] sm:$0xff]
    %v9033 = vld [vmem:[#allocation7 + $0x250] sm:$0xff]
    %v9034 = vld [vmem:[#allocation7 + $0x258] sm:$0xff]
    %v9035 = vld [vmem:[#allocation7 + $0x260] sm:$0xff]
    %v9036 = vld [vmem:[#allocation7 + $0x268] sm:$0xff]
    %v9037 = vld [vmem:[#allocation7 + $0x270] sm:$0xff]
    %v9038 = vld [vmem:[#allocation7 + $0x278] sm:$0xff]
    %v9039 = vld [vmem:[#allocation7 + $0x280] sm:$0xff]
    %v9040 = vld [vmem:[#allocation7 + $0x288] sm:$0xff]
    %v9041 = vld [vmem:[#allocation7 + $0x290] sm:$0xff]
    %v9042 = vld [vmem:[#allocation7 + $0x298] sm:$0xff]
    %v9043 = vld [vmem:[#allocation7 + $0x2a0] sm:$0xff]
    %v9044 = vld [vmem:[#allocation7 + $0x2a8] sm:$0xff]
    %v9045 = vld [vmem:[#allocation7 + $0x2b0] sm:$0xff]
    %v9046 = vld [vmem:[#allocation7 + $0x2b8] sm:$0xff]
    %v9047 = vld [vmem:[#allocation7 + $0x2c0] sm:$0xff]
    %v9048 = vld [vmem:[#allocation7 + $0x2c8] sm:$0xff]
    %v9049 = vld [vmem:[#allocation7 + $0x2d0] sm:$0xff]
    %v9050 = vld [vmem:[#allocation7 + $0x2d8] sm:$0xff]
    %v9051 = vld [vmem:[#allocation7 + $0x2e0] sm:$0xff]
    %v9052 = vld [vmem:[#allocation7 + $0x2e8] sm:$0xff]
    %v9053 = vld [vmem:[#allocation7 + $0x2f0] sm:$0xff]
    %v9054 = vld [vmem:[#allocation7 + $0x2f8] sm:$0xff]
    %v9151 = vunpack.c.l.b16 %v8959
    %v9152 = vunpack.c.h.b16 %v8959
    %v9153 = vunpack.c.l.b16 %v8960
    %v9154 = vunpack.c.h.b16 %v8960
    %v9155 = vunpack.c.l.b16 %v8961
    %v9156 = vunpack.c.h.b16 %v8961
    %v9157 = vunpack.c.l.b16 %v8962
    %v9158 = vunpack.c.h.b16 %v8962
    %v9159 = vunpack.c.l.b16 %v8963
    %v9160 = vunpack.c.h.b16 %v8963
    %v9161 = vunpack.c.l.b16 %v8964
    %v9162 = vunpack.c.h.b16 %v8964
    %v9163 = vunpack.c.l.b16 %v8965
    %v9164 = vunpack.c.h.b16 %v8965
    %v9165 = vunpack.c.l.b16 %v8966
    %v9166 = vunpack.c.h.b16 %v8966
    %v9167 = vunpack.c.l.b16 %v8967
    %v9168 = vunpack.c.h.b16 %v8967
    %v9169 = vunpack.c.l.b16 %v8968
    %v9170 = vunpack.c.h.b16 %v8968
    %v9171 = vunpack.c.l.b16 %v8969
    %v9172 = vunpack.c.h.b16 %v8969
    %v9173 = vunpack.c.l.b16 %v8970
    %v9174 = vunpack.c.h.b16 %v8970
    %v9175 = vunpack.c.l.b16 %v8971
    %v9176 = vunpack.c.h.b16 %v8971
    %v9177 = vunpack.c.l.b16 %v8972
    %v9178 = vunpack.c.h.b16 %v8972
    %v9179 = vunpack.c.l.b16 %v8973
    %v9180 = vunpack.c.h.b16 %v8973
    %v9181 = vunpack.c.l.b16 %v8974
    %v9182 = vunpack.c.h.b16 %v8974
    %v9183 = vunpack.c.l.b16 %v8975
    %v9184 = vunpack.c.h.b16 %v8975
    %v9185 = vunpack.c.l.b16 %v8976
    %v9186 = vunpack.c.h.b16 %v8976
    %v9187 = vunpack.c.l.b16 %v8977
    %v9188 = vunpack.c.h.b16 %v8977
    %v9189 = vunpack.c.l.b16 %v8978
    %v9190 = vunpack.c.h.b16 %v8978
    %v9191 = vunpack.c.l.b16 %v8979
    %v9192 = vunpack.c.h.b16 %v8979
    %v9193 = vunpack.c.l.b16 %v8980
    %v9194 = vunpack.c.h.b16 %v8980
    %v9195 = vunpack.c.l.b16 %v8981
    %v9196 = vunpack.c.h.b16 %v8981
    %v9197 = vunpack.c.l.b16 %v8982
    %v9198 = vunpack.c.h.b16 %v8982
    %v9199 = vunpack.c.l.b16 %v8983
    %v9200 = vunpack.c.h.b16 %v8983
    %v9201 = vunpack.c.l.b16 %v8984
    %v9202 = vunpack.c.h.b16 %v8984
    %v9203 = vunpack.c.l.b16 %v8985
    %v9204 = vunpack.c.h.b16 %v8985
    %v9205 = vunpack.c.l.b16 %v8986
    %v9206 = vunpack.c.h.b16 %v8986
    %v9207 = vunpack.c.l.b16 %v8987
    %v9208 = vunpack.c.h.b16 %v8987
    %v9209 = vunpack.c.l.b16 %v8988
    %v9210 = vunpack.c.h.b16 %v8988
    %v9211 = vunpack.c.l.b16 %v8989
    %v9212 = vunpack.c.h.b16 %v8989
    %v9213 = vunpack.c.l.b16 %v8990
    %v9214 = vunpack.c.h.b16 %v8990
    %v9215 = vunpack.c.l.b16 %v8991
    %v9216 = vunpack.c.h.b16 %v8991
    %v9217 = vunpack.c.l.b16 %v8992
    %v9218 = vunpack.c.h.b16 %v8992
    %v9219 = vunpack.c.l.b16 %v8993
    %v9220 = vunpack.c.h.b16 %v8993
    %v9221 = vunpack.c.l.b16 %v8994
    %v9222 = vunpack.c.h.b16 %v8994
    %v9223 = vunpack.c.l.b16 %v8995
    %v9224 = vunpack.c.h.b16 %v8995
    %v9225 = vunpack.c.l.b16 %v8996
    %v9226 = vunpack.c.h.b16 %v8996
    %v9227 = vunpack.c.l.b16 %v8997
    %v9228 = vunpack.c.h.b16 %v8997
    %v9229 = vunpack.c.l.b16 %v8998
    %v9230 = vunpack.c.h.b16 %v8998
    %v9231 = vunpack.c.l.b16 %v8999
    %v9232 = vunpack.c.h.b16 %v8999
    %v9233 = vunpack.c.l.b16 %v9000
    %v9234 = vunpack.c.h.b16 %v9000
    %v9235 = vunpack.c.l.b16 %v9001
    %v9236 = vunpack.c.h.b16 %v9001
    %v9237 = vunpack.c.l.b16 %v9002
    %v9238 = vunpack.c.h.b16 %v9002
    %v9239 = vunpack.c.l.b16 %v9003
    %v9240 = vunpack.c.h.b16 %v9003
    %v9241 = vunpack.c.l.b16 %v9004
    %v9242 = vunpack.c.h.b16 %v9004
    %v9243 = vunpack.c.l.b16 %v9005
    %v9244 = vunpack.c.h.b16 %v9005
    %v9245 = vunpack.c.l.b16 %v9006
    %v9246 = vunpack.c.h.b16 %v9006
    %v9247 = vunpack.c.l.b16 %v9007
    %v9248 = vunpack.c.h.b16 %v9007
    %v9249 = vunpack.c.l.b16 %v9008
    %v9250 = vunpack.c.h.b16 %v9008
    %v9251 = vunpack.c.l.b16 %v9009
    %v9252 = vunpack.c.h.b16 %v9009
    %v9253 = vunpack.c.l.b16 %v9010
    %v9254 = vunpack.c.h.b16 %v9010
    %v9255 = vunpack.c.l.b16 %v9011
    %v9256 = vunpack.c.h.b16 %v9011
    %v9257 = vunpack.c.l.b16 %v9012
    %v9258 = vunpack.c.h.b16 %v9012
    %v9259 = vunpack.c.l.b16 %v9013
    %v9260 = vunpack.c.h.b16 %v9013
    %v9261 = vunpack.c.l.b16 %v9014
    %v9262 = vunpack.c.h.b16 %v9014
    %v9263 = vunpack.c.l.b16 %v9015
    %v9264 = vunpack.c.h.b16 %v9015
    %v9265 = vunpack.c.l.b16 %v9016
    %v9266 = vunpack.c.h.b16 %v9016
    %v9267 = vunpack.c.l.b16 %v9017
    %v9268 = vunpack.c.h.b16 %v9017
    %v9269 = vunpack.c.l.b16 %v9018
    %v9270 = vunpack.c.h.b16 %v9018
    %v9271 = vunpack.c.l.b16 %v9019
    %v9272 = vunpack.c.h.b16 %v9019
    %v9273 = vunpack.c.l.b16 %v9020
    %v9274 = vunpack.c.h.b16 %v9020
    %v9275 = vunpack.c.l.b16 %v9021
    %v9276 = vunpack.c.h.b16 %v9021
    %v9277 = vunpack.c.l.b16 %v9022
    %v9278 = vunpack.c.h.b16 %v9022
    %v9279 = vunpack.c.l.b16 %v9023
    %v9280 = vunpack.c.h.b16 %v9023
    %v9281 = vunpack.c.l.b16 %v9024
    %v9282 = vunpack.c.h.b16 %v9024
    %v9283 = vunpack.c.l.b16 %v9025
    %v9284 = vunpack.c.h.b16 %v9025
    %v9285 = vunpack.c.l.b16 %v9026
    %v9286 = vunpack.c.h.b16 %v9026
    %v9287 = vunpack.c.l.b16 %v9027
    %v9288 = vunpack.c.h.b16 %v9027
    %v9289 = vunpack.c.l.b16 %v9028
    %v9290 = vunpack.c.h.b16 %v9028
    %v9291 = vunpack.c.l.b16 %v9029
    %v9292 = vunpack.c.h.b16 %v9029
    %v9293 = vunpack.c.l.b16 %v9030
    %v9294 = vunpack.c.h.b16 %v9030
    %v9295 = vunpack.c.l.b16 %v9031
    %v9296 = vunpack.c.h.b16 %v9031
    %v9297 = vunpack.c.l.b16 %v9032
    %v9298 = vunpack.c.h.b16 %v9032
    %v9299 = vunpack.c.l.b16 %v9033
    %v9300 = vunpack.c.h.b16 %v9033
    %v9301 = vunpack.c.l.b16 %v9034
    %v9302 = vunpack.c.h.b16 %v9034
    %v9303 = vunpack.c.l.b16 %v9035
    %v9304 = vunpack.c.h.b16 %v9035
    %v9305 = vunpack.c.l.b16 %v9036
    %v9306 = vunpack.c.h.b16 %v9036
    %v9307 = vunpack.c.l.b16 %v9037
    %v9308 = vunpack.c.h.b16 %v9037
    %v9309 = vunpack.c.l.b16 %v9038
    %v9310 = vunpack.c.h.b16 %v9038
    %v9311 = vunpack.c.l.b16 %v9039
    %v9312 = vunpack.c.h.b16 %v9039
    %v9313 = vunpack.c.l.b16 %v9040
    %v9314 = vunpack.c.h.b16 %v9040
    %v9315 = vunpack.c.l.b16 %v9041
    %v9316 = vunpack.c.h.b16 %v9041
    %v9317 = vunpack.c.l.b16 %v9042
    %v9318 = vunpack.c.h.b16 %v9042
    %v9319 = vunpack.c.l.b16 %v9043
    %v9320 = vunpack.c.h.b16 %v9043
    %v9321 = vunpack.c.l.b16 %v9044
    %v9322 = vunpack.c.h.b16 %v9044
    %v9323 = vunpack.c.l.b16 %v9045
    %v9324 = vunpack.c.h.b16 %v9045
    %v9325 = vunpack.c.l.b16 %v9046
    %v9326 = vunpack.c.h.b16 %v9046
    %v9327 = vunpack.c.l.b16 %v9047
    %v9328 = vunpack.c.h.b16 %v9047
    %v9329 = vunpack.c.l.b16 %v9048
    %v9330 = vunpack.c.h.b16 %v9048
    %v9331 = vunpack.c.l.b16 %v9049
    %v9332 = vunpack.c.h.b16 %v9049
    %v9333 = vunpack.c.l.b16 %v9050
    %v9334 = vunpack.c.h.b16 %v9050
    %v9335 = vunpack.c.l.b16 %v9051
    %v9336 = vunpack.c.h.b16 %v9051
    %v9337 = vunpack.c.l.b16 %v9052
    %v9338 = vunpack.c.h.b16 %v9052
    %v9339 = vunpack.c.l.b16 %v9053
    %v9340 = vunpack.c.h.b16 %v9053
    %v9341 = vunpack.c.l.b16 %v9054
    %v9342 = vunpack.c.h.b16 %v9054
    %v9343 = vpack.c.b16 %v9157, %v9151
    %v9344 = vpack.c.b16 %v9158, %v9152
    %v9345 = vpack.c.b16 %v9159, %v9153
    %v9346 = vpack.c.b16 %v9160, %v9154
    %v9347 = vpack.c.b16 %v9161, %v9155
    %v9348 = vpack.c.b16 %v9162, %v9156
    %v9349 = vpack.c.b16 %v9169, %v9163
    %v9350 = vpack.c.b16 %v9170, %v9164
    %v9351 = vpack.c.b16 %v9171, %v9165
    %v9352 = vpack.c.b16 %v9172, %v9166
    %v9353 = vpack.c.b16 %v9173, %v9167
    %v9354 = vpack.c.b16 %v9174, %v9168
    %v9355 = vpack.c.b16 %v9181, %v9175
    %v9356 = vpack.c.b16 %v9182, %v9176
    %v9357 = vpack.c.b16 %v9183, %v9177
    %v9358 = vpack.c.b16 %v9184, %v9178
    %v9359 = vpack.c.b16 %v9185, %v9179
    %v9360 = vpack.c.b16 %v9186, %v9180
    %v9361 = vpack.c.b16 %v9193, %v9187
    %v9362 = vpack.c.b16 %v9194, %v9188
    %v9363 = vpack.c.b16 %v9195, %v9189
    %v9364 = vpack.c.b16 %v9196, %v9190
    %v9365 = vpack.c.b16 %v9197, %v9191
    %v9366 = vpack.c.b16 %v9198, %v9192
    %v9367 = vpack.c.b16 %v9205, %v9199
    %v9368 = vpack.c.b16 %v9206, %v9200
    %v9369 = vpack.c.b16 %v9207, %v9201
    %v9370 = vpack.c.b16 %v9208, %v9202
    %v9371 = vpack.c.b16 %v9209, %v9203
    %v9372 = vpack.c.b16 %v9210, %v9204
    %v9373 = vpack.c.b16 %v9217, %v9211
    %v9374 = vpack.c.b16 %v9218, %v9212
    %v9375 = vpack.c.b16 %v9219, %v9213
    %v9376 = vpack.c.b16 %v9220, %v9214
    %v9377 = vpack.c.b16 %v9221, %v9215
    %v9378 = vpack.c.b16 %v9222, %v9216
    %v9379 = vpack.c.b16 %v9229, %v9223
    %v9380 = vpack.c.b16 %v9230, %v9224
    %v9381 = vpack.c.b16 %v9231, %v9225
    %v9382 = vpack.c.b16 %v9232, %v9226
    %v9383 = vpack.c.b16 %v9233, %v9227
    %v9384 = vpack.c.b16 %v9234, %v9228
    %v9385 = vpack.c.b16 %v9241, %v9235
    %v9386 = vpack.c.b16 %v9242, %v9236
    %v9387 = vpack.c.b16 %v9243, %v9237
    %v9388 = vpack.c.b16 %v9244, %v9238
    %v9389 = vpack.c.b16 %v9245, %v9239
    %v9390 = vpack.c.b16 %v9246, %v9240
    %v9391 = vpack.c.b16 %v9253, %v9247
    %v9392 = vpack.c.b16 %v9254, %v9248
    %v9393 = vpack.c.b16 %v9255, %v9249
    %v9394 = vpack.c.b16 %v9256, %v9250
    %v9395 = vpack.c.b16 %v9257, %v9251
    %v9396 = vpack.c.b16 %v9258, %v9252
    %v9397 = vpack.c.b16 %v9265, %v9259
    %v9398 = vpack.c.b16 %v9266, %v9260
    %v9399 = vpack.c.b16 %v9267, %v9261
    %v9400 = vpack.c.b16 %v9268, %v9262
    %v9401 = vpack.c.b16 %v9269, %v9263
    %v9402 = vpack.c.b16 %v9270, %v9264
    %v9403 = vpack.c.b16 %v9277, %v9271
    %v9404 = vpack.c.b16 %v9278, %v9272
    %v9405 = vpack.c.b16 %v9279, %v9273
    %v9406 = vpack.c.b16 %v9280, %v9274
    %v9407 = vpack.c.b16 %v9281, %v9275
    %v9408 = vpack.c.b16 %v9282, %v9276
    %v9409 = vpack.c.b16 %v9289, %v9283
    %v9410 = vpack.c.b16 %v9290, %v9284
    %v9411 = vpack.c.b16 %v9291, %v9285
    %v9412 = vpack.c.b16 %v9292, %v9286
    %v9413 = vpack.c.b16 %v9293, %v9287
    %v9414 = vpack.c.b16 %v9294, %v9288
    %v9415 = vpack.c.b16 %v9301, %v9295
    %v9416 = vpack.c.b16 %v9302, %v9296
    %v9417 = vpack.c.b16 %v9303, %v9297
    %v9418 = vpack.c.b16 %v9304, %v9298
    %v9419 = vpack.c.b16 %v9305, %v9299
    %v9420 = vpack.c.b16 %v9306, %v9300
    %v9421 = vpack.c.b16 %v9313, %v9307
    %v9422 = vpack.c.b16 %v9314, %v9308
    %v9423 = vpack.c.b16 %v9315, %v9309
    %v9424 = vpack.c.b16 %v9316, %v9310
    %v9425 = vpack.c.b16 %v9317, %v9311
    %v9426 = vpack.c.b16 %v9318, %v9312
    %v9427 = vpack.c.b16 %v9325, %v9319
    %v9428 = vpack.c.b16 %v9326, %v9320
    %v9429 = vpack.c.b16 %v9327, %v9321
    %v9430 = vpack.c.b16 %v9328, %v9322
    %v9431 = vpack.c.b16 %v9329, %v9323
    %v9432 = vpack.c.b16 %v9330, %v9324
    %v9433 = vpack.c.b16 %v9337, %v9331
    %v9434 = vpack.c.b16 %v9338, %v9332
    %v9435 = vpack.c.b16 %v9339, %v9333
    %v9436 = vpack.c.b16 %v9340, %v9334
    %v9437 = vpack.c.b16 %v9341, %v9335
    %v9438 = vpack.c.b16 %v9342, %v9336
    %9535 = vmatprep.subr.bf16.mxu0 %v9344
    %9536 = vmatpush1.bf16.msra.mxu0 %v9343
    %9537 = vmatprep.subr.bf16.mxu0 %v9350
    %9538 = vmatpush1.bf16.msra.mxu0 %v9349
    %9539 = vmatprep.subr.bf16.mxu0 %v9356
    %9540 = vmatpush1.bf16.msra.mxu0 %v9355
    %9541 = vmatprep.subr.bf16.mxu0 %v9362
    %9542 = vmatpush1.bf16.msra.mxu0 %v9361
    %9543 = vmatprep.subr.bf16.mxu0 %v9368
    %9544 = vmatpush1.bf16.msra.mxu0 %v9367
    %9545 = vmatprep.subr.bf16.mxu0 %v9374
    %9546 = vmatpush1.bf16.msra.mxu0 %v9373
    %9547 = vmatprep.subr.bf16.mxu0 %v9380
    %9548 = vmatpush1.bf16.msra.mxu0 %v9379
    %9549 = vmatprep.subr.bf16.mxu0 %v9386
    %9550 = vmatpush1.bf16.msra.mxu0 %v9385
    %9551 = vmatprep.subr.bf16.mxu0 %v9392
    %9552 = vmatpush1.bf16.msra.mxu0 %v9391
    %9553 = vmatprep.subr.bf16.mxu0 %v9398
    %9554 = vmatpush1.bf16.msra.mxu0 %v9397
    %9555 = vmatprep.subr.bf16.mxu0 %v9404
    %9556 = vmatpush1.bf16.msra.mxu0 %v9403
    %9557 = vmatprep.subr.bf16.mxu0 %v9410
    %9558 = vmatpush1.bf16.msra.mxu0 %v9409
    %9559 = vmatprep.subr.bf16.mxu0 %v9416
    %9560 = vmatpush1.bf16.msra.mxu0 %v9415
    %9561 = vmatprep.subr.bf16.mxu0 %v9422
    %9562 = vmatpush1.bf16.msra.mxu0 %v9421
    %9563 = vmatprep.subr.bf16.mxu0 %v9428
    %9564 = vmatpush1.bf16.msra.mxu0 %v9427
    %9565 = vmatprep.subr.bf16.mxu0 %v9434
    %9566 = vmatpush1.bf16.msra.mxu0 %v9433
    %9567 = vmatprep.mubr.bf16.mxu0 %v8958
    %9568 = vmatmul.mubr.bf16.gmra.mrb[0].mxu0 %v8957
    %v9569 = vpop.f32.mrb[0].mxu0
    %v9570 = vadd.f32 0.0, %v9569
    %v9571 = vpop.f32.mrb[0].mxu0
    %v9572 = vadd.f32 0.0, %v9571
    %v9573 = vpop.f32.mrb[0].mxu0
    %v9574 = vpop.f32.mrb[0].mxu0
    %9575 = vdwg.mxu0
    %9576 = vmatprep.subr.bf16.mxu0 %v9346
    %9577 = vmatpush1.bf16.msra.mxu0 %v9345
    %9578 = vmatprep.subr.bf16.mxu0 %v9352
    %9579 = vmatpush1.bf16.msra.mxu0 %v9351
    %9580 = vmatprep.subr.bf16.mxu0 %v9358
    %9581 = vmatpush1.bf16.msra.mxu0 %v9357
    %9582 = vmatprep.subr.bf16.mxu0 %v9364
    %9583 = vmatpush1.bf16.msra.mxu0 %v9363
    %9584 = vmatprep.subr.bf16.mxu0 %v9370
    %9585 = vmatpush1.bf16.msra.mxu0 %v9369
    %9586 = vmatprep.subr.bf16.mxu0 %v9376
    %9587 = vmatpush1.bf16.msra.mxu0 %v9375
    %9588 = vmatprep.subr.bf16.mxu0 %v9382
    %9589 = vmatpush1.bf16.msra.mxu0 %v9381
    %9590 = vmatprep.subr.bf16.mxu0 %v9388
    %9591 = vmatpush1.bf16.msra.mxu0 %v9387
    %9592 = vmatprep.subr.bf16.mxu0 %v9394
    %9593 = vmatpush1.bf16.msra.mxu0 %v9393
    %9594 = vmatprep.subr.bf16.mxu0 %v9400
    %9595 = vmatpush1.bf16.msra.mxu0 %v9399
    %9596 = vmatprep.subr.bf16.mxu0 %v9406
    %9597 = vmatpush1.bf16.msra.mxu0 %v9405
    %9598 = vmatprep.subr.bf16.mxu0 %v9412
    %9599 = vmatpush1.bf16.msra.mxu0 %v9411
    %9600 = vmatprep.subr.bf16.mxu0 %v9418
    %9601 = vmatpush1.bf16.msra.mxu0 %v9417
    %9602 = vmatprep.subr.bf16.mxu0 %v9424
    %9603 = vmatpush1.bf16.msra.mxu0 %v9423
    %9604 = vmatprep.subr.bf16.mxu0 %v9430
    %9605 = vmatpush1.bf16.msra.mxu0 %v9429
    %9606 = vmatprep.subr.bf16.mxu0 %v9436
    %9607 = vmatpush1.bf16.msra.mxu0 %v9435
    %9608 = vmatprep.mubr.bf16.mxu0 %v8958
    %9609 = vmatmul.mubr.bf16.gmra.mrb[0].mxu0 %v8957
    %v9610 = vpop.f32.mrb[0].mxu0
    %v9611 = vadd.f32 0.0, %v9610
    %v9612 = vpop.f32.mrb[0].mxu0
    %v9613 = vadd.f32 0.0, %v9612
    %v9614 = vpop.f32.mrb[0].mxu0
    %v9615 = vpop.f32.mrb[0].mxu0
    %9616 = vdwg.mxu0
    %9617 = vmatprep.subr.bf16.mxu0 %v9348
    %9618 = vmatpush1.bf16.msra.mxu0 %v9347
    %9619 = vmatprep.subr.bf16.mxu0 %v9354
    %9620 = vmatpush1.bf16.msra.mxu0 %v9353
    %9621 = vmatprep.subr.bf16.mxu0 %v9360
    %9622 = vmatpush1.bf16.msra.mxu0 %v9359
    %9623 = vmatprep.subr.bf16.mxu0 %v9366
    %9624 = vmatpush1.bf16.msra.mxu0 %v9365
    %9625 = vmatprep.subr.bf16.mxu0 %v9372
    %9626 = vmatpush1.bf16.msra.mxu0 %v9371
    %9627 = vmatprep.subr.bf16.mxu0 %v9378
    %9628 = vmatpush1.bf16.msra.mxu0 %v9377
    %9629 = vmatprep.subr.bf16.mxu0 %v9384
    %9630 = vmatpush1.bf16.msra.mxu0 %v9383
    %9631 = vmatprep.subr.bf16.mxu0 %v9390
    %9632 = vmatpush1.bf16.msra.mxu0 %v9389
    %9633 = vmatprep.subr.bf16.mxu0 %v9396
    %9634 = vmatpush1.bf16.msra.mxu0 %v9395
    %9635 = vmatprep.subr.bf16.mxu0 %v9402
    %9636 = vmatpush1.bf16.msra.mxu0 %v9401
    %9637 = vmatprep.subr.bf16.mxu0 %v9408
    %9638 = vmatpush1.bf16.msra.mxu0 %v9407
    %9639 = vmatprep.subr.bf16.mxu0 %v9414
    %9640 = vmatpush1.bf16.msra.mxu0 %v9413
    %9641 = vmatprep.subr.bf16.mxu0 %v9420
    %9642 = vmatpush1.bf16.msra.mxu0 %v9419
    %9643 = vmatprep.subr.bf16.mxu0 %v9426
    %9644 = vmatpush1.bf16.msra.mxu0 %v9425
    %9645 = vmatprep.subr.bf16.mxu0 %v9432
    %9646 = vmatpush1.bf16.msra.mxu0 %v9431
    %9647 = vmatprep.subr.bf16.mxu0 %v9438
    %9648 = vmatpush1.bf16.msra.mxu0 %v9437
    %9649 = vmatprep.mubr.bf16.mxu0 %v8958
    %9650 = vmatmul.mubr.bf16.gmra.mrb[0].mxu0 %v8957
    %v9651 = vpop.f32.mrb[0].mxu0
    %v9652 = vadd.f32 0.0, %v9651
    %v9653 = vpop.f32.mrb[0].mxu0
    %v9654 = vadd.f32 0.0, %v9653
    %v9655 = vpop.f32.mrb[0].mxu0
    %v9656 = vpop.f32.mrb[0].mxu0
    %9657 = vdwg.mxu0
    %s9658 = scalar_lea.vmem [#allocation3], 50
    %v9659 = vld [vmem:[%s9658] ss:$8 sm:$0xf]
    %v9660 = vld [vmem:[%s9658] ss:$8 sm:$0x30]
    %v9661 = vor.u32 %v9659, %v9660
    %v9664 = vcombine.low %v9570, %v9572
    %v9666 = vunpack.c.l.s4 1966171168
    %v9667 = vunpack.c.0.s8 %v9666
    %v9668 = vlaneseq
    %v9669 = vshrl.u32 %v9668, 7
    %v9670 = vsub.s32 %v9667, %v9669
    %v9671 = vrot.slane %v9664, %v9670
    %v9673 = vunpack.c.l.s4 1966171168
    %v9674 = vunpack.c.0.s8 %v9673
    %v9675 = vlaneseq
    %v9676 = vshrl.u32 %v9675, 7
    %v9677 = vsub.s32 %v9674, %v9676
    %v9678 = vrot.slane %v9671, %v9677
    %v9680 = vadd.f32 %v9661, %v9678
    %v9681 = vxor.u32 %v9680, 2147483648
    %v9682 = vmul.f32 %v9681, 1.442695
    %v9683 = vpow.pop %v9682
    %v9684 = vadd.f32 %v9683, 1.0
    %v9685 = vrcp.pop %v9684
    %v9686 = vmul.f32 1.0, %v9685
    %v9688 = vrot.slane %v9661, 2
    %v9692 = vcombine.low %v9611, %v9613
    %v9694 = vunpack.c.l.s4 1966171168
    %v9695 = vunpack.c.0.s8 %v9694
    %v9696 = vlaneseq
    %v9697 = vshrl.u32 %v9696, 7
    %v9698 = vsub.s32 %v9695, %v9697
    %v9699 = vrot.slane %v9692, %v9698
    %v9701 = vunpack.c.l.s4 1966171168
    %v9702 = vunpack.c.0.s8 %v9701
    %v9703 = vlaneseq
    %v9704 = vshrl.u32 %v9703, 7
    %v9705 = vsub.s32 %v9702, %v9704
    %v9706 = vrot.slane %v9699, %v9705
    %v9708 = vadd.f32 %v9688, %v9706
    %v9709 = vxor.u32 %v9708, 2147483648
    %v9710 = vmul.f32 %v9709, 1.442695
    %v9711 = vpow.pop %v9710
    %v9712 = vadd.f32 %v9711, 1.0
    %v9713 = vrcp.pop %v9712
    %v9714 = vmul.f32 1.0, %v9713
    %v9715 = vld [vmem:[%s5] sm:$0x3]
    %v9717 = vlaneseq
    %v9718 = vshrl.u32 %v9717, 7
    %v9719 = vsub.s32 0, %v9718
    %v9720 = vrot.slane %v9715, %v9719
    %v9721 = vlaneseq
    %v9722 = vshrl.u32 %v9721, 7
    %v9723 = vsub.s32 1, %v9722
    %v9724 = vrot.slane %v9715, %v9723
    %v9727 = vadd.f32 %v9652, %v9720
    %v9728 = vadd.f32 %v9654, %v9724
    %v9731 = vcombine.low %v9727, %v9728
    %v9733 = vunpack.c.l.s4 1966171168
    %v9734 = vunpack.c.0.s8 %v9733
    %v9735 = vlaneseq
    %v9736 = vshrl.u32 %v9735, 7
    %v9737 = vsub.s32 %v9734, %v9736
    %v9738 = vrot.slane %v9731, %v9737
    %v9740 = vunpack.c.l.s4 1966171168
    %v9741 = vunpack.c.0.s8 %v9740
    %v9742 = vlaneseq
    %v9743 = vshrl.u32 %v9742, 7
    %v9744 = vsub.s32 %v9741, %v9743
    %v9745 = vrot.slane %v9738, %v9744
    %v9747 = vmul.f32 %v9686, %v9745
    %v9748 = vrot.slane %v9661, 4
    %v9750 = vadd.f32 %v9748, %v9747
    %v9751 = vtanh.pop %v9750
    %v9752 = vsub.f32 %v8942, %v9751
    %v9753 = vmul.f32 %v9714, %v9752
    %v9754 = vadd.f32 %v9751, %v9753
    %s9755 = scalar_lea.vmem [#allocation9], 18
    %9756 = vst.msk [vmem:[%s9755] ss:$8 sm:$0x3] %vm1635, %v9754
    %9757 = vst.msk [vmem:[%s9755] ss:$8 sm:$0x0] %vm1635, %v9754
    %v9759 = vlaneseq
    %v9760 = vshrl.u32 %v9759, 7
    %v9761 = vsub.s32 0, %v9760
    %v9762 = vrot.slane %v9754, %v9761
    %v9763 = vlaneseq
    %v9764 = vshrl.u32 %v9763, 7
    %v9765 = vsub.s32 1, %v9764
    %v9766 = vrot.slane %v9754, %v9765
    %v9769 = vpack.c.bf16 %v9762, %v9762
    %v9770 = vpack.c.bf16 %v9766, %v9766
    %v9771 = vld [vmem:[#allocation7] sm:$0xff]
    %v9772 = vld [vmem:[#allocation7 + $0x8] sm:$0xff]
    %v9773 = vld [vmem:[#allocation7 + $0x10] sm:$0xff]
    %v9774 = vld [vmem:[#allocation7 + $0x18] sm:$0xff]
    %v9775 = vld [vmem:[#allocation7 + $0x20] sm:$0xff]
    %v9776 = vld [vmem:[#allocation7 + $0x28] sm:$0xff]
    %v9777 = vld [vmem:[#allocation7 + $0x30] sm:$0xff]
    %v9778 = vld [vmem:[#allocation7 + $0x38] sm:$0xff]
    %v9779 = vld [vmem:[#allocation7 + $0x40] sm:$0xff]
    %v9780 = vld [vmem:[#allocation7 + $0x48] sm:$0xff]
    %v9781 = vld [vmem:[#allocation7 + $0x50] sm:$0xff]
    %v9782 = vld [vmem:[#allocation7 + $0x58] sm:$0xff]
    %v9783 = vld [vmem:[#allocation7 + $0x60] sm:$0xff]
    %v9784 = vld [vmem:[#allocation7 + $0x68] sm:$0xff]
    %v9785 = vld [vmem:[#allocation7 + $0x70] sm:$0xff]
    %v9786 = vld [vmem:[#allocation7 + $0x78] sm:$0xff]
    %v9787 = vld [vmem:[#allocation7 + $0x80] sm:$0xff]
    %v9788 = vld [vmem:[#allocation7 + $0x88] sm:$0xff]
    %v9789 = vld [vmem:[#allocation7 + $0x90] sm:$0xff]
    %v9790 = vld [vmem:[#allocation7 + $0x98] sm:$0xff]
    %v9791 = vld [vmem:[#allocation7 + $0xa0] sm:$0xff]
    %v9792 = vld [vmem:[#allocation7 + $0xa8] sm:$0xff]
    %v9793 = vld [vmem:[#allocation7 + $0xb0] sm:$0xff]
    %v9794 = vld [vmem:[#allocation7 + $0xb8] sm:$0xff]
    %v9795 = vld [vmem:[#allocation7 + $0xc0] sm:$0xff]
    %v9796 = vld [vmem:[#allocation7 + $0xc8] sm:$0xff]
    %v9797 = vld [vmem:[#allocation7 + $0xd0] sm:$0xff]
    %v9798 = vld [vmem:[#allocation7 + $0xd8] sm:$0xff]
    %v9799 = vld [vmem:[#allocation7 + $0xe0] sm:$0xff]
    %v9800 = vld [vmem:[#allocation7 + $0xe8] sm:$0xff]
    %v9801 = vld [vmem:[#allocation7 + $0xf0] sm:$0xff]
    %v9802 = vld [vmem:[#allocation7 + $0xf8] sm:$0xff]
    %v9803 = vld [vmem:[#allocation7 + $0x100] sm:$0xff]
    %v9804 = vld [vmem:[#allocation7 + $0x108] sm:$0xff]
    %v9805 = vld [vmem:[#allocation7 + $0x110] sm:$0xff]
    %v9806 = vld [vmem:[#allocation7 + $0x118] sm:$0xff]
    %v9807 = vld [vmem:[#allocation7 + $0x120] sm:$0xff]
    %v9808 = vld [vmem:[#allocation7 + $0x128] sm:$0xff]
    %v9809 = vld [vmem:[#allocation7 + $0x130] sm:$0xff]
    %v9810 = vld [vmem:[#allocation7 + $0x138] sm:$0xff]
    %v9811 = vld [vmem:[#allocation7 + $0x140] sm:$0xff]
    %v9812 = vld [vmem:[#allocation7 + $0x148] sm:$0xff]
    %v9813 = vld [vmem:[#allocation7 + $0x150] sm:$0xff]
    %v9814 = vld [vmem:[#allocation7 + $0x158] sm:$0xff]
    %v9815 = vld [vmem:[#allocation7 + $0x160] sm:$0xff]
    %v9816 = vld [vmem:[#allocation7 + $0x168] sm:$0xff]
    %v9817 = vld [vmem:[#allocation7 + $0x170] sm:$0xff]
    %v9818 = vld [vmem:[#allocation7 + $0x178] sm:$0xff]
    %v9819 = vld [vmem:[#allocation7 + $0x180] sm:$0xff]
    %v9820 = vld [vmem:[#allocation7 + $0x188] sm:$0xff]
    %v9821 = vld [vmem:[#allocation7 + $0x190] sm:$0xff]
    %v9822 = vld [vmem:[#allocation7 + $0x198] sm:$0xff]
    %v9823 = vld [vmem:[#allocation7 + $0x1a0] sm:$0xff]
    %v9824 = vld [vmem:[#allocation7 + $0x1a8] sm:$0xff]
    %v9825 = vld [vmem:[#allocation7 + $0x1b0] sm:$0xff]
    %v9826 = vld [vmem:[#allocation7 + $0x1b8] sm:$0xff]
    %v9827 = vld [vmem:[#allocation7 + $0x1c0] sm:$0xff]
    %v9828 = vld [vmem:[#allocation7 + $0x1c8] sm:$0xff]
    %v9829 = vld [vmem:[#allocation7 + $0x1d0] sm:$0xff]
    %v9830 = vld [vmem:[#allocation7 + $0x1d8] sm:$0xff]
    %v9831 = vld [vmem:[#allocation7 + $0x1e0] sm:$0xff]
    %v9832 = vld [vmem:[#allocation7 + $0x1e8] sm:$0xff]
    %v9833 = vld [vmem:[#allocation7 + $0x1f0] sm:$0xff]
    %v9834 = vld [vmem:[#allocation7 + $0x1f8] sm:$0xff]
    %v9835 = vld [vmem:[#allocation7 + $0x200] sm:$0xff]
    %v9836 = vld [vmem:[#allocation7 + $0x208] sm:$0xff]
    %v9837 = vld [vmem:[#allocation7 + $0x210] sm:$0xff]
    %v9838 = vld [vmem:[#allocation7 + $0x218] sm:$0xff]
    %v9839 = vld [vmem:[#allocation7 + $0x220] sm:$0xff]
    %v9840 = vld [vmem:[#allocation7 + $0x228] sm:$0xff]
    %v9841 = vld [vmem:[#allocation7 + $0x230] sm:$0xff]
    %v9842 = vld [vmem:[#allocation7 + $0x238] sm:$0xff]
    %v9843 = vld [vmem:[#allocation7 + $0x240] sm:$0xff]
    %v9844 = vld [vmem:[#allocation7 + $0x248] sm:$0xff]
    %v9845 = vld [vmem:[#allocation7 + $0x250] sm:$0xff]
    %v9846 = vld [vmem:[#allocation7 + $0x258] sm:$0xff]
    %v9847 = vld [vmem:[#allocation7 + $0x260] sm:$0xff]
    %v9848 = vld [vmem:[#allocation7 + $0x268] sm:$0xff]
    %v9849 = vld [vmem:[#allocation7 + $0x270] sm:$0xff]
    %v9850 = vld [vmem:[#allocation7 + $0x278] sm:$0xff]
    %v9851 = vld [vmem:[#allocation7 + $0x280] sm:$0xff]
    %v9852 = vld [vmem:[#allocation7 + $0x288] sm:$0xff]
    %v9853 = vld [vmem:[#allocation7 + $0x290] sm:$0xff]
    %v9854 = vld [vmem:[#allocation7 + $0x298] sm:$0xff]
    %v9855 = vld [vmem:[#allocation7 + $0x2a0] sm:$0xff]
    %v9856 = vld [vmem:[#allocation7 + $0x2a8] sm:$0xff]
    %v9857 = vld [vmem:[#allocation7 + $0x2b0] sm:$0xff]
    %v9858 = vld [vmem:[#allocation7 + $0x2b8] sm:$0xff]
    %v9859 = vld [vmem:[#allocation7 + $0x2c0] sm:$0xff]
    %v9860 = vld [vmem:[#allocation7 + $0x2c8] sm:$0xff]
    %v9861 = vld [vmem:[#allocation7 + $0x2d0] sm:$0xff]
    %v9862 = vld [vmem:[#allocation7 + $0x2d8] sm:$0xff]
    %v9863 = vld [vmem:[#allocation7 + $0x2e0] sm:$0xff]
    %v9864 = vld [vmem:[#allocation7 + $0x2e8] sm:$0xff]
    %v9865 = vld [vmem:[#allocation7 + $0x2f0] sm:$0xff]
    %v9866 = vld [vmem:[#allocation7 + $0x2f8] sm:$0xff]
    %v9963 = vunpack.c.l.b16 %v9771
    %v9964 = vunpack.c.h.b16 %v9771
    %v9965 = vunpack.c.l.b16 %v9772
    %v9966 = vunpack.c.h.b16 %v9772
    %v9967 = vunpack.c.l.b16 %v9773
    %v9968 = vunpack.c.h.b16 %v9773
    %v9969 = vunpack.c.l.b16 %v9774
    %v9970 = vunpack.c.h.b16 %v9774
    %v9971 = vunpack.c.l.b16 %v9775
    %v9972 = vunpack.c.h.b16 %v9775
    %v9973 = vunpack.c.l.b16 %v9776
    %v9974 = vunpack.c.h.b16 %v9776
    %v9975 = vunpack.c.l.b16 %v9777
    %v9976 = vunpack.c.h.b16 %v9777
    %v9977 = vunpack.c.l.b16 %v9778
    %v9978 = vunpack.c.h.b16 %v9778
    %v9979 = vunpack.c.l.b16 %v9779
    %v9980 = vunpack.c.h.b16 %v9779
    %v9981 = vunpack.c.l.b16 %v9780
    %v9982 = vunpack.c.h.b16 %v9780
    %v9983 = vunpack.c.l.b16 %v9781
    %v9984 = vunpack.c.h.b16 %v9781
    %v9985 = vunpack.c.l.b16 %v9782
    %v9986 = vunpack.c.h.b16 %v9782
    %v9987 = vunpack.c.l.b16 %v9783
    %v9988 = vunpack.c.h.b16 %v9783
    %v9989 = vunpack.c.l.b16 %v9784
    %v9990 = vunpack.c.h.b16 %v9784
    %v9991 = vunpack.c.l.b16 %v9785
    %v9992 = vunpack.c.h.b16 %v9785
    %v9993 = vunpack.c.l.b16 %v9786
    %v9994 = vunpack.c.h.b16 %v9786
    %v9995 = vunpack.c.l.b16 %v9787
    %v9996 = vunpack.c.h.b16 %v9787
    %v9997 = vunpack.c.l.b16 %v9788
    %v9998 = vunpack.c.h.b16 %v9788
    %v9999 = vunpack.c.l.b16 %v9789
    %v10000 = vunpack.c.h.b16 %v9789
    %v10001 = vunpack.c.l.b16 %v9790
    %v10002 = vunpack.c.h.b16 %v9790
    %v10003 = vunpack.c.l.b16 %v9791
    %v10004 = vunpack.c.h.b16 %v9791
    %v10005 = vunpack.c.l.b16 %v9792
    %v10006 = vunpack.c.h.b16 %v9792
    %v10007 = vunpack.c.l.b16 %v9793
    %v10008 = vunpack.c.h.b16 %v9793
    %v10009 = vunpack.c.l.b16 %v9794
    %v10010 = vunpack.c.h.b16 %v9794
    %v10011 = vunpack.c.l.b16 %v9795
    %v10012 = vunpack.c.h.b16 %v9795
    %v10013 = vunpack.c.l.b16 %v9796
    %v10014 = vunpack.c.h.b16 %v9796
    %v10015 = vunpack.c.l.b16 %v9797
    %v10016 = vunpack.c.h.b16 %v9797
    %v10017 = vunpack.c.l.b16 %v9798
    %v10018 = vunpack.c.h.b16 %v9798
    %v10019 = vunpack.c.l.b16 %v9799
    %v10020 = vunpack.c.h.b16 %v9799
    %v10021 = vunpack.c.l.b16 %v9800
    %v10022 = vunpack.c.h.b16 %v9800
    %v10023 = vunpack.c.l.b16 %v9801
    %v10024 = vunpack.c.h.b16 %v9801
    %v10025 = vunpack.c.l.b16 %v9802
    %v10026 = vunpack.c.h.b16 %v9802
    %v10027 = vunpack.c.l.b16 %v9803
    %v10028 = vunpack.c.h.b16 %v9803
    %v10029 = vunpack.c.l.b16 %v9804
    %v10030 = vunpack.c.h.b16 %v9804
    %v10031 = vunpack.c.l.b16 %v9805
    %v10032 = vunpack.c.h.b16 %v9805
    %v10033 = vunpack.c.l.b16 %v9806
    %v10034 = vunpack.c.h.b16 %v9806
    %v10035 = vunpack.c.l.b16 %v9807
    %v10036 = vunpack.c.h.b16 %v9807
    %v10037 = vunpack.c.l.b16 %v9808
    %v10038 = vunpack.c.h.b16 %v9808
    %v10039 = vunpack.c.l.b16 %v9809
    %v10040 = vunpack.c.h.b16 %v9809
    %v10041 = vunpack.c.l.b16 %v9810
    %v10042 = vunpack.c.h.b16 %v9810
    %v10043 = vunpack.c.l.b16 %v9811
    %v10044 = vunpack.c.h.b16 %v9811
    %v10045 = vunpack.c.l.b16 %v9812
    %v10046 = vunpack.c.h.b16 %v9812
    %v10047 = vunpack.c.l.b16 %v9813
    %v10048 = vunpack.c.h.b16 %v9813
    %v10049 = vunpack.c.l.b16 %v9814
    %v10050 = vunpack.c.h.b16 %v9814
    %v10051 = vunpack.c.l.b16 %v9815
    %v10052 = vunpack.c.h.b16 %v9815
    %v10053 = vunpack.c.l.b16 %v9816
    %v10054 = vunpack.c.h.b16 %v9816
    %v10055 = vunpack.c.l.b16 %v9817
    %v10056 = vunpack.c.h.b16 %v9817
    %v10057 = vunpack.c.l.b16 %v9818
    %v10058 = vunpack.c.h.b16 %v9818
    %v10059 = vunpack.c.l.b16 %v9819
    %v10060 = vunpack.c.h.b16 %v9819
    %v10061 = vunpack.c.l.b16 %v9820
    %v10062 = vunpack.c.h.b16 %v9820
    %v10063 = vunpack.c.l.b16 %v9821
    %v10064 = vunpack.c.h.b16 %v9821
    %v10065 = vunpack.c.l.b16 %v9822
    %v10066 = vunpack.c.h.b16 %v9822
    %v10067 = vunpack.c.l.b16 %v9823
    %v10068 = vunpack.c.h.b16 %v9823
    %v10069 = vunpack.c.l.b16 %v9824
    %v10070 = vunpack.c.h.b16 %v9824
    %v10071 = vunpack.c.l.b16 %v9825
    %v10072 = vunpack.c.h.b16 %v9825
    %v10073 = vunpack.c.l.b16 %v9826
    %v10074 = vunpack.c.h.b16 %v9826
    %v10075 = vunpack.c.l.b16 %v9827
    %v10076 = vunpack.c.h.b16 %v9827
    %v10077 = vunpack.c.l.b16 %v9828
    %v10078 = vunpack.c.h.b16 %v9828
    %v10079 = vunpack.c.l.b16 %v9829
    %v10080 = vunpack.c.h.b16 %v9829
    %v10081 = vunpack.c.l.b16 %v9830
    %v10082 = vunpack.c.h.b16 %v9830
    %v10083 = vunpack.c.l.b16 %v9831
    %v10084 = vunpack.c.h.b16 %v9831
    %v10085 = vunpack.c.l.b16 %v9832
    %v10086 = vunpack.c.h.b16 %v9832
    %v10087 = vunpack.c.l.b16 %v9833
    %v10088 = vunpack.c.h.b16 %v9833
    %v10089 = vunpack.c.l.b16 %v9834
    %v10090 = vunpack.c.h.b16 %v9834
    %v10091 = vunpack.c.l.b16 %v9835
    %v10092 = vunpack.c.h.b16 %v9835
    %v10093 = vunpack.c.l.b16 %v9836
    %v10094 = vunpack.c.h.b16 %v9836
    %v10095 = vunpack.c.l.b16 %v9837
    %v10096 = vunpack.c.h.b16 %v9837
    %v10097 = vunpack.c.l.b16 %v9838
    %v10098 = vunpack.c.h.b16 %v9838
    %v10099 = vunpack.c.l.b16 %v9839
    %v10100 = vunpack.c.h.b16 %v9839
    %v10101 = vunpack.c.l.b16 %v9840
    %v10102 = vunpack.c.h.b16 %v9840
    %v10103 = vunpack.c.l.b16 %v9841
    %v10104 = vunpack.c.h.b16 %v9841
    %v10105 = vunpack.c.l.b16 %v9842
    %v10106 = vunpack.c.h.b16 %v9842
    %v10107 = vunpack.c.l.b16 %v9843
    %v10108 = vunpack.c.h.b16 %v9843
    %v10109 = vunpack.c.l.b16 %v9844
    %v10110 = vunpack.c.h.b16 %v9844
    %v10111 = vunpack.c.l.b16 %v9845
    %v10112 = vunpack.c.h.b16 %v9845
    %v10113 = vunpack.c.l.b16 %v9846
    %v10114 = vunpack.c.h.b16 %v9846
    %v10115 = vunpack.c.l.b16 %v9847
    %v10116 = vunpack.c.h.b16 %v9847
    %v10117 = vunpack.c.l.b16 %v9848
    %v10118 = vunpack.c.h.b16 %v9848
    %v10119 = vunpack.c.l.b16 %v9849
    %v10120 = vunpack.c.h.b16 %v9849
    %v10121 = vunpack.c.l.b16 %v9850
    %v10122 = vunpack.c.h.b16 %v9850
    %v10123 = vunpack.c.l.b16 %v9851
    %v10124 = vunpack.c.h.b16 %v9851
    %v10125 = vunpack.c.l.b16 %v9852
    %v10126 = vunpack.c.h.b16 %v9852
    %v10127 = vunpack.c.l.b16 %v9853
    %v10128 = vunpack.c.h.b16 %v9853
    %v10129 = vunpack.c.l.b16 %v9854
    %v10130 = vunpack.c.h.b16 %v9854
    %v10131 = vunpack.c.l.b16 %v9855
    %v10132 = vunpack.c.h.b16 %v9855
    %v10133 = vunpack.c.l.b16 %v9856
    %v10134 = vunpack.c.h.b16 %v9856
    %v10135 = vunpack.c.l.b16 %v9857
    %v10136 = vunpack.c.h.b16 %v9857
    %v10137 = vunpack.c.l.b16 %v9858
    %v10138 = vunpack.c.h.b16 %v9858
    %v10139 = vunpack.c.l.b16 %v9859
    %v10140 = vunpack.c.h.b16 %v9859
    %v10141 = vunpack.c.l.b16 %v9860
    %v10142 = vunpack.c.h.b16 %v9860
    %v10143 = vunpack.c.l.b16 %v9861
    %v10144 = vunpack.c.h.b16 %v9861
    %v10145 = vunpack.c.l.b16 %v9862
    %v10146 = vunpack.c.h.b16 %v9862
    %v10147 = vunpack.c.l.b16 %v9863
    %v10148 = vunpack.c.h.b16 %v9863
    %v10149 = vunpack.c.l.b16 %v9864
    %v10150 = vunpack.c.h.b16 %v9864
    %v10151 = vunpack.c.l.b16 %v9865
    %v10152 = vunpack.c.h.b16 %v9865
    %v10153 = vunpack.c.l.b16 %v9866
    %v10154 = vunpack.c.h.b16 %v9866
    %v10155 = vpack.c.b16 %v9969, %v9963
    %v10156 = vpack.c.b16 %v9970, %v9964
    %v10157 = vpack.c.b16 %v9971, %v9965
    %v10158 = vpack.c.b16 %v9972, %v9966
    %v10159 = vpack.c.b16 %v9973, %v9967
    %v10160 = vpack.c.b16 %v9974, %v9968
    %v10161 = vpack.c.b16 %v9981, %v9975
    %v10162 = vpack.c.b16 %v9982, %v9976
    %v10163 = vpack.c.b16 %v9983, %v9977
    %v10164 = vpack.c.b16 %v9984, %v9978
    %v10165 = vpack.c.b16 %v9985, %v9979
    %v10166 = vpack.c.b16 %v9986, %v9980
    %v10167 = vpack.c.b16 %v9993, %v9987
    %v10168 = vpack.c.b16 %v9994, %v9988
    %v10169 = vpack.c.b16 %v9995, %v9989
    %v10170 = vpack.c.b16 %v9996, %v9990
    %v10171 = vpack.c.b16 %v9997, %v9991
    %v10172 = vpack.c.b16 %v9998, %v9992
    %v10173 = vpack.c.b16 %v10005, %v9999
    %v10174 = vpack.c.b16 %v10006, %v10000
    %v10175 = vpack.c.b16 %v10007, %v10001
    %v10176 = vpack.c.b16 %v10008, %v10002
    %v10177 = vpack.c.b16 %v10009, %v10003
    %v10178 = vpack.c.b16 %v10010, %v10004
    %v10179 = vpack.c.b16 %v10017, %v10011
    %v10180 = vpack.c.b16 %v10018, %v10012
    %v10181 = vpack.c.b16 %v10019, %v10013
    %v10182 = vpack.c.b16 %v10020, %v10014
    %v10183 = vpack.c.b16 %v10021, %v10015
    %v10184 = vpack.c.b16 %v10022, %v10016
    %v10185 = vpack.c.b16 %v10029, %v10023
    %v10186 = vpack.c.b16 %v10030, %v10024
    %v10187 = vpack.c.b16 %v10031, %v10025
    %v10188 = vpack.c.b16 %v10032, %v10026
    %v10189 = vpack.c.b16 %v10033, %v10027
    %v10190 = vpack.c.b16 %v10034, %v10028
    %v10191 = vpack.c.b16 %v10041, %v10035
    %v10192 = vpack.c.b16 %v10042, %v10036
    %v10193 = vpack.c.b16 %v10043, %v10037
    %v10194 = vpack.c.b16 %v10044, %v10038
    %v10195 = vpack.c.b16 %v10045, %v10039
    %v10196 = vpack.c.b16 %v10046, %v10040
    %v10197 = vpack.c.b16 %v10053, %v10047
    %v10198 = vpack.c.b16 %v10054, %v10048
    %v10199 = vpack.c.b16 %v10055, %v10049
    %v10200 = vpack.c.b16 %v10056, %v10050
    %v10201 = vpack.c.b16 %v10057, %v10051
    %v10202 = vpack.c.b16 %v10058, %v10052
    %v10203 = vpack.c.b16 %v10065, %v10059
    %v10204 = vpack.c.b16 %v10066, %v10060
    %v10205 = vpack.c.b16 %v10067, %v10061
    %v10206 = vpack.c.b16 %v10068, %v10062
    %v10207 = vpack.c.b16 %v10069, %v10063
    %v10208 = vpack.c.b16 %v10070, %v10064
    %v10209 = vpack.c.b16 %v10077, %v10071
    %v10210 = vpack.c.b16 %v10078, %v10072
    %v10211 = vpack.c.b16 %v10079, %v10073
    %v10212 = vpack.c.b16 %v10080, %v10074
    %v10213 = vpack.c.b16 %v10081, %v10075
    %v10214 = vpack.c.b16 %v10082, %v10076
    %v10215 = vpack.c.b16 %v10089, %v10083
    %v10216 = vpack.c.b16 %v10090, %v10084
    %v10217 = vpack.c.b16 %v10091, %v10085
    %v10218 = vpack.c.b16 %v10092, %v10086
    %v10219 = vpack.c.b16 %v10093, %v10087
    %v10220 = vpack.c.b16 %v10094, %v10088
    %v10221 = vpack.c.b16 %v10101, %v10095
    %v10222 = vpack.c.b16 %v10102, %v10096
    %v10223 = vpack.c.b16 %v10103, %v10097
    %v10224 = vpack.c.b16 %v10104, %v10098
    %v10225 = vpack.c.b16 %v10105, %v10099
    %v10226 = vpack.c.b16 %v10106, %v10100
    %v10227 = vpack.c.b16 %v10113, %v10107
    %v10228 = vpack.c.b16 %v10114, %v10108
    %v10229 = vpack.c.b16 %v10115, %v10109
    %v10230 = vpack.c.b16 %v10116, %v10110
    %v10231 = vpack.c.b16 %v10117, %v10111
    %v10232 = vpack.c.b16 %v10118, %v10112
    %v10233 = vpack.c.b16 %v10125, %v10119
    %v10234 = vpack.c.b16 %v10126, %v10120
    %v10235 = vpack.c.b16 %v10127, %v10121
    %v10236 = vpack.c.b16 %v10128, %v10122
    %v10237 = vpack.c.b16 %v10129, %v10123
    %v10238 = vpack.c.b16 %v10130, %v10124
    %v10239 = vpack.c.b16 %v10137, %v10131
    %v10240 = vpack.c.b16 %v10138, %v10132
    %v10241 = vpack.c.b16 %v10139, %v10133
    %v10242 = vpack.c.b16 %v10140, %v10134
    %v10243 = vpack.c.b16 %v10141, %v10135
    %v10244 = vpack.c.b16 %v10142, %v10136
    %v10245 = vpack.c.b16 %v10149, %v10143
    %v10246 = vpack.c.b16 %v10150, %v10144
    %v10247 = vpack.c.b16 %v10151, %v10145
    %v10248 = vpack.c.b16 %v10152, %v10146
    %v10249 = vpack.c.b16 %v10153, %v10147
    %v10250 = vpack.c.b16 %v10154, %v10148
    %10347 = vmatprep.subr.bf16.mxu0 %v10156
    %10348 = vmatpush1.bf16.msra.mxu0 %v10155
    %10349 = vmatprep.subr.bf16.mxu0 %v10162
    %10350 = vmatpush1.bf16.msra.mxu0 %v10161
    %10351 = vmatprep.subr.bf16.mxu0 %v10168
    %10352 = vmatpush1.bf16.msra.mxu0 %v10167
    %10353 = vmatprep.subr.bf16.mxu0 %v10174
    %10354 = vmatpush1.bf16.msra.mxu0 %v10173
    %10355 = vmatprep.subr.bf16.mxu0 %v10180
    %10356 = vmatpush1.bf16.msra.mxu0 %v10179
    %10357 = vmatprep.subr.bf16.mxu0 %v10186
    %10358 = vmatpush1.bf16.msra.mxu0 %v10185
    %10359 = vmatprep.subr.bf16.mxu0 %v10192
    %10360 = vmatpush1.bf16.msra.mxu0 %v10191
    %10361 = vmatprep.subr.bf16.mxu0 %v10198
    %10362 = vmatpush1.bf16.msra.mxu0 %v10197
    %10363 = vmatprep.subr.bf16.mxu0 %v10204
    %10364 = vmatpush1.bf16.msra.mxu0 %v10203
    %10365 = vmatprep.subr.bf16.mxu0 %v10210
    %10366 = vmatpush1.bf16.msra.mxu0 %v10209
    %10367 = vmatprep.subr.bf16.mxu0 %v10216
    %10368 = vmatpush1.bf16.msra.mxu0 %v10215
    %10369 = vmatprep.subr.bf16.mxu0 %v10222
    %10370 = vmatpush1.bf16.msra.mxu0 %v10221
    %10371 = vmatprep.subr.bf16.mxu0 %v10228
    %10372 = vmatpush1.bf16.msra.mxu0 %v10227
    %10373 = vmatprep.subr.bf16.mxu0 %v10234
    %10374 = vmatpush1.bf16.msra.mxu0 %v10233
    %10375 = vmatprep.subr.bf16.mxu0 %v10240
    %10376 = vmatpush1.bf16.msra.mxu0 %v10239
    %10377 = vmatprep.subr.bf16.mxu0 %v10246
    %10378 = vmatpush1.bf16.msra.mxu0 %v10245
    %10379 = vmatprep.mubr.bf16.mxu0 %v9770
    %10380 = vmatmul.mubr.bf16.gmra.mrb[0].mxu0 %v9769
    %v10381 = vpop.f32.mrb[0].mxu0
    %v10382 = vadd.f32 0.0, %v10381
    %v10383 = vpop.f32.mrb[0].mxu0
    %v10384 = vadd.f32 0.0, %v10383
    %v10385 = vpop.f32.mrb[0].mxu0
    %v10386 = vpop.f32.mrb[0].mxu0
    %10387 = vdwg.mxu0
    %10388 = vmatprep.subr.bf16.mxu0 %v10158
    %10389 = vmatpush1.bf16.msra.mxu0 %v10157
    %10390 = vmatprep.subr.bf16.mxu0 %v10164
    %10391 = vmatpush1.bf16.msra.mxu0 %v10163
    %10392 = vmatprep.subr.bf16.mxu0 %v10170
    %10393 = vmatpush1.bf16.msra.mxu0 %v10169
    %10394 = vmatprep.subr.bf16.mxu0 %v10176
    %10395 = vmatpush1.bf16.msra.mxu0 %v10175
    %10396 = vmatprep.subr.bf16.mxu0 %v10182
    %10397 = vmatpush1.bf16.msra.mxu0 %v10181
    %10398 = vmatprep.subr.bf16.mxu0 %v10188
    %10399 = vmatpush1.bf16.msra.mxu0 %v10187
    %10400 = vmatprep.subr.bf16.mxu0 %v10194
    %10401 = vmatpush1.bf16.msra.mxu0 %v10193
    %10402 = vmatprep.subr.bf16.mxu0 %v10200
    %10403 = vmatpush1.bf16.msra.mxu0 %v10199
    %10404 = vmatprep.subr.bf16.mxu0 %v10206
    %10405 = vmatpush1.bf16.msra.mxu0 %v10205
    %10406 = vmatprep.subr.bf16.mxu0 %v10212
    %10407 = vmatpush1.bf16.msra.mxu0 %v10211
    %10408 = vmatprep.subr.bf16.mxu0 %v10218
    %10409 = vmatpush1.bf16.msra.mxu0 %v10217
    %10410 = vmatprep.subr.bf16.mxu0 %v10224
    %10411 = vmatpush1.bf16.msra.mxu0 %v10223
    %10412 = vmatprep.subr.bf16.mxu0 %v10230
    %10413 = vmatpush1.bf16.msra.mxu0 %v10229
    %10414 = vmatprep.subr.bf16.mxu0 %v10236
    %10415 = vmatpush1.bf16.msra.mxu0 %v10235
    %10416 = vmatprep.subr.bf16.mxu0 %v10242
    %10417 = vmatpush1.bf16.msra.mxu0 %v10241
    %10418 = vmatprep.subr.bf16.mxu0 %v10248
    %10419 = vmatpush1.bf16.msra.mxu0 %v10247
    %10420 = vmatprep.mubr.bf16.mxu0 %v9770
    %10421 = vmatmul.mubr.bf16.gmra.mrb[0].mxu0 %v9769
    %v10422 = vpop.f32.mrb[0].mxu0
    %v10423 = vadd.f32 0.0, %v10422
    %v10424 = vpop.f32.mrb[0].mxu0
    %v10425 = vadd.f32 0.0, %v10424
    %v10426 = vpop.f32.mrb[0].mxu0
    %v10427 = vpop.f32.mrb[0].mxu0
    %10428 = vdwg.mxu0
    %10429 = vmatprep.subr.bf16.mxu0 %v10160
    %10430 = vmatpush1.bf16.msra.mxu0 %v10159
    %10431 = vmatprep.subr.bf16.mxu0 %v10166
    %10432 = vmatpush1.bf16.msra.mxu0 %v10165
    %10433 = vmatprep.subr.bf16.mxu0 %v10172
    %10434 = vmatpush1.bf16.msra.mxu0 %v10171
    %10435 = vmatprep.subr.bf16.mxu0 %v10178
    %10436 = vmatpush1.bf16.msra.mxu0 %v10177
    %10437 = vmatprep.subr.bf16.mxu0 %v10184
    %10438 = vmatpush1.bf16.msra.mxu0 %v10183
    %10439 = vmatprep.subr.bf16.mxu0 %v10190
    %10440 = vmatpush1.bf16.msra.mxu0 %v10189
    %10441 = vmatprep.subr.bf16.mxu0 %v10196
    %10442 = vmatpush1.bf16.msra.mxu0 %v10195
    %10443 = vmatprep.subr.bf16.mxu0 %v10202
    %10444 = vmatpush1.bf16.msra.mxu0 %v10201
    %10445 = vmatprep.subr.bf16.mxu0 %v10208
    %10446 = vmatpush1.bf16.msra.mxu0 %v10207
    %10447 = vmatprep.subr.bf16.mxu0 %v10214
    %10448 = vmatpush1.bf16.msra.mxu0 %v10213
    %10449 = vmatprep.subr.bf16.mxu0 %v10220
    %10450 = vmatpush1.bf16.msra.mxu0 %v10219
    %10451 = vmatprep.subr.bf16.mxu0 %v10226
    %10452 = vmatpush1.bf16.msra.mxu0 %v10225
    %10453 = vmatprep.subr.bf16.mxu0 %v10232
    %10454 = vmatpush1.bf16.msra.mxu0 %v10231
    %10455 = vmatprep.subr.bf16.mxu0 %v10238
    %10456 = vmatpush1.bf16.msra.mxu0 %v10237
    %10457 = vmatprep.subr.bf16.mxu0 %v10244
    %10458 = vmatpush1.bf16.msra.mxu0 %v10243
    %10459 = vmatprep.subr.bf16.mxu0 %v10250
    %10460 = vmatpush1.bf16.msra.mxu0 %v10249
    %10461 = vmatprep.mubr.bf16.mxu0 %v9770
    %10462 = vmatmul.mubr.bf16.gmra.mrb[0].mxu0 %v9769
    %v10463 = vpop.f32.mrb[0].mxu0
    %v10464 = vadd.f32 0.0, %v10463
    %v10465 = vpop.f32.mrb[0].mxu0
    %v10466 = vadd.f32 0.0, %v10465
    %v10467 = vpop.f32.mrb[0].mxu0
    %v10468 = vpop.f32.mrb[0].mxu0
    %10469 = vdwg.mxu0
    %s10470 = scalar_lea.vmem [#allocation3], 51
    %v10471 = vld [vmem:[%s10470] ss:$8 sm:$0xf]
    %v10472 = vld [vmem:[%s10470] ss:$8 sm:$0x30]
    %v10473 = vor.u32 %v10471, %v10472
    %v10476 = vcombine.low %v10382, %v10384
    %v10478 = vunpack.c.l.s4 1966171168
    %v10479 = vunpack.c.0.s8 %v10478
    %v10480 = vlaneseq
    %v10481 = vshrl.u32 %v10480, 7
    %v10482 = vsub.s32 %v10479, %v10481
    %v10483 = vrot.slane %v10476, %v10482
    %v10485 = vunpack.c.l.s4 1966171168
    %v10486 = vunpack.c.0.s8 %v10485
    %v10487 = vlaneseq
    %v10488 = vshrl.u32 %v10487, 7
    %v10489 = vsub.s32 %v10486, %v10488
    %v10490 = vrot.slane %v10483, %v10489
    %v10492 = vadd.f32 %v10473, %v10490
    %v10493 = vxor.u32 %v10492, 2147483648
    %v10494 = vmul.f32 %v10493, 1.442695
    %v10495 = vpow.pop %v10494
    %v10496 = vadd.f32 %v10495, 1.0
    %v10497 = vrcp.pop %v10496
    %v10498 = vmul.f32 1.0, %v10497
    %v10500 = vrot.slane %v10473, 2
    %v10504 = vcombine.low %v10423, %v10425
    %v10506 = vunpack.c.l.s4 1966171168
    %v10507 = vunpack.c.0.s8 %v10506
    %v10508 = vlaneseq
    %v10509 = vshrl.u32 %v10508, 7
    %v10510 = vsub.s32 %v10507, %v10509
    %v10511 = vrot.slane %v10504, %v10510
    %v10513 = vunpack.c.l.s4 1966171168
    %v10514 = vunpack.c.0.s8 %v10513
    %v10515 = vlaneseq
    %v10516 = vshrl.u32 %v10515, 7
    %v10517 = vsub.s32 %v10514, %v10516
    %v10518 = vrot.slane %v10511, %v10517
    %v10520 = vadd.f32 %v10500, %v10518
    %v10521 = vxor.u32 %v10520, 2147483648
    %v10522 = vmul.f32 %v10521, 1.442695
    %v10523 = vpow.pop %v10522
    %v10524 = vadd.f32 %v10523, 1.0
    %v10525 = vrcp.pop %v10524
    %v10526 = vmul.f32 1.0, %v10525
    %v10527 = vld [vmem:[%s5] sm:$0x3]
    %v10529 = vlaneseq
    %v10530 = vshrl.u32 %v10529, 7
    %v10531 = vsub.s32 0, %v10530
    %v10532 = vrot.slane %v10527, %v10531
    %v10533 = vlaneseq
    %v10534 = vshrl.u32 %v10533, 7
    %v10535 = vsub.s32 1, %v10534
    %v10536 = vrot.slane %v10527, %v10535
    %v10539 = vadd.f32 %v10464, %v10532
    %v10540 = vadd.f32 %v10466, %v10536
    %v10543 = vcombine.low %v10539, %v10540
    %v10545 = vunpack.c.l.s4 1966171168
    %v10546 = vunpack.c.0.s8 %v10545
    %v10547 = vlaneseq
    %v10548 = vshrl.u32 %v10547, 7
    %v10549 = vsub.s32 %v10546, %v10548
    %v10550 = vrot.slane %v10543, %v10549
    %v10552 = vunpack.c.l.s4 1966171168
    %v10553 = vunpack.c.0.s8 %v10552
    %v10554 = vlaneseq
    %v10555 = vshrl.u32 %v10554, 7
    %v10556 = vsub.s32 %v10553, %v10555
    %v10557 = vrot.slane %v10550, %v10556
    %v10559 = vmul.f32 %v10498, %v10557
    %v10560 = vrot.slane %v10473, 4
    %v10562 = vadd.f32 %v10560, %v10559
    %v10563 = vtanh.pop %v10562
    %v10564 = vsub.f32 %v9754, %v10563
    %v10565 = vmul.f32 %v10526, %v10564
    %v10566 = vadd.f32 %v10563, %v10565
    %s10567 = scalar_lea.vmem [#allocation9], 19
    %10568 = vst.msk [vmem:[%s10567] ss:$8 sm:$0x3] %vm1635, %v10566
    %10569 = vst.msk [vmem:[%s10567] ss:$8 sm:$0x0] %vm1635, %v10566
    %v10571 = vlaneseq
    %v10572 = vshrl.u32 %v10571, 7
    %v10573 = vsub.s32 0, %v10572
    %v10574 = vrot.slane %v10566, %v10573
    %v10575 = vlaneseq
    %v10576 = vshrl.u32 %v10575, 7
    %v10577 = vsub.s32 1, %v10576
    %v10578 = vrot.slane %v10566, %v10577
    %v10581 = vpack.c.bf16 %v10574, %v10574
    %v10582 = vpack.c.bf16 %v10578, %v10578
    %v10583 = vld [vmem:[#allocation7] sm:$0xff]
    %v10584 = vld [vmem:[#allocation7 + $0x8] sm:$0xff]
    %v10585 = vld [vmem:[#allocation7 + $0x10] sm:$0xff]
    %v10586 = vld [vmem:[#allocation7 + $0x18] sm:$0xff]
    %v10587 = vld [vmem:[#allocation7 + $0x20] sm:$0xff]
    %v10588 = vld [vmem:[#allocation7 + $0x28] sm:$0xff]
    %v10589 = vld [vmem:[#allocation7 + $0x30] sm:$0xff]
    %v10590 = vld [vmem:[#allocation7 + $0x38] sm:$0xff]
    %v10591 = vld [vmem:[#allocation7 + $0x40] sm:$0xff]
    %v10592 = vld [vmem:[#allocation7 + $0x48] sm:$0xff]
    %v10593 = vld [vmem:[#allocation7 + $0x50] sm:$0xff]
    %v10594 = vld [vmem:[#allocation7 + $0x58] sm:$0xff]
    %v10595 = vld [vmem:[#allocation7 + $0x60] sm:$0xff]
    %v10596 = vld [vmem:[#allocation7 + $0x68] sm:$0xff]
    %v10597 = vld [vmem:[#allocation7 + $0x70] sm:$0xff]
    %v10598 = vld [vmem:[#allocation7 + $0x78] sm:$0xff]
    %v10599 = vld [vmem:[#allocation7 + $0x80] sm:$0xff]
    %v10600 = vld [vmem:[#allocation7 + $0x88] sm:$0xff]
    %v10601 = vld [vmem:[#allocation7 + $0x90] sm:$0xff]
    %v10602 = vld [vmem:[#allocation7 + $0x98] sm:$0xff]
    %v10603 = vld [vmem:[#allocation7 + $0xa0] sm:$0xff]
    %v10604 = vld [vmem:[#allocation7 + $0xa8] sm:$0xff]
    %v10605 = vld [vmem:[#allocation7 + $0xb0] sm:$0xff]
    %v10606 = vld [vmem:[#allocation7 + $0xb8] sm:$0xff]
    %v10607 = vld [vmem:[#allocation7 + $0xc0] sm:$0xff]
    %v10608 = vld [vmem:[#allocation7 + $0xc8] sm:$0xff]
    %v10609 = vld [vmem:[#allocation7 + $0xd0] sm:$0xff]
    %v10610 = vld [vmem:[#allocation7 + $0xd8] sm:$0xff]
    %v10611 = vld [vmem:[#allocation7 + $0xe0] sm:$0xff]
    %v10612 = vld [vmem:[#allocation7 + $0xe8] sm:$0xff]
    %v10613 = vld [vmem:[#allocation7 + $0xf0] sm:$0xff]
    %v10614 = vld [vmem:[#allocation7 + $0xf8] sm:$0xff]
    %v10615 = vld [vmem:[#allocation7 + $0x100] sm:$0xff]
    %v10616 = vld [vmem:[#allocation7 + $0x108] sm:$0xff]
    %v10617 = vld [vmem:[#allocation7 + $0x110] sm:$0xff]
    %v10618 = vld [vmem:[#allocation7 + $0x118] sm:$0xff]
    %v10619 = vld [vmem:[#allocation7 + $0x120] sm:$0xff]
    %v10620 = vld [vmem:[#allocation7 + $0x128] sm:$0xff]
    %v10621 = vld [vmem:[#allocation7 + $0x130] sm:$0xff]
    %v10622 = vld [vmem:[#allocation7 + $0x138] sm:$0xff]
    %v10623 = vld [vmem:[#allocation7 + $0x140] sm:$0xff]
    %v10624 = vld [vmem:[#allocation7 + $0x148] sm:$0xff]
    %v10625 = vld [vmem:[#allocation7 + $0x150] sm:$0xff]
    %v10626 = vld [vmem:[#allocation7 + $0x158] sm:$0xff]
    %v10627 = vld [vmem:[#allocation7 + $0x160] sm:$0xff]
    %v10628 = vld [vmem:[#allocation7 + $0x168] sm:$0xff]
    %v10629 = vld [vmem:[#allocation7 + $0x170] sm:$0xff]
    %v10630 = vld [vmem:[#allocation7 + $0x178] sm:$0xff]
    %v10631 = vld [vmem:[#allocation7 + $0x180] sm:$0xff]
    %v10632 = vld [vmem:[#allocation7 + $0x188] sm:$0xff]
    %v10633 = vld [vmem:[#allocation7 + $0x190] sm:$0xff]
    %v10634 = vld [vmem:[#allocation7 + $0x198] sm:$0xff]
    %v10635 = vld [vmem:[#allocation7 + $0x1a0] sm:$0xff]
    %v10636 = vld [vmem:[#allocation7 + $0x1a8] sm:$0xff]
    %v10637 = vld [vmem:[#allocation7 + $0x1b0] sm:$0xff]
    %v10638 = vld [vmem:[#allocation7 + $0x1b8] sm:$0xff]
    %v10639 = vld [vmem:[#allocation7 + $0x1c0] sm:$0xff]
    %v10640 = vld [vmem:[#allocation7 + $0x1c8] sm:$0xff]
    %v10641 = vld [vmem:[#allocation7 + $0x1d0] sm:$0xff]
    %v10642 = vld [vmem:[#allocation7 + $0x1d8] sm:$0xff]
    %v10643 = vld [vmem:[#allocation7 + $0x1e0] sm:$0xff]
    %v10644 = vld [vmem:[#allocation7 + $0x1e8] sm:$0xff]
    %v10645 = vld [vmem:[#allocation7 + $0x1f0] sm:$0xff]
    %v10646 = vld [vmem:[#allocation7 + $0x1f8] sm:$0xff]
    %v10647 = vld [vmem:[#allocation7 + $0x200] sm:$0xff]
    %v10648 = vld [vmem:[#allocation7 + $0x208] sm:$0xff]
    %v10649 = vld [vmem:[#allocation7 + $0x210] sm:$0xff]
    %v10650 = vld [vmem:[#allocation7 + $0x218] sm:$0xff]
    %v10651 = vld [vmem:[#allocation7 + $0x220] sm:$0xff]
    %v10652 = vld [vmem:[#allocation7 + $0x228] sm:$0xff]
    %v10653 = vld [vmem:[#allocation7 + $0x230] sm:$0xff]
    %v10654 = vld [vmem:[#allocation7 + $0x238] sm:$0xff]
    %v10655 = vld [vmem:[#allocation7 + $0x240] sm:$0xff]
    %v10656 = vld [vmem:[#allocation7 + $0x248] sm:$0xff]
    %v10657 = vld [vmem:[#allocation7 + $0x250] sm:$0xff]
    %v10658 = vld [vmem:[#allocation7 + $0x258] sm:$0xff]
    %v10659 = vld [vmem:[#allocation7 + $0x260] sm:$0xff]
    %v10660 = vld [vmem:[#allocation7 + $0x268] sm:$0xff]
    %v10661 = vld [vmem:[#allocation7 + $0x270] sm:$0xff]
    %v10662 = vld [vmem:[#allocation7 + $0x278] sm:$0xff]
    %v10663 = vld [vmem:[#allocation7 + $0x280] sm:$0xff]
    %v10664 = vld [vmem:[#allocation7 + $0x288] sm:$0xff]
    %v10665 = vld [vmem:[#allocation7 + $0x290] sm:$0xff]
    %v10666 = vld [vmem:[#allocation7 + $0x298] sm:$0xff]
    %v10667 = vld [vmem:[#allocation7 + $0x2a0] sm:$0xff]
    %v10668 = vld [vmem:[#allocation7 + $0x2a8] sm:$0xff]
    %v10669 = vld [vmem:[#allocation7 + $0x2b0] sm:$0xff]
    %v10670 = vld [vmem:[#allocation7 + $0x2b8] sm:$0xff]
    %v10671 = vld [vmem:[#allocation7 + $0x2c0] sm:$0xff]
    %v10672 = vld [vmem:[#allocation7 + $0x2c8] sm:$0xff]
    %v10673 = vld [vmem:[#allocation7 + $0x2d0] sm:$0xff]
    %v10674 = vld [vmem:[#allocation7 + $0x2d8] sm:$0xff]
    %v10675 = vld [vmem:[#allocation7 + $0x2e0] sm:$0xff]
    %v10676 = vld [vmem:[#allocation7 + $0x2e8] sm:$0xff]
    %v10677 = vld [vmem:[#allocation7 + $0x2f0] sm:$0xff]
    %v10678 = vld [vmem:[#allocation7 + $0x2f8] sm:$0xff]
    %v10775 = vunpack.c.l.b16 %v10583
    %v10776 = vunpack.c.h.b16 %v10583
    %v10777 = vunpack.c.l.b16 %v10584
    %v10778 = vunpack.c.h.b16 %v10584
    %v10779 = vunpack.c.l.b16 %v10585
    %v10780 = vunpack.c.h.b16 %v10585
    %v10781 = vunpack.c.l.b16 %v10586
    %v10782 = vunpack.c.h.b16 %v10586
    %v10783 = vunpack.c.l.b16 %v10587
    %v10784 = vunpack.c.h.b16 %v10587
    %v10785 = vunpack.c.l.b16 %v10588
    %v10786 = vunpack.c.h.b16 %v10588
    %v10787 = vunpack.c.l.b16 %v10589
    %v10788 = vunpack.c.h.b16 %v10589
    %v10789 = vunpack.c.l.b16 %v10590
    %v10790 = vunpack.c.h.b16 %v10590
    %v10791 = vunpack.c.l.b16 %v10591
    %v10792 = vunpack.c.h.b16 %v10591
    %v10793 = vunpack.c.l.b16 %v10592
    %v10794 = vunpack.c.h.b16 %v10592
    %v10795 = vunpack.c.l.b16 %v10593
    %v10796 = vunpack.c.h.b16 %v10593
    %v10797 = vunpack.c.l.b16 %v10594
    %v10798 = vunpack.c.h.b16 %v10594
    %v10799 = vunpack.c.l.b16 %v10595
    %v10800 = vunpack.c.h.b16 %v10595
    %v10801 = vunpack.c.l.b16 %v10596
    %v10802 = vunpack.c.h.b16 %v10596
    %v10803 = vunpack.c.l.b16 %v10597
    %v10804 = vunpack.c.h.b16 %v10597
    %v10805 = vunpack.c.l.b16 %v10598
    %v10806 = vunpack.c.h.b16 %v10598
    %v10807 = vunpack.c.l.b16 %v10599
    %v10808 = vunpack.c.h.b16 %v10599
    %v10809 = vunpack.c.l.b16 %v10600
    %v10810 = vunpack.c.h.b16 %v10600
    %v10811 = vunpack.c.l.b16 %v10601
    %v10812 = vunpack.c.h.b16 %v10601
    %v10813 = vunpack.c.l.b16 %v10602
    %v10814 = vunpack.c.h.b16 %v10602
    %v10815 = vunpack.c.l.b16 %v10603
    %v10816 = vunpack.c.h.b16 %v10603
    %v10817 = vunpack.c.l.b16 %v10604
    %v10818 = vunpack.c.h.b16 %v10604
    %v10819 = vunpack.c.l.b16 %v10605
    %v10820 = vunpack.c.h.b16 %v10605
    %v10821 = vunpack.c.l.b16 %v10606
    %v10822 = vunpack.c.h.b16 %v10606
    %v10823 = vunpack.c.l.b16 %v10607
    %v10824 = vunpack.c.h.b16 %v10607
    %v10825 = vunpack.c.l.b16 %v10608
    %v10826 = vunpack.c.h.b16 %v10608
    %v10827 = vunpack.c.l.b16 %v10609
    %v10828 = vunpack.c.h.b16 %v10609
    %v10829 = vunpack.c.l.b16 %v10610
    %v10830 = vunpack.c.h.b16 %v10610
    %v10831 = vunpack.c.l.b16 %v10611
    %v10832 = vunpack.c.h.b16 %v10611
    %v10833 = vunpack.c.l.b16 %v10612
    %v10834 = vunpack.c.h.b16 %v10612
    %v10835 = vunpack.c.l.b16 %v10613
    %v10836 = vunpack.c.h.b16 %v10613
    %v10837 = vunpack.c.l.b16 %v10614
    %v10838 = vunpack.c.h.b16 %v10614
    %v10839 = vunpack.c.l.b16 %v10615
    %v10840 = vunpack.c.h.b16 %v10615
    %v10841 = vunpack.c.l.b16 %v10616
    %v10842 = vunpack.c.h.b16 %v10616
    %v10843 = vunpack.c.l.b16 %v10617
    %v10844 = vunpack.c.h.b16 %v10617
    %v10845 = vunpack.c.l.b16 %v10618
    %v10846 = vunpack.c.h.b16 %v10618
    %v10847 = vunpack.c.l.b16 %v10619
    %v10848 = vunpack.c.h.b16 %v10619
    %v10849 = vunpack.c.l.b16 %v10620
    %v10850 = vunpack.c.h.b16 %v10620
    %v10851 = vunpack.c.l.b16 %v10621
    %v10852 = vunpack.c.h.b16 %v10621
    %v10853 = vunpack.c.l.b16 %v10622
    %v10854 = vunpack.c.h.b16 %v10622
    %v10855 = vunpack.c.l.b16 %v10623
    %v10856 = vunpack.c.h.b16 %v10623
    %v10857 = vunpack.c.l.b16 %v10624
    %v10858 = vunpack.c.h.b16 %v10624
    %v10859 = vunpack.c.l.b16 %v10625
    %v10860 = vunpack.c.h.b16 %v10625
    %v10861 = vunpack.c.l.b16 %v10626
    %v10862 = vunpack.c.h.b16 %v10626
    %v10863 = vunpack.c.l.b16 %v10627
    %v10864 = vunpack.c.h.b16 %v10627
    %v10865 = vunpack.c.l.b16 %v10628
    %v10866 = vunpack.c.h.b16 %v10628
    %v10867 = vunpack.c.l.b16 %v10629
    %v10868 = vunpack.c.h.b16 %v10629
    %v10869 = vunpack.c.l.b16 %v10630
    %v10870 = vunpack.c.h.b16 %v10630
    %v10871 = vunpack.c.l.b16 %v10631
    %v10872 = vunpack.c.h.b16 %v10631
    %v10873 = vunpack.c.l.b16 %v10632
    %v10874 = vunpack.c.h.b16 %v10632
    %v10875 = vunpack.c.l.b16 %v10633
    %v10876 = vunpack.c.h.b16 %v10633
    %v10877 = vunpack.c.l.b16 %v10634
    %v10878 = vunpack.c.h.b16 %v10634
    %v10879 = vunpack.c.l.b16 %v10635
    %v10880 = vunpack.c.h.b16 %v10635
    %v10881 = vunpack.c.l.b16 %v10636
    %v10882 = vunpack.c.h.b16 %v10636
    %v10883 = vunpack.c.l.b16 %v10637
    %v10884 = vunpack.c.h.b16 %v10637
    %v10885 = vunpack.c.l.b16 %v10638
    %v10886 = vunpack.c.h.b16 %v10638
    %v10887 = vunpack.c.l.b16 %v10639
    %v10888 = vunpack.c.h.b16 %v10639
    %v10889 = vunpack.c.l.b16 %v10640
    %v10890 = vunpack.c.h.b16 %v10640
    %v10891 = vunpack.c.l.b16 %v10641
    %v10892 = vunpack.c.h.b16 %v10641
    %v10893 = vunpack.c.l.b16 %v10642
    %v10894 = vunpack.c.h.b16 %v10642
    %v10895 = vunpack.c.l.b16 %v10643
    %v10896 = vunpack.c.h.b16 %v10643
    %v10897 = vunpack.c.l.b16 %v10644
    %v10898 = vunpack.c.h.b16 %v10644
    %v10899 = vunpack.c.l.b16 %v10645
    %v10900 = vunpack.c.h.b16 %v10645
    %v10901 = vunpack.c.l.b16 %v10646
    %v10902 = vunpack.c.h.b16 %v10646
    %v10903 = vunpack.c.l.b16 %v10647
    %v10904 = vunpack.c.h.b16 %v10647
    %v10905 = vunpack.c.l.b16 %v10648
    %v10906 = vunpack.c.h.b16 %v10648
    %v10907 = vunpack.c.l.b16 %v10649
    %v10908 = vunpack.c.h.b16 %v10649
    %v10909 = vunpack.c.l.b16 %v10650
    %v10910 = vunpack.c.h.b16 %v10650
    %v10911 = vunpack.c.l.b16 %v10651
    %v10912 = vunpack.c.h.b16 %v10651
    %v10913 = vunpack.c.l.b16 %v10652
    %v10914 = vunpack.c.h.b16 %v10652
    %v10915 = vunpack.c.l.b16 %v10653
    %v10916 = vunpack.c.h.b16 %v10653
    %v10917 = vunpack.c.l.b16 %v10654
    %v10918 = vunpack.c.h.b16 %v10654
    %v10919 = vunpack.c.l.b16 %v10655
    %v10920 = vunpack.c.h.b16 %v10655
    %v10921 = vunpack.c.l.b16 %v10656
    %v10922 = vunpack.c.h.b16 %v10656
    %v10923 = vunpack.c.l.b16 %v10657
    %v10924 = vunpack.c.h.b16 %v10657
    %v10925 = vunpack.c.l.b16 %v10658
    %v10926 = vunpack.c.h.b16 %v10658
    %v10927 = vunpack.c.l.b16 %v10659
    %v10928 = vunpack.c.h.b16 %v10659
    %v10929 = vunpack.c.l.b16 %v10660
    %v10930 = vunpack.c.h.b16 %v10660
    %v10931 = vunpack.c.l.b16 %v10661
    %v10932 = vunpack.c.h.b16 %v10661
    %v10933 = vunpack.c.l.b16 %v10662
    %v10934 = vunpack.c.h.b16 %v10662
    %v10935 = vunpack.c.l.b16 %v10663
    %v10936 = vunpack.c.h.b16 %v10663
    %v10937 = vunpack.c.l.b16 %v10664
    %v10938 = vunpack.c.h.b16 %v10664
    %v10939 = vunpack.c.l.b16 %v10665
    %v10940 = vunpack.c.h.b16 %v10665
    %v10941 = vunpack.c.l.b16 %v10666
    %v10942 = vunpack.c.h.b16 %v10666
    %v10943 = vunpack.c.l.b16 %v10667
    %v10944 = vunpack.c.h.b16 %v10667
    %v10945 = vunpack.c.l.b16 %v10668
    %v10946 = vunpack.c.h.b16 %v10668
    %v10947 = vunpack.c.l.b16 %v10669
    %v10948 = vunpack.c.h.b16 %v10669
    %v10949 = vunpack.c.l.b16 %v10670
    %v10950 = vunpack.c.h.b16 %v10670
    %v10951 = vunpack.c.l.b16 %v10671
    %v10952 = vunpack.c.h.b16 %v10671
    %v10953 = vunpack.c.l.b16 %v10672
    %v10954 = vunpack.c.h.b16 %v10672
    %v10955 = vunpack.c.l.b16 %v10673
    %v10956 = vunpack.c.h.b16 %v10673
    %v10957 = vunpack.c.l.b16 %v10674
    %v10958 = vunpack.c.h.b16 %v10674
    %v10959 = vunpack.c.l.b16 %v10675
    %v10960 = vunpack.c.h.b16 %v10675
    %v10961 = vunpack.c.l.b16 %v10676
    %v10962 = vunpack.c.h.b16 %v10676
    %v10963 = vunpack.c.l.b16 %v10677
    %v10964 = vunpack.c.h.b16 %v10677
    %v10965 = vunpack.c.l.b16 %v10678
    %v10966 = vunpack.c.h.b16 %v10678
    %v10967 = vpack.c.b16 %v10781, %v10775
    %v10968 = vpack.c.b16 %v10782, %v10776
    %v10969 = vpack.c.b16 %v10783, %v10777
    %v10970 = vpack.c.b16 %v10784, %v10778
    %v10971 = vpack.c.b16 %v10785, %v10779
    %v10972 = vpack.c.b16 %v10786, %v10780
    %v10973 = vpack.c.b16 %v10793, %v10787
    %v10974 = vpack.c.b16 %v10794, %v10788
    %v10975 = vpack.c.b16 %v10795, %v10789
    %v10976 = vpack.c.b16 %v10796, %v10790
    %v10977 = vpack.c.b16 %v10797, %v10791
    %v10978 = vpack.c.b16 %v10798, %v10792
    %v10979 = vpack.c.b16 %v10805, %v10799
    %v10980 = vpack.c.b16 %v10806, %v10800
    %v10981 = vpack.c.b16 %v10807, %v10801
    %v10982 = vpack.c.b16 %v10808, %v10802
    %v10983 = vpack.c.b16 %v10809, %v10803
    %v10984 = vpack.c.b16 %v10810, %v10804
    %v10985 = vpack.c.b16 %v10817, %v10811
    %v10986 = vpack.c.b16 %v10818, %v10812
    %v10987 = vpack.c.b16 %v10819, %v10813
    %v10988 = vpack.c.b16 %v10820, %v10814
    %v10989 = vpack.c.b16 %v10821, %v10815
    %v10990 = vpack.c.b16 %v10822, %v10816
    %v10991 = vpack.c.b16 %v10829, %v10823
    %v10992 = vpack.c.b16 %v10830, %v10824
    %v10993 = vpack.c.b16 %v10831, %v10825
    %v10994 = vpack.c.b16 %v10832, %v10826
    %v10995 = vpack.c.b16 %v10833, %v10827
    %v10996 = vpack.c.b16 %v10834, %v10828
    %v10997 = vpack.c.b16 %v10841, %v10835
    %v10998 = vpack.c.b16 %v10842, %v10836
    %v10999 = vpack.c.b16 %v10843, %v10837
    %v11000 = vpack.c.b16 %v10844, %v10838
    %v11001 = vpack.c.b16 %v10845, %v10839
    %v11002 = vpack.c.b16 %v10846, %v10840
    %v11003 = vpack.c.b16 %v10853, %v10847
    %v11004 = vpack.c.b16 %v10854, %v10848
    %v11005 = vpack.c.b16 %v10855, %v10849
    %v11006 = vpack.c.b16 %v10856, %v10850
    %v11007 = vpack.c.b16 %v10857, %v10851
    %v11008 = vpack.c.b16 %v10858, %v10852
    %v11009 = vpack.c.b16 %v10865, %v10859
    %v11010 = vpack.c.b16 %v10866, %v10860
    %v11011 = vpack.c.b16 %v10867, %v10861
    %v11012 = vpack.c.b16 %v10868, %v10862
    %v11013 = vpack.c.b16 %v10869, %v10863
    %v11014 = vpack.c.b16 %v10870, %v10864
    %v11015 = vpack.c.b16 %v10877, %v10871
    %v11016 = vpack.c.b16 %v10878, %v10872
    %v11017 = vpack.c.b16 %v10879, %v10873
    %v11018 = vpack.c.b16 %v10880, %v10874
    %v11019 = vpack.c.b16 %v10881, %v10875
    %v11020 = vpack.c.b16 %v10882, %v10876
    %v11021 = vpack.c.b16 %v10889, %v10883
    %v11022 = vpack.c.b16 %v10890, %v10884
    %v11023 = vpack.c.b16 %v10891, %v10885
    %v11024 = vpack.c.b16 %v10892, %v10886
    %v11025 = vpack.c.b16 %v10893, %v10887
    %v11026 = vpack.c.b16 %v10894, %v10888
    %v11027 = vpack.c.b16 %v10901, %v10895
    %v11028 = vpack.c.b16 %v10902, %v10896
    %v11029 = vpack.c.b16 %v10903, %v10897
    %v11030 = vpack.c.b16 %v10904, %v10898
    %v11031 = vpack.c.b16 %v10905, %v10899
    %v11032 = vpack.c.b16 %v10906, %v10900
    %v11033 = vpack.c.b16 %v10913, %v10907
    %v11034 = vpack.c.b16 %v10914, %v10908
    %v11035 = vpack.c.b16 %v10915, %v10909
    %v11036 = vpack.c.b16 %v10916, %v10910
    %v11037 = vpack.c.b16 %v10917, %v10911
    %v11038 = vpack.c.b16 %v10918, %v10912
    %v11039 = vpack.c.b16 %v10925, %v10919
    %v11040 = vpack.c.b16 %v10926, %v10920
    %v11041 = vpack.c.b16 %v10927, %v10921
    %v11042 = vpack.c.b16 %v10928, %v10922
    %v11043 = vpack.c.b16 %v10929, %v10923
    %v11044 = vpack.c.b16 %v10930, %v10924
    %v11045 = vpack.c.b16 %v10937, %v10931
    %v11046 = vpack.c.b16 %v10938, %v10932
    %v11047 = vpack.c.b16 %v10939, %v10933
    %v11048 = vpack.c.b16 %v10940, %v10934
    %v11049 = vpack.c.b16 %v10941, %v10935
    %v11050 = vpack.c.b16 %v10942, %v10936
    %v11051 = vpack.c.b16 %v10949, %v10943
    %v11052 = vpack.c.b16 %v10950, %v10944
    %v11053 = vpack.c.b16 %v10951, %v10945
    %v11054 = vpack.c.b16 %v10952, %v10946
    %v11055 = vpack.c.b16 %v10953, %v10947
    %v11056 = vpack.c.b16 %v10954, %v10948
    %v11057 = vpack.c.b16 %v10961, %v10955
    %v11058 = vpack.c.b16 %v10962, %v10956
    %v11059 = vpack.c.b16 %v10963, %v10957
    %v11060 = vpack.c.b16 %v10964, %v10958
    %v11061 = vpack.c.b16 %v10965, %v10959
    %v11062 = vpack.c.b16 %v10966, %v10960
    %11159 = vmatprep.subr.bf16.mxu0 %v10968
    %11160 = vmatpush1.bf16.msra.mxu0 %v10967
    %11161 = vmatprep.subr.bf16.mxu0 %v10974
    %11162 = vmatpush1.bf16.msra.mxu0 %v10973
    %11163 = vmatprep.subr.bf16.mxu0 %v10980
    %11164 = vmatpush1.bf16.msra.mxu0 %v10979
    %11165 = vmatprep.subr.bf16.mxu0 %v10986
    %11166 = vmatpush1.bf16.msra.mxu0 %v10985
    %11167 = vmatprep.subr.bf16.mxu0 %v10992
    %11168 = vmatpush1.bf16.msra.mxu0 %v10991
    %11169 = vmatprep.subr.bf16.mxu0 %v10998
    %11170 = vmatpush1.bf16.msra.mxu0 %v10997
    %11171 = vmatprep.subr.bf16.mxu0 %v11004
    %11172 = vmatpush1.bf16.msra.mxu0 %v11003
    %11173 = vmatprep.subr.bf16.mxu0 %v11010
    %11174 = vmatpush1.bf16.msra.mxu0 %v11009
    %11175 = vmatprep.subr.bf16.mxu0 %v11016
    %11176 = vmatpush1.bf16.msra.mxu0 %v11015
    %11177 = vmatprep.subr.bf16.mxu0 %v11022
    %11178 = vmatpush1.bf16.msra.mxu0 %v11021
    %11179 = vmatprep.subr.bf16.mxu0 %v11028
    %11180 = vmatpush1.bf16.msra.mxu0 %v11027
    %11181 = vmatprep.subr.bf16.mxu0 %v11034
    %11182 = vmatpush1.bf16.msra.mxu0 %v11033
    %11183 = vmatprep.subr.bf16.mxu0 %v11040
    %11184 = vmatpush1.bf16.msra.mxu0 %v11039
    %11185 = vmatprep.subr.bf16.mxu0 %v11046
    %11186 = vmatpush1.bf16.msra.mxu0 %v11045
    %11187 = vmatprep.subr.bf16.mxu0 %v11052
    %11188 = vmatpush1.bf16.msra.mxu0 %v11051
    %11189 = vmatprep.subr.bf16.mxu0 %v11058
    %11190 = vmatpush1.bf16.msra.mxu0 %v11057
    %11191 = vmatprep.mubr.bf16.mxu0 %v10582
    %11192 = vmatmul.mubr.bf16.gmra.mrb[0].mxu0 %v10581
    %v11193 = vpop.f32.mrb[0].mxu0
    %v11194 = vadd.f32 0.0, %v11193
    %v11195 = vpop.f32.mrb[0].mxu0
    %v11196 = vadd.f32 0.0, %v11195
    %v11197 = vpop.f32.mrb[0].mxu0
    %v11198 = vpop.f32.mrb[0].mxu0
    %11199 = vdwg.mxu0
    %11200 = vmatprep.subr.bf16.mxu0 %v10970
    %11201 = vmatpush1.bf16.msra.mxu0 %v10969
    %11202 = vmatprep.subr.bf16.mxu0 %v10976
    %11203 = vmatpush1.bf16.msra.mxu0 %v10975
    %11204 = vmatprep.subr.bf16.mxu0 %v10982
    %11205 = vmatpush1.bf16.msra.mxu0 %v10981
    %11206 = vmatprep.subr.bf16.mxu0 %v10988
    %11207 = vmatpush1.bf16.msra.mxu0 %v10987
    %11208 = vmatprep.subr.bf16.mxu0 %v10994
    %11209 = vmatpush1.bf16.msra.mxu0 %v10993
    %11210 = vmatprep.subr.bf16.mxu0 %v11000
    %11211 = vmatpush1.bf16.msra.mxu0 %v10999
    %11212 = vmatprep.subr.bf16.mxu0 %v11006
    %11213 = vmatpush1.bf16.msra.mxu0 %v11005
    %11214 = vmatprep.subr.bf16.mxu0 %v11012
    %11215 = vmatpush1.bf16.msra.mxu0 %v11011
    %11216 = vmatprep.subr.bf16.mxu0 %v11018
    %11217 = vmatpush1.bf16.msra.mxu0 %v11017
    %11218 = vmatprep.subr.bf16.mxu0 %v11024
    %11219 = vmatpush1.bf16.msra.mxu0 %v11023
    %11220 = vmatprep.subr.bf16.mxu0 %v11030
    %11221 = vmatpush1.bf16.msra.mxu0 %v11029
    %11222 = vmatprep.subr.bf16.mxu0 %v11036
    %11223 = vmatpush1.bf16.msra.mxu0 %v11035
    %11224 = vmatprep.subr.bf16.mxu0 %v11042
    %11225 = vmatpush1.bf16.msra.mxu0 %v11041
    %11226 = vmatprep.subr.bf16.mxu0 %v11048
    %11227 = vmatpush1.bf16.msra.mxu0 %v11047
    %11228 = vmatprep.subr.bf16.mxu0 %v11054
    %11229 = vmatpush1.bf16.msra.mxu0 %v11053
    %11230 = vmatprep.subr.bf16.mxu0 %v11060
    %11231 = vmatpush1.bf16.msra.mxu0 %v11059
    %11232 = vmatprep.mubr.bf16.mxu0 %v10582
    %11233 = vmatmul.mubr.bf16.gmra.mrb[0].mxu0 %v10581
    %v11234 = vpop.f32.mrb[0].mxu0
    %v11235 = vadd.f32 0.0, %v11234
    %v11236 = vpop.f32.mrb[0].mxu0
    %v11237 = vadd.f32 0.0, %v11236
    %v11238 = vpop.f32.mrb[0].mxu0
    %v11239 = vpop.f32.mrb[0].mxu0
    %11240 = vdwg.mxu0
    %11241 = vmatprep.subr.bf16.mxu0 %v10972
    %11242 = vmatpush1.bf16.msra.mxu0 %v10971
    %11243 = vmatprep.subr.bf16.mxu0 %v10978
    %11244 = vmatpush1.bf16.msra.mxu0 %v10977
    %11245 = vmatprep.subr.bf16.mxu0 %v10984
    %11246 = vmatpush1.bf16.msra.mxu0 %v10983
    %11247 = vmatprep.subr.bf16.mxu0 %v10990
    %11248 = vmatpush1.bf16.msra.mxu0 %v10989
    %11249 = vmatprep.subr.bf16.mxu0 %v10996
    %11250 = vmatpush1.bf16.msra.mxu0 %v10995
    %11251 = vmatprep.subr.bf16.mxu0 %v11002
    %11252 = vmatpush1.bf16.msra.mxu0 %v11001
    %11253 = vmatprep.subr.bf16.mxu0 %v11008
    %11254 = vmatpush1.bf16.msra.mxu0 %v11007
    %11255 = vmatprep.subr.bf16.mxu0 %v11014
    %11256 = vmatpush1.bf16.msra.mxu0 %v11013
    %11257 = vmatprep.subr.bf16.mxu0 %v11020
    %11258 = vmatpush1.bf16.msra.mxu0 %v11019
    %11259 = vmatprep.subr.bf16.mxu0 %v11026
    %11260 = vmatpush1.bf16.msra.mxu0 %v11025
    %11261 = vmatprep.subr.bf16.mxu0 %v11032
    %11262 = vmatpush1.bf16.msra.mxu0 %v11031
    %11263 = vmatprep.subr.bf16.mxu0 %v11038
    %11264 = vmatpush1.bf16.msra.mxu0 %v11037
    %11265 = vmatprep.subr.bf16.mxu0 %v11044
    %11266 = vmatpush1.bf16.msra.mxu0 %v11043
    %11267 = vmatprep.subr.bf16.mxu0 %v11050
    %11268 = vmatpush1.bf16.msra.mxu0 %v11049
    %11269 = vmatprep.subr.bf16.mxu0 %v11056
    %11270 = vmatpush1.bf16.msra.mxu0 %v11055
    %11271 = vmatprep.subr.bf16.mxu0 %v11062
    %11272 = vmatpush1.bf16.msra.mxu0 %v11061
    %11273 = vmatprep.mubr.bf16.mxu0 %v10582
    %11274 = vmatmul.mubr.bf16.gmra.mrb[0].mxu0 %v10581
    %v11275 = vpop.f32.mrb[0].mxu0
    %v11276 = vadd.f32 0.0, %v11275
    %v11277 = vpop.f32.mrb[0].mxu0
    %v11278 = vadd.f32 0.0, %v11277
    %v11279 = vpop.f32.mrb[0].mxu0
    %v11280 = vpop.f32.mrb[0].mxu0
    %11281 = vdwg.mxu0
    %s11282 = scalar_lea.vmem [#allocation3], 52
    %v11283 = vld [vmem:[%s11282] ss:$8 sm:$0xf]
    %v11284 = vld [vmem:[%s11282] ss:$8 sm:$0x30]
    %v11285 = vor.u32 %v11283, %v11284
    %v11288 = vcombine.low %v11194, %v11196
    %v11290 = vunpack.c.l.s4 1966171168
    %v11291 = vunpack.c.0.s8 %v11290
    %v11292 = vlaneseq
    %v11293 = vshrl.u32 %v11292, 7
    %v11294 = vsub.s32 %v11291, %v11293
    %v11295 = vrot.slane %v11288, %v11294
    %v11297 = vunpack.c.l.s4 1966171168
    %v11298 = vunpack.c.0.s8 %v11297
    %v11299 = vlaneseq
    %v11300 = vshrl.u32 %v11299, 7
    %v11301 = vsub.s32 %v11298, %v11300
    %v11302 = vrot.slane %v11295, %v11301
    %v11304 = vadd.f32 %v11285, %v11302
    %v11305 = vxor.u32 %v11304, 2147483648
    %v11306 = vmul.f32 %v11305, 1.442695
    %v11307 = vpow.pop %v11306
    %v11308 = vadd.f32 %v11307, 1.0
    %v11309 = vrcp.pop %v11308
    %v11310 = vmul.f32 1.0, %v11309
    %v11312 = vrot.slane %v11285, 2
    %v11316 = vcombine.low %v11235, %v11237
    %v11318 = vunpack.c.l.s4 1966171168
    %v11319 = vunpack.c.0.s8 %v11318
    %v11320 = vlaneseq
    %v11321 = vshrl.u32 %v11320, 7
    %v11322 = vsub.s32 %v11319, %v11321
    %v11323 = vrot.slane %v11316, %v11322
    %v11325 = vunpack.c.l.s4 1966171168
    %v11326 = vunpack.c.0.s8 %v11325
    %v11327 = vlaneseq
    %v11328 = vshrl.u32 %v11327, 7
    %v11329 = vsub.s32 %v11326, %v11328
    %v11330 = vrot.slane %v11323, %v11329
    %v11332 = vadd.f32 %v11312, %v11330
    %v11333 = vxor.u32 %v11332, 2147483648
    %v11334 = vmul.f32 %v11333, 1.442695
    %v11335 = vpow.pop %v11334
    %v11336 = vadd.f32 %v11335, 1.0
    %v11337 = vrcp.pop %v11336
    %v11338 = vmul.f32 1.0, %v11337
    %v11339 = vld [vmem:[%s5] sm:$0x3]
    %v11341 = vlaneseq
    %v11342 = vshrl.u32 %v11341, 7
    %v11343 = vsub.s32 0, %v11342
    %v11344 = vrot.slane %v11339, %v11343
    %v11345 = vlaneseq
    %v11346 = vshrl.u32 %v11345, 7
    %v11347 = vsub.s32 1, %v11346
    %v11348 = vrot.slane %v11339, %v11347
    %v11351 = vadd.f32 %v11276, %v11344
    %v11352 = vadd.f32 %v11278, %v11348
    %v11355 = vcombine.low %v11351, %v11352
    %v11357 = vunpack.c.l.s4 1966171168
    %v11358 = vunpack.c.0.s8 %v11357
    %v11359 = vlaneseq
    %v11360 = vshrl.u32 %v11359, 7
    %v11361 = vsub.s32 %v11358, %v11360
    %v11362 = vrot.slane %v11355, %v11361
    %v11364 = vunpack.c.l.s4 1966171168
    %v11365 = vunpack.c.0.s8 %v11364
    %v11366 = vlaneseq
    %v11367 = vshrl.u32 %v11366, 7
    %v11368 = vsub.s32 %v11365, %v11367
    %v11369 = vrot.slane %v11362, %v11368
    %v11371 = vmul.f32 %v11310, %v11369
    %v11372 = vrot.slane %v11285, 4
    %v11374 = vadd.f32 %v11372, %v11371
    %v11375 = vtanh.pop %v11374
    %v11376 = vsub.f32 %v10566, %v11375
    %v11377 = vmul.f32 %v11338, %v11376
    %v11378 = vadd.f32 %v11375, %v11377
    %s11379 = scalar_lea.vmem [#allocation9], 20
    %11380 = vst.msk [vmem:[%s11379] ss:$8 sm:$0x3] %vm1635, %v11378
    %11381 = vst.msk [vmem:[%s11379] ss:$8 sm:$0x0] %vm1635, %v11378
    %v11383 = vlaneseq
    %v11384 = vshrl.u32 %v11383, 7
    %v11385 = vsub.s32 0, %v11384
    %v11386 = vrot.slane %v11378, %v11385
    %v11387 = vlaneseq
    %v11388 = vshrl.u32 %v11387, 7
    %v11389 = vsub.s32 1, %v11388
    %v11390 = vrot.slane %v11378, %v11389
    %v11393 = vpack.c.bf16 %v11386, %v11386
    %v11394 = vpack.c.bf16 %v11390, %v11390
    %v11395 = vld [vmem:[#allocation7] sm:$0xff]
    %v11396 = vld [vmem:[#allocation7 + $0x8] sm:$0xff]
    %v11397 = vld [vmem:[#allocation7 + $0x10] sm:$0xff]
    %v11398 = vld [vmem:[#allocation7 + $0x18] sm:$0xff]
    %v11399 = vld [vmem:[#allocation7 + $0x20] sm:$0xff]
    %v11400 = vld [vmem:[#allocation7 + $0x28] sm:$0xff]
    %v11401 = vld [vmem:[#allocation7 + $0x30] sm:$0xff]
    %v11402 = vld [vmem:[#allocation7 + $0x38] sm:$0xff]
    %v11403 = vld [vmem:[#allocation7 + $0x40] sm:$0xff]
    %v11404 = vld [vmem:[#allocation7 + $0x48] sm:$0xff]
    %v11405 = vld [vmem:[#allocation7 + $0x50] sm:$0xff]
    %v11406 = vld [vmem:[#allocation7 + $0x58] sm:$0xff]
    %v11407 = vld [vmem:[#allocation7 + $0x60] sm:$0xff]
    %v11408 = vld [vmem:[#allocation7 + $0x68] sm:$0xff]
    %v11409 = vld [vmem:[#allocation7 + $0x70] sm:$0xff]
    %v11410 = vld [vmem:[#allocation7 + $0x78] sm:$0xff]
    %v11411 = vld [vmem:[#allocation7 + $0x80] sm:$0xff]
    %v11412 = vld [vmem:[#allocation7 + $0x88] sm:$0xff]
    %v11413 = vld [vmem:[#allocation7 + $0x90] sm:$0xff]
    %v11414 = vld [vmem:[#allocation7 + $0x98] sm:$0xff]
    %v11415 = vld [vmem:[#allocation7 + $0xa0] sm:$0xff]
    %v11416 = vld [vmem:[#allocation7 + $0xa8] sm:$0xff]
    %v11417 = vld [vmem:[#allocation7 + $0xb0] sm:$0xff]
    %v11418 = vld [vmem:[#allocation7 + $0xb8] sm:$0xff]
    %v11419 = vld [vmem:[#allocation7 + $0xc0] sm:$0xff]
    %v11420 = vld [vmem:[#allocation7 + $0xc8] sm:$0xff]
    %v11421 = vld [vmem:[#allocation7 + $0xd0] sm:$0xff]
    %v11422 = vld [vmem:[#allocation7 + $0xd8] sm:$0xff]
    %v11423 = vld [vmem:[#allocation7 + $0xe0] sm:$0xff]
    %v11424 = vld [vmem:[#allocation7 + $0xe8] sm:$0xff]
    %v11425 = vld [vmem:[#allocation7 + $0xf0] sm:$0xff]
    %v11426 = vld [vmem:[#allocation7 + $0xf8] sm:$0xff]
    %v11427 = vld [vmem:[#allocation7 + $0x100] sm:$0xff]
    %v11428 = vld [vmem:[#allocation7 + $0x108] sm:$0xff]
    %v11429 = vld [vmem:[#allocation7 + $0x110] sm:$0xff]
    %v11430 = vld [vmem:[#allocation7 + $0x118] sm:$0xff]
    %v11431 = vld [vmem:[#allocation7 + $0x120] sm:$0xff]
    %v11432 = vld [vmem:[#allocation7 + $0x128] sm:$0xff]
    %v11433 = vld [vmem:[#allocation7 + $0x130] sm:$0xff]
    %v11434 = vld [vmem:[#allocation7 + $0x138] sm:$0xff]
    %v11435 = vld [vmem:[#allocation7 + $0x140] sm:$0xff]
    %v11436 = vld [vmem:[#allocation7 + $0x148] sm:$0xff]
    %v11437 = vld [vmem:[#allocation7 + $0x150] sm:$0xff]
    %v11438 = vld [vmem:[#allocation7 + $0x158] sm:$0xff]
    %v11439 = vld [vmem:[#allocation7 + $0x160] sm:$0xff]
    %v11440 = vld [vmem:[#allocation7 + $0x168] sm:$0xff]
    %v11441 = vld [vmem:[#allocation7 + $0x170] sm:$0xff]
    %v11442 = vld [vmem:[#allocation7 + $0x178] sm:$0xff]
    %v11443 = vld [vmem:[#allocation7 + $0x180] sm:$0xff]
    %v11444 = vld [vmem:[#allocation7 + $0x188] sm:$0xff]
    %v11445 = vld [vmem:[#allocation7 + $0x190] sm:$0xff]
    %v11446 = vld [vmem:[#allocation7 + $0x198] sm:$0xff]
    %v11447 = vld [vmem:[#allocation7 + $0x1a0] sm:$0xff]
    %v11448 = vld [vmem:[#allocation7 + $0x1a8] sm:$0xff]
    %v11449 = vld [vmem:[#allocation7 + $0x1b0] sm:$0xff]
    %v11450 = vld [vmem:[#allocation7 + $0x1b8] sm:$0xff]
    %v11451 = vld [vmem:[#allocation7 + $0x1c0] sm:$0xff]
    %v11452 = vld [vmem:[#allocation7 + $0x1c8] sm:$0xff]
    %v11453 = vld [vmem:[#allocation7 + $0x1d0] sm:$0xff]
    %v11454 = vld [vmem:[#allocation7 + $0x1d8] sm:$0xff]
    %v11455 = vld [vmem:[#allocation7 + $0x1e0] sm:$0xff]
    %v11456 = vld [vmem:[#allocation7 + $0x1e8] sm:$0xff]
    %v11457 = vld [vmem:[#allocation7 + $0x1f0] sm:$0xff]
    %v11458 = vld [vmem:[#allocation7 + $0x1f8] sm:$0xff]
    %v11459 = vld [vmem:[#allocation7 + $0x200] sm:$0xff]
    %v11460 = vld [vmem:[#allocation7 + $0x208] sm:$0xff]
    %v11461 = vld [vmem:[#allocation7 + $0x210] sm:$0xff]
    %v11462 = vld [vmem:[#allocation7 + $0x218] sm:$0xff]
    %v11463 = vld [vmem:[#allocation7 + $0x220] sm:$0xff]
    %v11464 = vld [vmem:[#allocation7 + $0x228] sm:$0xff]
    %v11465 = vld [vmem:[#allocation7 + $0x230] sm:$0xff]
    %v11466 = vld [vmem:[#allocation7 + $0x238] sm:$0xff]
    %v11467 = vld [vmem:[#allocation7 + $0x240] sm:$0xff]
    %v11468 = vld [vmem:[#allocation7 + $0x248] sm:$0xff]
    %v11469 = vld [vmem:[#allocation7 + $0x250] sm:$0xff]
    %v11470 = vld [vmem:[#allocation7 + $0x258] sm:$0xff]
    %v11471 = vld [vmem:[#allocation7 + $0x260] sm:$0xff]
    %v11472 = vld [vmem:[#allocation7 + $0x268] sm:$0xff]
    %v11473 = vld [vmem:[#allocation7 + $0x270] sm:$0xff]
    %v11474 = vld [vmem:[#allocation7 + $0x278] sm:$0xff]
    %v11475 = vld [vmem:[#allocation7 + $0x280] sm:$0xff]
    %v11476 = vld [vmem:[#allocation7 + $0x288] sm:$0xff]
    %v11477 = vld [vmem:[#allocation7 + $0x290] sm:$0xff]
    %v11478 = vld [vmem:[#allocation7 + $0x298] sm:$0xff]
    %v11479 = vld [vmem:[#allocation7 + $0x2a0] sm:$0xff]
    %v11480 = vld [vmem:[#allocation7 + $0x2a8] sm:$0xff]
    %v11481 = vld [vmem:[#allocation7 + $0x2b0] sm:$0xff]
    %v11482 = vld [vmem:[#allocation7 + $0x2b8] sm:$0xff]
    %v11483 = vld [vmem:[#allocation7 + $0x2c0] sm:$0xff]
    %v11484 = vld [vmem:[#allocation7 + $0x2c8] sm:$0xff]
    %v11485 = vld [vmem:[#allocation7 + $0x2d0] sm:$0xff]
    %v11486 = vld [vmem:[#allocation7 + $0x2d8] sm:$0xff]
    %v11487 = vld [vmem:[#allocation7 + $0x2e0] sm:$0xff]
    %v11488 = vld [vmem:[#allocation7 + $0x2e8] sm:$0xff]
    %v11489 = vld [vmem:[#allocation7 + $0x2f0] sm:$0xff]
    %v11490 = vld [vmem:[#allocation7 + $0x2f8] sm:$0xff]
    %v11587 = vunpack.c.l.b16 %v11395
    %v11588 = vunpack.c.h.b16 %v11395
    %v11589 = vunpack.c.l.b16 %v11396
    %v11590 = vunpack.c.h.b16 %v11396
    %v11591 = vunpack.c.l.b16 %v11397
    %v11592 = vunpack.c.h.b16 %v11397
    %v11593 = vunpack.c.l.b16 %v11398
    %v11594 = vunpack.c.h.b16 %v11398
    %v11595 = vunpack.c.l.b16 %v11399
    %v11596 = vunpack.c.h.b16 %v11399
    %v11597 = vunpack.c.l.b16 %v11400
    %v11598 = vunpack.c.h.b16 %v11400
    %v11599 = vunpack.c.l.b16 %v11401
    %v11600 = vunpack.c.h.b16 %v11401
    %v11601 = vunpack.c.l.b16 %v11402
    %v11602 = vunpack.c.h.b16 %v11402
    %v11603 = vunpack.c.l.b16 %v11403
    %v11604 = vunpack.c.h.b16 %v11403
    %v11605 = vunpack.c.l.b16 %v11404
    %v11606 = vunpack.c.h.b16 %v11404
    %v11607 = vunpack.c.l.b16 %v11405
    %v11608 = vunpack.c.h.b16 %v11405
    %v11609 = vunpack.c.l.b16 %v11406
    %v11610 = vunpack.c.h.b16 %v11406
    %v11611 = vunpack.c.l.b16 %v11407
    %v11612 = vunpack.c.h.b16 %v11407
    %v11613 = vunpack.c.l.b16 %v11408
    %v11614 = vunpack.c.h.b16 %v11408
    %v11615 = vunpack.c.l.b16 %v11409
    %v11616 = vunpack.c.h.b16 %v11409
    %v11617 = vunpack.c.l.b16 %v11410
    %v11618 = vunpack.c.h.b16 %v11410
    %v11619 = vunpack.c.l.b16 %v11411
    %v11620 = vunpack.c.h.b16 %v11411
    %v11621 = vunpack.c.l.b16 %v11412
    %v11622 = vunpack.c.h.b16 %v11412
    %v11623 = vunpack.c.l.b16 %v11413
    %v11624 = vunpack.c.h.b16 %v11413
    %v11625 = vunpack.c.l.b16 %v11414
    %v11626 = vunpack.c.h.b16 %v11414
    %v11627 = vunpack.c.l.b16 %v11415
    %v11628 = vunpack.c.h.b16 %v11415
    %v11629 = vunpack.c.l.b16 %v11416
    %v11630 = vunpack.c.h.b16 %v11416
    %v11631 = vunpack.c.l.b16 %v11417
    %v11632 = vunpack.c.h.b16 %v11417
    %v11633 = vunpack.c.l.b16 %v11418
    %v11634 = vunpack.c.h.b16 %v11418
    %v11635 = vunpack.c.l.b16 %v11419
    %v11636 = vunpack.c.h.b16 %v11419
    %v11637 = vunpack.c.l.b16 %v11420
    %v11638 = vunpack.c.h.b16 %v11420
    %v11639 = vunpack.c.l.b16 %v11421
    %v11640 = vunpack.c.h.b16 %v11421
    %v11641 = vunpack.c.l.b16 %v11422
    %v11642 = vunpack.c.h.b16 %v11422
    %v11643 = vunpack.c.l.b16 %v11423
    %v11644 = vunpack.c.h.b16 %v11423
    %v11645 = vunpack.c.l.b16 %v11424
    %v11646 = vunpack.c.h.b16 %v11424
    %v11647 = vunpack.c.l.b16 %v11425
    %v11648 = vunpack.c.h.b16 %v11425
    %v11649 = vunpack.c.l.b16 %v11426
    %v11650 = vunpack.c.h.b16 %v11426
    %v11651 = vunpack.c.l.b16 %v11427
    %v11652 = vunpack.c.h.b16 %v11427
    %v11653 = vunpack.c.l.b16 %v11428
    %v11654 = vunpack.c.h.b16 %v11428
    %v11655 = vunpack.c.l.b16 %v11429
    %v11656 = vunpack.c.h.b16 %v11429
    %v11657 = vunpack.c.l.b16 %v11430
    %v11658 = vunpack.c.h.b16 %v11430
    %v11659 = vunpack.c.l.b16 %v11431
    %v11660 = vunpack.c.h.b16 %v11431
    %v11661 = vunpack.c.l.b16 %v11432
    %v11662 = vunpack.c.h.b16 %v11432
    %v11663 = vunpack.c.l.b16 %v11433
    %v11664 = vunpack.c.h.b16 %v11433
    %v11665 = vunpack.c.l.b16 %v11434
    %v11666 = vunpack.c.h.b16 %v11434
    %v11667 = vunpack.c.l.b16 %v11435
    %v11668 = vunpack.c.h.b16 %v11435
    %v11669 = vunpack.c.l.b16 %v11436
    %v11670 = vunpack.c.h.b16 %v11436
    %v11671 = vunpack.c.l.b16 %v11437
    %v11672 = vunpack.c.h.b16 %v11437
    %v11673 = vunpack.c.l.b16 %v11438
    %v11674 = vunpack.c.h.b16 %v11438
    %v11675 = vunpack.c.l.b16 %v11439
    %v11676 = vunpack.c.h.b16 %v11439
    %v11677 = vunpack.c.l.b16 %v11440
    %v11678 = vunpack.c.h.b16 %v11440
    %v11679 = vunpack.c.l.b16 %v11441
    %v11680 = vunpack.c.h.b16 %v11441
    %v11681 = vunpack.c.l.b16 %v11442
    %v11682 = vunpack.c.h.b16 %v11442
    %v11683 = vunpack.c.l.b16 %v11443
    %v11684 = vunpack.c.h.b16 %v11443
    %v11685 = vunpack.c.l.b16 %v11444
    %v11686 = vunpack.c.h.b16 %v11444
    %v11687 = vunpack.c.l.b16 %v11445
    %v11688 = vunpack.c.h.b16 %v11445
    %v11689 = vunpack.c.l.b16 %v11446
    %v11690 = vunpack.c.h.b16 %v11446
    %v11691 = vunpack.c.l.b16 %v11447
    %v11692 = vunpack.c.h.b16 %v11447
    %v11693 = vunpack.c.l.b16 %v11448
    %v11694 = vunpack.c.h.b16 %v11448
    %v11695 = vunpack.c.l.b16 %v11449
    %v11696 = vunpack.c.h.b16 %v11449
    %v11697 = vunpack.c.l.b16 %v11450
    %v11698 = vunpack.c.h.b16 %v11450
    %v11699 = vunpack.c.l.b16 %v11451
    %v11700 = vunpack.c.h.b16 %v11451
    %v11701 = vunpack.c.l.b16 %v11452
    %v11702 = vunpack.c.h.b16 %v11452
    %v11703 = vunpack.c.l.b16 %v11453
    %v11704 = vunpack.c.h.b16 %v11453
    %v11705 = vunpack.c.l.b16 %v11454
    %v11706 = vunpack.c.h.b16 %v11454
    %v11707 = vunpack.c.l.b16 %v11455
    %v11708 = vunpack.c.h.b16 %v11455
    %v11709 = vunpack.c.l.b16 %v11456
    %v11710 = vunpack.c.h.b16 %v11456
    %v11711 = vunpack.c.l.b16 %v11457
    %v11712 = vunpack.c.h.b16 %v11457
    %v11713 = vunpack.c.l.b16 %v11458
    %v11714 = vunpack.c.h.b16 %v11458
    %v11715 = vunpack.c.l.b16 %v11459
    %v11716 = vunpack.c.h.b16 %v11459
    %v11717 = vunpack.c.l.b16 %v11460
    %v11718 = vunpack.c.h.b16 %v11460
    %v11719 = vunpack.c.l.b16 %v11461
    %v11720 = vunpack.c.h.b16 %v11461
    %v11721 = vunpack.c.l.b16 %v11462
    %v11722 = vunpack.c.h.b16 %v11462
    %v11723 = vunpack.c.l.b16 %v11463
    %v11724 = vunpack.c.h.b16 %v11463
    %v11725 = vunpack.c.l.b16 %v11464
    %v11726 = vunpack.c.h.b16 %v11464
    %v11727 = vunpack.c.l.b16 %v11465
    %v11728 = vunpack.c.h.b16 %v11465
    %v11729 = vunpack.c.l.b16 %v11466
    %v11730 = vunpack.c.h.b16 %v11466
    %v11731 = vunpack.c.l.b16 %v11467
    %v11732 = vunpack.c.h.b16 %v11467
    %v11733 = vunpack.c.l.b16 %v11468
    %v11734 = vunpack.c.h.b16 %v11468
    %v11735 = vunpack.c.l.b16 %v11469
    %v11736 = vunpack.c.h.b16 %v11469
    %v11737 = vunpack.c.l.b16 %v11470
    %v11738 = vunpack.c.h.b16 %v11470
    %v11739 = vunpack.c.l.b16 %v11471
    %v11740 = vunpack.c.h.b16 %v11471
    %v11741 = vunpack.c.l.b16 %v11472
    %v11742 = vunpack.c.h.b16 %v11472
    %v11743 = vunpack.c.l.b16 %v11473
    %v11744 = vunpack.c.h.b16 %v11473
    %v11745 = vunpack.c.l.b16 %v11474
    %v11746 = vunpack.c.h.b16 %v11474
    %v11747 = vunpack.c.l.b16 %v11475
    %v11748 = vunpack.c.h.b16 %v11475
    %v11749 = vunpack.c.l.b16 %v11476
    %v11750 = vunpack.c.h.b16 %v11476
    %v11751 = vunpack.c.l.b16 %v11477
    %v11752 = vunpack.c.h.b16 %v11477
    %v11753 = vunpack.c.l.b16 %v11478
    %v11754 = vunpack.c.h.b16 %v11478
    %v11755 = vunpack.c.l.b16 %v11479
    %v11756 = vunpack.c.h.b16 %v11479
    %v11757 = vunpack.c.l.b16 %v11480
    %v11758 = vunpack.c.h.b16 %v11480
    %v11759 = vunpack.c.l.b16 %v11481
    %v11760 = vunpack.c.h.b16 %v11481
    %v11761 = vunpack.c.l.b16 %v11482
    %v11762 = vunpack.c.h.b16 %v11482
    %v11763 = vunpack.c.l.b16 %v11483
    %v11764 = vunpack.c.h.b16 %v11483
    %v11765 = vunpack.c.l.b16 %v11484
    %v11766 = vunpack.c.h.b16 %v11484
    %v11767 = vunpack.c.l.b16 %v11485
    %v11768 = vunpack.c.h.b16 %v11485
    %v11769 = vunpack.c.l.b16 %v11486
    %v11770 = vunpack.c.h.b16 %v11486
    %v11771 = vunpack.c.l.b16 %v11487
    %v11772 = vunpack.c.h.b16 %v11487
    %v11773 = vunpack.c.l.b16 %v11488
    %v11774 = vunpack.c.h.b16 %v11488
    %v11775 = vunpack.c.l.b16 %v11489
    %v11776 = vunpack.c.h.b16 %v11489
    %v11777 = vunpack.c.l.b16 %v11490
    %v11778 = vunpack.c.h.b16 %v11490
    %v11779 = vpack.c.b16 %v11593, %v11587
    %v11780 = vpack.c.b16 %v11594, %v11588
    %v11781 = vpack.c.b16 %v11595, %v11589
    %v11782 = vpack.c.b16 %v11596, %v11590
    %v11783 = vpack.c.b16 %v11597, %v11591
    %v11784 = vpack.c.b16 %v11598, %v11592
    %v11785 = vpack.c.b16 %v11605, %v11599
    %v11786 = vpack.c.b16 %v11606, %v11600
    %v11787 = vpack.c.b16 %v11607, %v11601
    %v11788 = vpack.c.b16 %v11608, %v11602
    %v11789 = vpack.c.b16 %v11609, %v11603
    %v11790 = vpack.c.b16 %v11610, %v11604
    %v11791 = vpack.c.b16 %v11617, %v11611
    %v11792 = vpack.c.b16 %v11618, %v11612
    %v11793 = vpack.c.b16 %v11619, %v11613
    %v11794 = vpack.c.b16 %v11620, %v11614
    %v11795 = vpack.c.b16 %v11621, %v11615
    %v11796 = vpack.c.b16 %v11622, %v11616
    %v11797 = vpack.c.b16 %v11629, %v11623
    %v11798 = vpack.c.b16 %v11630, %v11624
    %v11799 = vpack.c.b16 %v11631, %v11625
    %v11800 = vpack.c.b16 %v11632, %v11626
    %v11801 = vpack.c.b16 %v11633, %v11627
    %v11802 = vpack.c.b16 %v11634, %v11628
    %v11803 = vpack.c.b16 %v11641, %v11635
    %v11804 = vpack.c.b16 %v11642, %v11636
    %v11805 = vpack.c.b16 %v11643, %v11637
    %v11806 = vpack.c.b16 %v11644, %v11638
    %v11807 = vpack.c.b16 %v11645, %v11639
    %v11808 = vpack.c.b16 %v11646, %v11640
    %v11809 = vpack.c.b16 %v11653, %v11647
    %v11810 = vpack.c.b16 %v11654, %v11648
    %v11811 = vpack.c.b16 %v11655, %v11649
    %v11812 = vpack.c.b16 %v11656, %v11650
    %v11813 = vpack.c.b16 %v11657, %v11651
    %v11814 = vpack.c.b16 %v11658, %v11652
    %v11815 = vpack.c.b16 %v11665, %v11659
    %v11816 = vpack.c.b16 %v11666, %v11660
    %v11817 = vpack.c.b16 %v11667, %v11661
    %v11818 = vpack.c.b16 %v11668, %v11662
    %v11819 = vpack.c.b16 %v11669, %v11663
    %v11820 = vpack.c.b16 %v11670, %v11664
    %v11821 = vpack.c.b16 %v11677, %v11671
    %v11822 = vpack.c.b16 %v11678, %v11672
    %v11823 = vpack.c.b16 %v11679, %v11673
    %v11824 = vpack.c.b16 %v11680, %v11674
    %v11825 = vpack.c.b16 %v11681, %v11675
    %v11826 = vpack.c.b16 %v11682, %v11676
    %v11827 = vpack.c.b16 %v11689, %v11683
    %v11828 = vpack.c.b16 %v11690, %v11684
    %v11829 = vpack.c.b16 %v11691, %v11685
    %v11830 = vpack.c.b16 %v11692, %v11686
    %v11831 = vpack.c.b16 %v11693, %v11687
    %v11832 = vpack.c.b16 %v11694, %v11688
    %v11833 = vpack.c.b16 %v11701, %v11695
    %v11834 = vpack.c.b16 %v11702, %v11696
    %v11835 = vpack.c.b16 %v11703, %v11697
    %v11836 = vpack.c.b16 %v11704, %v11698
    %v11837 = vpack.c.b16 %v11705, %v11699
    %v11838 = vpack.c.b16 %v11706, %v11700
    %v11839 = vpack.c.b16 %v11713, %v11707
    %v11840 = vpack.c.b16 %v11714, %v11708
    %v11841 = vpack.c.b16 %v11715, %v11709
    %v11842 = vpack.c.b16 %v11716, %v11710
    %v11843 = vpack.c.b16 %v11717, %v11711
    %v11844 = vpack.c.b16 %v11718, %v11712
    %v11845 = vpack.c.b16 %v11725, %v11719
    %v11846 = vpack.c.b16 %v11726, %v11720
    %v11847 = vpack.c.b16 %v11727, %v11721
    %v11848 = vpack.c.b16 %v11728, %v11722
    %v11849 = vpack.c.b16 %v11729, %v11723
    %v11850 = vpack.c.b16 %v11730, %v11724
    %v11851 = vpack.c.b16 %v11737, %v11731
    %v11852 = vpack.c.b16 %v11738, %v11732
    %v11853 = vpack.c.b16 %v11739, %v11733
    %v11854 = vpack.c.b16 %v11740, %v11734
    %v11855 = vpack.c.b16 %v11741, %v11735
    %v11856 = vpack.c.b16 %v11742, %v11736
    %v11857 = vpack.c.b16 %v11749, %v11743
    %v11858 = vpack.c.b16 %v11750, %v11744
    %v11859 = vpack.c.b16 %v11751, %v11745
    %v11860 = vpack.c.b16 %v11752, %v11746
    %v11861 = vpack.c.b16 %v11753, %v11747
    %v11862 = vpack.c.b16 %v11754, %v11748
    %v11863 = vpack.c.b16 %v11761, %v11755
    %v11864 = vpack.c.b16 %v11762, %v11756
    %v11865 = vpack.c.b16 %v11763, %v11757
    %v11866 = vpack.c.b16 %v11764, %v11758
    %v11867 = vpack.c.b16 %v11765, %v11759
    %v11868 = vpack.c.b16 %v11766, %v11760
    %v11869 = vpack.c.b16 %v11773, %v11767
    %v11870 = vpack.c.b16 %v11774, %v11768
    %v11871 = vpack.c.b16 %v11775, %v11769
    %v11872 = vpack.c.b16 %v11776, %v11770
    %v11873 = vpack.c.b16 %v11777, %v11771
    %v11874 = vpack.c.b16 %v11778, %v11772
    %11971 = vmatprep.subr.bf16.mxu0 %v11780
    %11972 = vmatpush1.bf16.msra.mxu0 %v11779
    %11973 = vmatprep.subr.bf16.mxu0 %v11786
    %11974 = vmatpush1.bf16.msra.mxu0 %v11785
    %11975 = vmatprep.subr.bf16.mxu0 %v11792
    %11976 = vmatpush1.bf16.msra.mxu0 %v11791
    %11977 = vmatprep.subr.bf16.mxu0 %v11798
    %11978 = vmatpush1.bf16.msra.mxu0 %v11797
    %11979 = vmatprep.subr.bf16.mxu0 %v11804
    %11980 = vmatpush1.bf16.msra.mxu0 %v11803
    %11981 = vmatprep.subr.bf16.mxu0 %v11810
    %11982 = vmatpush1.bf16.msra.mxu0 %v11809
    %11983 = vmatprep.subr.bf16.mxu0 %v11816
    %11984 = vmatpush1.bf16.msra.mxu0 %v11815
    %11985 = vmatprep.subr.bf16.mxu0 %v11822
    %11986 = vmatpush1.bf16.msra.mxu0 %v11821
    %11987 = vmatprep.subr.bf16.mxu0 %v11828
    %11988 = vmatpush1.bf16.msra.mxu0 %v11827
    %11989 = vmatprep.subr.bf16.mxu0 %v11834
    %11990 = vmatpush1.bf16.msra.mxu0 %v11833
    %11991 = vmatprep.subr.bf16.mxu0 %v11840
    %11992 = vmatpush1.bf16.msra.mxu0 %v11839
    %11993 = vmatprep.subr.bf16.mxu0 %v11846
    %11994 = vmatpush1.bf16.msra.mxu0 %v11845
    %11995 = vmatprep.subr.bf16.mxu0 %v11852
    %11996 = vmatpush1.bf16.msra.mxu0 %v11851
    %11997 = vmatprep.subr.bf16.mxu0 %v11858
    %11998 = vmatpush1.bf16.msra.mxu0 %v11857
    %11999 = vmatprep.subr.bf16.mxu0 %v11864
    %12000 = vmatpush1.bf16.msra.mxu0 %v11863
    %12001 = vmatprep.subr.bf16.mxu0 %v11870
    %12002 = vmatpush1.bf16.msra.mxu0 %v11869
    %12003 = vmatprep.mubr.bf16.mxu0 %v11394
    %12004 = vmatmul.mubr.bf16.gmra.mrb[0].mxu0 %v11393
    %v12005 = vpop.f32.mrb[0].mxu0
    %v12006 = vadd.f32 0.0, %v12005
    %v12007 = vpop.f32.mrb[0].mxu0
    %v12008 = vadd.f32 0.0, %v12007
    %v12009 = vpop.f32.mrb[0].mxu0
    %v12010 = vpop.f32.mrb[0].mxu0
    %12011 = vdwg.mxu0
    %12012 = vmatprep.subr.bf16.mxu0 %v11782
    %12013 = vmatpush1.bf16.msra.mxu0 %v11781
    %12014 = vmatprep.subr.bf16.mxu0 %v11788
    %12015 = vmatpush1.bf16.msra.mxu0 %v11787
    %12016 = vmatprep.subr.bf16.mxu0 %v11794
    %12017 = vmatpush1.bf16.msra.mxu0 %v11793
    %12018 = vmatprep.subr.bf16.mxu0 %v11800
    %12019 = vmatpush1.bf16.msra.mxu0 %v11799
    %12020 = vmatprep.subr.bf16.mxu0 %v11806
    %12021 = vmatpush1.bf16.msra.mxu0 %v11805
    %12022 = vmatprep.subr.bf16.mxu0 %v11812
    %12023 = vmatpush1.bf16.msra.mxu0 %v11811
    %12024 = vmatprep.subr.bf16.mxu0 %v11818
    %12025 = vmatpush1.bf16.msra.mxu0 %v11817
    %12026 = vmatprep.subr.bf16.mxu0 %v11824
    %12027 = vmatpush1.bf16.msra.mxu0 %v11823
    %12028 = vmatprep.subr.bf16.mxu0 %v11830
    %12029 = vmatpush1.bf16.msra.mxu0 %v11829
    %12030 = vmatprep.subr.bf16.mxu0 %v11836
    %12031 = vmatpush1.bf16.msra.mxu0 %v11835
    %12032 = vmatprep.subr.bf16.mxu0 %v11842
    %12033 = vmatpush1.bf16.msra.mxu0 %v11841
    %12034 = vmatprep.subr.bf16.mxu0 %v11848
    %12035 = vmatpush1.bf16.msra.mxu0 %v11847
    %12036 = vmatprep.subr.bf16.mxu0 %v11854
    %12037 = vmatpush1.bf16.msra.mxu0 %v11853
    %12038 = vmatprep.subr.bf16.mxu0 %v11860
    %12039 = vmatpush1.bf16.msra.mxu0 %v11859
    %12040 = vmatprep.subr.bf16.mxu0 %v11866
    %12041 = vmatpush1.bf16.msra.mxu0 %v11865
    %12042 = vmatprep.subr.bf16.mxu0 %v11872
    %12043 = vmatpush1.bf16.msra.mxu0 %v11871
    %12044 = vmatprep.mubr.bf16.mxu0 %v11394
    %12045 = vmatmul.mubr.bf16.gmra.mrb[0].mxu0 %v11393
    %v12046 = vpop.f32.mrb[0].mxu0
    %v12047 = vadd.f32 0.0, %v12046
    %v12048 = vpop.f32.mrb[0].mxu0
    %v12049 = vadd.f32 0.0, %v12048
    %v12050 = vpop.f32.mrb[0].mxu0
    %v12051 = vpop.f32.mrb[0].mxu0
    %12052 = vdwg.mxu0
    %12053 = vmatprep.subr.bf16.mxu0 %v11784
    %12054 = vmatpush1.bf16.msra.mxu0 %v11783
    %12055 = vmatprep.subr.bf16.mxu0 %v11790
    %12056 = vmatpush1.bf16.msra.mxu0 %v11789
    %12057 = vmatprep.subr.bf16.mxu0 %v11796
    %12058 = vmatpush1.bf16.msra.mxu0 %v11795
    %12059 = vmatprep.subr.bf16.mxu0 %v11802
    %12060 = vmatpush1.bf16.msra.mxu0 %v11801
    %12061 = vmatprep.subr.bf16.mxu0 %v11808
    %12062 = vmatpush1.bf16.msra.mxu0 %v11807
    %12063 = vmatprep.subr.bf16.mxu0 %v11814
    %12064 = vmatpush1.bf16.msra.mxu0 %v11813
    %12065 = vmatprep.subr.bf16.mxu0 %v11820
    %12066 = vmatpush1.bf16.msra.mxu0 %v11819
    %12067 = vmatprep.subr.bf16.mxu0 %v11826
    %12068 = vmatpush1.bf16.msra.mxu0 %v11825
    %12069 = vmatprep.subr.bf16.mxu0 %v11832
    %12070 = vmatpush1.bf16.msra.mxu0 %v11831
    %12071 = vmatprep.subr.bf16.mxu0 %v11838
    %12072 = vmatpush1.bf16.msra.mxu0 %v11837
    %12073 = vmatprep.subr.bf16.mxu0 %v11844
    %12074 = vmatpush1.bf16.msra.mxu0 %v11843
    %12075 = vmatprep.subr.bf16.mxu0 %v11850
    %12076 = vmatpush1.bf16.msra.mxu0 %v11849
    %12077 = vmatprep.subr.bf16.mxu0 %v11856
    %12078 = vmatpush1.bf16.msra.mxu0 %v11855
    %12079 = vmatprep.subr.bf16.mxu0 %v11862
    %12080 = vmatpush1.bf16.msra.mxu0 %v11861
    %12081 = vmatprep.subr.bf16.mxu0 %v11868
    %12082 = vmatpush1.bf16.msra.mxu0 %v11867
    %12083 = vmatprep.subr.bf16.mxu0 %v11874
    %12084 = vmatpush1.bf16.msra.mxu0 %v11873
    %12085 = vmatprep.mubr.bf16.mxu0 %v11394
    %12086 = vmatmul.mubr.bf16.gmra.mrb[0].mxu0 %v11393
    %v12087 = vpop.f32.mrb[0].mxu0
    %v12088 = vadd.f32 0.0, %v12087
    %v12089 = vpop.f32.mrb[0].mxu0
    %v12090 = vadd.f32 0.0, %v12089
    %v12091 = vpop.f32.mrb[0].mxu0
    %v12092 = vpop.f32.mrb[0].mxu0
    %12093 = vdwg.mxu0
    %s12094 = scalar_lea.vmem [#allocation3], 53
    %v12095 = vld [vmem:[%s12094] ss:$8 sm:$0xf]
    %v12096 = vld [vmem:[%s12094] ss:$8 sm:$0x30]
    %v12097 = vor.u32 %v12095, %v12096
    %v12100 = vcombine.low %v12006, %v12008
    %v12102 = vunpack.c.l.s4 1966171168
    %v12103 = vunpack.c.0.s8 %v12102
    %v12104 = vlaneseq
    %v12105 = vshrl.u32 %v12104, 7
    %v12106 = vsub.s32 %v12103, %v12105
    %v12107 = vrot.slane %v12100, %v12106
    %v12109 = vunpack.c.l.s4 1966171168
    %v12110 = vunpack.c.0.s8 %v12109
    %v12111 = vlaneseq
    %v12112 = vshrl.u32 %v12111, 7
    %v12113 = vsub.s32 %v12110, %v12112
    %v12114 = vrot.slane %v12107, %v12113
    %v12116 = vadd.f32 %v12097, %v12114
    %v12117 = vxor.u32 %v12116, 2147483648
    %v12118 = vmul.f32 %v12117, 1.442695
    %v12119 = vpow.pop %v12118
    %v12120 = vadd.f32 %v12119, 1.0
    %v12121 = vrcp.pop %v12120
    %v12122 = vmul.f32 1.0, %v12121
    %v12124 = vrot.slane %v12097, 2
    %v12128 = vcombine.low %v12047, %v12049
    %v12130 = vunpack.c.l.s4 1966171168
    %v12131 = vunpack.c.0.s8 %v12130
    %v12132 = vlaneseq
    %v12133 = vshrl.u32 %v12132, 7
    %v12134 = vsub.s32 %v12131, %v12133
    %v12135 = vrot.slane %v12128, %v12134
    %v12137 = vunpack.c.l.s4 1966171168
    %v12138 = vunpack.c.0.s8 %v12137
    %v12139 = vlaneseq
    %v12140 = vshrl.u32 %v12139, 7
    %v12141 = vsub.s32 %v12138, %v12140
    %v12142 = vrot.slane %v12135, %v12141
    %v12144 = vadd.f32 %v12124, %v12142
    %v12145 = vxor.u32 %v12144, 2147483648
    %v12146 = vmul.f32 %v12145, 1.442695
    %v12147 = vpow.pop %v12146
    %v12148 = vadd.f32 %v12147, 1.0
    %v12149 = vrcp.pop %v12148
    %v12150 = vmul.f32 1.0, %v12149
    %v12151 = vld [vmem:[%s5] sm:$0x3]
    %v12153 = vlaneseq
    %v12154 = vshrl.u32 %v12153, 7
    %v12155 = vsub.s32 0, %v12154
    %v12156 = vrot.slane %v12151, %v12155
    %v12157 = vlaneseq
    %v12158 = vshrl.u32 %v12157, 7
    %v12159 = vsub.s32 1, %v12158
    %v12160 = vrot.slane %v12151, %v12159
    %v12163 = vadd.f32 %v12088, %v12156
    %v12164 = vadd.f32 %v12090, %v12160
    %v12167 = vcombine.low %v12163, %v12164
    %v12169 = vunpack.c.l.s4 1966171168
    %v12170 = vunpack.c.0.s8 %v12169
    %v12171 = vlaneseq
    %v12172 = vshrl.u32 %v12171, 7
    %v12173 = vsub.s32 %v12170, %v12172
    %v12174 = vrot.slane %v12167, %v12173
    %v12176 = vunpack.c.l.s4 1966171168
    %v12177 = vunpack.c.0.s8 %v12176
    %v12178 = vlaneseq
    %v12179 = vshrl.u32 %v12178, 7
    %v12180 = vsub.s32 %v12177, %v12179
    %v12181 = vrot.slane %v12174, %v12180
    %v12183 = vmul.f32 %v12122, %v12181
    %v12184 = vrot.slane %v12097, 4
    %v12186 = vadd.f32 %v12184, %v12183
    %v12187 = vtanh.pop %v12186
    %v12188 = vsub.f32 %v11378, %v12187
    %v12189 = vmul.f32 %v12150, %v12188
    %v12190 = vadd.f32 %v12187, %v12189
    %s12191 = scalar_lea.vmem [#allocation9], 21
    %12192 = vst.msk [vmem:[%s12191] ss:$8 sm:$0x3] %vm1635, %v12190
    %12193 = vst.msk [vmem:[%s12191] ss:$8 sm:$0x0] %vm1635, %v12190
    %v12195 = vlaneseq
    %v12196 = vshrl.u32 %v12195, 7
    %v12197 = vsub.s32 0, %v12196
    %v12198 = vrot.slane %v12190, %v12197
    %v12199 = vlaneseq
    %v12200 = vshrl.u32 %v12199, 7
    %v12201 = vsub.s32 1, %v12200
    %v12202 = vrot.slane %v12190, %v12201
    %v12205 = vpack.c.bf16 %v12198, %v12198
    %v12206 = vpack.c.bf16 %v12202, %v12202
    %v12207 = vld [vmem:[#allocation7] sm:$0xff]
    %v12208 = vld [vmem:[#allocation7 + $0x8] sm:$0xff]
    %v12209 = vld [vmem:[#allocation7 + $0x10] sm:$0xff]
    %v12210 = vld [vmem:[#allocation7 + $0x18] sm:$0xff]
    %v12211 = vld [vmem:[#allocation7 + $0x20] sm:$0xff]
    %v12212 = vld [vmem:[#allocation7 + $0x28] sm:$0xff]
    %v12213 = vld [vmem:[#allocation7 + $0x30] sm:$0xff]
    %v12214 = vld [vmem:[#allocation7 + $0x38] sm:$0xff]
    %v12215 = vld [vmem:[#allocation7 + $0x40] sm:$0xff]
    %v12216 = vld [vmem:[#allocation7 + $0x48] sm:$0xff]
    %v12217 = vld [vmem:[#allocation7 + $0x50] sm:$0xff]
    %v12218 = vld [vmem:[#allocation7 + $0x58] sm:$0xff]
    %v12219 = vld [vmem:[#allocation7 + $0x60] sm:$0xff]
    %v12220 = vld [vmem:[#allocation7 + $0x68] sm:$0xff]
    %v12221 = vld [vmem:[#allocation7 + $0x70] sm:$0xff]
    %v12222 = vld [vmem:[#allocation7 + $0x78] sm:$0xff]
    %v12223 = vld [vmem:[#allocation7 + $0x80] sm:$0xff]
    %v12224 = vld [vmem:[#allocation7 + $0x88] sm:$0xff]
    %v12225 = vld [vmem:[#allocation7 + $0x90] sm:$0xff]
    %v12226 = vld [vmem:[#allocation7 + $0x98] sm:$0xff]
    %v12227 = vld [vmem:[#allocation7 + $0xa0] sm:$0xff]
    %v12228 = vld [vmem:[#allocation7 + $0xa8] sm:$0xff]
    %v12229 = vld [vmem:[#allocation7 + $0xb0] sm:$0xff]
    %v12230 = vld [vmem:[#allocation7 + $0xb8] sm:$0xff]
    %v12231 = vld [vmem:[#allocation7 + $0xc0] sm:$0xff]
    %v12232 = vld [vmem:[#allocation7 + $0xc8] sm:$0xff]
    %v12233 = vld [vmem:[#allocation7 + $0xd0] sm:$0xff]
    %v12234 = vld [vmem:[#allocation7 + $0xd8] sm:$0xff]
    %v12235 = vld [vmem:[#allocation7 + $0xe0] sm:$0xff]
    %v12236 = vld [vmem:[#allocation7 + $0xe8] sm:$0xff]
    %v12237 = vld [vmem:[#allocation7 + $0xf0] sm:$0xff]
    %v12238 = vld [vmem:[#allocation7 + $0xf8] sm:$0xff]
    %v12239 = vld [vmem:[#allocation7 + $0x100] sm:$0xff]
    %v12240 = vld [vmem:[#allocation7 + $0x108] sm:$0xff]
    %v12241 = vld [vmem:[#allocation7 + $0x110] sm:$0xff]
    %v12242 = vld [vmem:[#allocation7 + $0x118] sm:$0xff]
    %v12243 = vld [vmem:[#allocation7 + $0x120] sm:$0xff]
    %v12244 = vld [vmem:[#allocation7 + $0x128] sm:$0xff]
    %v12245 = vld [vmem:[#allocation7 + $0x130] sm:$0xff]
    %v12246 = vld [vmem:[#allocation7 + $0x138] sm:$0xff]
    %v12247 = vld [vmem:[#allocation7 + $0x140] sm:$0xff]
    %v12248 = vld [vmem:[#allocation7 + $0x148] sm:$0xff]
    %v12249 = vld [vmem:[#allocation7 + $0x150] sm:$0xff]
    %v12250 = vld [vmem:[#allocation7 + $0x158] sm:$0xff]
    %v12251 = vld [vmem:[#allocation7 + $0x160] sm:$0xff]
    %v12252 = vld [vmem:[#allocation7 + $0x168] sm:$0xff]
    %v12253 = vld [vmem:[#allocation7 + $0x170] sm:$0xff]
    %v12254 = vld [vmem:[#allocation7 + $0x178] sm:$0xff]
    %v12255 = vld [vmem:[#allocation7 + $0x180] sm:$0xff]
    %v12256 = vld [vmem:[#allocation7 + $0x188] sm:$0xff]
    %v12257 = vld [vmem:[#allocation7 + $0x190] sm:$0xff]
    %v12258 = vld [vmem:[#allocation7 + $0x198] sm:$0xff]
    %v12259 = vld [vmem:[#allocation7 + $0x1a0] sm:$0xff]
    %v12260 = vld [vmem:[#allocation7 + $0x1a8] sm:$0xff]
    %v12261 = vld [vmem:[#allocation7 + $0x1b0] sm:$0xff]
    %v12262 = vld [vmem:[#allocation7 + $0x1b8] sm:$0xff]
    %v12263 = vld [vmem:[#allocation7 + $0x1c0] sm:$0xff]
    %v12264 = vld [vmem:[#allocation7 + $0x1c8] sm:$0xff]
    %v12265 = vld [vmem:[#allocation7 + $0x1d0] sm:$0xff]
    %v12266 = vld [vmem:[#allocation7 + $0x1d8] sm:$0xff]
    %v12267 = vld [vmem:[#allocation7 + $0x1e0] sm:$0xff]
    %v12268 = vld [vmem:[#allocation7 + $0x1e8] sm:$0xff]
    %v12269 = vld [vmem:[#allocation7 + $0x1f0] sm:$0xff]
    %v12270 = vld [vmem:[#allocation7 + $0x1f8] sm:$0xff]
    %v12271 = vld [vmem:[#allocation7 + $0x200] sm:$0xff]
    %v12272 = vld [vmem:[#allocation7 + $0x208] sm:$0xff]
    %v12273 = vld [vmem:[#allocation7 + $0x210] sm:$0xff]
    %v12274 = vld [vmem:[#allocation7 + $0x218] sm:$0xff]
    %v12275 = vld [vmem:[#allocation7 + $0x220] sm:$0xff]
    %v12276 = vld [vmem:[#allocation7 + $0x228] sm:$0xff]
    %v12277 = vld [vmem:[#allocation7 + $0x230] sm:$0xff]
    %v12278 = vld [vmem:[#allocation7 + $0x238] sm:$0xff]
    %v12279 = vld [vmem:[#allocation7 + $0x240] sm:$0xff]
    %v12280 = vld [vmem:[#allocation7 + $0x248] sm:$0xff]
    %v12281 = vld [vmem:[#allocation7 + $0x250] sm:$0xff]
    %v12282 = vld [vmem:[#allocation7 + $0x258] sm:$0xff]
    %v12283 = vld [vmem:[#allocation7 + $0x260] sm:$0xff]
    %v12284 = vld [vmem:[#allocation7 + $0x268] sm:$0xff]
    %v12285 = vld [vmem:[#allocation7 + $0x270] sm:$0xff]
    %v12286 = vld [vmem:[#allocation7 + $0x278] sm:$0xff]
    %v12287 = vld [vmem:[#allocation7 + $0x280] sm:$0xff]
    %v12288 = vld [vmem:[#allocation7 + $0x288] sm:$0xff]
    %v12289 = vld [vmem:[#allocation7 + $0x290] sm:$0xff]
    %v12290 = vld [vmem:[#allocation7 + $0x298] sm:$0xff]
    %v12291 = vld [vmem:[#allocation7 + $0x2a0] sm:$0xff]
    %v12292 = vld [vmem:[#allocation7 + $0x2a8] sm:$0xff]
    %v12293 = vld [vmem:[#allocation7 + $0x2b0] sm:$0xff]
    %v12294 = vld [vmem:[#allocation7 + $0x2b8] sm:$0xff]
    %v12295 = vld [vmem:[#allocation7 + $0x2c0] sm:$0xff]
    %v12296 = vld [vmem:[#allocation7 + $0x2c8] sm:$0xff]
    %v12297 = vld [vmem:[#allocation7 + $0x2d0] sm:$0xff]
    %v12298 = vld [vmem:[#allocation7 + $0x2d8] sm:$0xff]
    %v12299 = vld [vmem:[#allocation7 + $0x2e0] sm:$0xff]
    %v12300 = vld [vmem:[#allocation7 + $0x2e8] sm:$0xff]
    %v12301 = vld [vmem:[#allocation7 + $0x2f0] sm:$0xff]
    %v12302 = vld [vmem:[#allocation7 + $0x2f8] sm:$0xff]
    %v12399 = vunpack.c.l.b16 %v12207
    %v12400 = vunpack.c.h.b16 %v12207
    %v12401 = vunpack.c.l.b16 %v12208
    %v12402 = vunpack.c.h.b16 %v12208
    %v12403 = vunpack.c.l.b16 %v12209
    %v12404 = vunpack.c.h.b16 %v12209
    %v12405 = vunpack.c.l.b16 %v12210
    %v12406 = vunpack.c.h.b16 %v12210
    %v12407 = vunpack.c.l.b16 %v12211
    %v12408 = vunpack.c.h.b16 %v12211
    %v12409 = vunpack.c.l.b16 %v12212
    %v12410 = vunpack.c.h.b16 %v12212
    %v12411 = vunpack.c.l.b16 %v12213
    %v12412 = vunpack.c.h.b16 %v12213
    %v12413 = vunpack.c.l.b16 %v12214
    %v12414 = vunpack.c.h.b16 %v12214
    %v12415 = vunpack.c.l.b16 %v12215
    %v12416 = vunpack.c.h.b16 %v12215
    %v12417 = vunpack.c.l.b16 %v12216
    %v12418 = vunpack.c.h.b16 %v12216
    %v12419 = vunpack.c.l.b16 %v12217
    %v12420 = vunpack.c.h.b16 %v12217
    %v12421 = vunpack.c.l.b16 %v12218
    %v12422 = vunpack.c.h.b16 %v12218
    %v12423 = vunpack.c.l.b16 %v12219
    %v12424 = vunpack.c.h.b16 %v12219
    %v12425 = vunpack.c.l.b16 %v12220
    %v12426 = vunpack.c.h.b16 %v12220
    %v12427 = vunpack.c.l.b16 %v12221
    %v12428 = vunpack.c.h.b16 %v12221
    %v12429 = vunpack.c.l.b16 %v12222
    %v12430 = vunpack.c.h.b16 %v12222
    %v12431 = vunpack.c.l.b16 %v12223
    %v12432 = vunpack.c.h.b16 %v12223
    %v12433 = vunpack.c.l.b16 %v12224
    %v12434 = vunpack.c.h.b16 %v12224
    %v12435 = vunpack.c.l.b16 %v12225
    %v12436 = vunpack.c.h.b16 %v12225
    %v12437 = vunpack.c.l.b16 %v12226
    %v12438 = vunpack.c.h.b16 %v12226
    %v12439 = vunpack.c.l.b16 %v12227
    %v12440 = vunpack.c.h.b16 %v12227
    %v12441 = vunpack.c.l.b16 %v12228
    %v12442 = vunpack.c.h.b16 %v12228
    %v12443 = vunpack.c.l.b16 %v12229
    %v12444 = vunpack.c.h.b16 %v12229
    %v12445 = vunpack.c.l.b16 %v12230
    %v12446 = vunpack.c.h.b16 %v12230
    %v12447 = vunpack.c.l.b16 %v12231
    %v12448 = vunpack.c.h.b16 %v12231
    %v12449 = vunpack.c.l.b16 %v12232
    %v12450 = vunpack.c.h.b16 %v12232
    %v12451 = vunpack.c.l.b16 %v12233
    %v12452 = vunpack.c.h.b16 %v12233
    %v12453 = vunpack.c.l.b16 %v12234
    %v12454 = vunpack.c.h.b16 %v12234
    %v12455 = vunpack.c.l.b16 %v12235
    %v12456 = vunpack.c.h.b16 %v12235
    %v12457 = vunpack.c.l.b16 %v12236
    %v12458 = vunpack.c.h.b16 %v12236
    %v12459 = vunpack.c.l.b16 %v12237
    %v12460 = vunpack.c.h.b16 %v12237
    %v12461 = vunpack.c.l.b16 %v12238
    %v12462 = vunpack.c.h.b16 %v12238
    %v12463 = vunpack.c.l.b16 %v12239
    %v12464 = vunpack.c.h.b16 %v12239
    %v12465 = vunpack.c.l.b16 %v12240
    %v12466 = vunpack.c.h.b16 %v12240
    %v12467 = vunpack.c.l.b16 %v12241
    %v12468 = vunpack.c.h.b16 %v12241
    %v12469 = vunpack.c.l.b16 %v12242
    %v12470 = vunpack.c.h.b16 %v12242
    %v12471 = vunpack.c.l.b16 %v12243
    %v12472 = vunpack.c.h.b16 %v12243
    %v12473 = vunpack.c.l.b16 %v12244
    %v12474 = vunpack.c.h.b16 %v12244
    %v12475 = vunpack.c.l.b16 %v12245
    %v12476 = vunpack.c.h.b16 %v12245
    %v12477 = vunpack.c.l.b16 %v12246
    %v12478 = vunpack.c.h.b16 %v12246
    %v12479 = vunpack.c.l.b16 %v12247
    %v12480 = vunpack.c.h.b16 %v12247
    %v12481 = vunpack.c.l.b16 %v12248
    %v12482 = vunpack.c.h.b16 %v12248
    %v12483 = vunpack.c.l.b16 %v12249
    %v12484 = vunpack.c.h.b16 %v12249
    %v12485 = vunpack.c.l.b16 %v12250
    %v12486 = vunpack.c.h.b16 %v12250
    %v12487 = vunpack.c.l.b16 %v12251
    %v12488 = vunpack.c.h.b16 %v12251
    %v12489 = vunpack.c.l.b16 %v12252
    %v12490 = vunpack.c.h.b16 %v12252
    %v12491 = vunpack.c.l.b16 %v12253
    %v12492 = vunpack.c.h.b16 %v12253
    %v12493 = vunpack.c.l.b16 %v12254
    %v12494 = vunpack.c.h.b16 %v12254
    %v12495 = vunpack.c.l.b16 %v12255
    %v12496 = vunpack.c.h.b16 %v12255
    %v12497 = vunpack.c.l.b16 %v12256
    %v12498 = vunpack.c.h.b16 %v12256
    %v12499 = vunpack.c.l.b16 %v12257
    %v12500 = vunpack.c.h.b16 %v12257
    %v12501 = vunpack.c.l.b16 %v12258
    %v12502 = vunpack.c.h.b16 %v12258
    %v12503 = vunpack.c.l.b16 %v12259
    %v12504 = vunpack.c.h.b16 %v12259
    %v12505 = vunpack.c.l.b16 %v12260
    %v12506 = vunpack.c.h.b16 %v12260
    %v12507 = vunpack.c.l.b16 %v12261
    %v12508 = vunpack.c.h.b16 %v12261
    %v12509 = vunpack.c.l.b16 %v12262
    %v12510 = vunpack.c.h.b16 %v12262
    %v12511 = vunpack.c.l.b16 %v12263
    %v12512 = vunpack.c.h.b16 %v12263
    %v12513 = vunpack.c.l.b16 %v12264
    %v12514 = vunpack.c.h.b16 %v12264
    %v12515 = vunpack.c.l.b16 %v12265
    %v12516 = vunpack.c.h.b16 %v12265
    %v12517 = vunpack.c.l.b16 %v12266
    %v12518 = vunpack.c.h.b16 %v12266
    %v12519 = vunpack.c.l.b16 %v12267
    %v12520 = vunpack.c.h.b16 %v12267
    %v12521 = vunpack.c.l.b16 %v12268
    %v12522 = vunpack.c.h.b16 %v12268
    %v12523 = vunpack.c.l.b16 %v12269
    %v12524 = vunpack.c.h.b16 %v12269
    %v12525 = vunpack.c.l.b16 %v12270
    %v12526 = vunpack.c.h.b16 %v12270
    %v12527 = vunpack.c.l.b16 %v12271
    %v12528 = vunpack.c.h.b16 %v12271
    %v12529 = vunpack.c.l.b16 %v12272
    %v12530 = vunpack.c.h.b16 %v12272
    %v12531 = vunpack.c.l.b16 %v12273
    %v12532 = vunpack.c.h.b16 %v12273
    %v12533 = vunpack.c.l.b16 %v12274
    %v12534 = vunpack.c.h.b16 %v12274
    %v12535 = vunpack.c.l.b16 %v12275
    %v12536 = vunpack.c.h.b16 %v12275
    %v12537 = vunpack.c.l.b16 %v12276
    %v12538 = vunpack.c.h.b16 %v12276
    %v12539 = vunpack.c.l.b16 %v12277
    %v12540 = vunpack.c.h.b16 %v12277
    %v12541 = vunpack.c.l.b16 %v12278
    %v12542 = vunpack.c.h.b16 %v12278
    %v12543 = vunpack.c.l.b16 %v12279
    %v12544 = vunpack.c.h.b16 %v12279
    %v12545 = vunpack.c.l.b16 %v12280
    %v12546 = vunpack.c.h.b16 %v12280
    %v12547 = vunpack.c.l.b16 %v12281
    %v12548 = vunpack.c.h.b16 %v12281
    %v12549 = vunpack.c.l.b16 %v12282
    %v12550 = vunpack.c.h.b16 %v12282
    %v12551 = vunpack.c.l.b16 %v12283
    %v12552 = vunpack.c.h.b16 %v12283
    %v12553 = vunpack.c.l.b16 %v12284
    %v12554 = vunpack.c.h.b16 %v12284
    %v12555 = vunpack.c.l.b16 %v12285
    %v12556 = vunpack.c.h.b16 %v12285
    %v12557 = vunpack.c.l.b16 %v12286
    %v12558 = vunpack.c.h.b16 %v12286
    %v12559 = vunpack.c.l.b16 %v12287
    %v12560 = vunpack.c.h.b16 %v12287
    %v12561 = vunpack.c.l.b16 %v12288
    %v12562 = vunpack.c.h.b16 %v12288
    %v12563 = vunpack.c.l.b16 %v12289
    %v12564 = vunpack.c.h.b16 %v12289
    %v12565 = vunpack.c.l.b16 %v12290
    %v12566 = vunpack.c.h.b16 %v12290
    %v12567 = vunpack.c.l.b16 %v12291
    %v12568 = vunpack.c.h.b16 %v12291
    %v12569 = vunpack.c.l.b16 %v12292
    %v12570 = vunpack.c.h.b16 %v12292
    %v12571 = vunpack.c.l.b16 %v12293
    %v12572 = vunpack.c.h.b16 %v12293
    %v12573 = vunpack.c.l.b16 %v12294
    %v12574 = vunpack.c.h.b16 %v12294
    %v12575 = vunpack.c.l.b16 %v12295
    %v12576 = vunpack.c.h.b16 %v12295
    %v12577 = vunpack.c.l.b16 %v12296
    %v12578 = vunpack.c.h.b16 %v12296
    %v12579 = vunpack.c.l.b16 %v12297
    %v12580 = vunpack.c.h.b16 %v12297
    %v12581 = vunpack.c.l.b16 %v12298
    %v12582 = vunpack.c.h.b16 %v12298
    %v12583 = vunpack.c.l.b16 %v12299
    %v12584 = vunpack.c.h.b16 %v12299
    %v12585 = vunpack.c.l.b16 %v12300
    %v12586 = vunpack.c.h.b16 %v12300
    %v12587 = vunpack.c.l.b16 %v12301
    %v12588 = vunpack.c.h.b16 %v12301
    %v12589 = vunpack.c.l.b16 %v12302
    %v12590 = vunpack.c.h.b16 %v12302
    %v12591 = vpack.c.b16 %v12405, %v12399
    %v12592 = vpack.c.b16 %v12406, %v12400
    %v12593 = vpack.c.b16 %v12407, %v12401
    %v12594 = vpack.c.b16 %v12408, %v12402
    %v12595 = vpack.c.b16 %v12409, %v12403
    %v12596 = vpack.c.b16 %v12410, %v12404
    %v12597 = vpack.c.b16 %v12417, %v12411
    %v12598 = vpack.c.b16 %v12418, %v12412
    %v12599 = vpack.c.b16 %v12419, %v12413
    %v12600 = vpack.c.b16 %v12420, %v12414
    %v12601 = vpack.c.b16 %v12421, %v12415
    %v12602 = vpack.c.b16 %v12422, %v12416
    %v12603 = vpack.c.b16 %v12429, %v12423
    %v12604 = vpack.c.b16 %v12430, %v12424
    %v12605 = vpack.c.b16 %v12431, %v12425
    %v12606 = vpack.c.b16 %v12432, %v12426
    %v12607 = vpack.c.b16 %v12433, %v12427
    %v12608 = vpack.c.b16 %v12434, %v12428
    %v12609 = vpack.c.b16 %v12441, %v12435
    %v12610 = vpack.c.b16 %v12442, %v12436
    %v12611 = vpack.c.b16 %v12443, %v12437
    %v12612 = vpack.c.b16 %v12444, %v12438
    %v12613 = vpack.c.b16 %v12445, %v12439
    %v12614 = vpack.c.b16 %v12446, %v12440
    %v12615 = vpack.c.b16 %v12453, %v12447
    %v12616 = vpack.c.b16 %v12454, %v12448
    %v12617 = vpack.c.b16 %v12455, %v12449
    %v12618 = vpack.c.b16 %v12456, %v12450
    %v12619 = vpack.c.b16 %v12457, %v12451
    %v12620 = vpack.c.b16 %v12458, %v12452
    %v12621 = vpack.c.b16 %v12465, %v12459
    %v12622 = vpack.c.b16 %v12466, %v12460
    %v12623 = vpack.c.b16 %v12467, %v12461
    %v12624 = vpack.c.b16 %v12468, %v12462
    %v12625 = vpack.c.b16 %v12469, %v12463
    %v12626 = vpack.c.b16 %v12470, %v12464
    %v12627 = vpack.c.b16 %v12477, %v12471
    %v12628 = vpack.c.b16 %v12478, %v12472
    %v12629 = vpack.c.b16 %v12479, %v12473
    %v12630 = vpack.c.b16 %v12480, %v12474
    %v12631 = vpack.c.b16 %v12481, %v12475
    %v12632 = vpack.c.b16 %v12482, %v12476
    %v12633 = vpack.c.b16 %v12489, %v12483
    %v12634 = vpack.c.b16 %v12490, %v12484
    %v12635 = vpack.c.b16 %v12491, %v12485
    %v12636 = vpack.c.b16 %v12492, %v12486
    %v12637 = vpack.c.b16 %v12493, %v12487
    %v12638 = vpack.c.b16 %v12494, %v12488
    %v12639 = vpack.c.b16 %v12501, %v12495
    %v12640 = vpack.c.b16 %v12502, %v12496
    %v12641 = vpack.c.b16 %v12503, %v12497
    %v12642 = vpack.c.b16 %v12504, %v12498
    %v12643 = vpack.c.b16 %v12505, %v12499
    %v12644 = vpack.c.b16 %v12506, %v12500
    %v12645 = vpack.c.b16 %v12513, %v12507
    %v12646 = vpack.c.b16 %v12514, %v12508
    %v12647 = vpack.c.b16 %v12515, %v12509
    %v12648 = vpack.c.b16 %v12516, %v12510
    %v12649 = vpack.c.b16 %v12517, %v12511
    %v12650 = vpack.c.b16 %v12518, %v12512
    %v12651 = vpack.c.b16 %v12525, %v12519
    %v12652 = vpack.c.b16 %v12526, %v12520
    %v12653 = vpack.c.b16 %v12527, %v12521
    %v12654 = vpack.c.b16 %v12528, %v12522
    %v12655 = vpack.c.b16 %v12529, %v12523
    %v12656 = vpack.c.b16 %v12530, %v12524
    %v12657 = vpack.c.b16 %v12537, %v12531
    %v12658 = vpack.c.b16 %v12538, %v12532
    %v12659 = vpack.c.b16 %v12539, %v12533
    %v12660 = vpack.c.b16 %v12540, %v12534
    %v12661 = vpack.c.b16 %v12541, %v12535
    %v12662 = vpack.c.b16 %v12542, %v12536
    %v12663 = vpack.c.b16 %v12549, %v12543
    %v12664 = vpack.c.b16 %v12550, %v12544
    %v12665 = vpack.c.b16 %v12551, %v12545
    %v12666 = vpack.c.b16 %v12552, %v12546
    %v12667 = vpack.c.b16 %v12553, %v12547
    %v12668 = vpack.c.b16 %v12554, %v12548
    %v12669 = vpack.c.b16 %v12561, %v12555
    %v12670 = vpack.c.b16 %v12562, %v12556
    %v12671 = vpack.c.b16 %v12563, %v12557
    %v12672 = vpack.c.b16 %v12564, %v12558
    %v12673 = vpack.c.b16 %v12565, %v12559
    %v12674 = vpack.c.b16 %v12566, %v12560
    %v12675 = vpack.c.b16 %v12573, %v12567
    %v12676 = vpack.c.b16 %v12574, %v12568
    %v12677 = vpack.c.b16 %v12575, %v12569
    %v12678 = vpack.c.b16 %v12576, %v12570
    %v12679 = vpack.c.b16 %v12577, %v12571
    %v12680 = vpack.c.b16 %v12578, %v12572
    %v12681 = vpack.c.b16 %v12585, %v12579
    %v12682 = vpack.c.b16 %v12586, %v12580
    %v12683 = vpack.c.b16 %v12587, %v12581
    %v12684 = vpack.c.b16 %v12588, %v12582
    %v12685 = vpack.c.b16 %v12589, %v12583
    %v12686 = vpack.c.b16 %v12590, %v12584
    %12783 = vmatprep.subr.bf16.mxu0 %v12592
    %12784 = vmatpush1.bf16.msra.mxu0 %v12591
    %12785 = vmatprep.subr.bf16.mxu0 %v12598
    %12786 = vmatpush1.bf16.msra.mxu0 %v12597
    %12787 = vmatprep.subr.bf16.mxu0 %v12604
    %12788 = vmatpush1.bf16.msra.mxu0 %v12603
    %12789 = vmatprep.subr.bf16.mxu0 %v12610
    %12790 = vmatpush1.bf16.msra.mxu0 %v12609
    %12791 = vmatprep.subr.bf16.mxu0 %v12616
    %12792 = vmatpush1.bf16.msra.mxu0 %v12615
    %12793 = vmatprep.subr.bf16.mxu0 %v12622
    %12794 = vmatpush1.bf16.msra.mxu0 %v12621
    %12795 = vmatprep.subr.bf16.mxu0 %v12628
    %12796 = vmatpush1.bf16.msra.mxu0 %v12627
    %12797 = vmatprep.subr.bf16.mxu0 %v12634
    %12798 = vmatpush1.bf16.msra.mxu0 %v12633
    %12799 = vmatprep.subr.bf16.mxu0 %v12640
    %12800 = vmatpush1.bf16.msra.mxu0 %v12639
    %12801 = vmatprep.subr.bf16.mxu0 %v12646
    %12802 = vmatpush1.bf16.msra.mxu0 %v12645
    %12803 = vmatprep.subr.bf16.mxu0 %v12652
    %12804 = vmatpush1.bf16.msra.mxu0 %v12651
    %12805 = vmatprep.subr.bf16.mxu0 %v12658
    %12806 = vmatpush1.bf16.msra.mxu0 %v12657
    %12807 = vmatprep.subr.bf16.mxu0 %v12664
    %12808 = vmatpush1.bf16.msra.mxu0 %v12663
    %12809 = vmatprep.subr.bf16.mxu0 %v12670
    %12810 = vmatpush1.bf16.msra.mxu0 %v12669
    %12811 = vmatprep.subr.bf16.mxu0 %v12676
    %12812 = vmatpush1.bf16.msra.mxu0 %v12675
    %12813 = vmatprep.subr.bf16.mxu0 %v12682
    %12814 = vmatpush1.bf16.msra.mxu0 %v12681
    %12815 = vmatprep.mubr.bf16.mxu0 %v12206
    %12816 = vmatmul.mubr.bf16.gmra.mrb[0].mxu0 %v12205
    %v12817 = vpop.f32.mrb[0].mxu0
    %v12818 = vadd.f32 0.0, %v12817
    %v12819 = vpop.f32.mrb[0].mxu0
    %v12820 = vadd.f32 0.0, %v12819
    %v12821 = vpop.f32.mrb[0].mxu0
    %v12822 = vpop.f32.mrb[0].mxu0
    %12823 = vdwg.mxu0
    %12824 = vmatprep.subr.bf16.mxu0 %v12594
    %12825 = vmatpush1.bf16.msra.mxu0 %v12593
    %12826 = vmatprep.subr.bf16.mxu0 %v12600
    %12827 = vmatpush1.bf16.msra.mxu0 %v12599
    %12828 = vmatprep.subr.bf16.mxu0 %v12606
    %12829 = vmatpush1.bf16.msra.mxu0 %v12605
    %12830 = vmatprep.subr.bf16.mxu0 %v12612
    %12831 = vmatpush1.bf16.msra.mxu0 %v12611
    %12832 = vmatprep.subr.bf16.mxu0 %v12618
    %12833 = vmatpush1.bf16.msra.mxu0 %v12617
    %12834 = vmatprep.subr.bf16.mxu0 %v12624
    %12835 = vmatpush1.bf16.msra.mxu0 %v12623
    %12836 = vmatprep.subr.bf16.mxu0 %v12630
    %12837 = vmatpush1.bf16.msra.mxu0 %v12629
    %12838 = vmatprep.subr.bf16.mxu0 %v12636
    %12839 = vmatpush1.bf16.msra.mxu0 %v12635
    %12840 = vmatprep.subr.bf16.mxu0 %v12642
    %12841 = vmatpush1.bf16.msra.mxu0 %v12641
    %12842 = vmatprep.subr.bf16.mxu0 %v12648
    %12843 = vmatpush1.bf16.msra.mxu0 %v12647
    %12844 = vmatprep.subr.bf16.mxu0 %v12654
    %12845 = vmatpush1.bf16.msra.mxu0 %v12653
    %12846 = vmatprep.subr.bf16.mxu0 %v12660
    %12847 = vmatpush1.bf16.msra.mxu0 %v12659
    %12848 = vmatprep.subr.bf16.mxu0 %v12666
    %12849 = vmatpush1.bf16.msra.mxu0 %v12665
    %12850 = vmatprep.subr.bf16.mxu0 %v12672
    %12851 = vmatpush1.bf16.msra.mxu0 %v12671
    %12852 = vmatprep.subr.bf16.mxu0 %v12678
    %12853 = vmatpush1.bf16.msra.mxu0 %v12677
    %12854 = vmatprep.subr.bf16.mxu0 %v12684
    %12855 = vmatpush1.bf16.msra.mxu0 %v12683
    %12856 = vmatprep.mubr.bf16.mxu0 %v12206
    %12857 = vmatmul.mubr.bf16.gmra.mrb[0].mxu0 %v12205
    %v12858 = vpop.f32.mrb[0].mxu0
    %v12859 = vadd.f32 0.0, %v12858
    %v12860 = vpop.f32.mrb[0].mxu0
    %v12861 = vadd.f32 0.0, %v12860
    %v12862 = vpop.f32.mrb[0].mxu0
    %v12863 = vpop.f32.mrb[0].mxu0
    %12864 = vdwg.mxu0
    %12865 = vmatprep.subr.bf16.mxu0 %v12596
    %12866 = vmatpush1.bf16.msra.mxu0 %v12595
    %12867 = vmatprep.subr.bf16.mxu0 %v12602
    %12868 = vmatpush1.bf16.msra.mxu0 %v12601
    %12869 = vmatprep.subr.bf16.mxu0 %v12608
    %12870 = vmatpush1.bf16.msra.mxu0 %v12607
    %12871 = vmatprep.subr.bf16.mxu0 %v12614
    %12872 = vmatpush1.bf16.msra.mxu0 %v12613
    %12873 = vmatprep.subr.bf16.mxu0 %v12620
    %12874 = vmatpush1.bf16.msra.mxu0 %v12619
    %12875 = vmatprep.subr.bf16.mxu0 %v12626
    %12876 = vmatpush1.bf16.msra.mxu0 %v12625
    %12877 = vmatprep.subr.bf16.mxu0 %v12632
    %12878 = vmatpush1.bf16.msra.mxu0 %v12631
    %12879 = vmatprep.subr.bf16.mxu0 %v12638
    %12880 = vmatpush1.bf16.msra.mxu0 %v12637
    %12881 = vmatprep.subr.bf16.mxu0 %v12644
    %12882 = vmatpush1.bf16.msra.mxu0 %v12643
    %12883 = vmatprep.subr.bf16.mxu0 %v12650
    %12884 = vmatpush1.bf16.msra.mxu0 %v12649
    %12885 = vmatprep.subr.bf16.mxu0 %v12656
    %12886 = vmatpush1.bf16.msra.mxu0 %v12655
    %12887 = vmatprep.subr.bf16.mxu0 %v12662
    %12888 = vmatpush1.bf16.msra.mxu0 %v12661
    %12889 = vmatprep.subr.bf16.mxu0 %v12668
    %12890 = vmatpush1.bf16.msra.mxu0 %v12667
    %12891 = vmatprep.subr.bf16.mxu0 %v12674
    %12892 = vmatpush1.bf16.msra.mxu0 %v12673
    %12893 = vmatprep.subr.bf16.mxu0 %v12680
    %12894 = vmatpush1.bf16.msra.mxu0 %v12679
    %12895 = vmatprep.subr.bf16.mxu0 %v12686
    %12896 = vmatpush1.bf16.msra.mxu0 %v12685
    %12897 = vmatprep.mubr.bf16.mxu0 %v12206
    %12898 = vmatmul.mubr.bf16.gmra.mrb[0].mxu0 %v12205
    %v12899 = vpop.f32.mrb[0].mxu0
    %v12900 = vadd.f32 0.0, %v12899
    %v12901 = vpop.f32.mrb[0].mxu0
    %v12902 = vadd.f32 0.0, %v12901
    %v12903 = vpop.f32.mrb[0].mxu0
    %v12904 = vpop.f32.mrb[0].mxu0
    %12905 = vdwg.mxu0
    %s12906 = scalar_lea.vmem [#allocation3], 54
    %v12907 = vld [vmem:[%s12906] ss:$8 sm:$0xf]
    %v12908 = vld [vmem:[%s12906] ss:$8 sm:$0x30]
    %v12909 = vor.u32 %v12907, %v12908
    %v12912 = vcombine.low %v12818, %v12820
    %v12914 = vunpack.c.l.s4 1966171168
    %v12915 = vunpack.c.0.s8 %v12914
    %v12916 = vlaneseq
    %v12917 = vshrl.u32 %v12916, 7
    %v12918 = vsub.s32 %v12915, %v12917
    %v12919 = vrot.slane %v12912, %v12918
    %v12921 = vunpack.c.l.s4 1966171168
    %v12922 = vunpack.c.0.s8 %v12921
    %v12923 = vlaneseq
    %v12924 = vshrl.u32 %v12923, 7
    %v12925 = vsub.s32 %v12922, %v12924
    %v12926 = vrot.slane %v12919, %v12925
    %v12928 = vadd.f32 %v12909, %v12926
    %v12929 = vxor.u32 %v12928, 2147483648
    %v12930 = vmul.f32 %v12929, 1.442695
    %v12931 = vpow.pop %v12930
    %v12932 = vadd.f32 %v12931, 1.0
    %v12933 = vrcp.pop %v12932
    %v12934 = vmul.f32 1.0, %v12933
    %v12936 = vrot.slane %v12909, 2
    %v12940 = vcombine.low %v12859, %v12861
    %v12942 = vunpack.c.l.s4 1966171168
    %v12943 = vunpack.c.0.s8 %v12942
    %v12944 = vlaneseq
    %v12945 = vshrl.u32 %v12944, 7
    %v12946 = vsub.s32 %v12943, %v12945
    %v12947 = vrot.slane %v12940, %v12946
    %v12949 = vunpack.c.l.s4 1966171168
    %v12950 = vunpack.c.0.s8 %v12949
    %v12951 = vlaneseq
    %v12952 = vshrl.u32 %v12951, 7
    %v12953 = vsub.s32 %v12950, %v12952
    %v12954 = vrot.slane %v12947, %v12953
    %v12956 = vadd.f32 %v12936, %v12954
    %v12957 = vxor.u32 %v12956, 2147483648
    %v12958 = vmul.f32 %v12957, 1.442695
    %v12959 = vpow.pop %v12958
    %v12960 = vadd.f32 %v12959, 1.0
    %v12961 = vrcp.pop %v12960
    %v12962 = vmul.f32 1.0, %v12961
    %v12963 = vld [vmem:[%s5] sm:$0x3]
    %v12965 = vlaneseq
    %v12966 = vshrl.u32 %v12965, 7
    %v12967 = vsub.s32 0, %v12966
    %v12968 = vrot.slane %v12963, %v12967
    %v12969 = vlaneseq
    %v12970 = vshrl.u32 %v12969, 7
    %v12971 = vsub.s32 1, %v12970
    %v12972 = vrot.slane %v12963, %v12971
    %v12975 = vadd.f32 %v12900, %v12968
    %v12976 = vadd.f32 %v12902, %v12972
    %v12979 = vcombine.low %v12975, %v12976
    %v12981 = vunpack.c.l.s4 1966171168
    %v12982 = vunpack.c.0.s8 %v12981
    %v12983 = vlaneseq
    %v12984 = vshrl.u32 %v12983, 7
    %v12985 = vsub.s32 %v12982, %v12984
    %v12986 = vrot.slane %v12979, %v12985
    %v12988 = vunpack.c.l.s4 1966171168
    %v12989 = vunpack.c.0.s8 %v12988
    %v12990 = vlaneseq
    %v12991 = vshrl.u32 %v12990, 7
    %v12992 = vsub.s32 %v12989, %v12991
    %v12993 = vrot.slane %v12986, %v12992
    %v12995 = vmul.f32 %v12934, %v12993
    %v12996 = vrot.slane %v12909, 4
    %v12998 = vadd.f32 %v12996, %v12995
    %v12999 = vtanh.pop %v12998
    %v13000 = vsub.f32 %v12190, %v12999
    %v13001 = vmul.f32 %v12962, %v13000
    %v13002 = vadd.f32 %v12999, %v13001
    %s13003 = scalar_lea.vmem [#allocation9], 22
    %13004 = vst.msk [vmem:[%s13003] ss:$8 sm:$0x3] %vm1635, %v13002
    %13005 = vst.msk [vmem:[%s13003] ss:$8 sm:$0x0] %vm1635, %v13002
    %v13007 = vlaneseq
    %v13008 = vshrl.u32 %v13007, 7
    %v13009 = vsub.s32 0, %v13008
    %v13010 = vrot.slane %v13002, %v13009
    %v13011 = vlaneseq
    %v13012 = vshrl.u32 %v13011, 7
    %v13013 = vsub.s32 1, %v13012
    %v13014 = vrot.slane %v13002, %v13013
    %v13017 = vpack.c.bf16 %v13010, %v13010
    %v13018 = vpack.c.bf16 %v13014, %v13014
    %v13019 = vld [vmem:[#allocation7] sm:$0xff]
    %v13020 = vld [vmem:[#allocation7 + $0x8] sm:$0xff]
    %v13021 = vld [vmem:[#allocation7 + $0x10] sm:$0xff]
    %v13022 = vld [vmem:[#allocation7 + $0x18] sm:$0xff]
    %v13023 = vld [vmem:[#allocation7 + $0x20] sm:$0xff]
    %v13024 = vld [vmem:[#allocation7 + $0x28] sm:$0xff]
    %v13025 = vld [vmem:[#allocation7 + $0x30] sm:$0xff]
    %v13026 = vld [vmem:[#allocation7 + $0x38] sm:$0xff]
    %v13027 = vld [vmem:[#allocation7 + $0x40] sm:$0xff]
    %v13028 = vld [vmem:[#allocation7 + $0x48] sm:$0xff]
    %v13029 = vld [vmem:[#allocation7 + $0x50] sm:$0xff]
    %v13030 = vld [vmem:[#allocation7 + $0x58] sm:$0xff]
    %v13031 = vld [vmem:[#allocation7 + $0x60] sm:$0xff]
    %v13032 = vld [vmem:[#allocation7 + $0x68] sm:$0xff]
    %v13033 = vld [vmem:[#allocation7 + $0x70] sm:$0xff]
    %v13034 = vld [vmem:[#allocation7 + $0x78] sm:$0xff]
    %v13035 = vld [vmem:[#allocation7 + $0x80] sm:$0xff]
    %v13036 = vld [vmem:[#allocation7 + $0x88] sm:$0xff]
    %v13037 = vld [vmem:[#allocation7 + $0x90] sm:$0xff]
    %v13038 = vld [vmem:[#allocation7 + $0x98] sm:$0xff]
    %v13039 = vld [vmem:[#allocation7 + $0xa0] sm:$0xff]
    %v13040 = vld [vmem:[#allocation7 + $0xa8] sm:$0xff]
    %v13041 = vld [vmem:[#allocation7 + $0xb0] sm:$0xff]
    %v13042 = vld [vmem:[#allocation7 + $0xb8] sm:$0xff]
    %v13043 = vld [vmem:[#allocation7 + $0xc0] sm:$0xff]
    %v13044 = vld [vmem:[#allocation7 + $0xc8] sm:$0xff]
    %v13045 = vld [vmem:[#allocation7 + $0xd0] sm:$0xff]
    %v13046 = vld [vmem:[#allocation7 + $0xd8] sm:$0xff]
    %v13047 = vld [vmem:[#allocation7 + $0xe0] sm:$0xff]
    %v13048 = vld [vmem:[#allocation7 + $0xe8] sm:$0xff]
    %v13049 = vld [vmem:[#allocation7 + $0xf0] sm:$0xff]
    %v13050 = vld [vmem:[#allocation7 + $0xf8] sm:$0xff]
    %v13051 = vld [vmem:[#allocation7 + $0x100] sm:$0xff]
    %v13052 = vld [vmem:[#allocation7 + $0x108] sm:$0xff]
    %v13053 = vld [vmem:[#allocation7 + $0x110] sm:$0xff]
    %v13054 = vld [vmem:[#allocation7 + $0x118] sm:$0xff]
    %v13055 = vld [vmem:[#allocation7 + $0x120] sm:$0xff]
    %v13056 = vld [vmem:[#allocation7 + $0x128] sm:$0xff]
    %v13057 = vld [vmem:[#allocation7 + $0x130] sm:$0xff]
    %v13058 = vld [vmem:[#allocation7 + $0x138] sm:$0xff]
    %v13059 = vld [vmem:[#allocation7 + $0x140] sm:$0xff]
    %v13060 = vld [vmem:[#allocation7 + $0x148] sm:$0xff]
    %v13061 = vld [vmem:[#allocation7 + $0x150] sm:$0xff]
    %v13062 = vld [vmem:[#allocation7 + $0x158] sm:$0xff]
    %v13063 = vld [vmem:[#allocation7 + $0x160] sm:$0xff]
    %v13064 = vld [vmem:[#allocation7 + $0x168] sm:$0xff]
    %v13065 = vld [vmem:[#allocation7 + $0x170] sm:$0xff]
    %v13066 = vld [vmem:[#allocation7 + $0x178] sm:$0xff]
    %v13067 = vld [vmem:[#allocation7 + $0x180] sm:$0xff]
    %v13068 = vld [vmem:[#allocation7 + $0x188] sm:$0xff]
    %v13069 = vld [vmem:[#allocation7 + $0x190] sm:$0xff]
    %v13070 = vld [vmem:[#allocation7 + $0x198] sm:$0xff]
    %v13071 = vld [vmem:[#allocation7 + $0x1a0] sm:$0xff]
    %v13072 = vld [vmem:[#allocation7 + $0x1a8] sm:$0xff]
    %v13073 = vld [vmem:[#allocation7 + $0x1b0] sm:$0xff]
    %v13074 = vld [vmem:[#allocation7 + $0x1b8] sm:$0xff]
    %v13075 = vld [vmem:[#allocation7 + $0x1c0] sm:$0xff]
    %v13076 = vld [vmem:[#allocation7 + $0x1c8] sm:$0xff]
    %v13077 = vld [vmem:[#allocation7 + $0x1d0] sm:$0xff]
    %v13078 = vld [vmem:[#allocation7 + $0x1d8] sm:$0xff]
    %v13079 = vld [vmem:[#allocation7 + $0x1e0] sm:$0xff]
    %v13080 = vld [vmem:[#allocation7 + $0x1e8] sm:$0xff]
    %v13081 = vld [vmem:[#allocation7 + $0x1f0] sm:$0xff]
    %v13082 = vld [vmem:[#allocation7 + $0x1f8] sm:$0xff]
    %v13083 = vld [vmem:[#allocation7 + $0x200] sm:$0xff]
    %v13084 = vld [vmem:[#allocation7 + $0x208] sm:$0xff]
    %v13085 = vld [vmem:[#allocation7 + $0x210] sm:$0xff]
    %v13086 = vld [vmem:[#allocation7 + $0x218] sm:$0xff]
    %v13087 = vld [vmem:[#allocation7 + $0x220] sm:$0xff]
    %v13088 = vld [vmem:[#allocation7 + $0x228] sm:$0xff]
    %v13089 = vld [vmem:[#allocation7 + $0x230] sm:$0xff]
    %v13090 = vld [vmem:[#allocation7 + $0x238] sm:$0xff]
    %v13091 = vld [vmem:[#allocation7 + $0x240] sm:$0xff]
    %v13092 = vld [vmem:[#allocation7 + $0x248] sm:$0xff]
    %v13093 = vld [vmem:[#allocation7 + $0x250] sm:$0xff]
    %v13094 = vld [vmem:[#allocation7 + $0x258] sm:$0xff]
    %v13095 = vld [vmem:[#allocation7 + $0x260] sm:$0xff]
    %v13096 = vld [vmem:[#allocation7 + $0x268] sm:$0xff]
    %v13097 = vld [vmem:[#allocation7 + $0x270] sm:$0xff]
    %v13098 = vld [vmem:[#allocation7 + $0x278] sm:$0xff]
    %v13099 = vld [vmem:[#allocation7 + $0x280] sm:$0xff]
    %v13100 = vld [vmem:[#allocation7 + $0x288] sm:$0xff]
    %v13101 = vld [vmem:[#allocation7 + $0x290] sm:$0xff]
    %v13102 = vld [vmem:[#allocation7 + $0x298] sm:$0xff]
    %v13103 = vld [vmem:[#allocation7 + $0x2a0] sm:$0xff]
    %v13104 = vld [vmem:[#allocation7 + $0x2a8] sm:$0xff]
    %v13105 = vld [vmem:[#allocation7 + $0x2b0] sm:$0xff]
    %v13106 = vld [vmem:[#allocation7 + $0x2b8] sm:$0xff]
    %v13107 = vld [vmem:[#allocation7 + $0x2c0] sm:$0xff]
    %v13108 = vld [vmem:[#allocation7 + $0x2c8] sm:$0xff]
    %v13109 = vld [vmem:[#allocation7 + $0x2d0] sm:$0xff]
    %v13110 = vld [vmem:[#allocation7 + $0x2d8] sm:$0xff]
    %v13111 = vld [vmem:[#allocation7 + $0x2e0] sm:$0xff]
    %v13112 = vld [vmem:[#allocation7 + $0x2e8] sm:$0xff]
    %v13113 = vld [vmem:[#allocation7 + $0x2f0] sm:$0xff]
    %v13114 = vld [vmem:[#allocation7 + $0x2f8] sm:$0xff]
    %v13211 = vunpack.c.l.b16 %v13019
    %v13212 = vunpack.c.h.b16 %v13019
    %v13213 = vunpack.c.l.b16 %v13020
    %v13214 = vunpack.c.h.b16 %v13020
    %v13215 = vunpack.c.l.b16 %v13021
    %v13216 = vunpack.c.h.b16 %v13021
    %v13217 = vunpack.c.l.b16 %v13022
    %v13218 = vunpack.c.h.b16 %v13022
    %v13219 = vunpack.c.l.b16 %v13023
    %v13220 = vunpack.c.h.b16 %v13023
    %v13221 = vunpack.c.l.b16 %v13024
    %v13222 = vunpack.c.h.b16 %v13024
    %v13223 = vunpack.c.l.b16 %v13025
    %v13224 = vunpack.c.h.b16 %v13025
    %v13225 = vunpack.c.l.b16 %v13026
    %v13226 = vunpack.c.h.b16 %v13026
    %v13227 = vunpack.c.l.b16 %v13027
    %v13228 = vunpack.c.h.b16 %v13027
    %v13229 = vunpack.c.l.b16 %v13028
    %v13230 = vunpack.c.h.b16 %v13028
    %v13231 = vunpack.c.l.b16 %v13029
    %v13232 = vunpack.c.h.b16 %v13029
    %v13233 = vunpack.c.l.b16 %v13030
    %v13234 = vunpack.c.h.b16 %v13030
    %v13235 = vunpack.c.l.b16 %v13031
    %v13236 = vunpack.c.h.b16 %v13031
    %v13237 = vunpack.c.l.b16 %v13032
    %v13238 = vunpack.c.h.b16 %v13032
    %v13239 = vunpack.c.l.b16 %v13033
    %v13240 = vunpack.c.h.b16 %v13033
    %v13241 = vunpack.c.l.b16 %v13034
    %v13242 = vunpack.c.h.b16 %v13034
    %v13243 = vunpack.c.l.b16 %v13035
    %v13244 = vunpack.c.h.b16 %v13035
    %v13245 = vunpack.c.l.b16 %v13036
    %v13246 = vunpack.c.h.b16 %v13036
    %v13247 = vunpack.c.l.b16 %v13037
    %v13248 = vunpack.c.h.b16 %v13037
    %v13249 = vunpack.c.l.b16 %v13038
    %v13250 = vunpack.c.h.b16 %v13038
    %v13251 = vunpack.c.l.b16 %v13039
    %v13252 = vunpack.c.h.b16 %v13039
    %v13253 = vunpack.c.l.b16 %v13040
    %v13254 = vunpack.c.h.b16 %v13040
    %v13255 = vunpack.c.l.b16 %v13041
    %v13256 = vunpack.c.h.b16 %v13041
    %v13257 = vunpack.c.l.b16 %v13042
    %v13258 = vunpack.c.h.b16 %v13042
    %v13259 = vunpack.c.l.b16 %v13043
    %v13260 = vunpack.c.h.b16 %v13043
    %v13261 = vunpack.c.l.b16 %v13044
    %v13262 = vunpack.c.h.b16 %v13044
    %v13263 = vunpack.c.l.b16 %v13045
    %v13264 = vunpack.c.h.b16 %v13045
    %v13265 = vunpack.c.l.b16 %v13046
    %v13266 = vunpack.c.h.b16 %v13046
    %v13267 = vunpack.c.l.b16 %v13047
    %v13268 = vunpack.c.h.b16 %v13047
    %v13269 = vunpack.c.l.b16 %v13048
    %v13270 = vunpack.c.h.b16 %v13048
    %v13271 = vunpack.c.l.b16 %v13049
    %v13272 = vunpack.c.h.b16 %v13049
    %v13273 = vunpack.c.l.b16 %v13050
    %v13274 = vunpack.c.h.b16 %v13050
    %v13275 = vunpack.c.l.b16 %v13051
    %v13276 = vunpack.c.h.b16 %v13051
    %v13277 = vunpack.c.l.b16 %v13052
    %v13278 = vunpack.c.h.b16 %v13052
    %v13279 = vunpack.c.l.b16 %v13053
    %v13280 = vunpack.c.h.b16 %v13053
    %v13281 = vunpack.c.l.b16 %v13054
    %v13282 = vunpack.c.h.b16 %v13054
    %v13283 = vunpack.c.l.b16 %v13055
    %v13284 = vunpack.c.h.b16 %v13055
    %v13285 = vunpack.c.l.b16 %v13056
    %v13286 = vunpack.c.h.b16 %v13056
    %v13287 = vunpack.c.l.b16 %v13057
    %v13288 = vunpack.c.h.b16 %v13057
    %v13289 = vunpack.c.l.b16 %v13058
    %v13290 = vunpack.c.h.b16 %v13058
    %v13291 = vunpack.c.l.b16 %v13059
    %v13292 = vunpack.c.h.b16 %v13059
    %v13293 = vunpack.c.l.b16 %v13060
    %v13294 = vunpack.c.h.b16 %v13060
    %v13295 = vunpack.c.l.b16 %v13061
    %v13296 = vunpack.c.h.b16 %v13061
    %v13297 = vunpack.c.l.b16 %v13062
    %v13298 = vunpack.c.h.b16 %v13062
    %v13299 = vunpack.c.l.b16 %v13063
    %v13300 = vunpack.c.h.b16 %v13063
    %v13301 = vunpack.c.l.b16 %v13064
    %v13302 = vunpack.c.h.b16 %v13064
    %v13303 = vunpack.c.l.b16 %v13065
    %v13304 = vunpack.c.h.b16 %v13065
    %v13305 = vunpack.c.l.b16 %v13066
    %v13306 = vunpack.c.h.b16 %v13066
    %v13307 = vunpack.c.l.b16 %v13067
    %v13308 = vunpack.c.h.b16 %v13067
    %v13309 = vunpack.c.l.b16 %v13068
    %v13310 = vunpack.c.h.b16 %v13068
    %v13311 = vunpack.c.l.b16 %v13069
    %v13312 = vunpack.c.h.b16 %v13069
    %v13313 = vunpack.c.l.b16 %v13070
    %v13314 = vunpack.c.h.b16 %v13070
    %v13315 = vunpack.c.l.b16 %v13071
    %v13316 = vunpack.c.h.b16 %v13071
    %v13317 = vunpack.c.l.b16 %v13072
    %v13318 = vunpack.c.h.b16 %v13072
    %v13319 = vunpack.c.l.b16 %v13073
    %v13320 = vunpack.c.h.b16 %v13073
    %v13321 = vunpack.c.l.b16 %v13074
    %v13322 = vunpack.c.h.b16 %v13074
    %v13323 = vunpack.c.l.b16 %v13075
    %v13324 = vunpack.c.h.b16 %v13075
    %v13325 = vunpack.c.l.b16 %v13076
    %v13326 = vunpack.c.h.b16 %v13076
    %v13327 = vunpack.c.l.b16 %v13077
    %v13328 = vunpack.c.h.b16 %v13077
    %v13329 = vunpack.c.l.b16 %v13078
    %v13330 = vunpack.c.h.b16 %v13078
    %v13331 = vunpack.c.l.b16 %v13079
    %v13332 = vunpack.c.h.b16 %v13079
    %v13333 = vunpack.c.l.b16 %v13080
    %v13334 = vunpack.c.h.b16 %v13080
    %v13335 = vunpack.c.l.b16 %v13081
    %v13336 = vunpack.c.h.b16 %v13081
    %v13337 = vunpack.c.l.b16 %v13082
    %v13338 = vunpack.c.h.b16 %v13082
    %v13339 = vunpack.c.l.b16 %v13083
    %v13340 = vunpack.c.h.b16 %v13083
    %v13341 = vunpack.c.l.b16 %v13084
    %v13342 = vunpack.c.h.b16 %v13084
    %v13343 = vunpack.c.l.b16 %v13085
    %v13344 = vunpack.c.h.b16 %v13085
    %v13345 = vunpack.c.l.b16 %v13086
    %v13346 = vunpack.c.h.b16 %v13086
    %v13347 = vunpack.c.l.b16 %v13087
    %v13348 = vunpack.c.h.b16 %v13087
    %v13349 = vunpack.c.l.b16 %v13088
    %v13350 = vunpack.c.h.b16 %v13088
    %v13351 = vunpack.c.l.b16 %v13089
    %v13352 = vunpack.c.h.b16 %v13089
    %v13353 = vunpack.c.l.b16 %v13090
    %v13354 = vunpack.c.h.b16 %v13090
    %v13355 = vunpack.c.l.b16 %v13091
    %v13356 = vunpack.c.h.b16 %v13091
    %v13357 = vunpack.c.l.b16 %v13092
    %v13358 = vunpack.c.h.b16 %v13092
    %v13359 = vunpack.c.l.b16 %v13093
    %v13360 = vunpack.c.h.b16 %v13093
    %v13361 = vunpack.c.l.b16 %v13094
    %v13362 = vunpack.c.h.b16 %v13094
    %v13363 = vunpack.c.l.b16 %v13095
    %v13364 = vunpack.c.h.b16 %v13095
    %v13365 = vunpack.c.l.b16 %v13096
    %v13366 = vunpack.c.h.b16 %v13096
    %v13367 = vunpack.c.l.b16 %v13097
    %v13368 = vunpack.c.h.b16 %v13097
    %v13369 = vunpack.c.l.b16 %v13098
    %v13370 = vunpack.c.h.b16 %v13098
    %v13371 = vunpack.c.l.b16 %v13099
    %v13372 = vunpack.c.h.b16 %v13099
    %v13373 = vunpack.c.l.b16 %v13100
    %v13374 = vunpack.c.h.b16 %v13100
    %v13375 = vunpack.c.l.b16 %v13101
    %v13376 = vunpack.c.h.b16 %v13101
    %v13377 = vunpack.c.l.b16 %v13102
    %v13378 = vunpack.c.h.b16 %v13102
    %v13379 = vunpack.c.l.b16 %v13103
    %v13380 = vunpack.c.h.b16 %v13103
    %v13381 = vunpack.c.l.b16 %v13104
    %v13382 = vunpack.c.h.b16 %v13104
    %v13383 = vunpack.c.l.b16 %v13105
    %v13384 = vunpack.c.h.b16 %v13105
    %v13385 = vunpack.c.l.b16 %v13106
    %v13386 = vunpack.c.h.b16 %v13106
    %v13387 = vunpack.c.l.b16 %v13107
    %v13388 = vunpack.c.h.b16 %v13107
    %v13389 = vunpack.c.l.b16 %v13108
    %v13390 = vunpack.c.h.b16 %v13108
    %v13391 = vunpack.c.l.b16 %v13109
    %v13392 = vunpack.c.h.b16 %v13109
    %v13393 = vunpack.c.l.b16 %v13110
    %v13394 = vunpack.c.h.b16 %v13110
    %v13395 = vunpack.c.l.b16 %v13111
    %v13396 = vunpack.c.h.b16 %v13111
    %v13397 = vunpack.c.l.b16 %v13112
    %v13398 = vunpack.c.h.b16 %v13112
    %v13399 = vunpack.c.l.b16 %v13113
    %v13400 = vunpack.c.h.b16 %v13113
    %v13401 = vunpack.c.l.b16 %v13114
    %v13402 = vunpack.c.h.b16 %v13114
    %v13403 = vpack.c.b16 %v13217, %v13211
    %v13404 = vpack.c.b16 %v13218, %v13212
    %v13405 = vpack.c.b16 %v13219, %v13213
    %v13406 = vpack.c.b16 %v13220, %v13214
    %v13407 = vpack.c.b16 %v13221, %v13215
    %v13408 = vpack.c.b16 %v13222, %v13216
    %v13409 = vpack.c.b16 %v13229, %v13223
    %v13410 = vpack.c.b16 %v13230, %v13224
    %v13411 = vpack.c.b16 %v13231, %v13225
    %v13412 = vpack.c.b16 %v13232, %v13226
    %v13413 = vpack.c.b16 %v13233, %v13227
    %v13414 = vpack.c.b16 %v13234, %v13228
    %v13415 = vpack.c.b16 %v13241, %v13235
    %v13416 = vpack.c.b16 %v13242, %v13236
    %v13417 = vpack.c.b16 %v13243, %v13237
    %v13418 = vpack.c.b16 %v13244, %v13238
    %v13419 = vpack.c.b16 %v13245, %v13239
    %v13420 = vpack.c.b16 %v13246, %v13240
    %v13421 = vpack.c.b16 %v13253, %v13247
    %v13422 = vpack.c.b16 %v13254, %v13248
    %v13423 = vpack.c.b16 %v13255, %v13249
    %v13424 = vpack.c.b16 %v13256, %v13250
    %v13425 = vpack.c.b16 %v13257, %v13251
    %v13426 = vpack.c.b16 %v13258, %v13252
    %v13427 = vpack.c.b16 %v13265, %v13259
    %v13428 = vpack.c.b16 %v13266, %v13260
    %v13429 = vpack.c.b16 %v13267, %v13261
    %v13430 = vpack.c.b16 %v13268, %v13262
    %v13431 = vpack.c.b16 %v13269, %v13263
    %v13432 = vpack.c.b16 %v13270, %v13264
    %v13433 = vpack.c.b16 %v13277, %v13271
    %v13434 = vpack.c.b16 %v13278, %v13272
    %v13435 = vpack.c.b16 %v13279, %v13273
    %v13436 = vpack.c.b16 %v13280, %v13274
    %v13437 = vpack.c.b16 %v13281, %v13275
    %v13438 = vpack.c.b16 %v13282, %v13276
    %v13439 = vpack.c.b16 %v13289, %v13283
    %v13440 = vpack.c.b16 %v13290, %v13284
    %v13441 = vpack.c.b16 %v13291, %v13285
    %v13442 = vpack.c.b16 %v13292, %v13286
    %v13443 = vpack.c.b16 %v13293, %v13287
    %v13444 = vpack.c.b16 %v13294, %v13288
    %v13445 = vpack.c.b16 %v13301, %v13295
    %v13446 = vpack.c.b16 %v13302, %v13296
    %v13447 = vpack.c.b16 %v13303, %v13297
    %v13448 = vpack.c.b16 %v13304, %v13298
    %v13449 = vpack.c.b16 %v13305, %v13299
    %v13450 = vpack.c.b16 %v13306, %v13300
    %v13451 = vpack.c.b16 %v13313, %v13307
    %v13452 = vpack.c.b16 %v13314, %v13308
    %v13453 = vpack.c.b16 %v13315, %v13309
    %v13454 = vpack.c.b16 %v13316, %v13310
    %v13455 = vpack.c.b16 %v13317, %v13311
    %v13456 = vpack.c.b16 %v13318, %v13312
    %v13457 = vpack.c.b16 %v13325, %v13319
    %v13458 = vpack.c.b16 %v13326, %v13320
    %v13459 = vpack.c.b16 %v13327, %v13321
    %v13460 = vpack.c.b16 %v13328, %v13322
    %v13461 = vpack.c.b16 %v13329, %v13323
    %v13462 = vpack.c.b16 %v13330, %v13324
    %v13463 = vpack.c.b16 %v13337, %v13331
    %v13464 = vpack.c.b16 %v13338, %v13332
    %v13465 = vpack.c.b16 %v13339, %v13333
    %v13466 = vpack.c.b16 %v13340, %v13334
    %v13467 = vpack.c.b16 %v13341, %v13335
    %v13468 = vpack.c.b16 %v13342, %v13336
    %v13469 = vpack.c.b16 %v13349, %v13343
    %v13470 = vpack.c.b16 %v13350, %v13344
    %v13471 = vpack.c.b16 %v13351, %v13345
    %v13472 = vpack.c.b16 %v13352, %v13346
    %v13473 = vpack.c.b16 %v13353, %v13347
    %v13474 = vpack.c.b16 %v13354, %v13348
    %v13475 = vpack.c.b16 %v13361, %v13355
    %v13476 = vpack.c.b16 %v13362, %v13356
    %v13477 = vpack.c.b16 %v13363, %v13357
    %v13478 = vpack.c.b16 %v13364, %v13358
    %v13479 = vpack.c.b16 %v13365, %v13359
    %v13480 = vpack.c.b16 %v13366, %v13360
    %v13481 = vpack.c.b16 %v13373, %v13367
    %v13482 = vpack.c.b16 %v13374, %v13368
    %v13483 = vpack.c.b16 %v13375, %v13369
    %v13484 = vpack.c.b16 %v13376, %v13370
    %v13485 = vpack.c.b16 %v13377, %v13371
    %v13486 = vpack.c.b16 %v13378, %v13372
    %v13487 = vpack.c.b16 %v13385, %v13379
    %v13488 = vpack.c.b16 %v13386, %v13380
    %v13489 = vpack.c.b16 %v13387, %v13381
    %v13490 = vpack.c.b16 %v13388, %v13382
    %v13491 = vpack.c.b16 %v13389, %v13383
    %v13492 = vpack.c.b16 %v13390, %v13384
    %v13493 = vpack.c.b16 %v13397, %v13391
    %v13494 = vpack.c.b16 %v13398, %v13392
    %v13495 = vpack.c.b16 %v13399, %v13393
    %v13496 = vpack.c.b16 %v13400, %v13394
    %v13497 = vpack.c.b16 %v13401, %v13395
    %v13498 = vpack.c.b16 %v13402, %v13396
    %13595 = vmatprep.subr.bf16.mxu0 %v13404
    %13596 = vmatpush1.bf16.msra.mxu0 %v13403
    %13597 = vmatprep.subr.bf16.mxu0 %v13410
    %13598 = vmatpush1.bf16.msra.mxu0 %v13409
    %13599 = vmatprep.subr.bf16.mxu0 %v13416
    %13600 = vmatpush1.bf16.msra.mxu0 %v13415
    %13601 = vmatprep.subr.bf16.mxu0 %v13422
    %13602 = vmatpush1.bf16.msra.mxu0 %v13421
    %13603 = vmatprep.subr.bf16.mxu0 %v13428
    %13604 = vmatpush1.bf16.msra.mxu0 %v13427
    %13605 = vmatprep.subr.bf16.mxu0 %v13434
    %13606 = vmatpush1.bf16.msra.mxu0 %v13433
    %13607 = vmatprep.subr.bf16.mxu0 %v13440
    %13608 = vmatpush1.bf16.msra.mxu0 %v13439
    %13609 = vmatprep.subr.bf16.mxu0 %v13446
    %13610 = vmatpush1.bf16.msra.mxu0 %v13445
    %13611 = vmatprep.subr.bf16.mxu0 %v13452
    %13612 = vmatpush1.bf16.msra.mxu0 %v13451
    %13613 = vmatprep.subr.bf16.mxu0 %v13458
    %13614 = vmatpush1.bf16.msra.mxu0 %v13457
    %13615 = vmatprep.subr.bf16.mxu0 %v13464
    %13616 = vmatpush1.bf16.msra.mxu0 %v13463
    %13617 = vmatprep.subr.bf16.mxu0 %v13470
    %13618 = vmatpush1.bf16.msra.mxu0 %v13469
    %13619 = vmatprep.subr.bf16.mxu0 %v13476
    %13620 = vmatpush1.bf16.msra.mxu0 %v13475
    %13621 = vmatprep.subr.bf16.mxu0 %v13482
    %13622 = vmatpush1.bf16.msra.mxu0 %v13481
    %13623 = vmatprep.subr.bf16.mxu0 %v13488
    %13624 = vmatpush1.bf16.msra.mxu0 %v13487
    %13625 = vmatprep.subr.bf16.mxu0 %v13494
    %13626 = vmatpush1.bf16.msra.mxu0 %v13493
    %13627 = vmatprep.mubr.bf16.mxu0 %v13018
    %13628 = vmatmul.mubr.bf16.gmra.mrb[0].mxu0 %v13017
    %v13629 = vpop.f32.mrb[0].mxu0
    %v13630 = vadd.f32 0.0, %v13629
    %v13631 = vpop.f32.mrb[0].mxu0
    %v13632 = vadd.f32 0.0, %v13631
    %v13633 = vpop.f32.mrb[0].mxu0
    %v13634 = vpop.f32.mrb[0].mxu0
    %13635 = vdwg.mxu0
    %13636 = vmatprep.subr.bf16.mxu0 %v13406
    %13637 = vmatpush1.bf16.msra.mxu0 %v13405
    %13638 = vmatprep.subr.bf16.mxu0 %v13412
    %13639 = vmatpush1.bf16.msra.mxu0 %v13411
    %13640 = vmatprep.subr.bf16.mxu0 %v13418
    %13641 = vmatpush1.bf16.msra.mxu0 %v13417
    %13642 = vmatprep.subr.bf16.mxu0 %v13424
    %13643 = vmatpush1.bf16.msra.mxu0 %v13423
    %13644 = vmatprep.subr.bf16.mxu0 %v13430
    %13645 = vmatpush1.bf16.msra.mxu0 %v13429
    %13646 = vmatprep.subr.bf16.mxu0 %v13436
    %13647 = vmatpush1.bf16.msra.mxu0 %v13435
    %13648 = vmatprep.subr.bf16.mxu0 %v13442
    %13649 = vmatpush1.bf16.msra.mxu0 %v13441
    %13650 = vmatprep.subr.bf16.mxu0 %v13448
    %13651 = vmatpush1.bf16.msra.mxu0 %v13447
    %13652 = vmatprep.subr.bf16.mxu0 %v13454
    %13653 = vmatpush1.bf16.msra.mxu0 %v13453
    %13654 = vmatprep.subr.bf16.mxu0 %v13460
    %13655 = vmatpush1.bf16.msra.mxu0 %v13459
    %13656 = vmatprep.subr.bf16.mxu0 %v13466
    %13657 = vmatpush1.bf16.msra.mxu0 %v13465
    %13658 = vmatprep.subr.bf16.mxu0 %v13472
    %13659 = vmatpush1.bf16.msra.mxu0 %v13471
    %13660 = vmatprep.subr.bf16.mxu0 %v13478
    %13661 = vmatpush1.bf16.msra.mxu0 %v13477
    %13662 = vmatprep.subr.bf16.mxu0 %v13484
    %13663 = vmatpush1.bf16.msra.mxu0 %v13483
    %13664 = vmatprep.subr.bf16.mxu0 %v13490
    %13665 = vmatpush1.bf16.msra.mxu0 %v13489
    %13666 = vmatprep.subr.bf16.mxu0 %v13496
    %13667 = vmatpush1.bf16.msra.mxu0 %v13495
    %13668 = vmatprep.mubr.bf16.mxu0 %v13018
    %13669 = vmatmul.mubr.bf16.gmra.mrb[0].mxu0 %v13017
    %v13670 = vpop.f32.mrb[0].mxu0
    %v13671 = vadd.f32 0.0, %v13670
    %v13672 = vpop.f32.mrb[0].mxu0
    %v13673 = vadd.f32 0.0, %v13672
    %v13674 = vpop.f32.mrb[0].mxu0
    %v13675 = vpop.f32.mrb[0].mxu0
    %13676 = vdwg.mxu0
    %13677 = vmatprep.subr.bf16.mxu0 %v13408
    %13678 = vmatpush1.bf16.msra.mxu0 %v13407
    %13679 = vmatprep.subr.bf16.mxu0 %v13414
    %13680 = vmatpush1.bf16.msra.mxu0 %v13413
    %13681 = vmatprep.subr.bf16.mxu0 %v13420
    %13682 = vmatpush1.bf16.msra.mxu0 %v13419
    %13683 = vmatprep.subr.bf16.mxu0 %v13426
    %13684 = vmatpush1.bf16.msra.mxu0 %v13425
    %13685 = vmatprep.subr.bf16.mxu0 %v13432
    %13686 = vmatpush1.bf16.msra.mxu0 %v13431
    %13687 = vmatprep.subr.bf16.mxu0 %v13438
    %13688 = vmatpush1.bf16.msra.mxu0 %v13437
    %13689 = vmatprep.subr.bf16.mxu0 %v13444
    %13690 = vmatpush1.bf16.msra.mxu0 %v13443
    %13691 = vmatprep.subr.bf16.mxu0 %v13450
    %13692 = vmatpush1.bf16.msra.mxu0 %v13449
    %13693 = vmatprep.subr.bf16.mxu0 %v13456
    %13694 = vmatpush1.bf16.msra.mxu0 %v13455
    %13695 = vmatprep.subr.bf16.mxu0 %v13462
    %13696 = vmatpush1.bf16.msra.mxu0 %v13461
    %13697 = vmatprep.subr.bf16.mxu0 %v13468
    %13698 = vmatpush1.bf16.msra.mxu0 %v13467
    %13699 = vmatprep.subr.bf16.mxu0 %v13474
    %13700 = vmatpush1.bf16.msra.mxu0 %v13473
    %13701 = vmatprep.subr.bf16.mxu0 %v13480
    %13702 = vmatpush1.bf16.msra.mxu0 %v13479
    %13703 = vmatprep.subr.bf16.mxu0 %v13486
    %13704 = vmatpush1.bf16.msra.mxu0 %v13485
    %13705 = vmatprep.subr.bf16.mxu0 %v13492
    %13706 = vmatpush1.bf16.msra.mxu0 %v13491
    %13707 = vmatprep.subr.bf16.mxu0 %v13498
    %13708 = vmatpush1.bf16.msra.mxu0 %v13497
    %13709 = vmatprep.mubr.bf16.mxu0 %v13018
    %13710 = vmatmul.mubr.bf16.gmra.mrb[0].mxu0 %v13017
    %v13711 = vpop.f32.mrb[0].mxu0
    %v13712 = vadd.f32 0.0, %v13711
    %v13713 = vpop.f32.mrb[0].mxu0
    %v13714 = vadd.f32 0.0, %v13713
    %v13715 = vpop.f32.mrb[0].mxu0
    %v13716 = vpop.f32.mrb[0].mxu0
    %13717 = vdwg.mxu0
    %s13718 = scalar_lea.vmem [#allocation3], 55
    %v13719 = vld [vmem:[%s13718] ss:$8 sm:$0xf]
    %v13720 = vld [vmem:[%s13718] ss:$8 sm:$0x30]
    %v13721 = vor.u32 %v13719, %v13720
    %v13724 = vcombine.low %v13630, %v13632
    %v13726 = vunpack.c.l.s4 1966171168
    %v13727 = vunpack.c.0.s8 %v13726
    %v13728 = vlaneseq
    %v13729 = vshrl.u32 %v13728, 7
    %v13730 = vsub.s32 %v13727, %v13729
    %v13731 = vrot.slane %v13724, %v13730
    %v13733 = vunpack.c.l.s4 1966171168
    %v13734 = vunpack.c.0.s8 %v13733
    %v13735 = vlaneseq
    %v13736 = vshrl.u32 %v13735, 7
    %v13737 = vsub.s32 %v13734, %v13736
    %v13738 = vrot.slane %v13731, %v13737
    %v13740 = vadd.f32 %v13721, %v13738
    %v13741 = vxor.u32 %v13740, 2147483648
    %v13742 = vmul.f32 %v13741, 1.442695
    %v13743 = vpow.pop %v13742
    %v13744 = vadd.f32 %v13743, 1.0
    %v13745 = vrcp.pop %v13744
    %v13746 = vmul.f32 1.0, %v13745
    %v13748 = vrot.slane %v13721, 2
    %v13752 = vcombine.low %v13671, %v13673
    %v13754 = vunpack.c.l.s4 1966171168
    %v13755 = vunpack.c.0.s8 %v13754
    %v13756 = vlaneseq
    %v13757 = vshrl.u32 %v13756, 7
    %v13758 = vsub.s32 %v13755, %v13757
    %v13759 = vrot.slane %v13752, %v13758
    %v13761 = vunpack.c.l.s4 1966171168
    %v13762 = vunpack.c.0.s8 %v13761
    %v13763 = vlaneseq
    %v13764 = vshrl.u32 %v13763, 7
    %v13765 = vsub.s32 %v13762, %v13764
    %v13766 = vrot.slane %v13759, %v13765
    %v13768 = vadd.f32 %v13748, %v13766
    %v13769 = vxor.u32 %v13768, 2147483648
    %v13770 = vmul.f32 %v13769, 1.442695
    %v13771 = vpow.pop %v13770
    %v13772 = vadd.f32 %v13771, 1.0
    %v13773 = vrcp.pop %v13772
    %v13774 = vmul.f32 1.0, %v13773
    %v13775 = vld [vmem:[%s5] sm:$0x3]
    %v13777 = vlaneseq
    %v13778 = vshrl.u32 %v13777, 7
    %v13779 = vsub.s32 0, %v13778
    %v13780 = vrot.slane %v13775, %v13779
    %v13781 = vlaneseq
    %v13782 = vshrl.u32 %v13781, 7
    %v13783 = vsub.s32 1, %v13782
    %v13784 = vrot.slane %v13775, %v13783
    %v13787 = vadd.f32 %v13712, %v13780
    %v13788 = vadd.f32 %v13714, %v13784
    %v13791 = vcombine.low %v13787, %v13788
    %v13793 = vunpack.c.l.s4 1966171168
    %v13794 = vunpack.c.0.s8 %v13793
    %v13795 = vlaneseq
    %v13796 = vshrl.u32 %v13795, 7
    %v13797 = vsub.s32 %v13794, %v13796
    %v13798 = vrot.slane %v13791, %v13797
    %v13800 = vunpack.c.l.s4 1966171168
    %v13801 = vunpack.c.0.s8 %v13800
    %v13802 = vlaneseq
    %v13803 = vshrl.u32 %v13802, 7
    %v13804 = vsub.s32 %v13801, %v13803
    %v13805 = vrot.slane %v13798, %v13804
    %v13807 = vmul.f32 %v13746, %v13805
    %v13808 = vrot.slane %v13721, 4
    %v13810 = vadd.f32 %v13808, %v13807
    %v13811 = vtanh.pop %v13810
    %v13812 = vsub.f32 %v13002, %v13811
    %v13813 = vmul.f32 %v13774, %v13812
    %v13814 = vadd.f32 %v13811, %v13813
    %s13815 = scalar_lea.vmem [#allocation9], 23
    %13816 = vst.msk [vmem:[%s13815] ss:$8 sm:$0x3] %vm1635, %v13814
    %13817 = vst.msk [vmem:[%s13815] ss:$8 sm:$0x0] %vm1635, %v13814
    %13818 = vst.msk [vmem:[#allocation2] sm:$0x3] %vm1635, %v13814
    // Predicated region
    $region38: #{encoder_gru_forward.1} parent=1 // pred_check
      _
    $region39: #{encoder_gru_forward.1} parent=1 // pred_check_branch
      %13820 = sbr.rel (0) target = $region41
    $region40: #{encoder_gru_forward.1} parent=1 // pred_region
      %s13822 = ssub.s32 512, 512
      %13823 = vsyncadd [#allocation6], %s13822
      %s13824 = sshll.u32 [#allocation9], 4
      %s13825 = int_to_ptr.vmem [resolvable:$true] %s13824
      %13830 = dma.vmem_to_hbm [thread:$0]  %s13825, 512, %s6, [#allocation6], 256, 256, 16
    $region41: #{encoder_gru_forward.1} parent=1 // pred_fallthru
      _
    // Predicated region
    $region42: #{encoder_gru_forward.1} parent=1 // pred_check
      _
    $region43: #{encoder_gru_forward.1} parent=1 // pred_check_branch
      %13832 = sbr.rel (0) target = $region45
    $region44: #{encoder_gru_forward.1} parent=1 // pred_region
      %13833 = dma.done [#allocation6], 512
    $region45: #{encoder_gru_forward.1} parent=1 // pred_fallthru
      _
    %13834 = vsyncpa [#allocation5], 1
    %13835 = vsyncpa [#allocation8], 1
    %13836 = vsyncpa [#allocation6], 1

</llo_original>
